<compile_context>
chip_gen: v7x
topology: tpu7x:2x2x1
jax: 0.10.0
libtpu: 0.0.40
codegen_flags: <defaults>
</compile_context>

<pallas_src>
import functools
import math

import jax
import jax.numpy as jnp
from jax.experimental import pallas as pl
from jax.experimental.pallas import tpu as pltpu


# ----------------------------------------------------------------------------
# Pallas kernel: one grid step == one transformer layer (whole batch resident).
# ----------------------------------------------------------------------------
def _transformer_kernel(
    # shared across layers (block index constant in l)
    h0_ref,      # (B*S, D)    f32   embedded + scaled + pos-encoded input
    lnfg_ref,    # (1, D)      f32
    lnfb_ref,    # (1, D)      f32
    # streamed per layer (leading block dim = current layer)
    w_in_ref,    # (1, D, 3D)  bf16
    b_in_ref,    # (1, 1, 3D)  f32
    w_out_ref,   # (1, D, D)   bf16
    b_out_ref,   # (1, 1, D)   f32
    ln1g_ref,    # (1, 1, D)   f32
    ln1b_ref,    # (1, 1, D)   f32
    w_ff1_ref,   # (1, D, 4D)  bf16
    b_ff1_ref,   # (1, 1, 4D)  f32
    w_ff2_ref,   # (1, 4D, D)  bf16
    b_ff2_ref,   # (1, 1, D)   f32
    ln2g_ref,    # (1, 1, D)   f32
    ln2b_ref,    # (1, 1, D)   f32
    # output
    o_ref,       # (B*S, D)    f32
    # scratch
    h_ref,       # (B*S, D)    f32 -- hidden state carried across the layer axis
    attn_ref,    # (B*S, D)    f32 -- per-head AV results assembled in place
    *,
    num_layers: int,
    num_heads: int,
    d_model: int,
    batch: int,
    seq: int,
):
    l = pl.program_id(0)
    D = d_model
    H = num_heads
    S = seq
    dh = D // H
    eps = jnp.float32(1e-5)
    neg_large = jnp.float32(-1e30)    # finite "-inf": avoids inf-arith hazards
    inv_sqrt_dh = jnp.float32(1.0 / math.sqrt(dh))
    bf16 = jnp.bfloat16

    def layer_norm(v, g, b):
        mu = jnp.mean(v, axis=-1, keepdims=True)
        var = jnp.mean((v - mu) ** 2, axis=-1, keepdims=True)
        return (v - mu) * jax.lax.rsqrt(var + eps) * g + b

    def mm(a, w):
        # bf16 inputs to the MXU, f32 accumulation.
        return jnp.dot(a.astype(bf16), w, preferred_element_type=jnp.float32)

    # ---- layer 0: initialize the carried hidden state ------------------------
    @pl.when(l == 0)
    def _init():
        h_ref[...] = h0_ref[...]

    h = h_ref[...]                                    # (B*S, D) f32

    # ---- self attention -------------------------------------------------------
    # Batched QKV projection over the flattened (B*S) rows.
    qkv = mm(h, w_in_ref[0]) + b_in_ref[0]            # (B*S, 3D) f32

    # Causal mask indices (shared across batch/head).
    rows = jax.lax.broadcasted_iota(jnp.int32, (S, S), 0)
    cols = jax.lax.broadcasted_iota(jnp.int32, (S, S), 1)
    causal = cols > rows

    # Per-(batch, head) score/AV dots with static lane/sublane slices; each
    # head's result is written directly into the (B*S, D) attention scratch
    # (no stack/concat copies).  dh is lane-aligned (128) at these shapes.
    for b in range(batch):
        rs = b * S
        for hd in range(H):
            cs = hd * dh
            q = (qkv[rs:rs + S, 0 * D + cs:0 * D + cs + dh]
                 * inv_sqrt_dh).astype(bf16)          # (S, dh)
            k = qkv[rs:rs + S, 1 * D + cs:1 * D + cs + dh].astype(bf16)
            v = qkv[rs:rs + S, 2 * D + cs:2 * D + cs + dh].astype(bf16)

            s = jax.lax.dot_general(                  # q @ k^T -> (S, S) f32
                q, k, (((1,), (1,)), ((), ())),
                preferred_element_type=jnp.float32)
            s = jnp.where(causal, neg_large, s)

            m = jnp.max(s, axis=-1, keepdims=True)
            p = jnp.exp(s - m)
            p = p / jnp.sum(p, axis=-1, keepdims=True)   # exact division

            av = jnp.dot(p.astype(bf16), v,
                         preferred_element_type=jnp.float32)   # (S, dh)
            attn_ref[rs:rs + S, cs:cs + dh] = av

    attn = mm(attn_ref[...], w_out_ref[0]) + b_out_ref[0]      # (B*S, D)
    h1 = layer_norm(h + attn, ln1g_ref[0], ln1b_ref[0])

    # ---- feed forward (ReLU) --------------------------------------------------
    ff = jnp.maximum(mm(h1, w_ff1_ref[0]) + b_ff1_ref[0], 0.0)
    ff = mm(ff, w_ff2_ref[0]) + b_ff2_ref[0]
    h2 = layer_norm(h1 + ff, ln2g_ref[0], ln2b_ref[0])

    h_ref[...] = h2

    # ---- last layer: final LayerNorm + output writeback -----------------------
    # o_ref's block index is constant over l, so HBM writeback happens once
    # after the last grid step (accumulator pattern).
    @pl.when(l == num_layers - 1)
    def _final():
        o_ref[...] = layer_norm(h2, lnfg_ref[...],
                                lnfb_ref[...]).astype(o_ref.dtype)


# ----------------------------------------------------------------------------
# Wrapper
# ----------------------------------------------------------------------------
def transformer_forward(params, x, *, num_layers, num_heads, d_model):
    B, S, V = x.shape
    D, L, H = d_model, num_layers, num_heads
    assert D % H == 0
    assert S <= params["pos"].shape[1]
    bf16 = jnp.bfloat16

    # Embedding projection in plain XLA (K=V=16 matmul would waste MXU rows and
    # the lane-padded vocab dim would waste VMEM inside the kernel).
    h0 = jnp.dot(x.astype(bf16), params["w_emb"].astype(bf16),
                 preferred_element_type=jnp.float32) + params["b_emb"]
    h0 = h0 * jnp.float32(math.sqrt(D)) + params["pos"][0, :S, :]
    h0 = h0.reshape(B * S, D).astype(jnp.float32)

    shared_inputs = (h0, params["lnf_g"], params["lnf_b"])
    layer_inputs = (
        params["w_in"].astype(bf16), params["b_in"],
        params["w_out"].astype(bf16), params["b_out"],
        params["ln1_g"], params["ln1_b"],
        params["w_ff1"].astype(bf16), params["b_ff1"],
        params["w_ff2"].astype(bf16), params["b_ff2"],
        params["ln2_g"], params["ln2_b"],
    )

    def shared_spec(arr):
        nd = arr.ndim
        return pl.BlockSpec(arr.shape, lambda l, _nd=nd: (0,) * _nd)

    def layer_spec(arr):                              # (L, ...) streamed over l
        nd = arr.ndim
        return pl.BlockSpec((1,) + arr.shape[1:],
                            lambda l, _nd=nd: (l,) + (0,) * (_nd - 1))

    in_specs = [shared_spec(a) for a in shared_inputs]
    in_specs += [layer_spec(a) for a in layer_inputs]

    kernel = functools.partial(
        _transformer_kernel,
        num_layers=L, num_heads=H, d_model=D, batch=B, seq=S)

    out = pl.pallas_call(
        kernel,
        out_shape=jax.ShapeDtypeStruct((B * S, D), jnp.float32),
        grid_spec=pltpu.PrefetchScalarGridSpec(
            num_scalar_prefetch=0,
            grid=(L,),                                # layer axis only: each
            in_specs=in_specs,                        # layer's weights DMA'd once
            out_specs=pl.BlockSpec((B * S, D), lambda l: (0, 0)),
            scratch_shapes=[pltpu.VMEM((B * S, D), jnp.float32),   # hidden carry
                            pltpu.VMEM((B * S, D), jnp.float32)],  # attn assembly
        ),
        compiler_params=pltpu.CompilerParams(
            dimension_semantics=("arbitrary",),       # sequential layer carry
            vmem_limit_bytes=32 * 1024 * 1024,
        ),
    )(*shared_inputs, *layer_inputs)
    return out.reshape(B, S, D)


# ----------------------------------------------------------------------------
# Pure-JAX reference with identical numerics (bf16 MXU inputs, f32 accum,
# exact softmax division, same q pre-scaling).
# ----------------------------------------------------------------------------
def reference_forward(params, x, *, num_layers, num_heads, d_model):
    B, S, V = x.shape
    D, H, L = d_model, num_heads, num_layers
    dh = D // H
    eps = jnp.float32(1e-5)
    bf16 = jnp.bfloat16

    def ln(v, g, b):
        mu = jnp.mean(v, axis=-1, keepdims=True)
        var = jnp.mean((v - mu) ** 2, axis=-1, keepdims=True)
        return (v - mu) * jax.lax.rsqrt(var + eps) * g + b

    def mm(a, w):
        return jnp.dot(a.astype(bf16), w.astype(bf16),
                       preferred_element_type=jnp.float32)

    h = (mm(x, params["w_emb"]) + params["b_emb"]) * jnp.float32(math.sqrt(D))
    h = h + params["pos"][:, :S, :]

    rows = jnp.arange(S)[:, None]
    cols = jnp.arange(S)[None, :]
    neg = jnp.float32(-1e30)
    inv_sqrt_dh = jnp.float32(1.0 / math.sqrt(dh))

    for l in range(L):
        qkv = mm(h, params["w_in"][l]) + params["b_in"][l]
        q = (qkv[..., :D] * inv_sqrt_dh).reshape(B, S, H, dh)
        q = q.transpose(0, 2, 1, 3).astype(bf16)
        k = qkv[..., D:2 * D].reshape(B, S, H, dh).transpose(0, 2, 1, 3).astype(bf16)
        v = qkv[..., 2 * D:].reshape(B, S, H, dh).transpose(0, 2, 1, 3).astype(bf16)
        s = jnp.einsum("bhqd,bhkd->bhqk", q, k,
                       preferred_element_type=jnp.float32)
        s = jnp.where(cols > rows, neg, s)
        m = jnp.max(s, axis=-1, keepdims=True)
        p = jnp.exp(s - m)
        p = p / jnp.sum(p, axis=-1, keepdims=True)
        a = jnp.einsum("bhqk,bhkd->bhqd", p.astype(bf16), v,
                       preferred_element_type=jnp.float32)
        a = a.transpose(0, 2, 1, 3).reshape(B, S, D)
        a = mm(a, params["w_out"][l]) + params["b_out"][l]
        h = ln(h + a, params["ln1_g"][l], params["ln1_b"][l])
        ff = jax.nn.relu(mm(h, params["w_ff1"][l]) + params["b_ff1"][l])
        ff = mm(ff, params["w_ff2"][l]) + params["b_ff2"][l]
        h = ln(h + ff, params["ln2_g"][l], params["ln2_b"][l])

    return ln(h, params["lnf_g"], params["lnf_b"])


# ----------------------------------------------------------------------------
# Deterministic parameter init + example run.
# ----------------------------------------------------------------------------
def init_params(key, vocab_size, d_model, num_heads, num_layers):
    D, V, L = d_model, vocab_size, num_layers
    keys = jax.random.split(key, 8)
    s = 0.05
    return {
        "w_emb": jax.random.normal(keys[0], (V, D), jnp.float32) * s,
        "b_emb": jax.random.normal(keys[1], (1, D), jnp.float32) * s,
        "pos":   jax.random.normal(keys[2], (1, 128, D), jnp.float32) * s,
        "w_in":  jax.random.normal(keys[3], (L, D, 3 * D), jnp.float32) * s,
        "b_in":  jnp.zeros((L, 1, 3 * D), jnp.float32),
        "w_out": jax.random.normal(keys[4], (L, D, D), jnp.float32) * s,
        "b_out": jnp.zeros((L, 1, D), jnp.float32),
        "ln1_g": jnp.ones((L, 1, D), jnp.float32),
        "ln1_b": jnp.zeros((L, 1, D), jnp.float32),
        "w_ff1": jax.random.normal(keys[5], (L, D, 4 * D), jnp.float32) * s,
        "b_ff1": jnp.zeros((L, 1, 4 * D), jnp.float32),
        "w_ff2": jax.random.normal(keys[6], (L, 4 * D, D), jnp.float32) * s,
        "b_ff2": jnp.zeros((L, 1, D), jnp.float32),
        "ln2_g": jnp.ones((L, 1, D), jnp.float32),
        "ln2_b": jnp.zeros((L, 1, D), jnp.float32),
        "lnf_g": jnp.ones((1, D), jnp.float32),
        "lnf_b": jnp.zeros((1, D), jnp.float32),
    }


if __name__ == "__main__":
    # Small but lane-friendly shapes: D, 3D, 4D and dh are multiples of 128.
    vocab_size, d_model, num_heads, num_layers = 16, 256, 2, 2
    batch, seq = 2, 64

    key = jax.random.PRNGKey(0)
    kx, kp = jax.random.split(key)
    x = jax.random.normal(kx, (batch, seq, vocab_size), jnp.float32)
    params = init_params(kp, vocab_size, d_model, num_heads, num_layers)

    out = transformer_forward(
        params, x, num_layers=num_layers, num_heads=num_heads, d_model=d_model)
    out = jax.block_until_ready(out)

    ref = reference_forward(
        params, x, num_layers=num_layers, num_heads=num_heads, d_model=d_model)
    ref = jax.block_until_ready(ref)

    assert out.shape == (batch, seq, d_model)
    max_diff = float(jnp.max(jnp.abs(out - ref)))
    # Kernel and reference use identical bf16-input / f32-accumulate math and
    # exact softmax division, so they should agree to reduction-order noise.
    assert jnp.allclose(out, ref, atol=1e-2, rtol=1e-2), max_diff

    print("KERNEL_OK")
</pallas_src>

<mosaic_0001>
module attributes {stable_mosaic.version = 11 : i64} {
  func.func @_transformer_kernel(%arg0: i32, %arg1: memref<128x256xf32, #tpu.memory_space<vmem>>, %arg2: memref<1x256xf32, #tpu.memory_space<vmem>>, %arg3: memref<1x256xf32, #tpu.memory_space<vmem>>, %arg4: memref<1x256x768xbf16, #tpu.memory_space<vmem>>, %arg5: memref<1x1x768xf32, #tpu.memory_space<vmem>>, %arg6: memref<1x256x256xbf16, #tpu.memory_space<vmem>>, %arg7: memref<1x1x256xf32, #tpu.memory_space<vmem>>, %arg8: memref<1x1x256xf32, #tpu.memory_space<vmem>>, %arg9: memref<1x1x256xf32, #tpu.memory_space<vmem>>, %arg10: memref<1x256x1024xbf16, #tpu.memory_space<vmem>>, %arg11: memref<1x1x1024xf32, #tpu.memory_space<vmem>>, %arg12: memref<1x1024x256xbf16, #tpu.memory_space<vmem>>, %arg13: memref<1x1x256xf32, #tpu.memory_space<vmem>>, %arg14: memref<1x1x256xf32, #tpu.memory_space<vmem>>, %arg15: memref<1x1x256xf32, #tpu.memory_space<vmem>>, %arg16: memref<128x256xf32, #tpu.memory_space<vmem>>, %arg17: memref<128x256xf32, #tpu.memory_space<vmem>>, %arg18: memref<128x256xf32, #tpu.memory_space<vmem>>) attributes {dimension_semantics = [#tpu.dimension_semantics<arbitrary>], iteration_bounds = array<i64: 2>, scalar_prefetch = 0 : i64, scratch_operands = 2 : i64, tpu.core_type = #tpu.core_type<tc>, window_params = [{pipeline_mode = #tpu.pipeline_mode<synchronous>, transform_indices = @transform_0, window_bounds = array<i64: 128, 256>}, {pipeline_mode = #tpu.pipeline_mode<synchronous>, transform_indices = @transform_1, window_bounds = array<i64: 1, 256>}, {pipeline_mode = #tpu.pipeline_mode<synchronous>, transform_indices = @transform_2, window_bounds = array<i64: 1, 256>}, {transform_indices = @transform_3, window_bounds = array<i64: 1, 256, 768>}, {transform_indices = @transform_4, window_bounds = array<i64: 1, 1, 768>}, {transform_indices = @transform_5, window_bounds = array<i64: 1, 256, 256>}, {transform_indices = @transform_6, window_bounds = array<i64: 1, 1, 256>}, {transform_indices = @transform_7, window_bounds = array<i64: 1, 1, 256>}, {transform_indices = @transform_8, window_bounds = array<i64: 1, 1, 256>}, {transform_indices = @transform_9, window_bounds = array<i64: 1, 256, 1024>}, {transform_indices = @transform_10, window_bounds = array<i64: 1, 1, 1024>}, {transform_indices = @transform_11, window_bounds = array<i64: 1, 1024, 256>}, {transform_indices = @transform_12, window_bounds = array<i64: 1, 1, 256>}, {transform_indices = @transform_13, window_bounds = array<i64: 1, 1, 256>}, {transform_indices = @transform_14, window_bounds = array<i64: 1, 1, 256>}, {pipeline_mode = #tpu.pipeline_mode<synchronous>, transform_indices = @transform_15, window_bounds = array<i64: 128, 256>}]} {
    %c0_i32 = arith.constant 0 : i32
    %0 = arith.cmpi eq, %arg0, %c0_i32 : i32
    %1 = arith.extui %0 : i1 to i32
    %c0_i32_0 = arith.constant 0 : i32
    %2 = arith.cmpi ne, %1, %c0_i32_0 : i32
    scf.if %2 {
      %c0_88 = arith.constant 0 : index
      %c0_89 = arith.constant 0 : index
      %192 = vector.load %arg1[%c0_88, %c0_89] : memref<128x256xf32, #tpu.memory_space<vmem>>, vector<128x256xf32>
      %c0_90 = arith.constant 0 : index
      %c0_91 = arith.constant 0 : index
      %193 = vector.load %arg17[%c0_90, %c0_91] : memref<128x256xf32, #tpu.memory_space<vmem>>, vector<128x256xf32>
      tpu.vector_store %arg17[%c0_90, %c0_91], %192 {strides = array<i32>} : memref<128x256xf32, #tpu.memory_space<vmem>>, vector<128x256xf32>,
    } else {
    }
    %c0 = arith.constant 0 : index
    %c0_1 = arith.constant 0 : index
    %3 = vector.load %arg17[%c0, %c0_1] : memref<128x256xf32, #tpu.memory_space<vmem>>, vector<128x256xf32>
    %c0_2 = arith.constant 0 : index
    %c0_3 = arith.constant 0 : index
    %c0_4 = arith.constant 0 : index
    %4 = vector.load %arg4[%c0_2, %c0_3, %c0_4] : memref<1x256x768xbf16, #tpu.memory_space<vmem>>, vector<1x256x768xbf16>
    %5 = vector.shape_cast %4 : vector<1x256x768xbf16> to vector<256x768xbf16>
    %6 = arith.truncf %3 : vector<128x256xf32> to vector<128x256xbf16>
    %cst = arith.constant dense<0.000000e+00> : vector<128x768xf32>
    %7 = tpu.matmul %6, %5, %cst {dimension_numbers = #tpu.dot_dimension_numbers<[1], [0], [0], [1], [0, 0, 1, 1], [], []>} : vector<128x256xbf16>, vector<256x768xbf16>, vector<128x768xf32> -> vector<128x768xf32>
    %c0_5 = arith.constant 0 : index
    %c0_6 = arith.constant 0 : index
    %c0_7 = arith.constant 0 : index
    %8 = vector.load %arg5[%c0_5, %c0_6, %c0_7] : memref<1x1x768xf32, #tpu.memory_space<vmem>>, vector<1x1x768xf32>
    %9 = vector.shape_cast %8 : vector<1x1x768xf32> to vector<1x768xf32>
    %10 = vector.broadcast %9 : vector<1x768xf32> to vector<128x768xf32>
    %11 = arith.addf %7, %10 : vector<128x768xf32>
    %12 = tpu.iota {dimensions = array<i32: 0>} : vector<64x64xi32>
    %13 = tpu.iota {dimensions = array<i32: 1>} : vector<64x64xi32>
    %14 = arith.cmpi sgt, %13, %12 : vector<64x64xi32>
    %15 = vector.extract_strided_slice %11 {offsets = [0, 0], sizes = [64, 128], strides = [1, 1]} : vector<128x768xf32> to vector<64x128xf32>
    %cst_8 = arith.constant 0.0883883461 : f32
    %16 = vector.broadcast %cst_8 : f32 to vector<64x128xf32>
    %17 = arith.mulf %15, %16 : vector<64x128xf32>
    %18 = arith.truncf %17 : vector<64x128xf32> to vector<64x128xbf16>
    %19 = vector.extract_strided_slice %11 {offsets = [0, 256], sizes = [64, 128], strides = [1, 1]} : vector<128x768xf32> to vector<64x128xf32>
    %20 = arith.truncf %19 : vector<64x128xf32> to vector<64x128xbf16>
    %21 = vector.extract_strided_slice %11 {offsets = [0, 512], sizes = [64, 128], strides = [1, 1]} : vector<128x768xf32> to vector<64x128xf32>
    %22 = arith.truncf %21 : vector<64x128xf32> to vector<64x128xbf16>
    %cst_9 = arith.constant dense<0.000000e+00> : vector<64x64xf32>
    %23 = tpu.matmul %18, %20, %cst_9 {dimension_numbers = #tpu.dot_dimension_numbers<[1], [1], [0], [0], [0, 0, 1, 0], [], []>} : vector<64x128xbf16>, vector<64x128xbf16>, vector<64x64xf32> -> vector<64x64xf32>
    %cst_10 = arith.constant -1.000000e+30 : f32
    %24 = vector.broadcast %cst_10 : f32 to vector<64x64xf32>
    %25 = arith.select %14, %24, %23 : vector<64x64xi1>, vector<64x64xf32>
    %cst_11 = arith.constant dense<0xFF800000> : vector<64xf32>
    %26 = vector.multi_reduction <maximumf>, %25, %cst_11 [1] : vector<64x64xf32> to vector<64xf32>
    %27 = vector.shape_cast %26 : vector<64xf32> to vector<64x1xf32>
    %28 = vector.broadcast %27 : vector<64x1xf32> to vector<64x64xf32>
    %29 = arith.subf %25, %28 : vector<64x64xf32>
    %30 = math.exp %29 : vector<64x64xf32>
    %cst_12 = arith.constant dense<0.000000e+00> : vector<64xf32>
    %31 = vector.multi_reduction <add>, %30, %cst_12 [1] : vector<64x64xf32> to vector<64xf32>
    %32 = vector.shape_cast %31 : vector<64xf32> to vector<64x1xf32>
    %33 = vector.broadcast %32 : vector<64x1xf32> to vector<64x64xf32>
    %34 = arith.divf %30, %33 : vector<64x64xf32>
    %35 = arith.truncf %34 : vector<64x64xf32> to vector<64x64xbf16>
    %cst_13 = arith.constant dense<0.000000e+00> : vector<64x128xf32>
    %36 = tpu.matmul %35, %22, %cst_13 {dimension_numbers = #tpu.dot_dimension_numbers<[1], [0], [0], [1], [0, 0, 1, 1], [], []>} : vector<64x64xbf16>, vector<64x128xbf16>, vector<64x128xf32> -> vector<64x128xf32>
    %c0_14 = arith.constant 0 : index
    %c0_15 = arith.constant 0 : index
    %37 = vector.load %arg18[%c0_14, %c0_15] : memref<128x256xf32, #tpu.memory_space<vmem>>, vector<64x128xf32>
    tpu.vector_store %arg18[%c0_14, %c0_15], %36 {strides = array<i32>} : memref<128x256xf32, #tpu.memory_space<vmem>>, vector<64x128xf32>,
    %38 = vector.extract_strided_slice %11 {offsets = [0, 128], sizes = [64, 128], strides = [1, 1]} : vector<128x768xf32> to vector<64x128xf32>
    %cst_16 = arith.constant 0.0883883461 : f32
    %39 = vector.broadcast %cst_16 : f32 to vector<64x128xf32>
    %40 = arith.mulf %38, %39 : vector<64x128xf32>
    %41 = arith.truncf %40 : vector<64x128xf32> to vector<64x128xbf16>
    %42 = vector.extract_strided_slice %11 {offsets = [0, 384], sizes = [64, 128], strides = [1, 1]} : vector<128x768xf32> to vector<64x128xf32>
    %43 = arith.truncf %42 : vector<64x128xf32> to vector<64x128xbf16>
    %44 = vector.extract_strided_slice %11 {offsets = [0, 640], sizes = [64, 128], strides = [1, 1]} : vector<128x768xf32> to vector<64x128xf32>
    %45 = arith.truncf %44 : vector<64x128xf32> to vector<64x128xbf16>
    %cst_17 = arith.constant dense<0.000000e+00> : vector<64x64xf32>
    %46 = tpu.matmul %41, %43, %cst_17 {dimension_numbers = #tpu.dot_dimension_numbers<[1], [1], [0], [0], [0, 0, 1, 0], [], []>} : vector<64x128xbf16>, vector<64x128xbf16>, vector<64x64xf32> -> vector<64x64xf32>
    %cst_18 = arith.constant -1.000000e+30 : f32
    %47 = vector.broadcast %cst_18 : f32 to vector<64x64xf32>
    %48 = arith.select %14, %47, %46 : vector<64x64xi1>, vector<64x64xf32>
    %cst_19 = arith.constant dense<0xFF800000> : vector<64xf32>
    %49 = vector.multi_reduction <maximumf>, %48, %cst_19 [1] : vector<64x64xf32> to vector<64xf32>
    %50 = vector.shape_cast %49 : vector<64xf32> to vector<64x1xf32>
    %51 = vector.broadcast %50 : vector<64x1xf32> to vector<64x64xf32>
    %52 = arith.subf %48, %51 : vector<64x64xf32>
    %53 = math.exp %52 : vector<64x64xf32>
    %cst_20 = arith.constant dense<0.000000e+00> : vector<64xf32>
    %54 = vector.multi_reduction <add>, %53, %cst_20 [1] : vector<64x64xf32> to vector<64xf32>
    %55 = vector.shape_cast %54 : vector<64xf32> to vector<64x1xf32>
    %56 = vector.broadcast %55 : vector<64x1xf32> to vector<64x64xf32>
    %57 = arith.divf %53, %56 : vector<64x64xf32>
    %58 = arith.truncf %57 : vector<64x64xf32> to vector<64x64xbf16>
    %cst_21 = arith.constant dense<0.000000e+00> : vector<64x128xf32>
    %59 = tpu.matmul %58, %45, %cst_21 {dimension_numbers = #tpu.dot_dimension_numbers<[1], [0], [0], [1], [0, 0, 1, 1], [], []>} : vector<64x64xbf16>, vector<64x128xbf16>, vector<64x128xf32> -> vector<64x128xf32>
    %c0_22 = arith.constant 0 : index
    %c128 = arith.constant 128 : index
    %60 = vector.load %arg18[%c0_22, %c128] : memref<128x256xf32, #tpu.memory_space<vmem>>, vector<64x128xf32>
    tpu.vector_store %arg18[%c0_22, %c128], %59 {strides = array<i32>} : memref<128x256xf32, #tpu.memory_space<vmem>>, vector<64x128xf32>,
    %61 = vector.extract_strided_slice %11 {offsets = [64, 0], sizes = [64, 128], strides = [1, 1]} : vector<128x768xf32> to vector<64x128xf32>
    %cst_23 = arith.constant 0.0883883461 : f32
    %62 = vector.broadcast %cst_23 : f32 to vector<64x128xf32>
    %63 = arith.mulf %61, %62 : vector<64x128xf32>
    %64 = arith.truncf %63 : vector<64x128xf32> to vector<64x128xbf16>
    %65 = vector.extract_strided_slice %11 {offsets = [64, 256], sizes = [64, 128], strides = [1, 1]} : vector<128x768xf32> to vector<64x128xf32>
    %66 = arith.truncf %65 : vector<64x128xf32> to vector<64x128xbf16>
    %67 = vector.extract_strided_slice %11 {offsets = [64, 512], sizes = [64, 128], strides = [1, 1]} : vector<128x768xf32> to vector<64x128xf32>
    %68 = arith.truncf %67 : vector<64x128xf32> to vector<64x128xbf16>
    %cst_24 = arith.constant dense<0.000000e+00> : vector<64x64xf32>
    %69 = tpu.matmul %64, %66, %cst_24 {dimension_numbers = #tpu.dot_dimension_numbers<[1], [1], [0], [0], [0, 0, 1, 0], [], []>} : vector<64x128xbf16>, vector<64x128xbf16>, vector<64x64xf32> -> vector<64x64xf32>
    %cst_25 = arith.constant -1.000000e+30 : f32
    %70 = vector.broadcast %cst_25 : f32 to vector<64x64xf32>
    %71 = arith.select %14, %70, %69 : vector<64x64xi1>, vector<64x64xf32>
    %cst_26 = arith.constant dense<0xFF800000> : vector<64xf32>
    %72 = vector.multi_reduction <maximumf>, %71, %cst_26 [1] : vector<64x64xf32> to vector<64xf32>
    %73 = vector.shape_cast %72 : vector<64xf32> to vector<64x1xf32>
    %74 = vector.broadcast %73 : vector<64x1xf32> to vector<64x64xf32>
    %75 = arith.subf %71, %74 : vector<64x64xf32>
    %76 = math.exp %75 : vector<64x64xf32>
    %cst_27 = arith.constant dense<0.000000e+00> : vector<64xf32>
    %77 = vector.multi_reduction <add>, %76, %cst_27 [1] : vector<64x64xf32> to vector<64xf32>
    %78 = vector.shape_cast %77 : vector<64xf32> to vector<64x1xf32>
    %79 = vector.broadcast %78 : vector<64x1xf32> to vector<64x64xf32>
    %80 = arith.divf %76, %79 : vector<64x64xf32>
    %81 = arith.truncf %80 : vector<64x64xf32> to vector<64x64xbf16>
    %cst_28 = arith.constant dense<0.000000e+00> : vector<64x128xf32>
    %82 = tpu.matmul %81, %68, %cst_28 {dimension_numbers = #tpu.dot_dimension_numbers<[1], [0], [0], [1], [0, 0, 1, 1], [], []>} : vector<64x64xbf16>, vector<64x128xbf16>, vector<64x128xf32> -> vector<64x128xf32>
    %c64 = arith.constant 64 : index
    %c0_29 = arith.constant 0 : index
    %83 = vector.load %arg18[%c64, %c0_29] : memref<128x256xf32, #tpu.memory_space<vmem>>, vector<64x128xf32>
    tpu.vector_store %arg18[%c64, %c0_29], %82 {strides = array<i32>} : memref<128x256xf32, #tpu.memory_space<vmem>>, vector<64x128xf32>,
    %84 = vector.extract_strided_slice %11 {offsets = [64, 128], sizes = [64, 128], strides = [1, 1]} : vector<128x768xf32> to vector<64x128xf32>
    %cst_30 = arith.constant 0.0883883461 : f32
    %85 = vector.broadcast %cst_30 : f32 to vector<64x128xf32>
    %86 = arith.mulf %84, %85 : vector<64x128xf32>
    %87 = arith.truncf %86 : vector<64x128xf32> to vector<64x128xbf16>
    %88 = vector.extract_strided_slice %11 {offsets = [64, 384], sizes = [64, 128], strides = [1, 1]} : vector<128x768xf32> to vector<64x128xf32>
    %89 = arith.truncf %88 : vector<64x128xf32> to vector<64x128xbf16>
    %90 = vector.extract_strided_slice %11 {offsets = [64, 640], sizes = [64, 128], strides = [1, 1]} : vector<128x768xf32> to vector<64x128xf32>
    %91 = arith.truncf %90 : vector<64x128xf32> to vector<64x128xbf16>
    %cst_31 = arith.constant dense<0.000000e+00> : vector<64x64xf32>
    %92 = tpu.matmul %87, %89, %cst_31 {dimension_numbers = #tpu.dot_dimension_numbers<[1], [1], [0], [0], [0, 0, 1, 0], [], []>} : vector<64x128xbf16>, vector<64x128xbf16>, vector<64x64xf32> -> vector<64x64xf32>
    %cst_32 = arith.constant -1.000000e+30 : f32
    %93 = vector.broadcast %cst_32 : f32 to vector<64x64xf32>
    %94 = arith.select %14, %93, %92 : vector<64x64xi1>, vector<64x64xf32>
    %cst_33 = arith.constant dense<0xFF800000> : vector<64xf32>
    %95 = vector.multi_reduction <maximumf>, %94, %cst_33 [1] : vector<64x64xf32> to vector<64xf32>
    %96 = vector.shape_cast %95 : vector<64xf32> to vector<64x1xf32>
    %97 = vector.broadcast %96 : vector<64x1xf32> to vector<64x64xf32>
    %98 = arith.subf %94, %97 : vector<64x64xf32>
    %99 = math.exp %98 : vector<64x64xf32>
    %cst_34 = arith.constant dense<0.000000e+00> : vector<64xf32>
    %100 = vector.multi_reduction <add>, %99, %cst_34 [1] : vector<64x64xf32> to vector<64xf32>
    %101 = vector.shape_cast %100 : vector<64xf32> to vector<64x1xf32>
    %102 = vector.broadcast %101 : vector<64x1xf32> to vector<64x64xf32>
    %103 = arith.divf %99, %102 : vector<64x64xf32>
    %104 = arith.truncf %103 : vector<64x64xf32> to vector<64x64xbf16>
    %cst_35 = arith.constant dense<0.000000e+00> : vector<64x128xf32>
    %105 = tpu.matmul %104, %91, %cst_35 {dimension_numbers = #tpu.dot_dimension_numbers<[1], [0], [0], [1], [0, 0, 1, 1], [], []>} : vector<64x64xbf16>, vector<64x128xbf16>, vector<64x128xf32> -> vector<64x128xf32>
    %c64_36 = arith.constant 64 : index
    %c128_37 = arith.constant 128 : index
    %106 = vector.load %arg18[%c64_36, %c128_37] : memref<128x256xf32, #tpu.memory_space<vmem>>, vector<64x128xf32>
    tpu.vector_store %arg18[%c64_36, %c128_37], %105 {strides = array<i32>} : memref<128x256xf32, #tpu.memory_space<vmem>>, vector<64x128xf32>,
    %c0_38 = arith.constant 0 : index
    %c0_39 = arith.constant 0 : index
    %107 = vector.load %arg18[%c0_38, %c0_39] : memref<128x256xf32, #tpu.memory_space<vmem>>, vector<128x256xf32>
    %c0_40 = arith.constant 0 : index
    %c0_41 = arith.constant 0 : index
    %c0_42 = arith.constant 0 : index
    %108 = vector.load %arg6[%c0_40, %c0_41, %c0_42] : memref<1x256x256xbf16, #tpu.memory_space<vmem>>, vector<1x256x256xbf16>
    %109 = vector.shape_cast %108 : vector<1x256x256xbf16> to vector<256x256xbf16>
    %110 = arith.truncf %107 : vector<128x256xf32> to vector<128x256xbf16>
    %cst_43 = arith.constant dense<0.000000e+00> : vector<128x256xf32>
    %111 = tpu.matmul %110, %109, %cst_43 {dimension_numbers = #tpu.dot_dimension_numbers<[1], [0], [0], [1], [0, 0, 1, 1], [], []>} : vector<128x256xbf16>, vector<256x256xbf16>, vector<128x256xf32> -> vector<128x256xf32>
    %c0_44 = arith.constant 0 : index
    %c0_45 = arith.constant 0 : index
    %c0_46 = arith.constant 0 : index
    %112 = vector.load %arg7[%c0_44, %c0_45, %c0_46] : memref<1x1x256xf32, #tpu.memory_space<vmem>>, vector<1x1x256xf32>
    %113 = vector.shape_cast %112 : vector<1x1x256xf32> to vector<1x256xf32>
    %114 = vector.broadcast %113 : vector<1x256xf32> to vector<128x256xf32>
    %115 = arith.addf %111, %114 : vector<128x256xf32>
    %116 = arith.addf %3, %115 : vector<128x256xf32>
    %c0_47 = arith.constant 0 : index
    %c0_48 = arith.constant 0 : index
    %c0_49 = arith.constant 0 : index
    %117 = vector.load %arg8[%c0_47, %c0_48, %c0_49] : memref<1x1x256xf32, #tpu.memory_space<vmem>>, vector<1x1x256xf32>
    %118 = vector.shape_cast %117 : vector<1x1x256xf32> to vector<1x256xf32>
    %c0_50 = arith.constant 0 : index
    %c0_51 = arith.constant 0 : index
    %c0_52 = arith.constant 0 : index
    %119 = vector.load %arg9[%c0_50, %c0_51, %c0_52] : memref<1x1x256xf32, #tpu.memory_space<vmem>>, vector<1x1x256xf32>
    %120 = vector.shape_cast %119 : vector<1x1x256xf32> to vector<1x256xf32>
    %cst_53 = arith.constant dense<0.000000e+00> : vector<128xf32>
    %121 = vector.multi_reduction <add>, %116, %cst_53 [1] : vector<128x256xf32> to vector<128xf32>
    %122 = vector.shape_cast %121 : vector<128xf32> to vector<128x1xf32>
    %cst_54 = arith.constant 2.560000e+02 : f32
    %123 = vector.broadcast %cst_54 : f32 to vector<128x1xf32>
    %124 = arith.divf %122, %123 : vector<128x1xf32>
    %125 = vector.broadcast %124 : vector<128x1xf32> to vector<128x256xf32>
    %126 = arith.subf %116, %125 : vector<128x256xf32>
    %127 = arith.mulf %126, %126 : vector<128x256xf32>
    %cst_55 = arith.constant dense<0.000000e+00> : vector<128xf32>
    %128 = vector.multi_reduction <add>, %127, %cst_55 [1] : vector<128x256xf32> to vector<128xf32>
    %129 = vector.shape_cast %128 : vector<128xf32> to vector<128x1xf32>
    %cst_56 = arith.constant 2.560000e+02 : f32
    %130 = vector.broadcast %cst_56 : f32 to vector<128x1xf32>
    %131 = arith.divf %129, %130 : vector<128x1xf32>
    %132 = vector.broadcast %124 : vector<128x1xf32> to vector<128x256xf32>
    %133 = arith.subf %116, %132 : vector<128x256xf32>
    %cst_57 = arith.constant 9.99999974E-6 : f32
    %134 = vector.broadcast %cst_57 : f32 to vector<128x1xf32>
    %135 = arith.addf %131, %134 : vector<128x1xf32>
    %136 = math.rsqrt %135 : vector<128x1xf32>
    %137 = vector.broadcast %136 : vector<128x1xf32> to vector<128x256xf32>
    %138 = arith.mulf %133, %137 : vector<128x256xf32>
    %139 = vector.broadcast %118 : vector<1x256xf32> to vector<128x256xf32>
    %140 = arith.mulf %138, %139 : vector<128x256xf32>
    %141 = vector.broadcast %120 : vector<1x256xf32> to vector<128x256xf32>
    %142 = arith.addf %140, %141 : vector<128x256xf32>
    %c0_58 = arith.constant 0 : index
    %c0_59 = arith.constant 0 : index
    %c0_60 = arith.constant 0 : index
    %143 = vector.load %arg10[%c0_58, %c0_59, %c0_60] : memref<1x256x1024xbf16, #tpu.memory_space<vmem>>, vector<1x256x1024xbf16>
    %144 = vector.shape_cast %143 : vector<1x256x1024xbf16> to vector<256x1024xbf16>
    %145 = arith.truncf %142 : vector<128x256xf32> to vector<128x256xbf16>
    %cst_61 = arith.constant dense<0.000000e+00> : vector<128x1024xf32>
    %146 = tpu.matmul %145, %144, %cst_61 {dimension_numbers = #tpu.dot_dimension_numbers<[1], [0], [0], [1], [0, 0, 1, 1], [], []>} : vector<128x256xbf16>, vector<256x1024xbf16>, vector<128x1024xf32> -> vector<128x1024xf32>
    %c0_62 = arith.constant 0 : index
    %c0_63 = arith.constant 0 : index
    %c0_64 = arith.constant 0 : index
    %147 = vector.load %arg11[%c0_62, %c0_63, %c0_64] : memref<1x1x1024xf32, #tpu.memory_space<vmem>>, vector<1x1x1024xf32>
    %148 = vector.shape_cast %147 : vector<1x1x1024xf32> to vector<1x1024xf32>
    %149 = vector.broadcast %148 : vector<1x1024xf32> to vector<128x1024xf32>
    %150 = arith.addf %146, %149 : vector<128x1024xf32>
    %cst_65 = arith.constant 0.000000e+00 : f32
    %151 = vector.broadcast %cst_65 : f32 to vector<128x1024xf32>
    %152 = arith.maximumf %150, %151 : vector<128x1024xf32>
    %c0_66 = arith.constant 0 : index
    %c0_67 = arith.constant 0 : index
    %c0_68 = arith.constant 0 : index
    %153 = vector.load %arg12[%c0_66, %c0_67, %c0_68] : memref<1x1024x256xbf16, #tpu.memory_space<vmem>>, vector<1x1024x256xbf16>
    %154 = vector.shape_cast %153 : vector<1x1024x256xbf16> to vector<1024x256xbf16>
    %155 = arith.truncf %152 : vector<128x1024xf32> to vector<128x1024xbf16>
    %cst_69 = arith.constant dense<0.000000e+00> : vector<128x256xf32>
    %156 = tpu.matmul %155, %154, %cst_69 {dimension_numbers = #tpu.dot_dimension_numbers<[1], [0], [0], [1], [0, 0, 1, 1], [], []>} : vector<128x1024xbf16>, vector<1024x256xbf16>, vector<128x256xf32> -> vector<128x256xf32>
    %c0_70 = arith.constant 0 : index
    %c0_71 = arith.constant 0 : index
    %c0_72 = arith.constant 0 : index
    %157 = vector.load %arg13[%c0_70, %c0_71, %c0_72] : memref<1x1x256xf32, #tpu.memory_space<vmem>>, vector<1x1x256xf32>
    %158 = vector.shape_cast %157 : vector<1x1x256xf32> to vector<1x256xf32>
    %159 = vector.broadcast %158 : vector<1x256xf32> to vector<128x256xf32>
    %160 = arith.addf %156, %159 : vector<128x256xf32>
    %161 = arith.addf %142, %160 : vector<128x256xf32>
    %c0_73 = arith.constant 0 : index
    %c0_74 = arith.constant 0 : index
    %c0_75 = arith.constant 0 : index
    %162 = vector.load %arg14[%c0_73, %c0_74, %c0_75] : memref<1x1x256xf32, #tpu.memory_space<vmem>>, vector<1x1x256xf32>
    %163 = vector.shape_cast %162 : vector<1x1x256xf32> to vector<1x256xf32>
    %c0_76 = arith.constant 0 : index
    %c0_77 = arith.constant 0 : index
    %c0_78 = arith.constant 0 : index
    %164 = vector.load %arg15[%c0_76, %c0_77, %c0_78] : memref<1x1x256xf32, #tpu.memory_space<vmem>>, vector<1x1x256xf32>
    %165 = vector.shape_cast %164 : vector<1x1x256xf32> to vector<1x256xf32>
    %cst_79 = arith.constant dense<0.000000e+00> : vector<128xf32>
    %166 = vector.multi_reduction <add>, %161, %cst_79 [1] : vector<128x256xf32> to vector<128xf32>
    %167 = vector.shape_cast %166 : vector<128xf32> to vector<128x1xf32>
    %cst_80 = arith.constant 2.560000e+02 : f32
    %168 = vector.broadcast %cst_80 : f32 to vector<128x1xf32>
    %169 = arith.divf %167, %168 : vector<128x1xf32>
    %170 = vector.broadcast %169 : vector<128x1xf32> to vector<128x256xf32>
    %171 = arith.subf %161, %170 : vector<128x256xf32>
    %172 = arith.mulf %171, %171 : vector<128x256xf32>
    %cst_81 = arith.constant dense<0.000000e+00> : vector<128xf32>
    %173 = vector.multi_reduction <add>, %172, %cst_81 [1] : vector<128x256xf32> to vector<128xf32>
    %174 = vector.shape_cast %173 : vector<128xf32> to vector<128x1xf32>
    %cst_82 = arith.constant 2.560000e+02 : f32
    %175 = vector.broadcast %cst_82 : f32 to vector<128x1xf32>
    %176 = arith.divf %174, %175 : vector<128x1xf32>
    %177 = vector.broadcast %169 : vector<128x1xf32> to vector<128x256xf32>
    %178 = arith.subf %161, %177 : vector<128x256xf32>
    %cst_83 = arith.constant 9.99999974E-6 : f32
    %179 = vector.broadcast %cst_83 : f32 to vector<128x1xf32>
    %180 = arith.addf %176, %179 : vector<128x1xf32>
    %181 = math.rsqrt %180 : vector<128x1xf32>
    %182 = vector.broadcast %181 : vector<128x1xf32> to vector<128x256xf32>
    %183 = arith.mulf %178, %182 : vector<128x256xf32>
    %184 = vector.broadcast %163 : vector<1x256xf32> to vector<128x256xf32>
    %185 = arith.mulf %183, %184 : vector<128x256xf32>
    %186 = vector.broadcast %165 : vector<1x256xf32> to vector<128x256xf32>
    %187 = arith.addf %185, %186 : vector<128x256xf32>
    %c0_84 = arith.constant 0 : index
    %c0_85 = arith.constant 0 : index
    %188 = vector.load %arg17[%c0_84, %c0_85] : memref<128x256xf32, #tpu.memory_space<vmem>>, vector<128x256xf32>
    tpu.vector_store %arg17[%c0_84, %c0_85], %187 {strides = array<i32>} : memref<128x256xf32, #tpu.memory_space<vmem>>, vector<128x256xf32>,
    %c1_i32 = arith.constant 1 : i32
    %189 = arith.cmpi eq, %arg0, %c1_i32 : i32
    %190 = arith.extui %189 : i1 to i32
    %cst_86 = arith.constant 9.99999974E-6 : f32
    %c0_i32_87 = arith.constant 0 : i32
    %191 = arith.cmpi ne, %190, %c0_i32_87 : i32
    scf.if %191 {
      %c0_88 = arith.constant 0 : index
      %c0_89 = arith.constant 0 : index
      %192 = vector.load %arg2[%c0_88, %c0_89] : memref<1x256xf32, #tpu.memory_space<vmem>>, vector<1x256xf32>
      %c0_90 = arith.constant 0 : index
      %c0_91 = arith.constant 0 : index
      %193 = vector.load %arg3[%c0_90, %c0_91] : memref<1x256xf32, #tpu.memory_space<vmem>>, vector<1x256xf32>
      %cst_92 = arith.constant dense<0.000000e+00> : vector<128xf32>
      %194 = vector.multi_reduction <add>, %187, %cst_92 [1] : vector<128x256xf32> to vector<128xf32>
      %195 = vector.shape_cast %194 : vector<128xf32> to vector<128x1xf32>
      %cst_93 = arith.constant 2.560000e+02 : f32
      %196 = vector.broadcast %cst_93 : f32 to vector<128x1xf32>
      %197 = arith.divf %195, %196 : vector<128x1xf32>
      %198 = vector.broadcast %197 : vector<128x1xf32> to vector<128x256xf32>
      %199 = arith.subf %187, %198 : vector<128x256xf32>
      %200 = arith.mulf %199, %199 : vector<128x256xf32>
      %cst_94 = arith.constant dense<0.000000e+00> : vector<128xf32>
      %201 = vector.multi_reduction <add>, %200, %cst_94 [1] : vector<128x256xf32> to vector<128xf32>
      %202 = vector.shape_cast %201 : vector<128xf32> to vector<128x1xf32>
      %cst_95 = arith.constant 2.560000e+02 : f32
      %203 = vector.broadcast %cst_95 : f32 to vector<128x1xf32>
      %204 = arith.divf %202, %203 : vector<128x1xf32>
      %205 = vector.broadcast %197 : vector<128x1xf32> to vector<128x256xf32>
      %206 = arith.subf %187, %205 : vector<128x256xf32>
      %207 = vector.broadcast %cst_86 : f32 to vector<128x1xf32>
      %208 = arith.addf %204, %207 : vector<128x1xf32>
      %209 = math.rsqrt %208 : vector<128x1xf32>
      %210 = vector.broadcast %209 : vector<128x1xf32> to vector<128x256xf32>
      %211 = arith.mulf %206, %210 : vector<128x256xf32>
      %212 = vector.broadcast %192 : vector<1x256xf32> to vector<128x256xf32>
      %213 = arith.mulf %211, %212 : vector<128x256xf32>
      %214 = vector.broadcast %193 : vector<1x256xf32> to vector<128x256xf32>
      %215 = arith.addf %213, %214 : vector<128x256xf32>
      %c0_96 = arith.constant 0 : index
      %c0_97 = arith.constant 0 : index
      %216 = vector.load %arg16[%c0_96, %c0_97] : memref<128x256xf32, #tpu.memory_space<vmem>>, vector<128x256xf32>
      tpu.vector_store %arg16[%c0_96, %c0_97], %215 {strides = array<i32>} : memref<128x256xf32, #tpu.memory_space<vmem>>, vector<128x256xf32>,
    } else {
    }
    return
  }
  func.func @transform_0(%arg0: i32) -> (i32, i32) {
    %c0_i32 = arith.constant 0 : i32
    %c0_i32_0 = arith.constant 0 : i32
    %c0_i32_1 = arith.constant 0 : i32
    return %c0_i32, %c0_i32_0 : i32, i32
  }
  func.func @transform_1(%arg0: i32) -> (i32, i32) {
    %c0_i32 = arith.constant 0 : i32
    %c0_i32_0 = arith.constant 0 : i32
    %c0_i32_1 = arith.constant 0 : i32
    return %c0_i32, %c0_i32_0 : i32, i32
  }
  func.func @transform_2(%arg0: i32) -> (i32, i32) {
    %c0_i32 = arith.constant 0 : i32
    %c0_i32_0 = arith.constant 0 : i32
    %c0_i32_1 = arith.constant 0 : i32
    return %c0_i32, %c0_i32_0 : i32, i32
  }
  func.func @transform_3(%arg0: i32) -> (i32, i32, i32) {
    %c0_i32 = arith.constant 0 : i32
    %c0_i32_0 = arith.constant 0 : i32
    %c0_i32_1 = arith.constant 0 : i32
    return %arg0, %c0_i32, %c0_i32_0 : i32, i32, i32
  }
  func.func @transform_4(%arg0: i32) -> (i32, i32, i32) {
    %c0_i32 = arith.constant 0 : i32
    %c0_i32_0 = arith.constant 0 : i32
    %c0_i32_1 = arith.constant 0 : i32
    return %arg0, %c0_i32, %c0_i32_0 : i32, i32, i32
  }
  func.func @transform_5(%arg0: i32) -> (i32, i32, i32) {
    %c0_i32 = arith.constant 0 : i32
    %c0_i32_0 = arith.constant 0 : i32
    %c0_i32_1 = arith.constant 0 : i32
    return %arg0, %c0_i32, %c0_i32_0 : i32, i32, i32
  }
  func.func @transform_6(%arg0: i32) -> (i32, i32, i32) {
    %c0_i32 = arith.constant 0 : i32
    %c0_i32_0 = arith.constant 0 : i32
    %c0_i32_1 = arith.constant 0 : i32
    return %arg0, %c0_i32, %c0_i32_0 : i32, i32, i32
  }
  func.func @transform_7(%arg0: i32) -> (i32, i32, i32) {
    %c0_i32 = arith.constant 0 : i32
    %c0_i32_0 = arith.constant 0 : i32
    %c0_i32_1 = arith.constant 0 : i32
    return %arg0, %c0_i32, %c0_i32_0 : i32, i32, i32
  }
  func.func @transform_8(%arg0: i32) -> (i32, i32, i32) {
    %c0_i32 = arith.constant 0 : i32
    %c0_i32_0 = arith.constant 0 : i32
    %c0_i32_1 = arith.constant 0 : i32
    return %arg0, %c0_i32, %c0_i32_0 : i32, i32, i32
  }
  func.func @transform_9(%arg0: i32) -> (i32, i32, i32) {
    %c0_i32 = arith.constant 0 : i32
    %c0_i32_0 = arith.constant 0 : i32
    %c0_i32_1 = arith.constant 0 : i32
    return %arg0, %c0_i32, %c0_i32_0 : i32, i32, i32
  }
  func.func @transform_10(%arg0: i32) -> (i32, i32, i32) {
    %c0_i32 = arith.constant 0 : i32
    %c0_i32_0 = arith.constant 0 : i32
    %c0_i32_1 = arith.constant 0 : i32
    return %arg0, %c0_i32, %c0_i32_0 : i32, i32, i32
  }
  func.func @transform_11(%arg0: i32) -> (i32, i32, i32) {
    %c0_i32 = arith.constant 0 : i32
    %c0_i32_0 = arith.constant 0 : i32
    %c0_i32_1 = arith.constant 0 : i32
    return %arg0, %c0_i32, %c0_i32_0 : i32, i32, i32
  }
  func.func @transform_12(%arg0: i32) -> (i32, i32, i32) {
    %c0_i32 = arith.constant 0 : i32
    %c0_i32_0 = arith.constant 0 : i32
    %c0_i32_1 = arith.constant 0 : i32
    return %arg0, %c0_i32, %c0_i32_0 : i32, i32, i32
  }
  func.func @transform_13(%arg0: i32) -> (i32, i32, i32) {
    %c0_i32 = arith.constant 0 : i32
    %c0_i32_0 = arith.constant 0 : i32
    %c0_i32_1 = arith.constant 0 : i32
    return %arg0, %c0_i32, %c0_i32_0 : i32, i32, i32
  }
  func.func @transform_14(%arg0: i32) -> (i32, i32, i32) {
    %c0_i32 = arith.constant 0 : i32
    %c0_i32_0 = arith.constant 0 : i32
    %c0_i32_1 = arith.constant 0 : i32
    return %arg0, %c0_i32, %c0_i32_0 : i32, i32, i32
  }
  func.func @transform_15(%arg0: i32) -> (i32, i32) {
    %c0_i32 = arith.constant 0 : i32
    %c0_i32_0 = arith.constant 0 : i32
    %c0_i32_1 = arith.constant 0 : i32
    return %c0_i32, %c0_i32_0 : i32, i32
  }
}

</mosaic_0001>

<llo_original>
// kernel: tpu_custom_call.1
$region0: #{tpu_custom_call.1}
  #allocation0 [shape = 'u32[]', space=smem, size = 0x4, offset = 0x4, fixed_abs, tag = 'smem constant byte address 0x4 - core index']
  #allocation1 [shape = 'u32[144,128]{1,0:T(1,128)}', space=vmem, size = 0x12000, scoped, tag = 'internal scratch']
  #allocation2 [shape = 'f32[128,256]{1,0:T(8,128)}', space=vmem, size = 0x20000, scoped, tag = 'scratch operand']
  #allocation3 [shape = 'f32[128,256]{1,0:T(8,128)}', space=vmem, size = 0x20000, scoped, tag = 'scratch operand']
  %s0 = inlined_call_operand.hbm [shape: f32[128,256], index: 0, kind: input, shape index: {}]
  %s1 = inlined_call_operand.hbm [shape: f32[1,256], index: 1, kind: input, shape index: {}]
  %s2 = inlined_call_operand.hbm [shape: f32[1,256], index: 2, kind: input, shape index: {}]
  %s3 = inlined_call_operand.hbm [shape: bf16[2,256,768], index: 3, kind: input, shape index: {}]
  %s4 = inlined_call_operand.vmem [shape: f32[2,1,768], index: 4, kind: input, shape index: {}]
  %s5 = inlined_call_operand.hbm [shape: bf16[2,256,256], index: 5, kind: input, shape index: {}]
  %s6 = inlined_call_operand.hbm [shape: f32[2,1,256], index: 6, kind: input, shape index: {}]
  %s7 = inlined_call_operand.hbm [shape: f32[2,1,256], index: 7, kind: input, shape index: {}]
  %s8 = inlined_call_operand.hbm [shape: f32[2,1,256], index: 8, kind: input, shape index: {}]
  %s9 = inlined_call_operand.hbm [shape: bf16[2,256,1024], index: 9, kind: input, shape index: {}]
  %s10 = inlined_call_operand.vmem [shape: f32[2,1,1024], index: 10, kind: input, shape index: {}]
  %s11 = inlined_call_operand.hbm [shape: bf16[2,1024,256], index: 11, kind: input, shape index: {}]
  %s12 = inlined_call_operand.vmem [shape: f32[2,1,256], index: 12, kind: input, shape index: {}]
  %s13 = inlined_call_operand.vmem [shape: f32[2,1,256], index: 13, kind: input, shape index: {}]
  %s14 = inlined_call_operand.vmem [shape: f32[2,1,256], index: 14, kind: input, shape index: {}]
  %s15 = inlined_call_operand.hbm [shape: f32[128,256], index: 15, kind: output, shape index: {}]
  %s16 = sld [smem:[#allocation0]]
  $region141: #{tpu_custom_call.1} parent=0
    _
  %s18 = ssub.s32 1, %s16
  %s19 = scalar_select 0, %s18, %s16
  $region1: #{tpu_custom_call.1} parent=0
    #allocation4 [shape = 'u8[131072]{0}', space=vmem, size = 0x20000, scoped, tag = 'input window, operand 0, single buffered']
    #allocation5 [shape = 's32[2]{0}', space=sflag, size = 0x8, scoped, tag = 'scoped memory for tpu_custom_call.1']
    #allocation6 [shape = 's32[2]{0}', space=sflag, size = 0x8, scoped, tag = 'scoped memory for tpu_custom_call.1']
    #allocation7 [shape = 'u8[1024]{0}', space=vmem, size = 0x400, scoped, tag = 'input window, operand 1, single buffered']
    #allocation8 [shape = 's32[1]{0}', space=sflag, size = 0x4, scoped, tag = 'scoped memory for tpu_custom_call.1']
    #allocation9 [shape = 'u8[1024]{0}', space=vmem, size = 0x400, scoped, tag = 'input window, operand 2, single buffered']
    #allocation10 [shape = 'u8[786432]{0}', space=vmem, size = 0xc0000, scoped, tag = 'input window, operand 3']
    #allocation11 [shape = 's32[2]{0}', space=sflag, size = 0x8, scoped, tag = 'scoped memory for tpu_custom_call.1']
    #allocation12 [shape = 'u8[262144]{0}', space=vmem, size = 0x40000, scoped, tag = 'input window, operand 5']
    #allocation13 [shape = 'u8[2048]{0}', space=vmem, size = 0x800, scoped, tag = 'input window, operand 6']
    #allocation14 [shape = 's32[2]{0}', space=sflag, size = 0x8, scoped, tag = 'scoped memory for tpu_custom_call.1']
    #allocation15 [shape = 'u8[2048]{0}', space=vmem, size = 0x800, scoped, tag = 'input window, operand 7']
    #allocation16 [shape = 'u8[2048]{0}', space=vmem, size = 0x800, scoped, tag = 'input window, operand 8']
    #allocation17 [shape = 's32[2]{0}', space=sflag, size = 0x8, scoped, tag = 'scoped memory for tpu_custom_call.1']
    #allocation18 [shape = 'u8[1048576]{0}', space=vmem, size = 0x100000, scoped, tag = 'input window, operand 9']
    #allocation19 [shape = 'u8[1048576]{0}', space=vmem, size = 0x100000, scoped, tag = 'input window, operand 11']
    #allocation20 [shape = 's32[2]{0}', space=sflag, size = 0x8, scoped, tag = 'scoped memory for tpu_custom_call.1']
    #allocation21 [shape = 'u8[131072]{0}', space=vmem, size = 0x20000, scoped, tag = 'output window, operand 0, single buffered']
    %20 = vsyncpa [#allocation5], 0
    %21 = vsyncpa [#allocation8], 0
    %22 = vsyncpa [#allocation11], 0
    %s23 = scalar_lea.sflag [#allocation11], 1
    %24 = vsyncpa %s23, 0
    %25 = vsyncpa [#allocation14], 0
    %s26 = scalar_lea.sflag [#allocation14], 1
    %27 = vsyncpa %s26, 0
    %28 = vsyncpa [#allocation17], 0
    %s29 = scalar_lea.sflag [#allocation17], 1
    %30 = vsyncpa %s29, 0
    %31 = vsyncpa [#allocation20], 0
    %s32 = scalar_lea.sflag [#allocation20], 1
    %33 = vsyncpa %s32, 0
    %34 = vsyncpa [#allocation6], 0
    loop: start=0, step=1, limit=4
    $region2: #{tpu_custom_call.1} parent=1 // loop_pre_header
      _
    $region3: #{tpu_custom_call.1} parent=1 // loop_header
      %s36 = sphi 0, %s40
      %p37 = scmp.ge.s32.totalorder %s36, 4
      %s44 = sphi 0, %s44
      %s46 = sphi 0, %s44
      %s47 = sphi 0, %s46
      %s61 = sphi 0, %s47
      %s65 = sphi 0, %s65
      %s67 = sphi 0, %s65
      %s68 = sphi 0, %s67
      %s82 = sphi 0, %s68
      %s86 = sphi 0, %s86
      %s88 = sphi 0, %s86
      %s89 = sphi 0, %s88
      %s103 = sphi 0, %s89
      %s109 = sphi 0, %s111
      %s112 = sphi 0, %s109
      %s113 = sphi 0, %s112
      %s129 = sphi 0, %s113
      %s135 = sphi 0, %s137
      %s138 = sphi 0, %s135
      %s139 = sphi 0, %s138
      %s155 = sphi 0, %s139
      %s161 = sphi 0, %s163
      %s164 = sphi 0, %s161
      %s165 = sphi 0, %s164
      %s181 = sphi 0, %s165
      %s187 = sphi 0, %s189
      %s190 = sphi 0, %s187
      %s191 = sphi 0, %s190
      %s207 = sphi 0, %s191
      %s213 = sphi 0, %s215
      %s216 = sphi 0, %s213
      %s217 = sphi 0, %s216
      %s233 = sphi 0, %s217
      %s239 = sphi 0, %s241
      %s242 = sphi 0, %s239
      %s243 = sphi 0, %s242
      %s259 = sphi 0, %s243
      %s265 = sphi 0, %s267
      %s268 = sphi 0, %s265
      %s269 = sphi 0, %s268
      %s285 = sphi 0, %s269
      %s291 = sphi 0, %s293
      %s294 = sphi 0, %s291
      %s295 = sphi 0, %s294
      %s311 = sphi 0, %s295
      %s317 = sphi 0, %s319
      %s320 = sphi 0, %s317
      %s321 = sphi 0, %s320
      %s337 = sphi 0, %s321
      %s343 = sphi 0, %s345
      %s346 = sphi 0, %s343
      %s347 = sphi 0, %s346
      %s363 = sphi 0, %s347
      %s369 = sphi 0, %s371
      %s372 = sphi 0, %s369
      %s373 = sphi 0, %s372
      %s389 = sphi 0, %s373
      %s395 = sphi 0, %s397
      %s398 = sphi 0, %s395
      %s399 = sphi 0, %s398
      %s415 = sphi 0, %s399
      %s419 = sphi 0, %s419
      %s421 = sphi 0, %s419
      %s422 = sphi 0, %s421
      %s436 = sphi 0, %s422
    $region4: #{tpu_custom_call.1} parent=1 // loop_header_branch
      %39 = sbr.rel (%p37) target = $region8
    $region5: #{tpu_custom_call.1} parent=1 // loop_body
      %s41 = ssub.s32 %s36, 1
      %s42 = ssub.s32 %s36, 2
      %s43 = sadd.s32 %s36, 1
      %s45 = sadd.s32 %s44, 1
      %p48 = scmp.eq.s32.totalorder %s36, 1
      %p49 = scmp.ne.s32.totalorder %s44, %s46
      %p50 = scmp.eq.s32.totalorder %s36, 0
      %p51 = por %p49, %p50
      %p52 = scmp.ne.s32.totalorder %s44, %s46
      %p53 = scmp.eq.s32.totalorder %s41, 1
      %p54 = por %p52, %p53
      %p55 = scmp.ne.s32.totalorder %s46, %s47
      %p56 = scmp.eq.s32.totalorder %s41, 0
      %p57 = por %p55, %p56
      %p58 = scmp.ne.s32.totalorder %s46, %s47
      %p59 = scmp.eq.s32.totalorder %s42, 1
      %p60 = por %p58, %p59
      %p62 = scmp.ne.s32.totalorder %s47, %s61
      %p63 = scmp.eq.s32.totalorder %s42, 0
      %p64 = por %p62, %p63
      %s66 = sadd.s32 %s65, 1
      %p69 = scmp.eq.s32.totalorder %s36, 1
      %p70 = scmp.ne.s32.totalorder %s65, %s67
      %p71 = scmp.eq.s32.totalorder %s36, 0
      %p72 = por %p70, %p71
      %p73 = scmp.ne.s32.totalorder %s65, %s67
      %p74 = scmp.eq.s32.totalorder %s41, 1
      %p75 = por %p73, %p74
      %p76 = scmp.ne.s32.totalorder %s67, %s68
      %p77 = scmp.eq.s32.totalorder %s41, 0
      %p78 = por %p76, %p77
      %p79 = scmp.ne.s32.totalorder %s67, %s68
      %p80 = scmp.eq.s32.totalorder %s42, 1
      %p81 = por %p79, %p80
      %p83 = scmp.ne.s32.totalorder %s68, %s82
      %p84 = scmp.eq.s32.totalorder %s42, 0
      %p85 = por %p83, %p84
      %s87 = sadd.s32 %s86, 1
      %p90 = scmp.eq.s32.totalorder %s36, 1
      %p91 = scmp.ne.s32.totalorder %s86, %s88
      %p92 = scmp.eq.s32.totalorder %s36, 0
      %p93 = por %p91, %p92
      %p94 = scmp.ne.s32.totalorder %s86, %s88
      %p95 = scmp.eq.s32.totalorder %s41, 1
      %p96 = por %p94, %p95
      %p97 = scmp.ne.s32.totalorder %s88, %s89
      %p98 = scmp.eq.s32.totalorder %s41, 0
      %p99 = por %p97, %p98
      %p100 = scmp.ne.s32.totalorder %s88, %s89
      %p101 = scmp.eq.s32.totalorder %s42, 1
      %p102 = por %p100, %p101
      %p104 = scmp.ne.s32.totalorder %s89, %s103
      %p105 = scmp.eq.s32.totalorder %s42, 0
      %p106 = por %p104, %p105
      %s107 = ssub.s32 %s36, %s43
      %p108 = scmp.eq.s32.totalorder %s107, 0
      %s110 = sadd.s32 %s109, 1
      %s111 = scalar_select %p108, %s109, %s110
      %p114 = pneg %p108
      %p115 = scmp.eq.s32.totalorder %s36, 1
      %p116 = por %p114, %p115
      %p117 = scmp.ne.s32.totalorder %s109, %s112
      %p118 = scmp.eq.s32.totalorder %s36, 0
      %p119 = por %p117, %p118
      %p120 = scmp.ne.s32.totalorder %s109, %s112
      %p121 = scmp.eq.s32.totalorder %s41, 1
      %p122 = por %p120, %p121
      %p123 = scmp.ne.s32.totalorder %s112, %s113
      %p124 = scmp.eq.s32.totalorder %s41, 0
      %p125 = por %p123, %p124
      %p126 = scmp.ne.s32.totalorder %s112, %s113
      %p127 = scmp.eq.s32.totalorder %s42, 1
      %p128 = por %p126, %p127
      %p130 = scmp.ne.s32.totalorder %s113, %s129
      %p131 = scmp.eq.s32.totalorder %s42, 0
      %p132 = por %p130, %p131
      %s133 = ssub.s32 %s36, %s43
      %p134 = scmp.eq.s32.totalorder %s133, 0
      %s136 = sadd.s32 %s135, 1
      %s137 = scalar_select %p134, %s135, %s136
      %p140 = pneg %p134
      %p141 = scmp.eq.s32.totalorder %s36, 1
      %p142 = por %p140, %p141
      %p143 = scmp.ne.s32.totalorder %s135, %s138
      %p144 = scmp.eq.s32.totalorder %s36, 0
      %p145 = por %p143, %p144
      %p146 = scmp.ne.s32.totalorder %s135, %s138
      %p147 = scmp.eq.s32.totalorder %s41, 1
      %p148 = por %p146, %p147
      %p149 = scmp.ne.s32.totalorder %s138, %s139
      %p150 = scmp.eq.s32.totalorder %s41, 0
      %p151 = por %p149, %p150
      %p152 = scmp.ne.s32.totalorder %s138, %s139
      %p153 = scmp.eq.s32.totalorder %s42, 1
      %p154 = por %p152, %p153
      %p156 = scmp.ne.s32.totalorder %s139, %s155
      %p157 = scmp.eq.s32.totalorder %s42, 0
      %p158 = por %p156, %p157
      %s159 = ssub.s32 %s36, %s43
      %p160 = scmp.eq.s32.totalorder %s159, 0
      %s162 = sadd.s32 %s161, 1
      %s163 = scalar_select %p160, %s161, %s162
      %p166 = pneg %p160
      %p167 = scmp.eq.s32.totalorder %s36, 1
      %p168 = por %p166, %p167
      %p169 = scmp.ne.s32.totalorder %s161, %s164
      %p170 = scmp.eq.s32.totalorder %s36, 0
      %p171 = por %p169, %p170
      %p172 = scmp.ne.s32.totalorder %s161, %s164
      %p173 = scmp.eq.s32.totalorder %s41, 1
      %p174 = por %p172, %p173
      %p175 = scmp.ne.s32.totalorder %s164, %s165
      %p176 = scmp.eq.s32.totalorder %s41, 0
      %p177 = por %p175, %p176
      %p178 = scmp.ne.s32.totalorder %s164, %s165
      %p179 = scmp.eq.s32.totalorder %s42, 1
      %p180 = por %p178, %p179
      %p182 = scmp.ne.s32.totalorder %s165, %s181
      %p183 = scmp.eq.s32.totalorder %s42, 0
      %p184 = por %p182, %p183
      %s185 = ssub.s32 %s36, %s43
      %p186 = scmp.eq.s32.totalorder %s185, 0
      %s188 = sadd.s32 %s187, 1
      %s189 = scalar_select %p186, %s187, %s188
      %p192 = pneg %p186
      %p193 = scmp.eq.s32.totalorder %s36, 1
      %p194 = por %p192, %p193
      %p195 = scmp.ne.s32.totalorder %s187, %s190
      %p196 = scmp.eq.s32.totalorder %s36, 0
      %p197 = por %p195, %p196
      %p198 = scmp.ne.s32.totalorder %s187, %s190
      %p199 = scmp.eq.s32.totalorder %s41, 1
      %p200 = por %p198, %p199
      %p201 = scmp.ne.s32.totalorder %s190, %s191
      %p202 = scmp.eq.s32.totalorder %s41, 0
      %p203 = por %p201, %p202
      %p204 = scmp.ne.s32.totalorder %s190, %s191
      %p205 = scmp.eq.s32.totalorder %s42, 1
      %p206 = por %p204, %p205
      %p208 = scmp.ne.s32.totalorder %s191, %s207
      %p209 = scmp.eq.s32.totalorder %s42, 0
      %p210 = por %p208, %p209
      %s211 = ssub.s32 %s36, %s43
      %p212 = scmp.eq.s32.totalorder %s211, 0
      %s214 = sadd.s32 %s213, 1
      %s215 = scalar_select %p212, %s213, %s214
      %p218 = pneg %p212
      %p219 = scmp.eq.s32.totalorder %s36, 1
      %p220 = por %p218, %p219
      %p221 = scmp.ne.s32.totalorder %s213, %s216
      %p222 = scmp.eq.s32.totalorder %s36, 0
      %p223 = por %p221, %p222
      %p224 = scmp.ne.s32.totalorder %s213, %s216
      %p225 = scmp.eq.s32.totalorder %s41, 1
      %p226 = por %p224, %p225
      %p227 = scmp.ne.s32.totalorder %s216, %s217
      %p228 = scmp.eq.s32.totalorder %s41, 0
      %p229 = por %p227, %p228
      %p230 = scmp.ne.s32.totalorder %s216, %s217
      %p231 = scmp.eq.s32.totalorder %s42, 1
      %p232 = por %p230, %p231
      %p234 = scmp.ne.s32.totalorder %s217, %s233
      %p235 = scmp.eq.s32.totalorder %s42, 0
      %p236 = por %p234, %p235
      %s237 = ssub.s32 %s36, %s43
      %p238 = scmp.eq.s32.totalorder %s237, 0
      %s240 = sadd.s32 %s239, 1
      %s241 = scalar_select %p238, %s239, %s240
      %p244 = pneg %p238
      %p245 = scmp.eq.s32.totalorder %s36, 1
      %p246 = por %p244, %p245
      %p247 = scmp.ne.s32.totalorder %s239, %s242
      %p248 = scmp.eq.s32.totalorder %s36, 0
      %p249 = por %p247, %p248
      %p250 = scmp.ne.s32.totalorder %s239, %s242
      %p251 = scmp.eq.s32.totalorder %s41, 1
      %p252 = por %p250, %p251
      %p253 = scmp.ne.s32.totalorder %s242, %s243
      %p254 = scmp.eq.s32.totalorder %s41, 0
      %p255 = por %p253, %p254
      %p256 = scmp.ne.s32.totalorder %s242, %s243
      %p257 = scmp.eq.s32.totalorder %s42, 1
      %p258 = por %p256, %p257
      %p260 = scmp.ne.s32.totalorder %s243, %s259
      %p261 = scmp.eq.s32.totalorder %s42, 0
      %p262 = por %p260, %p261
      %s263 = ssub.s32 %s36, %s43
      %p264 = scmp.eq.s32.totalorder %s263, 0
      %s266 = sadd.s32 %s265, 1
      %s267 = scalar_select %p264, %s265, %s266
      %p270 = pneg %p264
      %p271 = scmp.eq.s32.totalorder %s36, 1
      %p272 = por %p270, %p271
      %p273 = scmp.ne.s32.totalorder %s265, %s268
      %p274 = scmp.eq.s32.totalorder %s36, 0
      %p275 = por %p273, %p274
      %p276 = scmp.ne.s32.totalorder %s265, %s268
      %p277 = scmp.eq.s32.totalorder %s41, 1
      %p278 = por %p276, %p277
      %p279 = scmp.ne.s32.totalorder %s268, %s269
      %p280 = scmp.eq.s32.totalorder %s41, 0
      %p281 = por %p279, %p280
      %p282 = scmp.ne.s32.totalorder %s268, %s269
      %p283 = scmp.eq.s32.totalorder %s42, 1
      %p284 = por %p282, %p283
      %p286 = scmp.ne.s32.totalorder %s269, %s285
      %p287 = scmp.eq.s32.totalorder %s42, 0
      %p288 = por %p286, %p287
      %s289 = ssub.s32 %s36, %s43
      %p290 = scmp.eq.s32.totalorder %s289, 0
      %s292 = sadd.s32 %s291, 1
      %s293 = scalar_select %p290, %s291, %s292
      %p296 = pneg %p290
      %p297 = scmp.eq.s32.totalorder %s36, 1
      %p298 = por %p296, %p297
      %p299 = scmp.ne.s32.totalorder %s291, %s294
      %p300 = scmp.eq.s32.totalorder %s36, 0
      %p301 = por %p299, %p300
      %p302 = scmp.ne.s32.totalorder %s291, %s294
      %p303 = scmp.eq.s32.totalorder %s41, 1
      %p304 = por %p302, %p303
      %p305 = scmp.ne.s32.totalorder %s294, %s295
      %p306 = scmp.eq.s32.totalorder %s41, 0
      %p307 = por %p305, %p306
      %p308 = scmp.ne.s32.totalorder %s294, %s295
      %p309 = scmp.eq.s32.totalorder %s42, 1
      %p310 = por %p308, %p309
      %p312 = scmp.ne.s32.totalorder %s295, %s311
      %p313 = scmp.eq.s32.totalorder %s42, 0
      %p314 = por %p312, %p313
      %s315 = ssub.s32 %s36, %s43
      %p316 = scmp.eq.s32.totalorder %s315, 0
      %s318 = sadd.s32 %s317, 1
      %s319 = scalar_select %p316, %s317, %s318
      %p322 = pneg %p316
      %p323 = scmp.eq.s32.totalorder %s36, 1
      %p324 = por %p322, %p323
      %p325 = scmp.ne.s32.totalorder %s317, %s320
      %p326 = scmp.eq.s32.totalorder %s36, 0
      %p327 = por %p325, %p326
      %p328 = scmp.ne.s32.totalorder %s317, %s320
      %p329 = scmp.eq.s32.totalorder %s41, 1
      %p330 = por %p328, %p329
      %p331 = scmp.ne.s32.totalorder %s320, %s321
      %p332 = scmp.eq.s32.totalorder %s41, 0
      %p333 = por %p331, %p332
      %p334 = scmp.ne.s32.totalorder %s320, %s321
      %p335 = scmp.eq.s32.totalorder %s42, 1
      %p336 = por %p334, %p335
      %p338 = scmp.ne.s32.totalorder %s321, %s337
      %p339 = scmp.eq.s32.totalorder %s42, 0
      %p340 = por %p338, %p339
      %s341 = ssub.s32 %s36, %s43
      %p342 = scmp.eq.s32.totalorder %s341, 0
      %s344 = sadd.s32 %s343, 1
      %s345 = scalar_select %p342, %s343, %s344
      %p348 = pneg %p342
      %p349 = scmp.eq.s32.totalorder %s36, 1
      %p350 = por %p348, %p349
      %p351 = scmp.ne.s32.totalorder %s343, %s346
      %p352 = scmp.eq.s32.totalorder %s36, 0
      %p353 = por %p351, %p352
      %p354 = scmp.ne.s32.totalorder %s343, %s346
      %p355 = scmp.eq.s32.totalorder %s41, 1
      %p356 = por %p354, %p355
      %p357 = scmp.ne.s32.totalorder %s346, %s347
      %p358 = scmp.eq.s32.totalorder %s41, 0
      %p359 = por %p357, %p358
      %p360 = scmp.ne.s32.totalorder %s346, %s347
      %p361 = scmp.eq.s32.totalorder %s42, 1
      %p362 = por %p360, %p361
      %p364 = scmp.ne.s32.totalorder %s347, %s363
      %p365 = scmp.eq.s32.totalorder %s42, 0
      %p366 = por %p364, %p365
      %s367 = ssub.s32 %s36, %s43
      %p368 = scmp.eq.s32.totalorder %s367, 0
      %s370 = sadd.s32 %s369, 1
      %s371 = scalar_select %p368, %s369, %s370
      %p374 = pneg %p368
      %p375 = scmp.eq.s32.totalorder %s36, 1
      %p376 = por %p374, %p375
      %p377 = scmp.ne.s32.totalorder %s369, %s372
      %p378 = scmp.eq.s32.totalorder %s36, 0
      %p379 = por %p377, %p378
      %p380 = scmp.ne.s32.totalorder %s369, %s372
      %p381 = scmp.eq.s32.totalorder %s41, 1
      %p382 = por %p380, %p381
      %p383 = scmp.ne.s32.totalorder %s372, %s373
      %p384 = scmp.eq.s32.totalorder %s41, 0
      %p385 = por %p383, %p384
      %p386 = scmp.ne.s32.totalorder %s372, %s373
      %p387 = scmp.eq.s32.totalorder %s42, 1
      %p388 = por %p386, %p387
      %p390 = scmp.ne.s32.totalorder %s373, %s389
      %p391 = scmp.eq.s32.totalorder %s42, 0
      %p392 = por %p390, %p391
      %s393 = ssub.s32 %s36, %s43
      %p394 = scmp.eq.s32.totalorder %s393, 0
      %s396 = sadd.s32 %s395, 1
      %s397 = scalar_select %p394, %s395, %s396
      %p400 = pneg %p394
      %p401 = scmp.eq.s32.totalorder %s36, 1
      %p402 = por %p400, %p401
      %p403 = scmp.ne.s32.totalorder %s395, %s398
      %p404 = scmp.eq.s32.totalorder %s36, 0
      %p405 = por %p403, %p404
      %p406 = scmp.ne.s32.totalorder %s395, %s398
      %p407 = scmp.eq.s32.totalorder %s41, 1
      %p408 = por %p406, %p407
      %p409 = scmp.ne.s32.totalorder %s398, %s399
      %p410 = scmp.eq.s32.totalorder %s41, 0
      %p411 = por %p409, %p410
      %p412 = scmp.ne.s32.totalorder %s398, %s399
      %p413 = scmp.eq.s32.totalorder %s42, 1
      %p414 = por %p412, %p413
      %p416 = scmp.ne.s32.totalorder %s399, %s415
      %p417 = scmp.eq.s32.totalorder %s42, 0
      %p418 = por %p416, %p417
      %s420 = sadd.s32 %s419, 1
      %p423 = scmp.eq.s32.totalorder %s36, 1
      %p424 = scmp.ne.s32.totalorder %s419, %s421
      %p425 = scmp.eq.s32.totalorder %s36, 0
      %p426 = por %p424, %p425
      %p427 = scmp.ne.s32.totalorder %s419, %s421
      %p428 = scmp.eq.s32.totalorder %s41, 1
      %p429 = por %p427, %p428
      %p430 = scmp.ne.s32.totalorder %s421, %s422
      %p431 = scmp.eq.s32.totalorder %s41, 0
      %p432 = por %p430, %p431
      %p433 = scmp.ne.s32.totalorder %s421, %s422
      %p434 = scmp.eq.s32.totalorder %s42, 1
      %p435 = por %p433, %p434
      %p437 = scmp.ne.s32.totalorder %s422, %s436
      %p438 = scmp.eq.s32.totalorder %s42, 0
      %p439 = por %p437, %p438
      %p440 = scmp.le.s32.totalorder 1, %s36
      %p441 = scmp.lt.s32.totalorder %s36, 3
      %p442 = pnand %p440, %p441
      %p443 = pneg %p442
      // Predicated region
      $region9: #{tpu_custom_call.1} parent=5 // pred_check
        _
      $region10: #{tpu_custom_call.1} parent=5 // pred_check_branch
        %445 = sbr.rel (%p442) target = $region12
      $region11: #{tpu_custom_call.1} parent=5 // pred_region
        %s446 = ssub.s32 %s36, 1
        // Predicated region
        $region13: #{tpu_custom_call.1} parent=11 // pred_check
          %p447 = pneg %p57
        $region14: #{tpu_custom_call.1} parent=11 // pred_check_branch
          %449 = sbr.rel (%p447) target = $region16
        $region15: #{tpu_custom_call.1} parent=11 // pred_region
          %s451 = ssub.s32 4096, 4096
          %452 = vsyncadd [#allocation5], %s451
          %s453 = sshll.u32 [#allocation4], 4
          %s454 = int_to_ptr.vmem [resolvable:$true] %s453
          %459 = dma.hbm_to_vmem [thread:$0]  %s0, 4096, %s454, [#allocation5], 256, 256, 16
        $region16: #{tpu_custom_call.1} parent=11 // pred_fallthru
          _
        // Predicated region
        $region17: #{tpu_custom_call.1} parent=11 // pred_check
          %p460 = pneg %p78
        $region18: #{tpu_custom_call.1} parent=11 // pred_check_branch
          %462 = sbr.rel (%p460) target = $region20
        $region19: #{tpu_custom_call.1} parent=11 // pred_region
          %s464 = ssub.s32 32, 32
          %465 = vsyncadd [#allocation8], %s464
          %s467 = sshll.u32 [#allocation7], 4
          %s468 = int_to_ptr.vmem [resolvable:$true] %s467
          %470 = dma.hbm_to_vmem [thread:$0]  %s1, 32, %s468, [#allocation8]
        $region20: #{tpu_custom_call.1} parent=11 // pred_fallthru
          _
        // Predicated region
        $region21: #{tpu_custom_call.1} parent=11 // pred_check
          %p471 = pneg %p99
        $region22: #{tpu_custom_call.1} parent=11 // pred_check_branch
          %473 = sbr.rel (%p471) target = $region24
        $region23: #{tpu_custom_call.1} parent=11 // pred_region
          %s475 = ssub.s32 32, 32
          %476 = vsyncadd [#allocation8], %s475
          %s478 = sshll.u32 [#allocation9], 4
          %s479 = int_to_ptr.vmem [resolvable:$true] %s478
          %481 = dma.hbm_to_vmem [thread:$0]  %s2, 32, %s479, [#allocation8]
        $region24: #{tpu_custom_call.1} parent=11 // pred_fallthru
          _
      $region12: #{tpu_custom_call.1} parent=5 // pred_fallthru
        _
      %p482 = scmp.lt.s32.totalorder %s36, 2
      // Predicated region
      $region25: #{tpu_custom_call.1} parent=5 // pred_check
        %p483 = pneg %p482
      $region26: #{tpu_custom_call.1} parent=5 // pred_check_branch
        %485 = sbr.rel (%p483) target = $region28
      $region27: #{tpu_custom_call.1} parent=5 // pred_region
        // Predicated region
        $region29: #{tpu_custom_call.1} parent=27 // pred_check
          %p486 = pneg %p119
        $region30: #{tpu_custom_call.1} parent=27 // pred_check_branch
          %488 = sbr.rel (%p486) target = $region32
        $region31: #{tpu_custom_call.1} parent=27 // pred_region
          %s489 = sand.u32 %s36, 1
          %s490 = scalar_lea.sflag [#allocation11], %s489
          %s491 = sand.u32 %s109, 1
          %s492 = smul.addr %s491, 768
          %s493 = scalar_lea.vmem [#allocation10], %s492
          %s495 = ssub.s32 12288, 12288
          %496 = vsyncadd %s490, %s495
          %s497 = smul.addr %s36, 192
          %s498 = smul.addr %s497, 64
          %s499 = scalar_lea.hbm %s3, %s498
          %s500 = sshll.u32 %s493, 4
          %s501 = int_to_ptr.vmem [resolvable:$true] %s500
          %506 = dma.hbm_to_vmem [thread:$0]  %s499, 12288, %s501, %s490, 384, 384, 24
        $region32: #{tpu_custom_call.1} parent=27 // pred_fallthru
          _
        // Predicated region
        $region33: #{tpu_custom_call.1} parent=27 // pred_check
          %p507 = pneg %p145
        $region34: #{tpu_custom_call.1} parent=27 // pred_check_branch
          %509 = sbr.rel (%p507) target = $region36
        $region35: #{tpu_custom_call.1} parent=27 // pred_region
          %p510 = scmp.lt.s32.totalorder %s36, 1
          %s511 = scalar_select %p510, %s36, 1
          %s512 = smul.addr %s511, 6
          %s513 = scalar_lea.vmem %s4, %s512
        $region36: #{tpu_custom_call.1} parent=27 // pred_fallthru
          _
        // Predicated region
        $region37: #{tpu_custom_call.1} parent=27 // pred_check
          %p514 = pneg %p171
        $region38: #{tpu_custom_call.1} parent=27 // pred_check_branch
          %516 = sbr.rel (%p514) target = $region40
        $region39: #{tpu_custom_call.1} parent=27 // pred_region
          %s517 = sand.u32 %s36, 1
          %s518 = scalar_lea.sflag [#allocation11], %s517
          %s519 = sand.u32 %s161, 1
          %s520 = smul.addr %s519, 256
          %s521 = scalar_lea.vmem [#allocation12], %s520
          %s523 = ssub.s32 4096, 4096
          %524 = vsyncadd %s518, %s523
          %s525 = smul.addr %s36, 64
          %s526 = smul.addr %s525, 64
          %s527 = scalar_lea.hbm %s5, %s526
          %s528 = sshll.u32 %s521, 4
          %s529 = int_to_ptr.vmem [resolvable:$true] %s528
          %534 = dma.hbm_to_vmem [thread:$0]  %s527, 4096, %s529, %s518, 128, 128, 8
        $region40: #{tpu_custom_call.1} parent=27 // pred_fallthru
          _
        // Predicated region
        $region41: #{tpu_custom_call.1} parent=27 // pred_check
          %p535 = pneg %p197
        $region42: #{tpu_custom_call.1} parent=27 // pred_check_branch
          %537 = sbr.rel (%p535) target = $region44
        $region43: #{tpu_custom_call.1} parent=27 // pred_region
          %s538 = sand.u32 %s36, 1
          %s539 = scalar_lea.sflag [#allocation14], %s538
          %s540 = sand.u32 %s187, 1
          %s541 = smul.addr %s540, 2
          %s542 = scalar_lea.vmem [#allocation13], %s541
          %s544 = ssub.s32 32, 32
          %545 = vsyncadd %s539, %s544
          %s546 = smul.addr %s36, 2
          %s547 = smul.addr %s546, 16
          %s548 = scalar_lea.hbm %s6, %s547
          %s550 = sshll.u32 %s542, 4
          %s551 = int_to_ptr.vmem [resolvable:$true] %s550
          %553 = dma.hbm_to_vmem [thread:$0]  %s548, 32, %s551, %s539
        $region44: #{tpu_custom_call.1} parent=27 // pred_fallthru
          _
        // Predicated region
        $region45: #{tpu_custom_call.1} parent=27 // pred_check
          %p554 = pneg %p223
        $region46: #{tpu_custom_call.1} parent=27 // pred_check_branch
          %556 = sbr.rel (%p554) target = $region48
        $region47: #{tpu_custom_call.1} parent=27 // pred_region
          %s557 = sand.u32 %s36, 1
          %s558 = scalar_lea.sflag [#allocation14], %s557
          %s559 = sand.u32 %s213, 1
          %s560 = smul.addr %s559, 2
          %s561 = scalar_lea.vmem [#allocation15], %s560
          %s563 = ssub.s32 32, 32
          %564 = vsyncadd %s558, %s563
          %s565 = smul.addr %s36, 2
          %s566 = smul.addr %s565, 16
          %s567 = scalar_lea.hbm %s7, %s566
          %s569 = sshll.u32 %s561, 4
          %s570 = int_to_ptr.vmem [resolvable:$true] %s569
          %572 = dma.hbm_to_vmem [thread:$0]  %s567, 32, %s570, %s558
        $region48: #{tpu_custom_call.1} parent=27 // pred_fallthru
          _
        // Predicated region
        $region49: #{tpu_custom_call.1} parent=27 // pred_check
          %p573 = pneg %p249
        $region50: #{tpu_custom_call.1} parent=27 // pred_check_branch
          %575 = sbr.rel (%p573) target = $region52
        $region51: #{tpu_custom_call.1} parent=27 // pred_region
          %s576 = sand.u32 %s36, 1
          %s577 = scalar_lea.sflag [#allocation17], %s576
          %s578 = sand.u32 %s239, 1
          %s579 = smul.addr %s578, 2
          %s580 = scalar_lea.vmem [#allocation16], %s579
          %s582 = ssub.s32 32, 32
          %583 = vsyncadd %s577, %s582
          %s584 = smul.addr %s36, 2
          %s585 = smul.addr %s584, 16
          %s586 = scalar_lea.hbm %s8, %s585
          %s588 = sshll.u32 %s580, 4
          %s589 = int_to_ptr.vmem [resolvable:$true] %s588
          %591 = dma.hbm_to_vmem [thread:$0]  %s586, 32, %s589, %s577
        $region52: #{tpu_custom_call.1} parent=27 // pred_fallthru
          _
        // Predicated region
        $region53: #{tpu_custom_call.1} parent=27 // pred_check
          %p592 = pneg %p275
        $region54: #{tpu_custom_call.1} parent=27 // pred_check_branch
          %594 = sbr.rel (%p592) target = $region56
        $region55: #{tpu_custom_call.1} parent=27 // pred_region
          %s595 = sand.u32 %s36, 1
          %s596 = scalar_lea.sflag [#allocation17], %s595
          %s597 = sand.u32 %s265, 1
          %s598 = smul.addr %s597, 1024
          %s599 = scalar_lea.vmem [#allocation18], %s598
          %s601 = ssub.s32 16384, 16384
          %602 = vsyncadd %s596, %s601
          %s603 = smul.addr %s36, 256
          %s604 = smul.addr %s603, 64
          %s605 = scalar_lea.hbm %s9, %s604
          %s606 = sshll.u32 %s599, 4
          %s607 = int_to_ptr.vmem [resolvable:$true] %s606
          %612 = dma.hbm_to_vmem [thread:$0]  %s605, 16384, %s607, %s596, 512, 512, 32
        $region56: #{tpu_custom_call.1} parent=27 // pred_fallthru
          _
        // Predicated region
        $region57: #{tpu_custom_call.1} parent=27 // pred_check
          %p613 = pneg %p301
        $region58: #{tpu_custom_call.1} parent=27 // pred_check_branch
          %615 = sbr.rel (%p613) target = $region60
        $region59: #{tpu_custom_call.1} parent=27 // pred_region
          %p616 = scmp.lt.s32.totalorder %s36, 1
          %s617 = scalar_select %p616, %s36, 1
          %s618 = smul.addr %s617, 8
          %s619 = scalar_lea.vmem %s10, %s618
        $region60: #{tpu_custom_call.1} parent=27 // pred_fallthru
          _
        // Predicated region
        $region61: #{tpu_custom_call.1} parent=27 // pred_check
          %p620 = pneg %p327
        $region62: #{tpu_custom_call.1} parent=27 // pred_check_branch
          %622 = sbr.rel (%p620) target = $region64
        $region63: #{tpu_custom_call.1} parent=27 // pred_region
          %s623 = sand.u32 %s317, 1
          %s624 = scalar_lea.sflag [#allocation20], %s623
          %s625 = sand.u32 %s317, 1
          %s626 = smul.addr %s625, 1024
          %s627 = scalar_lea.vmem [#allocation19], %s626
          %s629 = ssub.s32 16384, 16384
          %630 = vsyncadd %s624, %s629
          %s631 = smul.addr %s36, 256
          %s632 = smul.addr %s631, 64
          %s633 = scalar_lea.hbm %s11, %s632
          %s634 = sshll.u32 %s627, 4
          %s635 = int_to_ptr.vmem [resolvable:$true] %s634
          %640 = dma.hbm_to_vmem [thread:$0]  %s633, 16384, %s635, %s624, 128, 128, 8
        $region64: #{tpu_custom_call.1} parent=27 // pred_fallthru
          _
        // Predicated region
        $region65: #{tpu_custom_call.1} parent=27 // pred_check
          %p641 = pneg %p353
        $region66: #{tpu_custom_call.1} parent=27 // pred_check_branch
          %643 = sbr.rel (%p641) target = $region68
        $region67: #{tpu_custom_call.1} parent=27 // pred_region
          %p644 = scmp.lt.s32.totalorder %s36, 1
          %s645 = scalar_select %p644, %s36, 1
          %s646 = smul.addr %s645, 2
          %s647 = scalar_lea.vmem %s12, %s646
        $region68: #{tpu_custom_call.1} parent=27 // pred_fallthru
          _
        // Predicated region
        $region69: #{tpu_custom_call.1} parent=27 // pred_check
          %p648 = pneg %p379
        $region70: #{tpu_custom_call.1} parent=27 // pred_check_branch
          %650 = sbr.rel (%p648) target = $region72
        $region71: #{tpu_custom_call.1} parent=27 // pred_region
          %p651 = scmp.lt.s32.totalorder %s36, 1
          %s652 = scalar_select %p651, %s36, 1
          %s653 = smul.addr %s652, 2
          %s654 = scalar_lea.vmem %s13, %s653
        $region72: #{tpu_custom_call.1} parent=27 // pred_fallthru
          _
        // Predicated region
        $region73: #{tpu_custom_call.1} parent=27 // pred_check
          %p655 = pneg %p405
        $region74: #{tpu_custom_call.1} parent=27 // pred_check_branch
          %657 = sbr.rel (%p655) target = $region76
        $region75: #{tpu_custom_call.1} parent=27 // pred_region
          %p658 = scmp.lt.s32.totalorder %s36, 1
          %s659 = scalar_select %p658, %s36, 1
          %s660 = smul.addr %s659, 2
          %s661 = scalar_lea.vmem %s14, %s660
        $region76: #{tpu_custom_call.1} parent=27 // pred_fallthru
          _
      $region28: #{tpu_custom_call.1} parent=5 // pred_fallthru
        _
      %p662 = scmp.le.s32.totalorder 1, %s36
      %p663 = scmp.lt.s32.totalorder %s36, 3
      %p664 = pnand %p662, %p663
      %p665 = pneg %p664
      // Predicated region
      $region77: #{tpu_custom_call.1} parent=5 // pred_check
        _
      $region78: #{tpu_custom_call.1} parent=5 // pred_check_branch
        %667 = sbr.rel (%p664) target = $region80
      $region79: #{tpu_custom_call.1} parent=5 // pred_region
        %s668 = ssub.s32 %s36, 1
        // Predicated region
        $region81: #{tpu_custom_call.1} parent=79 // pred_check
          %p669 = pneg %p57
        $region82: #{tpu_custom_call.1} parent=79 // pred_check_branch
          %671 = sbr.rel (%p669) target = $region84
        $region83: #{tpu_custom_call.1} parent=79 // pred_region
          %672 = dma.done [#allocation5], 4096
        $region84: #{tpu_custom_call.1} parent=79 // pred_fallthru
          _
        // Predicated region
        $region85: #{tpu_custom_call.1} parent=79 // pred_check
          %p673 = pneg %p78
        $region86: #{tpu_custom_call.1} parent=79 // pred_check_branch
          %675 = sbr.rel (%p673) target = $region88
        $region87: #{tpu_custom_call.1} parent=79 // pred_region
          %676 = dma.done [#allocation8], 32
        $region88: #{tpu_custom_call.1} parent=79 // pred_fallthru
          _
        // Predicated region
        $region89: #{tpu_custom_call.1} parent=79 // pred_check
          %p677 = pneg %p99
        $region90: #{tpu_custom_call.1} parent=79 // pred_check_branch
          %679 = sbr.rel (%p677) target = $region92
        $region91: #{tpu_custom_call.1} parent=79 // pred_region
          %680 = dma.done [#allocation8], 32
        $region92: #{tpu_custom_call.1} parent=79 // pred_fallthru
          _
        %s681 = sand.u32 %s41, 1
        %s682 = scalar_lea.sflag [#allocation11], %s681
        %s683 = sand.u32 %s112, 1
        %s684 = smul.addr %s683, 768
        %s685 = scalar_lea.vmem [#allocation10], %s684
        // Predicated region
        $region93: #{tpu_custom_call.1} parent=79 // pred_check
          %p686 = pneg %p125
        $region94: #{tpu_custom_call.1} parent=79 // pred_check_branch
          %688 = sbr.rel (%p686) target = $region96
        $region95: #{tpu_custom_call.1} parent=79 // pred_region
          %689 = dma.done %s682, 12288
        $region96: #{tpu_custom_call.1} parent=79 // pred_fallthru
          _
        %s690 = sand.u32 %s41, 1
        %s691 = scalar_lea.sflag [#allocation11], %s690
        %s692 = sand.u32 %s164, 1
        %s693 = smul.addr %s692, 256
        %s694 = scalar_lea.vmem [#allocation12], %s693
        // Predicated region
        $region97: #{tpu_custom_call.1} parent=79 // pred_check
          %p695 = pneg %p177
        $region98: #{tpu_custom_call.1} parent=79 // pred_check_branch
          %697 = sbr.rel (%p695) target = $region100
        $region99: #{tpu_custom_call.1} parent=79 // pred_region
          %698 = dma.done %s691, 4096
        $region100: #{tpu_custom_call.1} parent=79 // pred_fallthru
          _
        %s699 = sand.u32 %s41, 1
        %s700 = scalar_lea.sflag [#allocation14], %s699
        %s701 = sand.u32 %s190, 1
        %s702 = smul.addr %s701, 2
        %s703 = scalar_lea.vmem [#allocation13], %s702
        // Predicated region
        $region101: #{tpu_custom_call.1} parent=79 // pred_check
          %p704 = pneg %p203
        $region102: #{tpu_custom_call.1} parent=79 // pred_check_branch
          %706 = sbr.rel (%p704) target = $region104
        $region103: #{tpu_custom_call.1} parent=79 // pred_region
          %707 = dma.done %s700, 32
        $region104: #{tpu_custom_call.1} parent=79 // pred_fallthru
          _
        %s708 = sand.u32 %s41, 1
        %s709 = scalar_lea.sflag [#allocation14], %s708
        %s710 = sand.u32 %s216, 1
        %s711 = smul.addr %s710, 2
        %s712 = scalar_lea.vmem [#allocation15], %s711
        // Predicated region
        $region105: #{tpu_custom_call.1} parent=79 // pred_check
          %p713 = pneg %p229
        $region106: #{tpu_custom_call.1} parent=79 // pred_check_branch
          %715 = sbr.rel (%p713) target = $region108
        $region107: #{tpu_custom_call.1} parent=79 // pred_region
          %716 = dma.done %s709, 32
        $region108: #{tpu_custom_call.1} parent=79 // pred_fallthru
          _
        %s717 = sand.u32 %s41, 1
        %s718 = scalar_lea.sflag [#allocation17], %s717
        %s719 = sand.u32 %s242, 1
        %s720 = smul.addr %s719, 2
        %s721 = scalar_lea.vmem [#allocation16], %s720
        // Predicated region
        $region109: #{tpu_custom_call.1} parent=79 // pred_check
          %p722 = pneg %p255
        $region110: #{tpu_custom_call.1} parent=79 // pred_check_branch
          %724 = sbr.rel (%p722) target = $region112
        $region111: #{tpu_custom_call.1} parent=79 // pred_region
          %725 = dma.done %s718, 32
        $region112: #{tpu_custom_call.1} parent=79 // pred_fallthru
          _
        %s726 = sand.u32 %s41, 1
        %s727 = scalar_lea.sflag [#allocation17], %s726
        %s728 = sand.u32 %s268, 1
        %s729 = smul.addr %s728, 1024
        %s730 = scalar_lea.vmem [#allocation18], %s729
        // Predicated region
        $region113: #{tpu_custom_call.1} parent=79 // pred_check
          %p731 = pneg %p281
        $region114: #{tpu_custom_call.1} parent=79 // pred_check_branch
          %733 = sbr.rel (%p731) target = $region116
        $region115: #{tpu_custom_call.1} parent=79 // pred_region
          %734 = dma.done %s727, 16384
        $region116: #{tpu_custom_call.1} parent=79 // pred_fallthru
          _
        %s735 = sand.u32 %s320, 1
        %s736 = scalar_lea.sflag [#allocation20], %s735
        %s737 = sand.u32 %s320, 1
        %s738 = smul.addr %s737, 1024
        %s739 = scalar_lea.vmem [#allocation19], %s738
        // Predicated region
        $region117: #{tpu_custom_call.1} parent=79 // pred_check
          %p740 = pneg %p333
        $region118: #{tpu_custom_call.1} parent=79 // pred_check_branch
          %742 = sbr.rel (%p740) target = $region120
        $region119: #{tpu_custom_call.1} parent=79 // pred_region
          %743 = dma.done %s736, 16384
        $region120: #{tpu_custom_call.1} parent=79 // pred_fallthru
          _
        %p744 = pneg %p57
        %p745 = pneg %p54
        %p746 = pneg %p78
        %p747 = pneg %p75
        %p748 = pneg %p99
        %p749 = pneg %p96
        %s750 = sand.u32 %s41, 1
        %s751 = scalar_lea.sflag [#allocation11], %s750
        %s752 = sand.u32 %s112, 1
        %s753 = smul.addr %s752, 768
        %s754 = scalar_lea.vmem [#allocation10], %s753
        %p755 = pneg %p125
        %p756 = pneg %p122
        %p757 = scmp.lt.s32.totalorder %s41, 1
        %s758 = scalar_select %p757, %s41, 1
        %s759 = smul.addr %s758, 6
        %s760 = scalar_lea.vmem %s4, %s759
        %p761 = pneg %p151
        %p762 = pneg %p148
        %s763 = sand.u32 %s41, 1
        %s764 = scalar_lea.sflag [#allocation11], %s763
        %s765 = sand.u32 %s164, 1
        %s766 = smul.addr %s765, 256
        %s767 = scalar_lea.vmem [#allocation12], %s766
        %p768 = pneg %p177
        %p769 = pneg %p174
        %s770 = sand.u32 %s41, 1
        %s771 = scalar_lea.sflag [#allocation14], %s770
        %s772 = sand.u32 %s190, 1
        %s773 = smul.addr %s772, 2
        %s774 = scalar_lea.vmem [#allocation13], %s773
        %p775 = pneg %p203
        %p776 = pneg %p200
        %s777 = sand.u32 %s41, 1
        %s778 = scalar_lea.sflag [#allocation14], %s777
        %s779 = sand.u32 %s216, 1
        %s780 = smul.addr %s779, 2
        %s781 = scalar_lea.vmem [#allocation15], %s780
        %p782 = pneg %p229
        %p783 = pneg %p226
        %s784 = sand.u32 %s41, 1
        %s785 = scalar_lea.sflag [#allocation17], %s784
        %s786 = sand.u32 %s242, 1
        %s787 = smul.addr %s786, 2
        %s788 = scalar_lea.vmem [#allocation16], %s787
        %p789 = pneg %p255
        %p790 = pneg %p252
        %s791 = sand.u32 %s41, 1
        %s792 = scalar_lea.sflag [#allocation17], %s791
        %s793 = sand.u32 %s268, 1
        %s794 = smul.addr %s793, 1024
        %s795 = scalar_lea.vmem [#allocation18], %s794
        %p796 = pneg %p281
        %p797 = pneg %p278
        %p798 = scmp.lt.s32.totalorder %s41, 1
        %s799 = scalar_select %p798, %s41, 1
        %s800 = smul.addr %s799, 8
        %s801 = scalar_lea.vmem %s10, %s800
        %p802 = pneg %p307
        %p803 = pneg %p304
        %s804 = sand.u32 %s320, 1
        %s805 = scalar_lea.sflag [#allocation20], %s804
        %s806 = sand.u32 %s320, 1
        %s807 = smul.addr %s806, 1024
        %s808 = scalar_lea.vmem [#allocation19], %s807
        %p809 = pneg %p333
        %p810 = pneg %p330
        %p811 = scmp.lt.s32.totalorder %s41, 1
        %s812 = scalar_select %p811, %s41, 1
        %s813 = smul.addr %s812, 2
        %s814 = scalar_lea.vmem %s12, %s813
        %p815 = pneg %p359
        %p816 = pneg %p356
        %p817 = scmp.lt.s32.totalorder %s41, 1
        %s818 = scalar_select %p817, %s41, 1
        %s819 = smul.addr %s818, 2
        %s820 = scalar_lea.vmem %s13, %s819
        %p821 = pneg %p385
        %p822 = pneg %p382
        %p823 = scmp.lt.s32.totalorder %s41, 1
        %s824 = scalar_select %p823, %s41, 1
        %s825 = smul.addr %s824, 2
        %s826 = scalar_lea.vmem %s14, %s825
        %p827 = pneg %p411
        %p828 = pneg %p408
        %p829 = pneg %p432
        %p830 = pneg %p429
        %p831 = scmp.lt.s32.totalorder %s41, 1
        %s832 = scalar_select %p831, %s41, 1
        %s833 = smul.addr %s832, 6
        %s834 = scalar_lea.vmem %s4, %s833
        %p835 = scmp.lt.s32.totalorder %s41, 1
        %s836 = scalar_select %p835, %s41, 1
        %s837 = smul.addr %s836, 8
        %s838 = scalar_lea.vmem %s10, %s837
        %p839 = scmp.lt.s32.totalorder %s41, 1
        %s840 = scalar_select %p839, %s41, 1
        %s841 = smul.addr %s840, 2
        %s842 = scalar_lea.vmem %s12, %s841
        %p843 = scmp.lt.s32.totalorder %s41, 1
        %s844 = scalar_select %p843, %s41, 1
        %s845 = smul.addr %s844, 2
        %s846 = scalar_lea.vmem %s13, %s845
        %p847 = scmp.lt.s32.totalorder %s41, 1
        %s848 = scalar_select %p847, %s41, 1
        %s849 = smul.addr %s848, 2
        %s850 = scalar_lea.vmem %s14, %s849
        %p852 = scmp.eq.s32.totalorder %s41, 0
        // Predicated region
        $region121: #{tpu_custom_call.1} parent=79 // pred_check
          %p853 = pneg %p852
        $region122: #{tpu_custom_call.1} parent=79 // pred_check_branch
          %855 = sbr.rel (%p853) target = $region124
        $region123: #{tpu_custom_call.1} parent=79 // pred_region
          %v856 = vld [vmem:[#allocation4] sm:$0xff]
          %v857 = vld [vmem:[#allocation4 + $0x8] sm:$0xff]
          %v858 = vld [vmem:[#allocation4 + $0x10] sm:$0xff]
          %v859 = vld [vmem:[#allocation4 + $0x18] sm:$0xff]
          %v860 = vld [vmem:[#allocation4 + $0x20] sm:$0xff]
          %v861 = vld [vmem:[#allocation4 + $0x28] sm:$0xff]
          %v862 = vld [vmem:[#allocation4 + $0x30] sm:$0xff]
          %v863 = vld [vmem:[#allocation4 + $0x38] sm:$0xff]
          %v864 = vld [vmem:[#allocation4 + $0x40] sm:$0xff]
          %v865 = vld [vmem:[#allocation4 + $0x48] sm:$0xff]
          %v866 = vld [vmem:[#allocation4 + $0x50] sm:$0xff]
          %v867 = vld [vmem:[#allocation4 + $0x58] sm:$0xff]
          %v868 = vld [vmem:[#allocation4 + $0x60] sm:$0xff]
          %v869 = vld [vmem:[#allocation4 + $0x68] sm:$0xff]
          %v870 = vld [vmem:[#allocation4 + $0x70] sm:$0xff]
          %v871 = vld [vmem:[#allocation4 + $0x78] sm:$0xff]
          %v872 = vld [vmem:[#allocation4 + $0x80] sm:$0xff]
          %v873 = vld [vmem:[#allocation4 + $0x88] sm:$0xff]
          %v874 = vld [vmem:[#allocation4 + $0x90] sm:$0xff]
          %v875 = vld [vmem:[#allocation4 + $0x98] sm:$0xff]
          %v876 = vld [vmem:[#allocation4 + $0xa0] sm:$0xff]
          %v877 = vld [vmem:[#allocation4 + $0xa8] sm:$0xff]
          %v878 = vld [vmem:[#allocation4 + $0xb0] sm:$0xff]
          %v879 = vld [vmem:[#allocation4 + $0xb8] sm:$0xff]
          %v880 = vld [vmem:[#allocation4 + $0xc0] sm:$0xff]
          %v881 = vld [vmem:[#allocation4 + $0xc8] sm:$0xff]
          %v882 = vld [vmem:[#allocation4 + $0xd0] sm:$0xff]
          %v883 = vld [vmem:[#allocation4 + $0xd8] sm:$0xff]
          %v884 = vld [vmem:[#allocation4 + $0xe0] sm:$0xff]
          %v885 = vld [vmem:[#allocation4 + $0xe8] sm:$0xff]
          %v886 = vld [vmem:[#allocation4 + $0xf0] sm:$0xff]
          %v887 = vld [vmem:[#allocation4 + $0xf8] sm:$0xff]
          %888 = vst [vmem:[#allocation2] sm:$0xff] %v856
          %889 = vst [vmem:[#allocation2 + $0x8] sm:$0xff] %v857
          %890 = vst [vmem:[#allocation2 + $0x10] sm:$0xff] %v858
          %891 = vst [vmem:[#allocation2 + $0x18] sm:$0xff] %v859
          %892 = vst [vmem:[#allocation2 + $0x20] sm:$0xff] %v860
          %893 = vst [vmem:[#allocation2 + $0x28] sm:$0xff] %v861
          %894 = vst [vmem:[#allocation2 + $0x30] sm:$0xff] %v862
          %895 = vst [vmem:[#allocation2 + $0x38] sm:$0xff] %v863
          %896 = vst [vmem:[#allocation2 + $0x40] sm:$0xff] %v864
          %897 = vst [vmem:[#allocation2 + $0x48] sm:$0xff] %v865
          %898 = vst [vmem:[#allocation2 + $0x50] sm:$0xff] %v866
          %899 = vst [vmem:[#allocation2 + $0x58] sm:$0xff] %v867
          %900 = vst [vmem:[#allocation2 + $0x60] sm:$0xff] %v868
          %901 = vst [vmem:[#allocation2 + $0x68] sm:$0xff] %v869
          %902 = vst [vmem:[#allocation2 + $0x70] sm:$0xff] %v870
          %903 = vst [vmem:[#allocation2 + $0x78] sm:$0xff] %v871
          %904 = vst [vmem:[#allocation2 + $0x80] sm:$0xff] %v872
          %905 = vst [vmem:[#allocation2 + $0x88] sm:$0xff] %v873
          %906 = vst [vmem:[#allocation2 + $0x90] sm:$0xff] %v874
          %907 = vst [vmem:[#allocation2 + $0x98] sm:$0xff] %v875
          %908 = vst [vmem:[#allocation2 + $0xa0] sm:$0xff] %v876
          %909 = vst [vmem:[#allocation2 + $0xa8] sm:$0xff] %v877
          %910 = vst [vmem:[#allocation2 + $0xb0] sm:$0xff] %v878
          %911 = vst [vmem:[#allocation2 + $0xb8] sm:$0xff] %v879
          %912 = vst [vmem:[#allocation2 + $0xc0] sm:$0xff] %v880
          %913 = vst [vmem:[#allocation2 + $0xc8] sm:$0xff] %v881
          %914 = vst [vmem:[#allocation2 + $0xd0] sm:$0xff] %v882
          %915 = vst [vmem:[#allocation2 + $0xd8] sm:$0xff] %v883
          %916 = vst [vmem:[#allocation2 + $0xe0] sm:$0xff] %v884
          %917 = vst [vmem:[#allocation2 + $0xe8] sm:$0xff] %v885
          %918 = vst [vmem:[#allocation2 + $0xf0] sm:$0xff] %v886
          %919 = vst [vmem:[#allocation2 + $0xf8] sm:$0xff] %v887
        $region124: #{tpu_custom_call.1} parent=79 // pred_fallthru
          _
        %v920 = vld [vmem:[#allocation2] sm:$0xff]
        %v921 = vld [vmem:[#allocation2 + $0x8] sm:$0xff]
        %v922 = vld [vmem:[#allocation2 + $0x10] sm:$0xff]
        %v923 = vld [vmem:[#allocation2 + $0x18] sm:$0xff]
        %v924 = vld [vmem:[#allocation2 + $0x20] sm:$0xff]
        %v925 = vld [vmem:[#allocation2 + $0x28] sm:$0xff]
        %v926 = vld [vmem:[#allocation2 + $0x30] sm:$0xff]
        %v927 = vld [vmem:[#allocation2 + $0x38] sm:$0xff]
        %v928 = vld [vmem:[#allocation2 + $0x40] sm:$0xff]
        %v929 = vld [vmem:[#allocation2 + $0x48] sm:$0xff]
        %v930 = vld [vmem:[#allocation2 + $0x50] sm:$0xff]
        %v931 = vld [vmem:[#allocation2 + $0x58] sm:$0xff]
        %v932 = vld [vmem:[#allocation2 + $0x60] sm:$0xff]
        %v933 = vld [vmem:[#allocation2 + $0x68] sm:$0xff]
        %v934 = vld [vmem:[#allocation2 + $0x70] sm:$0xff]
        %v935 = vld [vmem:[#allocation2 + $0x78] sm:$0xff]
        %v936 = vld [vmem:[#allocation2 + $0x80] sm:$0xff]
        %v937 = vld [vmem:[#allocation2 + $0x88] sm:$0xff]
        %v938 = vld [vmem:[#allocation2 + $0x90] sm:$0xff]
        %v939 = vld [vmem:[#allocation2 + $0x98] sm:$0xff]
        %v940 = vld [vmem:[#allocation2 + $0xa0] sm:$0xff]
        %v941 = vld [vmem:[#allocation2 + $0xa8] sm:$0xff]
        %v942 = vld [vmem:[#allocation2 + $0xb0] sm:$0xff]
        %v943 = vld [vmem:[#allocation2 + $0xb8] sm:$0xff]
        %v944 = vld [vmem:[#allocation2 + $0xc0] sm:$0xff]
        %v945 = vld [vmem:[#allocation2 + $0xc8] sm:$0xff]
        %v946 = vld [vmem:[#allocation2 + $0xd0] sm:$0xff]
        %v947 = vld [vmem:[#allocation2 + $0xd8] sm:$0xff]
        %v948 = vld [vmem:[#allocation2 + $0xe0] sm:$0xff]
        %v949 = vld [vmem:[#allocation2 + $0xe8] sm:$0xff]
        %v950 = vld [vmem:[#allocation2 + $0xf0] sm:$0xff]
        %v951 = vld [vmem:[#allocation2 + $0xf8] sm:$0xff]
        %v952 = vld [vmem:[%s685] sm:$0xff]
        %v953 = vld [vmem:[%s685 + $0x8] sm:$0xff]
        %v954 = vld [vmem:[%s685 + $0x10] sm:$0xff]
        %v955 = vld [vmem:[%s685 + $0x18] sm:$0xff]
        %v956 = vld [vmem:[%s685 + $0x20] sm:$0xff]
        %v957 = vld [vmem:[%s685 + $0x28] sm:$0xff]
        %v958 = vld [vmem:[%s685 + $0x30] sm:$0xff]
        %v959 = vld [vmem:[%s685 + $0x38] sm:$0xff]
        %v960 = vld [vmem:[%s685 + $0x40] sm:$0xff]
        %v961 = vld [vmem:[%s685 + $0x48] sm:$0xff]
        %v962 = vld [vmem:[%s685 + $0x50] sm:$0xff]
        %v963 = vld [vmem:[%s685 + $0x58] sm:$0xff]
        %v964 = vld [vmem:[%s685 + $0x60] sm:$0xff]
        %v965 = vld [vmem:[%s685 + $0x68] sm:$0xff]
        %v966 = vld [vmem:[%s685 + $0x70] sm:$0xff]
        %v967 = vld [vmem:[%s685 + $0x78] sm:$0xff]
        %v968 = vld [vmem:[%s685 + $0x80] sm:$0xff]
        %v969 = vld [vmem:[%s685 + $0x88] sm:$0xff]
        %v970 = vld [vmem:[%s685 + $0x90] sm:$0xff]
        %v971 = vld [vmem:[%s685 + $0x98] sm:$0xff]
        %v972 = vld [vmem:[%s685 + $0xa0] sm:$0xff]
        %v973 = vld [vmem:[%s685 + $0xa8] sm:$0xff]
        %v974 = vld [vmem:[%s685 + $0xb0] sm:$0xff]
        %v975 = vld [vmem:[%s685 + $0xb8] sm:$0xff]
        %v976 = vld [vmem:[%s685 + $0xc0] sm:$0xff]
        %v977 = vld [vmem:[%s685 + $0xc8] sm:$0xff]
        %v978 = vld [vmem:[%s685 + $0xd0] sm:$0xff]
        %v979 = vld [vmem:[%s685 + $0xd8] sm:$0xff]
        %v980 = vld [vmem:[%s685 + $0xe0] sm:$0xff]
        %v981 = vld [vmem:[%s685 + $0xe8] sm:$0xff]
        %v982 = vld [vmem:[%s685 + $0xf0] sm:$0xff]
        %v983 = vld [vmem:[%s685 + $0xf8] sm:$0xff]
        %v984 = vld [vmem:[%s685 + $0x100] sm:$0xff]
        %v985 = vld [vmem:[%s685 + $0x108] sm:$0xff]
        %v986 = vld [vmem:[%s685 + $0x110] sm:$0xff]
        %v987 = vld [vmem:[%s685 + $0x118] sm:$0xff]
        %v988 = vld [vmem:[%s685 + $0x120] sm:$0xff]
        %v989 = vld [vmem:[%s685 + $0x128] sm:$0xff]
        %v990 = vld [vmem:[%s685 + $0x130] sm:$0xff]
        %v991 = vld [vmem:[%s685 + $0x138] sm:$0xff]
        %v992 = vld [vmem:[%s685 + $0x140] sm:$0xff]
        %v993 = vld [vmem:[%s685 + $0x148] sm:$0xff]
        %v994 = vld [vmem:[%s685 + $0x150] sm:$0xff]
        %v995 = vld [vmem:[%s685 + $0x158] sm:$0xff]
        %v996 = vld [vmem:[%s685 + $0x160] sm:$0xff]
        %v997 = vld [vmem:[%s685 + $0x168] sm:$0xff]
        %v998 = vld [vmem:[%s685 + $0x170] sm:$0xff]
        %v999 = vld [vmem:[%s685 + $0x178] sm:$0xff]
        %v1000 = vld [vmem:[%s685 + $0x180] sm:$0xff]
        %v1001 = vld [vmem:[%s685 + $0x188] sm:$0xff]
        %v1002 = vld [vmem:[%s685 + $0x190] sm:$0xff]
        %v1003 = vld [vmem:[%s685 + $0x198] sm:$0xff]
        %v1004 = vld [vmem:[%s685 + $0x1a0] sm:$0xff]
        %v1005 = vld [vmem:[%s685 + $0x1a8] sm:$0xff]
        %v1006 = vld [vmem:[%s685 + $0x1b0] sm:$0xff]
        %v1007 = vld [vmem:[%s685 + $0x1b8] sm:$0xff]
        %v1008 = vld [vmem:[%s685 + $0x1c0] sm:$0xff]
        %v1009 = vld [vmem:[%s685 + $0x1c8] sm:$0xff]
        %v1010 = vld [vmem:[%s685 + $0x1d0] sm:$0xff]
        %v1011 = vld [vmem:[%s685 + $0x1d8] sm:$0xff]
        %v1012 = vld [vmem:[%s685 + $0x1e0] sm:$0xff]
        %v1013 = vld [vmem:[%s685 + $0x1e8] sm:$0xff]
        %v1014 = vld [vmem:[%s685 + $0x1f0] sm:$0xff]
        %v1015 = vld [vmem:[%s685 + $0x1f8] sm:$0xff]
        %v1016 = vld [vmem:[%s685 + $0x200] sm:$0xff]
        %v1017 = vld [vmem:[%s685 + $0x208] sm:$0xff]
        %v1018 = vld [vmem:[%s685 + $0x210] sm:$0xff]
        %v1019 = vld [vmem:[%s685 + $0x218] sm:$0xff]
        %v1020 = vld [vmem:[%s685 + $0x220] sm:$0xff]
        %v1021 = vld [vmem:[%s685 + $0x228] sm:$0xff]
        %v1022 = vld [vmem:[%s685 + $0x230] sm:$0xff]
        %v1023 = vld [vmem:[%s685 + $0x238] sm:$0xff]
        %v1024 = vld [vmem:[%s685 + $0x240] sm:$0xff]
        %v1025 = vld [vmem:[%s685 + $0x248] sm:$0xff]
        %v1026 = vld [vmem:[%s685 + $0x250] sm:$0xff]
        %v1027 = vld [vmem:[%s685 + $0x258] sm:$0xff]
        %v1028 = vld [vmem:[%s685 + $0x260] sm:$0xff]
        %v1029 = vld [vmem:[%s685 + $0x268] sm:$0xff]
        %v1030 = vld [vmem:[%s685 + $0x270] sm:$0xff]
        %v1031 = vld [vmem:[%s685 + $0x278] sm:$0xff]
        %v1032 = vld [vmem:[%s685 + $0x280] sm:$0xff]
        %v1033 = vld [vmem:[%s685 + $0x288] sm:$0xff]
        %v1034 = vld [vmem:[%s685 + $0x290] sm:$0xff]
        %v1035 = vld [vmem:[%s685 + $0x298] sm:$0xff]
        %v1036 = vld [vmem:[%s685 + $0x2a0] sm:$0xff]
        %v1037 = vld [vmem:[%s685 + $0x2a8] sm:$0xff]
        %v1038 = vld [vmem:[%s685 + $0x2b0] sm:$0xff]
        %v1039 = vld [vmem:[%s685 + $0x2b8] sm:$0xff]
        %v1040 = vld [vmem:[%s685 + $0x2c0] sm:$0xff]
        %v1041 = vld [vmem:[%s685 + $0x2c8] sm:$0xff]
        %v1042 = vld [vmem:[%s685 + $0x2d0] sm:$0xff]
        %v1043 = vld [vmem:[%s685 + $0x2d8] sm:$0xff]
        %v1044 = vld [vmem:[%s685 + $0x2e0] sm:$0xff]
        %v1045 = vld [vmem:[%s685 + $0x2e8] sm:$0xff]
        %v1046 = vld [vmem:[%s685 + $0x2f0] sm:$0xff]
        %v1047 = vld [vmem:[%s685 + $0x2f8] sm:$0xff]
        %v1048 = vpack.c.bf16 %v922, %v920
        %v1049 = vpack.c.bf16 %v923, %v921
        %v1050 = vpack.c.bf16 %v926, %v924
        %v1051 = vpack.c.bf16 %v927, %v925
        %v1052 = vpack.c.bf16 %v930, %v928
        %v1053 = vpack.c.bf16 %v931, %v929
        %v1054 = vpack.c.bf16 %v934, %v932
        %v1055 = vpack.c.bf16 %v935, %v933
        %v1056 = vpack.c.bf16 %v938, %v936
        %v1057 = vpack.c.bf16 %v939, %v937
        %v1058 = vpack.c.bf16 %v942, %v940
        %v1059 = vpack.c.bf16 %v943, %v941
        %v1060 = vpack.c.bf16 %v946, %v944
        %v1061 = vpack.c.bf16 %v947, %v945
        %v1062 = vpack.c.bf16 %v950, %v948
        %v1063 = vpack.c.bf16 %v951, %v949
        %v1064 = vld [vmem:[%s834] sm:$0x3f]
        %v1066 = vlaneseq
        %v1067 = vshrl.u32 %v1066, 7
        %v1068 = vsub.s32 0, %v1067
        %v1069 = vrot.slane %v1064, %v1068
        %v1070 = vlaneseq
        %v1071 = vshrl.u32 %v1070, 7
        %v1072 = vsub.s32 1, %v1071
        %v1073 = vrot.slane %v1064, %v1072
        %v1074 = vlaneseq
        %v1075 = vshrl.u32 %v1074, 7
        %v1076 = vsub.s32 2, %v1075
        %v1077 = vrot.slane %v1064, %v1076
        %v1078 = vlaneseq
        %v1079 = vshrl.u32 %v1078, 7
        %v1080 = vsub.s32 3, %v1079
        %v1081 = vrot.slane %v1064, %v1080
        %v1082 = vlaneseq
        %v1083 = vshrl.u32 %v1082, 7
        %v1084 = vsub.s32 4, %v1083
        %v1085 = vrot.slane %v1064, %v1084
        %v1086 = vlaneseq
        %v1087 = vshrl.u32 %v1086, 7
        %v1088 = vsub.s32 5, %v1087
        %v1089 = vrot.slane %v1064, %v1088
        %v1192 = vunpack.c.l.b16 %v952
        %v1193 = vunpack.c.h.b16 %v952
        %v1194 = vunpack.c.l.b16 %v953
        %v1195 = vunpack.c.h.b16 %v953
        %v1196 = vunpack.c.l.b16 %v954
        %v1197 = vunpack.c.h.b16 %v954
        %v1198 = vunpack.c.l.b16 %v955
        %v1199 = vunpack.c.h.b16 %v955
        %v1200 = vunpack.c.l.b16 %v956
        %v1201 = vunpack.c.h.b16 %v956
        %v1202 = vunpack.c.l.b16 %v957
        %v1203 = vunpack.c.h.b16 %v957
        %v1204 = vunpack.c.l.b16 %v958
        %v1205 = vunpack.c.h.b16 %v958
        %v1206 = vunpack.c.l.b16 %v959
        %v1207 = vunpack.c.h.b16 %v959
        %v1208 = vunpack.c.l.b16 %v960
        %v1209 = vunpack.c.h.b16 %v960
        %v1210 = vunpack.c.l.b16 %v961
        %v1211 = vunpack.c.h.b16 %v961
        %v1212 = vunpack.c.l.b16 %v962
        %v1213 = vunpack.c.h.b16 %v962
        %v1214 = vunpack.c.l.b16 %v963
        %v1215 = vunpack.c.h.b16 %v963
        %v1216 = vunpack.c.l.b16 %v964
        %v1217 = vunpack.c.h.b16 %v964
        %v1218 = vunpack.c.l.b16 %v965
        %v1219 = vunpack.c.h.b16 %v965
        %v1220 = vunpack.c.l.b16 %v966
        %v1221 = vunpack.c.h.b16 %v966
        %v1222 = vunpack.c.l.b16 %v967
        %v1223 = vunpack.c.h.b16 %v967
        %v1224 = vunpack.c.l.b16 %v968
        %v1225 = vunpack.c.h.b16 %v968
        %v1226 = vunpack.c.l.b16 %v969
        %v1227 = vunpack.c.h.b16 %v969
        %v1228 = vunpack.c.l.b16 %v970
        %v1229 = vunpack.c.h.b16 %v970
        %v1230 = vunpack.c.l.b16 %v971
        %v1231 = vunpack.c.h.b16 %v971
        %v1232 = vunpack.c.l.b16 %v972
        %v1233 = vunpack.c.h.b16 %v972
        %v1234 = vunpack.c.l.b16 %v973
        %v1235 = vunpack.c.h.b16 %v973
        %v1236 = vunpack.c.l.b16 %v974
        %v1237 = vunpack.c.h.b16 %v974
        %v1238 = vunpack.c.l.b16 %v975
        %v1239 = vunpack.c.h.b16 %v975
        %v1240 = vunpack.c.l.b16 %v976
        %v1241 = vunpack.c.h.b16 %v976
        %v1242 = vunpack.c.l.b16 %v977
        %v1243 = vunpack.c.h.b16 %v977
        %v1244 = vunpack.c.l.b16 %v978
        %v1245 = vunpack.c.h.b16 %v978
        %v1246 = vunpack.c.l.b16 %v979
        %v1247 = vunpack.c.h.b16 %v979
        %v1248 = vunpack.c.l.b16 %v980
        %v1249 = vunpack.c.h.b16 %v980
        %v1250 = vunpack.c.l.b16 %v981
        %v1251 = vunpack.c.h.b16 %v981
        %v1252 = vunpack.c.l.b16 %v982
        %v1253 = vunpack.c.h.b16 %v982
        %v1254 = vunpack.c.l.b16 %v983
        %v1255 = vunpack.c.h.b16 %v983
        %v1256 = vunpack.c.l.b16 %v984
        %v1257 = vunpack.c.h.b16 %v984
        %v1258 = vunpack.c.l.b16 %v985
        %v1259 = vunpack.c.h.b16 %v985
        %v1260 = vunpack.c.l.b16 %v986
        %v1261 = vunpack.c.h.b16 %v986
        %v1262 = vunpack.c.l.b16 %v987
        %v1263 = vunpack.c.h.b16 %v987
        %v1264 = vunpack.c.l.b16 %v988
        %v1265 = vunpack.c.h.b16 %v988
        %v1266 = vunpack.c.l.b16 %v989
        %v1267 = vunpack.c.h.b16 %v989
        %v1268 = vunpack.c.l.b16 %v990
        %v1269 = vunpack.c.h.b16 %v990
        %v1270 = vunpack.c.l.b16 %v991
        %v1271 = vunpack.c.h.b16 %v991
        %v1272 = vunpack.c.l.b16 %v992
        %v1273 = vunpack.c.h.b16 %v992
        %v1274 = vunpack.c.l.b16 %v993
        %v1275 = vunpack.c.h.b16 %v993
        %v1276 = vunpack.c.l.b16 %v994
        %v1277 = vunpack.c.h.b16 %v994
        %v1278 = vunpack.c.l.b16 %v995
        %v1279 = vunpack.c.h.b16 %v995
        %v1280 = vunpack.c.l.b16 %v996
        %v1281 = vunpack.c.h.b16 %v996
        %v1282 = vunpack.c.l.b16 %v997
        %v1283 = vunpack.c.h.b16 %v997
        %v1284 = vunpack.c.l.b16 %v998
        %v1285 = vunpack.c.h.b16 %v998
        %v1286 = vunpack.c.l.b16 %v999
        %v1287 = vunpack.c.h.b16 %v999
        %v1288 = vunpack.c.l.b16 %v1000
        %v1289 = vunpack.c.h.b16 %v1000
        %v1290 = vunpack.c.l.b16 %v1001
        %v1291 = vunpack.c.h.b16 %v1001
        %v1292 = vunpack.c.l.b16 %v1002
        %v1293 = vunpack.c.h.b16 %v1002
        %v1294 = vunpack.c.l.b16 %v1003
        %v1295 = vunpack.c.h.b16 %v1003
        %v1296 = vunpack.c.l.b16 %v1004
        %v1297 = vunpack.c.h.b16 %v1004
        %v1298 = vunpack.c.l.b16 %v1005
        %v1299 = vunpack.c.h.b16 %v1005
        %v1300 = vunpack.c.l.b16 %v1006
        %v1301 = vunpack.c.h.b16 %v1006
        %v1302 = vunpack.c.l.b16 %v1007
        %v1303 = vunpack.c.h.b16 %v1007
        %v1304 = vunpack.c.l.b16 %v1008
        %v1305 = vunpack.c.h.b16 %v1008
        %v1306 = vunpack.c.l.b16 %v1009
        %v1307 = vunpack.c.h.b16 %v1009
        %v1308 = vunpack.c.l.b16 %v1010
        %v1309 = vunpack.c.h.b16 %v1010
        %v1310 = vunpack.c.l.b16 %v1011
        %v1311 = vunpack.c.h.b16 %v1011
        %v1312 = vunpack.c.l.b16 %v1012
        %v1313 = vunpack.c.h.b16 %v1012
        %v1314 = vunpack.c.l.b16 %v1013
        %v1315 = vunpack.c.h.b16 %v1013
        %v1316 = vunpack.c.l.b16 %v1014
        %v1317 = vunpack.c.h.b16 %v1014
        %v1318 = vunpack.c.l.b16 %v1015
        %v1319 = vunpack.c.h.b16 %v1015
        %v1320 = vunpack.c.l.b16 %v1016
        %v1321 = vunpack.c.h.b16 %v1016
        %v1322 = vunpack.c.l.b16 %v1017
        %v1323 = vunpack.c.h.b16 %v1017
        %v1324 = vunpack.c.l.b16 %v1018
        %v1325 = vunpack.c.h.b16 %v1018
        %v1326 = vunpack.c.l.b16 %v1019
        %v1327 = vunpack.c.h.b16 %v1019
        %v1328 = vunpack.c.l.b16 %v1020
        %v1329 = vunpack.c.h.b16 %v1020
        %v1330 = vunpack.c.l.b16 %v1021
        %v1331 = vunpack.c.h.b16 %v1021
        %v1332 = vunpack.c.l.b16 %v1022
        %v1333 = vunpack.c.h.b16 %v1022
        %v1334 = vunpack.c.l.b16 %v1023
        %v1335 = vunpack.c.h.b16 %v1023
        %v1336 = vunpack.c.l.b16 %v1024
        %v1337 = vunpack.c.h.b16 %v1024
        %v1338 = vunpack.c.l.b16 %v1025
        %v1339 = vunpack.c.h.b16 %v1025
        %v1340 = vunpack.c.l.b16 %v1026
        %v1341 = vunpack.c.h.b16 %v1026
        %v1342 = vunpack.c.l.b16 %v1027
        %v1343 = vunpack.c.h.b16 %v1027
        %v1344 = vunpack.c.l.b16 %v1028
        %v1345 = vunpack.c.h.b16 %v1028
        %v1346 = vunpack.c.l.b16 %v1029
        %v1347 = vunpack.c.h.b16 %v1029
        %v1348 = vunpack.c.l.b16 %v1030
        %v1349 = vunpack.c.h.b16 %v1030
        %v1350 = vunpack.c.l.b16 %v1031
        %v1351 = vunpack.c.h.b16 %v1031
        %v1352 = vunpack.c.l.b16 %v1032
        %v1353 = vunpack.c.h.b16 %v1032
        %v1354 = vunpack.c.l.b16 %v1033
        %v1355 = vunpack.c.h.b16 %v1033
        %v1356 = vunpack.c.l.b16 %v1034
        %v1357 = vunpack.c.h.b16 %v1034
        %v1358 = vunpack.c.l.b16 %v1035
        %v1359 = vunpack.c.h.b16 %v1035
        %v1360 = vunpack.c.l.b16 %v1036
        %v1361 = vunpack.c.h.b16 %v1036
        %v1362 = vunpack.c.l.b16 %v1037
        %v1363 = vunpack.c.h.b16 %v1037
        %v1364 = vunpack.c.l.b16 %v1038
        %v1365 = vunpack.c.h.b16 %v1038
        %v1366 = vunpack.c.l.b16 %v1039
        %v1367 = vunpack.c.h.b16 %v1039
        %v1368 = vunpack.c.l.b16 %v1040
        %v1369 = vunpack.c.h.b16 %v1040
        %v1370 = vunpack.c.l.b16 %v1041
        %v1371 = vunpack.c.h.b16 %v1041
        %v1372 = vunpack.c.l.b16 %v1042
        %v1373 = vunpack.c.h.b16 %v1042
        %v1374 = vunpack.c.l.b16 %v1043
        %v1375 = vunpack.c.h.b16 %v1043
        %v1376 = vunpack.c.l.b16 %v1044
        %v1377 = vunpack.c.h.b16 %v1044
        %v1378 = vunpack.c.l.b16 %v1045
        %v1379 = vunpack.c.h.b16 %v1045
        %v1380 = vunpack.c.l.b16 %v1046
        %v1381 = vunpack.c.h.b16 %v1046
        %v1382 = vunpack.c.l.b16 %v1047
        %v1383 = vunpack.c.h.b16 %v1047
        %v1384 = vpack.c.b16 %v1198, %v1192
        %v1385 = vpack.c.b16 %v1199, %v1193
        %v1386 = vpack.c.b16 %v1200, %v1194
        %v1387 = vpack.c.b16 %v1201, %v1195
        %v1388 = vpack.c.b16 %v1202, %v1196
        %v1389 = vpack.c.b16 %v1203, %v1197
        %v1390 = vpack.c.b16 %v1210, %v1204
        %v1391 = vpack.c.b16 %v1211, %v1205
        %v1392 = vpack.c.b16 %v1212, %v1206
        %v1393 = vpack.c.b16 %v1213, %v1207
        %v1394 = vpack.c.b16 %v1214, %v1208
        %v1395 = vpack.c.b16 %v1215, %v1209
        %v1396 = vpack.c.b16 %v1222, %v1216
        %v1397 = vpack.c.b16 %v1223, %v1217
        %v1398 = vpack.c.b16 %v1224, %v1218
        %v1399 = vpack.c.b16 %v1225, %v1219
        %v1400 = vpack.c.b16 %v1226, %v1220
        %v1401 = vpack.c.b16 %v1227, %v1221
        %v1402 = vpack.c.b16 %v1234, %v1228
        %v1403 = vpack.c.b16 %v1235, %v1229
        %v1404 = vpack.c.b16 %v1236, %v1230
        %v1405 = vpack.c.b16 %v1237, %v1231
        %v1406 = vpack.c.b16 %v1238, %v1232
        %v1407 = vpack.c.b16 %v1239, %v1233
        %v1408 = vpack.c.b16 %v1246, %v1240
        %v1409 = vpack.c.b16 %v1247, %v1241
        %v1410 = vpack.c.b16 %v1248, %v1242
        %v1411 = vpack.c.b16 %v1249, %v1243
        %v1412 = vpack.c.b16 %v1250, %v1244
        %v1413 = vpack.c.b16 %v1251, %v1245
        %v1414 = vpack.c.b16 %v1258, %v1252
        %v1415 = vpack.c.b16 %v1259, %v1253
        %v1416 = vpack.c.b16 %v1260, %v1254
        %v1417 = vpack.c.b16 %v1261, %v1255
        %v1418 = vpack.c.b16 %v1262, %v1256
        %v1419 = vpack.c.b16 %v1263, %v1257
        %v1420 = vpack.c.b16 %v1270, %v1264
        %v1421 = vpack.c.b16 %v1271, %v1265
        %v1422 = vpack.c.b16 %v1272, %v1266
        %v1423 = vpack.c.b16 %v1273, %v1267
        %v1424 = vpack.c.b16 %v1274, %v1268
        %v1425 = vpack.c.b16 %v1275, %v1269
        %v1426 = vpack.c.b16 %v1282, %v1276
        %v1427 = vpack.c.b16 %v1283, %v1277
        %v1428 = vpack.c.b16 %v1284, %v1278
        %v1429 = vpack.c.b16 %v1285, %v1279
        %v1430 = vpack.c.b16 %v1286, %v1280
        %v1431 = vpack.c.b16 %v1287, %v1281
        %v1432 = vpack.c.b16 %v1294, %v1288
        %v1433 = vpack.c.b16 %v1295, %v1289
        %v1434 = vpack.c.b16 %v1296, %v1290
        %v1435 = vpack.c.b16 %v1297, %v1291
        %v1436 = vpack.c.b16 %v1298, %v1292
        %v1437 = vpack.c.b16 %v1299, %v1293
        %v1438 = vpack.c.b16 %v1306, %v1300
        %v1439 = vpack.c.b16 %v1307, %v1301
        %v1440 = vpack.c.b16 %v1308, %v1302
        %v1441 = vpack.c.b16 %v1309, %v1303
        %v1442 = vpack.c.b16 %v1310, %v1304
        %v1443 = vpack.c.b16 %v1311, %v1305
        %v1444 = vpack.c.b16 %v1318, %v1312
        %v1445 = vpack.c.b16 %v1319, %v1313
        %v1446 = vpack.c.b16 %v1320, %v1314
        %v1447 = vpack.c.b16 %v1321, %v1315
        %v1448 = vpack.c.b16 %v1322, %v1316
        %v1449 = vpack.c.b16 %v1323, %v1317
        %v1450 = vpack.c.b16 %v1330, %v1324
        %v1451 = vpack.c.b16 %v1331, %v1325
        %v1452 = vpack.c.b16 %v1332, %v1326
        %v1453 = vpack.c.b16 %v1333, %v1327
        %v1454 = vpack.c.b16 %v1334, %v1328
        %v1455 = vpack.c.b16 %v1335, %v1329
        %v1456 = vpack.c.b16 %v1342, %v1336
        %v1457 = vpack.c.b16 %v1343, %v1337
        %v1458 = vpack.c.b16 %v1344, %v1338
        %v1459 = vpack.c.b16 %v1345, %v1339
        %v1460 = vpack.c.b16 %v1346, %v1340
        %v1461 = vpack.c.b16 %v1347, %v1341
        %v1462 = vpack.c.b16 %v1354, %v1348
        %v1463 = vpack.c.b16 %v1355, %v1349
        %v1464 = vpack.c.b16 %v1356, %v1350
        %v1465 = vpack.c.b16 %v1357, %v1351
        %v1466 = vpack.c.b16 %v1358, %v1352
        %v1467 = vpack.c.b16 %v1359, %v1353
        %v1468 = vpack.c.b16 %v1366, %v1360
        %v1469 = vpack.c.b16 %v1367, %v1361
        %v1470 = vpack.c.b16 %v1368, %v1362
        %v1471 = vpack.c.b16 %v1369, %v1363
        %v1472 = vpack.c.b16 %v1370, %v1364
        %v1473 = vpack.c.b16 %v1371, %v1365
        %v1474 = vpack.c.b16 %v1378, %v1372
        %v1475 = vpack.c.b16 %v1379, %v1373
        %v1476 = vpack.c.b16 %v1380, %v1374
        %v1477 = vpack.c.b16 %v1381, %v1375
        %v1478 = vpack.c.b16 %v1382, %v1376
        %v1479 = vpack.c.b16 %v1383, %v1377
        %1576 = vmatprep.subr.bf16.mxu0 %v1385
        %1577 = vmatpush1.bf16.msra.mxu0 %v1384
        %1578 = vmatprep.subr.bf16.mxu0 %v1391
        %1579 = vmatpush1.bf16.msra.mxu0 %v1390
        %1580 = vmatprep.subr.bf16.mxu0 %v1397
        %1581 = vmatpush1.bf16.msra.mxu0 %v1396
        %1582 = vmatprep.subr.bf16.mxu0 %v1403
        %1583 = vmatpush1.bf16.msra.mxu0 %v1402
        %1584 = vmatprep.subr.bf16.mxu0 %v1409
        %1585 = vmatpush1.bf16.msra.mxu0 %v1408
        %1586 = vmatprep.subr.bf16.mxu0 %v1415
        %1587 = vmatpush1.bf16.msra.mxu0 %v1414
        %1588 = vmatprep.subr.bf16.mxu0 %v1421
        %1589 = vmatpush1.bf16.msra.mxu0 %v1420
        %1590 = vmatprep.subr.bf16.mxu0 %v1427
        %1591 = vmatpush1.bf16.msra.mxu0 %v1426
        %1592 = vmatprep.subr.bf16.mxu0 %v1433
        %1593 = vmatpush1.bf16.msra.mxu0 %v1432
        %1594 = vmatprep.subr.bf16.mxu0 %v1439
        %1595 = vmatpush1.bf16.msra.mxu0 %v1438
        %1596 = vmatprep.subr.bf16.mxu0 %v1445
        %1597 = vmatpush1.bf16.msra.mxu0 %v1444
        %1598 = vmatprep.subr.bf16.mxu0 %v1451
        %1599 = vmatpush1.bf16.msra.mxu0 %v1450
        %1600 = vmatprep.subr.bf16.mxu0 %v1457
        %1601 = vmatpush1.bf16.msra.mxu0 %v1456
        %1602 = vmatprep.subr.bf16.mxu0 %v1463
        %1603 = vmatpush1.bf16.msra.mxu0 %v1462
        %1604 = vmatprep.subr.bf16.mxu0 %v1469
        %1605 = vmatpush1.bf16.msra.mxu0 %v1468
        %1606 = vmatprep.subr.bf16.mxu0 %v1475
        %1607 = vmatpush1.bf16.msra.mxu0 %v1474
        %1608 = vmatprep.mubr.bf16.mxu0 %v1049
        %1609 = vmatmul.mubr.bf16.gmra.mrb[0].mxu0 %v1048
        %v1610 = vpop.f32.mrb[0].mxu0
        %v1611 = vadd.f32 %v1069, %v1610
        %v1612 = vpop.f32.mrb[0].mxu0
        %v1613 = vadd.f32 %v1073, %v1612
        %v1614 = vpop.f32.mrb[0].mxu0
        %v1615 = vadd.f32 %v1069, %v1614
        %v1616 = vpop.f32.mrb[0].mxu0
        %v1617 = vadd.f32 %v1073, %v1616
        %1618 = vmatprep.mubr.bf16.mxu0 %v1051
        %1619 = vmatmul.mubr.bf16.gmra.mrb[0].mxu0 %v1050
        %v1620 = vpop.f32.mrb[0].mxu0
        %v1621 = vadd.f32 %v1069, %v1620
        %v1622 = vpop.f32.mrb[0].mxu0
        %v1623 = vadd.f32 %v1073, %v1622
        %v1624 = vpop.f32.mrb[0].mxu0
        %v1625 = vadd.f32 %v1069, %v1624
        %v1626 = vpop.f32.mrb[0].mxu0
        %v1627 = vadd.f32 %v1073, %v1626
        %1628 = vmatprep.mubr.bf16.mxu0 %v1053
        %1629 = vmatmul.mubr.bf16.gmra.mrb[0].mxu0 %v1052
        %v1630 = vpop.f32.mrb[0].mxu0
        %v1631 = vadd.f32 %v1069, %v1630
        %v1632 = vpop.f32.mrb[0].mxu0
        %v1633 = vadd.f32 %v1073, %v1632
        %v1634 = vpop.f32.mrb[0].mxu0
        %v1635 = vadd.f32 %v1069, %v1634
        %v1636 = vpop.f32.mrb[0].mxu0
        %v1637 = vadd.f32 %v1073, %v1636
        %1638 = vmatprep.mubr.bf16.mxu0 %v1055
        %1639 = vmatmul.mubr.bf16.gmra.mrb[0].mxu0 %v1054
        %v1640 = vpop.f32.mrb[0].mxu0
        %v1641 = vadd.f32 %v1069, %v1640
        %v1642 = vpop.f32.mrb[0].mxu0
        %v1643 = vadd.f32 %v1073, %v1642
        %v1644 = vpop.f32.mrb[0].mxu0
        %v1645 = vadd.f32 %v1069, %v1644
        %v1646 = vpop.f32.mrb[0].mxu0
        %v1647 = vadd.f32 %v1073, %v1646
        %1648 = vmatprep.mubr.bf16.mxu0 %v1057
        %1649 = vmatmul.mubr.bf16.gmra.mrb[0].mxu0 %v1056
        %v1650 = vpop.f32.mrb[0].mxu0
        %v1651 = vadd.f32 %v1069, %v1650
        %v1652 = vpop.f32.mrb[0].mxu0
        %v1653 = vadd.f32 %v1073, %v1652
        %v1654 = vpop.f32.mrb[0].mxu0
        %v1655 = vadd.f32 %v1069, %v1654
        %v1656 = vpop.f32.mrb[0].mxu0
        %v1657 = vadd.f32 %v1073, %v1656
        %1658 = vmatprep.mubr.bf16.mxu0 %v1059
        %1659 = vmatmul.mubr.bf16.gmra.mrb[0].mxu0 %v1058
        %v1660 = vpop.f32.mrb[0].mxu0
        %v1661 = vadd.f32 %v1069, %v1660
        %v1662 = vpop.f32.mrb[0].mxu0
        %v1663 = vadd.f32 %v1073, %v1662
        %v1664 = vpop.f32.mrb[0].mxu0
        %v1665 = vadd.f32 %v1069, %v1664
        %v1666 = vpop.f32.mrb[0].mxu0
        %v1667 = vadd.f32 %v1073, %v1666
        %1668 = vmatprep.mubr.bf16.mxu0 %v1061
        %1669 = vmatmul.mubr.bf16.gmra.mrb[0].mxu0 %v1060
        %v1670 = vpop.f32.mrb[0].mxu0
        %v1671 = vadd.f32 %v1069, %v1670
        %v1672 = vpop.f32.mrb[0].mxu0
        %v1673 = vadd.f32 %v1073, %v1672
        %v1674 = vpop.f32.mrb[0].mxu0
        %v1675 = vadd.f32 %v1069, %v1674
        %v1676 = vpop.f32.mrb[0].mxu0
        %v1677 = vadd.f32 %v1073, %v1676
        %1678 = vmatprep.mubr.bf16.mxu0 %v1063
        %1679 = vmatmul.mubr.bf16.gmra.mrb[0].mxu0 %v1062
        %v1680 = vpop.f32.mrb[0].mxu0
        %v1681 = vadd.f32 %v1069, %v1680
        %v1682 = vpop.f32.mrb[0].mxu0
        %v1683 = vadd.f32 %v1073, %v1682
        %v1684 = vpop.f32.mrb[0].mxu0
        %v1685 = vadd.f32 %v1069, %v1684
        %v1686 = vpop.f32.mrb[0].mxu0
        %v1687 = vadd.f32 %v1073, %v1686
        %1688 = vdwg.mxu0
        %1689 = vmatprep.subr.bf16.mxu0 %v1387
        %1690 = vmatpush1.bf16.msra.mxu0 %v1386
        %1691 = vmatprep.subr.bf16.mxu0 %v1393
        %1692 = vmatpush1.bf16.msra.mxu0 %v1392
        %1693 = vmatprep.subr.bf16.mxu0 %v1399
        %1694 = vmatpush1.bf16.msra.mxu0 %v1398
        %1695 = vmatprep.subr.bf16.mxu0 %v1405
        %1696 = vmatpush1.bf16.msra.mxu0 %v1404
        %1697 = vmatprep.subr.bf16.mxu0 %v1411
        %1698 = vmatpush1.bf16.msra.mxu0 %v1410
        %1699 = vmatprep.subr.bf16.mxu0 %v1417
        %1700 = vmatpush1.bf16.msra.mxu0 %v1416
        %1701 = vmatprep.subr.bf16.mxu0 %v1423
        %1702 = vmatpush1.bf16.msra.mxu0 %v1422
        %1703 = vmatprep.subr.bf16.mxu0 %v1429
        %1704 = vmatpush1.bf16.msra.mxu0 %v1428
        %1705 = vmatprep.subr.bf16.mxu0 %v1435
        %1706 = vmatpush1.bf16.msra.mxu0 %v1434
        %1707 = vmatprep.subr.bf16.mxu0 %v1441
        %1708 = vmatpush1.bf16.msra.mxu0 %v1440
        %1709 = vmatprep.subr.bf16.mxu0 %v1447
        %1710 = vmatpush1.bf16.msra.mxu0 %v1446
        %1711 = vmatprep.subr.bf16.mxu0 %v1453
        %1712 = vmatpush1.bf16.msra.mxu0 %v1452
        %1713 = vmatprep.subr.bf16.mxu0 %v1459
        %1714 = vmatpush1.bf16.msra.mxu0 %v1458
        %1715 = vmatprep.subr.bf16.mxu0 %v1465
        %1716 = vmatpush1.bf16.msra.mxu0 %v1464
        %1717 = vmatprep.subr.bf16.mxu0 %v1471
        %1718 = vmatpush1.bf16.msra.mxu0 %v1470
        %1719 = vmatprep.subr.bf16.mxu0 %v1477
        %1720 = vmatpush1.bf16.msra.mxu0 %v1476
        %1721 = vmatprep.mubr.bf16.mxu0 %v1049
        %1722 = vmatmul.mubr.bf16.gmra.mrb[0].mxu0 %v1048
        %v1723 = vpop.f32.mrb[0].mxu0
        %v1724 = vadd.f32 %v1077, %v1723
        %v1725 = vpop.f32.mrb[0].mxu0
        %v1726 = vadd.f32 %v1081, %v1725
        %v1727 = vpop.f32.mrb[0].mxu0
        %v1728 = vadd.f32 %v1077, %v1727
        %v1729 = vpop.f32.mrb[0].mxu0
        %v1730 = vadd.f32 %v1081, %v1729
        %1731 = vmatprep.mubr.bf16.mxu0 %v1051
        %1732 = vmatmul.mubr.bf16.gmra.mrb[0].mxu0 %v1050
        %v1733 = vpop.f32.mrb[0].mxu0
        %v1734 = vadd.f32 %v1077, %v1733
        %v1735 = vpop.f32.mrb[0].mxu0
        %v1736 = vadd.f32 %v1081, %v1735
        %v1737 = vpop.f32.mrb[0].mxu0
        %v1738 = vadd.f32 %v1077, %v1737
        %v1739 = vpop.f32.mrb[0].mxu0
        %v1740 = vadd.f32 %v1081, %v1739
        %1741 = vmatprep.mubr.bf16.mxu0 %v1053
        %1742 = vmatmul.mubr.bf16.gmra.mrb[0].mxu0 %v1052
        %v1743 = vpop.f32.mrb[0].mxu0
        %v1744 = vadd.f32 %v1077, %v1743
        %v1745 = vpop.f32.mrb[0].mxu0
        %v1746 = vadd.f32 %v1081, %v1745
        %v1747 = vpop.f32.mrb[0].mxu0
        %v1748 = vadd.f32 %v1077, %v1747
        %v1749 = vpop.f32.mrb[0].mxu0
        %v1750 = vadd.f32 %v1081, %v1749
        %1751 = vmatprep.mubr.bf16.mxu0 %v1055
        %1752 = vmatmul.mubr.bf16.gmra.mrb[0].mxu0 %v1054
        %v1753 = vpop.f32.mrb[0].mxu0
        %v1754 = vadd.f32 %v1077, %v1753
        %v1755 = vpop.f32.mrb[0].mxu0
        %v1756 = vadd.f32 %v1081, %v1755
        %v1757 = vpop.f32.mrb[0].mxu0
        %v1758 = vadd.f32 %v1077, %v1757
        %v1759 = vpop.f32.mrb[0].mxu0
        %v1760 = vadd.f32 %v1081, %v1759
        %1761 = vmatprep.mubr.bf16.mxu0 %v1057
        %1762 = vmatmul.mubr.bf16.gmra.mrb[0].mxu0 %v1056
        %v1763 = vpop.f32.mrb[0].mxu0
        %v1764 = vadd.f32 %v1077, %v1763
        %v1765 = vpop.f32.mrb[0].mxu0
        %v1766 = vadd.f32 %v1081, %v1765
        %v1767 = vpop.f32.mrb[0].mxu0
        %v1768 = vadd.f32 %v1077, %v1767
        %v1769 = vpop.f32.mrb[0].mxu0
        %v1770 = vadd.f32 %v1081, %v1769
        %1771 = vmatprep.mubr.bf16.mxu0 %v1059
        %1772 = vmatmul.mubr.bf16.gmra.mrb[0].mxu0 %v1058
        %v1773 = vpop.f32.mrb[0].mxu0
        %v1774 = vadd.f32 %v1077, %v1773
        %v1775 = vpop.f32.mrb[0].mxu0
        %v1776 = vadd.f32 %v1081, %v1775
        %v1777 = vpop.f32.mrb[0].mxu0
        %v1778 = vadd.f32 %v1077, %v1777
        %v1779 = vpop.f32.mrb[0].mxu0
        %v1780 = vadd.f32 %v1081, %v1779
        %1781 = vmatprep.mubr.bf16.mxu0 %v1061
        %1782 = vmatmul.mubr.bf16.gmra.mrb[0].mxu0 %v1060
        %v1783 = vpop.f32.mrb[0].mxu0
        %v1784 = vadd.f32 %v1077, %v1783
        %v1785 = vpop.f32.mrb[0].mxu0
        %v1786 = vadd.f32 %v1081, %v1785
        %v1787 = vpop.f32.mrb[0].mxu0
        %v1788 = vadd.f32 %v1077, %v1787
        %v1789 = vpop.f32.mrb[0].mxu0
        %v1790 = vadd.f32 %v1081, %v1789
        %1791 = vmatprep.mubr.bf16.mxu0 %v1063
        %1792 = vmatmul.mubr.bf16.gmra.mrb[0].mxu0 %v1062
        %v1793 = vpop.f32.mrb[0].mxu0
        %v1794 = vadd.f32 %v1077, %v1793
        %v1795 = vpop.f32.mrb[0].mxu0
        %v1796 = vadd.f32 %v1081, %v1795
        %v1797 = vpop.f32.mrb[0].mxu0
        %v1798 = vadd.f32 %v1077, %v1797
        %v1799 = vpop.f32.mrb[0].mxu0
        %v1800 = vadd.f32 %v1081, %v1799
        %1801 = vdwg.mxu0
        %1802 = vmatprep.subr.bf16.mxu0 %v1389
        %1803 = vmatpush1.bf16.msra.mxu0 %v1388
        %1804 = vmatprep.subr.bf16.mxu0 %v1395
        %1805 = vmatpush1.bf16.msra.mxu0 %v1394
        %1806 = vmatprep.subr.bf16.mxu0 %v1401
        %1807 = vmatpush1.bf16.msra.mxu0 %v1400
        %1808 = vmatprep.subr.bf16.mxu0 %v1407
        %1809 = vmatpush1.bf16.msra.mxu0 %v1406
        %1810 = vmatprep.subr.bf16.mxu0 %v1413
        %1811 = vmatpush1.bf16.msra.mxu0 %v1412
        %1812 = vmatprep.subr.bf16.mxu0 %v1419
        %1813 = vmatpush1.bf16.msra.mxu0 %v1418
        %1814 = vmatprep.subr.bf16.mxu0 %v1425
        %1815 = vmatpush1.bf16.msra.mxu0 %v1424
        %1816 = vmatprep.subr.bf16.mxu0 %v1431
        %1817 = vmatpush1.bf16.msra.mxu0 %v1430
        %1818 = vmatprep.subr.bf16.mxu0 %v1437
        %1819 = vmatpush1.bf16.msra.mxu0 %v1436
        %1820 = vmatprep.subr.bf16.mxu0 %v1443
        %1821 = vmatpush1.bf16.msra.mxu0 %v1442
        %1822 = vmatprep.subr.bf16.mxu0 %v1449
        %1823 = vmatpush1.bf16.msra.mxu0 %v1448
        %1824 = vmatprep.subr.bf16.mxu0 %v1455
        %1825 = vmatpush1.bf16.msra.mxu0 %v1454
        %1826 = vmatprep.subr.bf16.mxu0 %v1461
        %1827 = vmatpush1.bf16.msra.mxu0 %v1460
        %1828 = vmatprep.subr.bf16.mxu0 %v1467
        %1829 = vmatpush1.bf16.msra.mxu0 %v1466
        %1830 = vmatprep.subr.bf16.mxu0 %v1473
        %1831 = vmatpush1.bf16.msra.mxu0 %v1472
        %1832 = vmatprep.subr.bf16.mxu0 %v1479
        %1833 = vmatpush1.bf16.msra.mxu0 %v1478
        %1834 = vmatprep.mubr.bf16.mxu0 %v1049
        %1835 = vmatmul.mubr.bf16.gmra.mrb[0].mxu0 %v1048
        %v1836 = vpop.f32.mrb[0].mxu0
        %v1837 = vadd.f32 %v1085, %v1836
        %v1838 = vpop.f32.mrb[0].mxu0
        %v1839 = vadd.f32 %v1089, %v1838
        %v1840 = vpop.f32.mrb[0].mxu0
        %v1841 = vadd.f32 %v1085, %v1840
        %v1842 = vpop.f32.mrb[0].mxu0
        %v1843 = vadd.f32 %v1089, %v1842
        %1844 = vmatprep.mubr.bf16.mxu0 %v1051
        %1845 = vmatmul.mubr.bf16.gmra.mrb[0].mxu0 %v1050
        %v1846 = vpop.f32.mrb[0].mxu0
        %v1847 = vadd.f32 %v1085, %v1846
        %v1848 = vpop.f32.mrb[0].mxu0
        %v1849 = vadd.f32 %v1089, %v1848
        %v1850 = vpop.f32.mrb[0].mxu0
        %v1851 = vadd.f32 %v1085, %v1850
        %v1852 = vpop.f32.mrb[0].mxu0
        %v1853 = vadd.f32 %v1089, %v1852
        %1854 = vmatprep.mubr.bf16.mxu0 %v1053
        %1855 = vmatmul.mubr.bf16.gmra.mrb[0].mxu0 %v1052
        %v1856 = vpop.f32.mrb[0].mxu0
        %v1857 = vadd.f32 %v1085, %v1856
        %v1858 = vpop.f32.mrb[0].mxu0
        %v1859 = vadd.f32 %v1089, %v1858
        %v1860 = vpop.f32.mrb[0].mxu0
        %v1861 = vadd.f32 %v1085, %v1860
        %v1862 = vpop.f32.mrb[0].mxu0
        %v1863 = vadd.f32 %v1089, %v1862
        %1864 = vmatprep.mubr.bf16.mxu0 %v1055
        %1865 = vmatmul.mubr.bf16.gmra.mrb[0].mxu0 %v1054
        %v1866 = vpop.f32.mrb[0].mxu0
        %v1867 = vadd.f32 %v1085, %v1866
        %v1868 = vpop.f32.mrb[0].mxu0
        %v1869 = vadd.f32 %v1089, %v1868
        %v1870 = vpop.f32.mrb[0].mxu0
        %v1871 = vadd.f32 %v1085, %v1870
        %v1872 = vpop.f32.mrb[0].mxu0
        %v1873 = vadd.f32 %v1089, %v1872
        %1874 = vmatprep.mubr.bf16.mxu0 %v1057
        %1875 = vmatmul.mubr.bf16.gmra.mrb[0].mxu0 %v1056
        %v1876 = vpop.f32.mrb[0].mxu0
        %v1877 = vadd.f32 %v1085, %v1876
        %v1878 = vpop.f32.mrb[0].mxu0
        %v1879 = vadd.f32 %v1089, %v1878
        %v1880 = vpop.f32.mrb[0].mxu0
        %v1881 = vadd.f32 %v1085, %v1880
        %v1882 = vpop.f32.mrb[0].mxu0
        %v1883 = vadd.f32 %v1089, %v1882
        %1884 = vmatprep.mubr.bf16.mxu0 %v1059
        %1885 = vmatmul.mubr.bf16.gmra.mrb[0].mxu0 %v1058
        %v1886 = vpop.f32.mrb[0].mxu0
        %v1887 = vadd.f32 %v1085, %v1886
        %v1888 = vpop.f32.mrb[0].mxu0
        %v1889 = vadd.f32 %v1089, %v1888
        %v1890 = vpop.f32.mrb[0].mxu0
        %v1891 = vadd.f32 %v1085, %v1890
        %v1892 = vpop.f32.mrb[0].mxu0
        %v1893 = vadd.f32 %v1089, %v1892
        %1894 = vmatprep.mubr.bf16.mxu0 %v1061
        %1895 = vmatmul.mubr.bf16.gmra.mrb[0].mxu0 %v1060
        %v1896 = vpop.f32.mrb[0].mxu0
        %v1897 = vadd.f32 %v1085, %v1896
        %v1898 = vpop.f32.mrb[0].mxu0
        %v1899 = vadd.f32 %v1089, %v1898
        %v1900 = vpop.f32.mrb[0].mxu0
        %v1901 = vadd.f32 %v1085, %v1900
        %v1902 = vpop.f32.mrb[0].mxu0
        %v1903 = vadd.f32 %v1089, %v1902
        %1904 = vmatprep.mubr.bf16.mxu0 %v1063
        %1905 = vmatmul.mubr.bf16.gmra.mrb[0].mxu0 %v1062
        %v1906 = vpop.f32.mrb[0].mxu0
        %v1907 = vadd.f32 %v1085, %v1906
        %v1908 = vpop.f32.mrb[0].mxu0
        %v1909 = vadd.f32 %v1089, %v1908
        %v1910 = vpop.f32.mrb[0].mxu0
        %v1911 = vadd.f32 %v1085, %v1910
        %v1912 = vpop.f32.mrb[0].mxu0
        %v1913 = vadd.f32 %v1089, %v1912
        %1914 = vdwg.mxu0
        %v1915 = vlaneseq
        %v1916 = vshrl.u32 %v1915, 7
        %v1917 = vadd.s32 %v1916, 8
        %v1918 = vadd.s32 %v1916, 16
        %v1919 = vadd.s32 %v1916, 24
        %v1920 = vadd.s32 %v1916, 32
        %v1921 = vadd.s32 %v1916, 40
        %v1922 = vadd.s32 %v1916, 48
        %v1923 = vadd.s32 %v1916, 56
        %v1924 = vlaneseq
        %v1925 = vand.u32 %v1924, 127
        %vm1926 = vcmp.gt.s32.totalorder %v1925, %v1916
        %vm1927 = vcmp.gt.s32.totalorder %v1925, %v1917
        %vm1928 = vcmp.gt.s32.totalorder %v1925, %v1918
        %vm1929 = vcmp.gt.s32.totalorder %v1925, %v1919
        %vm1930 = vcmp.gt.s32.totalorder %v1925, %v1920
        %vm1931 = vcmp.gt.s32.totalorder %v1925, %v1921
        %vm1932 = vcmp.gt.s32.totalorder %v1925, %v1922
        %vm1933 = vcmp.gt.s32.totalorder %v1925, %v1923
        %v1934 = vmul.f32 %v1611, 0.088388346
        %v1935 = vmul.f32 %v1615, 0.088388346
        %v1936 = vmul.f32 %v1621, 0.088388346
        %v1937 = vmul.f32 %v1625, 0.088388346
        %v1938 = vmul.f32 %v1631, 0.088388346
        %v1939 = vmul.f32 %v1635, 0.088388346
        %v1940 = vmul.f32 %v1641, 0.088388346
        %v1941 = vmul.f32 %v1645, 0.088388346
        %v1942 = vpack.c.bf16 %v1935, %v1934
        %v1943 = vpack.c.bf16 %v1937, %v1936
        %v1944 = vpack.c.bf16 %v1939, %v1938
        %v1945 = vpack.c.bf16 %v1941, %v1940
        %v1946 = vpack.c.bf16 %v1728, %v1724
        %v1947 = vpack.c.bf16 %v1738, %v1734
        %v1948 = vpack.c.bf16 %v1748, %v1744
        %v1949 = vpack.c.bf16 %v1758, %v1754
        %v1950 = vpack.c.bf16 %v1841, %v1837
        %v1951 = vpack.c.bf16 %v1851, %v1847
        %v1952 = vpack.c.bf16 %v1861, %v1857
        %v1953 = vpack.c.bf16 %v1871, %v1867
        %1954 = vmatprep.subr.bf16.mxu0 0
        %1955 = vmatpush1.bf16.xpose.msra.mxu0 %v1946
        %1956 = vmatprep.subr.bf16.mxu0 0
        %1957 = vmatpush1.bf16.xpose.msra.mxu0 %v1947
        %1958 = vmatprep.subr.bf16.mxu0 0
        %1959 = vmatpush1.bf16.xpose.msra.mxu0 %v1948
        %1960 = vmatprep.subr.bf16.mxu0 0
        %1961 = vmatpush1.bf16.xpose.msra.mxu0 %v1949
        %1962 = vmatprep.subr.bf16.mxu0 0
        %1963 = vmatpush1.bf16.xpose.msra.mxu0 0
        %1964 = vmatprep.subr.bf16.mxu0 0
        %1965 = vmatpush1.bf16.xpose.msra.mxu0 0
        %1966 = vmatprep.subr.bf16.mxu0 0
        %1967 = vmatpush1.bf16.xpose.msra.mxu0 0
        %1968 = vmatprep.subr.bf16.mxu0 0
        %1969 = vmatpush1.bf16.xpose.msra.mxu0 0
        %1970 = vmatprep.subr.bf16.mxu0 0
        %1971 = vmatpush1.bf16.xpose.msra.mxu0 0
        %1972 = vmatprep.subr.bf16.mxu0 0
        %1973 = vmatpush1.bf16.xpose.msra.mxu0 0
        %1974 = vmatprep.subr.bf16.mxu0 0
        %1975 = vmatpush1.bf16.xpose.msra.mxu0 0
        %1976 = vmatprep.subr.bf16.mxu0 0
        %1977 = vmatpush1.bf16.xpose.msra.mxu0 0
        %1978 = vmatprep.subr.bf16.mxu0 0
        %1979 = vmatpush1.bf16.xpose.msra.mxu0 0
        %1980 = vmatprep.subr.bf16.mxu0 0
        %1981 = vmatpush1.bf16.xpose.msra.mxu0 0
        %1982 = vmatprep.subr.bf16.mxu0 0
        %1983 = vmatpush1.bf16.xpose.msra.mxu0 0
        %1984 = vmatprep.subr.bf16.mxu0 0
        %1985 = vmatpush1.bf16.xpose.msra.mxu0 0
        %1986 = vmatprep.mubr.bf16.mxu0 0
        %1987 = vmatmul.mubr.bf16.gmra.mrb[0].mxu0 %v1942
        %v1988 = vpop.f32.mrb[0].mxu0
        %v1989 = vadd.f32 0.0, %v1988
        %v1990 = vpop.f32.mrb[0].mxu0
        %v1991 = vpop.f32.mrb[0].mxu0
        %v1992 = vadd.f32 0.0, %v1991
        %v1993 = vpop.f32.mrb[0].mxu0
        %1994 = vmatprep.mubr.bf16.mxu0 0
        %1995 = vmatmul.mubr.bf16.gmra.mrb[0].mxu0 %v1943
        %v1996 = vpop.f32.mrb[0].mxu0
        %v1997 = vadd.f32 0.0, %v1996
        %v1998 = vpop.f32.mrb[0].mxu0
        %v1999 = vpop.f32.mrb[0].mxu0
        %v2000 = vadd.f32 0.0, %v1999
        %v2001 = vpop.f32.mrb[0].mxu0
        %2002 = vmatprep.mubr.bf16.mxu0 0
        %2003 = vmatmul.mubr.bf16.gmra.mrb[0].mxu0 %v1944
        %v2004 = vpop.f32.mrb[0].mxu0
        %v2005 = vadd.f32 0.0, %v2004
        %v2006 = vpop.f32.mrb[0].mxu0
        %v2007 = vpop.f32.mrb[0].mxu0
        %v2008 = vadd.f32 0.0, %v2007
        %v2009 = vpop.f32.mrb[0].mxu0
        %2010 = vmatprep.mubr.bf16.mxu0 0
        %2011 = vmatmul.mubr.bf16.gmra.mrb[0].mxu0 %v1945
        %v2012 = vpop.f32.mrb[0].mxu0
        %v2013 = vadd.f32 0.0, %v2012
        %v2014 = vpop.f32.mrb[0].mxu0
        %v2015 = vpop.f32.mrb[0].mxu0
        %v2016 = vadd.f32 0.0, %v2015
        %v2017 = vpop.f32.mrb[0].mxu0
        %2018 = vdwg.mxu0
        %v2019 = vsel %vm1926, -1e+30, %v1989
        %v2020 = vsel %vm1927, -1e+30, %v1992
        %v2021 = vsel %vm1928, -1e+30, %v1997
        %v2022 = vsel %vm1929, -1e+30, %v2000
        %v2023 = vsel %vm1930, -1e+30, %v2005
        %v2024 = vsel %vm1931, -1e+30, %v2008
        %v2025 = vsel %vm1932, -1e+30, %v2013
        %v2026 = vsel %vm1933, -1e+30, %v2016
        %vm2027 = vcmask 523264
        %v2028 = vsel %vm2027, %v2019, -inf
        %2029 = vmax.xlane.f32.xlu0 %v2028
        %v2030 = vpop.xlane.xlu0 %2029
        %v2031 = vsel %vm2027, %v2020, -inf
        %2032 = vmax.xlane.f32.xlu0 %v2031
        %v2033 = vpop.xlane.xlu0 %2032
        %v2034 = vsel %vm2027, %v2021, -inf
        %2035 = vmax.xlane.f32.xlu0 %v2034
        %v2036 = vpop.xlane.xlu0 %2035
        %v2037 = vsel %vm2027, %v2022, -inf
        %2038 = vmax.xlane.f32.xlu0 %v2037
        %v2039 = vpop.xlane.xlu0 %2038
        %v2040 = vsel %vm2027, %v2023, -inf
        %2041 = vmax.xlane.f32.xlu0 %v2040
        %v2042 = vpop.xlane.xlu0 %2041
        %v2043 = vsel %vm2027, %v2024, -inf
        %2044 = vmax.xlane.f32.xlu0 %v2043
        %v2045 = vpop.xlane.xlu0 %2044
        %v2046 = vsel %vm2027, %v2025, -inf
        %2047 = vmax.xlane.f32.xlu0 %v2046
        %v2048 = vpop.xlane.xlu0 %2047
        %v2049 = vsel %vm2027, %v2026, -inf
        %2050 = vmax.xlane.f32.xlu0 %v2049
        %v2051 = vpop.xlane.xlu0 %2050
        %v2052 = vsub.f32 %v2019, %v2030
        %v2053 = vsub.f32 %v2020, %v2033
        %v2054 = vsub.f32 %v2021, %v2036
        %v2055 = vsub.f32 %v2022, %v2039
        %v2056 = vsub.f32 %v2023, %v2042
        %v2057 = vsub.f32 %v2024, %v2045
        %v2058 = vsub.f32 %v2025, %v2048
        %v2059 = vsub.f32 %v2026, %v2051
        %v2060 = vmul.f32 %v2052, 1.442695
        %v2061 = vpow.pop %v2060
        %v2062 = vmul.f32 %v2053, 1.442695
        %v2063 = vpow.pop %v2062
        %v2064 = vmul.f32 %v2054, 1.442695
        %v2065 = vpow.pop %v2064
        %v2066 = vmul.f32 %v2055, 1.442695
        %v2067 = vpow.pop %v2066
        %v2068 = vmul.f32 %v2056, 1.442695
        %v2069 = vpow.pop %v2068
        %v2070 = vmul.f32 %v2057, 1.442695
        %v2071 = vpow.pop %v2070
        %v2072 = vmul.f32 %v2058, 1.442695
        %v2073 = vpow.pop %v2072
        %v2074 = vmul.f32 %v2059, 1.442695
        %v2075 = vpow.pop %v2074
        %v2076 = vsel %vm2027, %v2061, 0.0
        %2077 = vadd.xlane.f32.xlu0 %v2076
        %v2078 = vpop.xlane.xlu0 %2077
        %v2079 = vsel %vm2027, %v2063, 0.0
        %2080 = vadd.xlane.f32.xlu0 %v2079
        %v2081 = vpop.xlane.xlu0 %2080
        %v2082 = vsel %vm2027, %v2065, 0.0
        %2083 = vadd.xlane.f32.xlu0 %v2082
        %v2084 = vpop.xlane.xlu0 %2083
        %v2085 = vsel %vm2027, %v2067, 0.0
        %2086 = vadd.xlane.f32.xlu0 %v2085
        %v2087 = vpop.xlane.xlu0 %2086
        %v2088 = vsel %vm2027, %v2069, 0.0
        %2089 = vadd.xlane.f32.xlu0 %v2088
        %v2090 = vpop.xlane.xlu0 %2089
        %v2091 = vsel %vm2027, %v2071, 0.0
        %2092 = vadd.xlane.f32.xlu0 %v2091
        %v2093 = vpop.xlane.xlu0 %2092
        %v2094 = vsel %vm2027, %v2073, 0.0
        %2095 = vadd.xlane.f32.xlu0 %v2094
        %v2096 = vpop.xlane.xlu0 %2095
        %v2097 = vsel %vm2027, %v2075, 0.0
        %2098 = vadd.xlane.f32.xlu0 %v2097
        %v2099 = vpop.xlane.xlu0 %2098
        %v2100 = vrcp.pop %v2078
        %v2101 = vmul.f32 %v2061, %v2100
        %v2102 = vrcp.pop %v2081
        %v2103 = vmul.f32 %v2063, %v2102
        %v2104 = vrcp.pop %v2084
        %v2105 = vmul.f32 %v2065, %v2104
        %v2106 = vrcp.pop %v2087
        %v2107 = vmul.f32 %v2067, %v2106
        %v2108 = vrcp.pop %v2090
        %v2109 = vmul.f32 %v2069, %v2108
        %v2110 = vrcp.pop %v2093
        %v2111 = vmul.f32 %v2071, %v2110
        %v2112 = vrcp.pop %v2096
        %v2113 = vmul.f32 %v2073, %v2112
        %v2114 = vrcp.pop %v2099
        %v2115 = vmul.f32 %v2075, %v2114
        %v2116 = vpack.c.bf16 %v2103, %v2101
        %v2117 = vpack.c.bf16 %v2107, %v2105
        %v2118 = vpack.c.bf16 %v2111, %v2109
        %v2119 = vpack.c.bf16 %v2115, %v2113
        %v2121 = vsel %vm2027, %v2116, 0
        %v2124 = vsel %vm2027, %v2117, 0
        %v2127 = vsel %vm2027, %v2118, 0
        %v2130 = vsel %vm2027, %v2119, 0
        %2132 = vmatprep.subr.bf16.mxu0 0
        %2133 = vmatpush1.bf16.msra.mxu0 %v1950
        %2134 = vmatprep.subr.bf16.mxu0 0
        %2135 = vmatpush1.bf16.msra.mxu0 %v1951
        %2136 = vmatprep.subr.bf16.mxu0 0
        %2137 = vmatpush1.bf16.msra.mxu0 %v1952
        %2138 = vmatprep.subr.bf16.mxu0 0
        %2139 = vmatpush1.bf16.msra.mxu0 %v1953
        %2140 = vmatprep.subr.bf16.mxu0 0
        %2141 = vmatpush1.bf16.msra.mxu0 0
        %2142 = vmatprep.subr.bf16.mxu0 0
        %2143 = vmatpush1.bf16.msra.mxu0 0
        %2144 = vmatprep.subr.bf16.mxu0 0
        %2145 = vmatpush1.bf16.msra.mxu0 0
        %2146 = vmatprep.subr.bf16.mxu0 0
        %2147 = vmatpush1.bf16.msra.mxu0 0
        %2148 = vmatprep.subr.bf16.mxu0 0
        %2149 = vmatpush1.bf16.msra.mxu0 0
        %2150 = vmatprep.subr.bf16.mxu0 0
        %2151 = vmatpush1.bf16.msra.mxu0 0
        %2152 = vmatprep.subr.bf16.mxu0 0
        %2153 = vmatpush1.bf16.msra.mxu0 0
        %2154 = vmatprep.subr.bf16.mxu0 0
        %2155 = vmatpush1.bf16.msra.mxu0 0
        %2156 = vmatprep.subr.bf16.mxu0 0
        %2157 = vmatpush1.bf16.msra.mxu0 0
        %2158 = vmatprep.subr.bf16.mxu0 0
        %2159 = vmatpush1.bf16.msra.mxu0 0
        %2160 = vmatprep.subr.bf16.mxu0 0
        %2161 = vmatpush1.bf16.msra.mxu0 0
        %2162 = vmatprep.subr.bf16.mxu0 0
        %2163 = vmatpush1.bf16.msra.mxu0 0
        %2164 = vmatprep.mubr.bf16.mxu0 0
        %2165 = vmatmul.mubr.bf16.gmra.mrb[0].mxu0 %v2121
        %v2166 = vpop.f32.mrb[0].mxu0
        %v2167 = vadd.f32 0.0, %v2166
        %v2168 = vpop.f32.mrb[0].mxu0
        %v2169 = vpop.f32.mrb[0].mxu0
        %v2170 = vadd.f32 0.0, %v2169
        %v2171 = vpop.f32.mrb[0].mxu0
        %2172 = vmatprep.mubr.bf16.mxu0 0
        %2173 = vmatmul.mubr.bf16.gmra.mrb[0].mxu0 %v2124
        %v2174 = vpop.f32.mrb[0].mxu0
        %v2175 = vadd.f32 0.0, %v2174
        %v2176 = vpop.f32.mrb[0].mxu0
        %v2177 = vpop.f32.mrb[0].mxu0
        %v2178 = vadd.f32 0.0, %v2177
        %v2179 = vpop.f32.mrb[0].mxu0
        %2180 = vmatprep.mubr.bf16.mxu0 0
        %2181 = vmatmul.mubr.bf16.gmra.mrb[0].mxu0 %v2127
        %v2182 = vpop.f32.mrb[0].mxu0
        %v2183 = vadd.f32 0.0, %v2182
        %v2184 = vpop.f32.mrb[0].mxu0
        %v2185 = vpop.f32.mrb[0].mxu0
        %v2186 = vadd.f32 0.0, %v2185
        %v2187 = vpop.f32.mrb[0].mxu0
        %2188 = vmatprep.mubr.bf16.mxu0 0
        %2189 = vmatmul.mubr.bf16.gmra.mrb[0].mxu0 %v2130
        %v2190 = vpop.f32.mrb[0].mxu0
        %v2191 = vadd.f32 0.0, %v2190
        %v2192 = vpop.f32.mrb[0].mxu0
        %v2193 = vpop.f32.mrb[0].mxu0
        %v2194 = vadd.f32 0.0, %v2193
        %v2195 = vpop.f32.mrb[0].mxu0
        %2196 = vdwg.mxu0
        %2197 = vst [vmem:[#allocation3] sm:$0xff] %v2167
        %2198 = vst [vmem:[#allocation3 + $0x10] sm:$0xff] %v2170
        %2199 = vst [vmem:[#allocation3 + $0x20] sm:$0xff] %v2175
        %2200 = vst [vmem:[#allocation3 + $0x30] sm:$0xff] %v2178
        %2201 = vst [vmem:[#allocation3 + $0x40] sm:$0xff] %v2183
        %2202 = vst [vmem:[#allocation3 + $0x50] sm:$0xff] %v2186
        %2203 = vst [vmem:[#allocation3 + $0x60] sm:$0xff] %v2191
        %2204 = vst [vmem:[#allocation3 + $0x70] sm:$0xff] %v2194
        %v2205 = vmul.f32 %v1613, 0.088388346
        %v2206 = vmul.f32 %v1617, 0.088388346
        %v2207 = vmul.f32 %v1623, 0.088388346
        %v2208 = vmul.f32 %v1627, 0.088388346
        %v2209 = vmul.f32 %v1633, 0.088388346
        %v2210 = vmul.f32 %v1637, 0.088388346
        %v2211 = vmul.f32 %v1643, 0.088388346
        %v2212 = vmul.f32 %v1647, 0.088388346
        %v2213 = vpack.c.bf16 %v2206, %v2205
        %v2214 = vpack.c.bf16 %v2208, %v2207
        %v2215 = vpack.c.bf16 %v2210, %v2209
        %v2216 = vpack.c.bf16 %v2212, %v2211
        %v2217 = vpack.c.bf16 %v1730, %v1726
        %v2218 = vpack.c.bf16 %v1740, %v1736
        %v2219 = vpack.c.bf16 %v1750, %v1746
        %v2220 = vpack.c.bf16 %v1760, %v1756
        %v2221 = vpack.c.bf16 %v1843, %v1839
        %v2222 = vpack.c.bf16 %v1853, %v1849
        %v2223 = vpack.c.bf16 %v1863, %v1859
        %v2224 = vpack.c.bf16 %v1873, %v1869
        %2225 = vmatprep.subr.bf16.mxu0 0
        %2226 = vmatpush1.bf16.xpose.msra.mxu0 %v2217
        %2227 = vmatprep.subr.bf16.mxu0 0
        %2228 = vmatpush1.bf16.xpose.msra.mxu0 %v2218
        %2229 = vmatprep.subr.bf16.mxu0 0
        %2230 = vmatpush1.bf16.xpose.msra.mxu0 %v2219
        %2231 = vmatprep.subr.bf16.mxu0 0
        %2232 = vmatpush1.bf16.xpose.msra.mxu0 %v2220
        %2233 = vmatprep.subr.bf16.mxu0 0
        %2234 = vmatpush1.bf16.xpose.msra.mxu0 0
        %2235 = vmatprep.subr.bf16.mxu0 0
        %2236 = vmatpush1.bf16.xpose.msra.mxu0 0
        %2237 = vmatprep.subr.bf16.mxu0 0
        %2238 = vmatpush1.bf16.xpose.msra.mxu0 0
        %2239 = vmatprep.subr.bf16.mxu0 0
        %2240 = vmatpush1.bf16.xpose.msra.mxu0 0
        %2241 = vmatprep.subr.bf16.mxu0 0
        %2242 = vmatpush1.bf16.xpose.msra.mxu0 0
        %2243 = vmatprep.subr.bf16.mxu0 0
        %2244 = vmatpush1.bf16.xpose.msra.mxu0 0
        %2245 = vmatprep.subr.bf16.mxu0 0
        %2246 = vmatpush1.bf16.xpose.msra.mxu0 0
        %2247 = vmatprep.subr.bf16.mxu0 0
        %2248 = vmatpush1.bf16.xpose.msra.mxu0 0
        %2249 = vmatprep.subr.bf16.mxu0 0
        %2250 = vmatpush1.bf16.xpose.msra.mxu0 0
        %2251 = vmatprep.subr.bf16.mxu0 0
        %2252 = vmatpush1.bf16.xpose.msra.mxu0 0
        %2253 = vmatprep.subr.bf16.mxu0 0
        %2254 = vmatpush1.bf16.xpose.msra.mxu0 0
        %2255 = vmatprep.subr.bf16.mxu0 0
        %2256 = vmatpush1.bf16.xpose.msra.mxu0 0
        %2257 = vmatprep.mubr.bf16.mxu0 0
        %2258 = vmatmul.mubr.bf16.gmra.mrb[0].mxu0 %v2213
        %v2259 = vpop.f32.mrb[0].mxu0
        %v2260 = vadd.f32 0.0, %v2259
        %v2261 = vpop.f32.mrb[0].mxu0
        %v2262 = vpop.f32.mrb[0].mxu0
        %v2263 = vadd.f32 0.0, %v2262
        %v2264 = vpop.f32.mrb[0].mxu0
        %2265 = vmatprep.mubr.bf16.mxu0 0
        %2266 = vmatmul.mubr.bf16.gmra.mrb[0].mxu0 %v2214
        %v2267 = vpop.f32.mrb[0].mxu0
        %v2268 = vadd.f32 0.0, %v2267
        %v2269 = vpop.f32.mrb[0].mxu0
        %v2270 = vpop.f32.mrb[0].mxu0
        %v2271 = vadd.f32 0.0, %v2270
        %v2272 = vpop.f32.mrb[0].mxu0
        %2273 = vmatprep.mubr.bf16.mxu0 0
        %2274 = vmatmul.mubr.bf16.gmra.mrb[0].mxu0 %v2215
        %v2275 = vpop.f32.mrb[0].mxu0
        %v2276 = vadd.f32 0.0, %v2275
        %v2277 = vpop.f32.mrb[0].mxu0
        %v2278 = vpop.f32.mrb[0].mxu0
        %v2279 = vadd.f32 0.0, %v2278
        %v2280 = vpop.f32.mrb[0].mxu0
        %2281 = vmatprep.mubr.bf16.mxu0 0
        %2282 = vmatmul.mubr.bf16.gmra.mrb[0].mxu0 %v2216
        %v2283 = vpop.f32.mrb[0].mxu0
        %v2284 = vadd.f32 0.0, %v2283
        %v2285 = vpop.f32.mrb[0].mxu0
        %v2286 = vpop.f32.mrb[0].mxu0
        %v2287 = vadd.f32 0.0, %v2286
        %v2288 = vpop.f32.mrb[0].mxu0
        %2289 = vdwg.mxu0
        %v2290 = vsel %vm1926, -1e+30, %v2260
        %v2291 = vsel %vm1927, -1e+30, %v2263
        %v2292 = vsel %vm1928, -1e+30, %v2268
        %v2293 = vsel %vm1929, -1e+30, %v2271
        %v2294 = vsel %vm1930, -1e+30, %v2276
        %v2295 = vsel %vm1931, -1e+30, %v2279
        %v2296 = vsel %vm1932, -1e+30, %v2284
        %v2297 = vsel %vm1933, -1e+30, %v2287
        %v2298 = vsel %vm2027, %v2290, -inf
        %2299 = vmax.xlane.f32.xlu0 %v2298
        %v2300 = vpop.xlane.xlu0 %2299
        %v2301 = vsel %vm2027, %v2291, -inf
        %2302 = vmax.xlane.f32.xlu0 %v2301
        %v2303 = vpop.xlane.xlu0 %2302
        %v2304 = vsel %vm2027, %v2292, -inf
        %2305 = vmax.xlane.f32.xlu0 %v2304
        %v2306 = vpop.xlane.xlu0 %2305
        %v2307 = vsel %vm2027, %v2293, -inf
        %2308 = vmax.xlane.f32.xlu0 %v2307
        %v2309 = vpop.xlane.xlu0 %2308
        %v2310 = vsel %vm2027, %v2294, -inf
        %2311 = vmax.xlane.f32.xlu0 %v2310
        %v2312 = vpop.xlane.xlu0 %2311
        %v2313 = vsel %vm2027, %v2295, -inf
        %2314 = vmax.xlane.f32.xlu0 %v2313
        %v2315 = vpop.xlane.xlu0 %2314
        %v2316 = vsel %vm2027, %v2296, -inf
        %2317 = vmax.xlane.f32.xlu0 %v2316
        %v2318 = vpop.xlane.xlu0 %2317
        %v2319 = vsel %vm2027, %v2297, -inf
        %2320 = vmax.xlane.f32.xlu0 %v2319
        %v2321 = vpop.xlane.xlu0 %2320
        %v2322 = vsub.f32 %v2290, %v2300
        %v2323 = vsub.f32 %v2291, %v2303
        %v2324 = vsub.f32 %v2292, %v2306
        %v2325 = vsub.f32 %v2293, %v2309
        %v2326 = vsub.f32 %v2294, %v2312
        %v2327 = vsub.f32 %v2295, %v2315
        %v2328 = vsub.f32 %v2296, %v2318
        %v2329 = vsub.f32 %v2297, %v2321
        %v2330 = vmul.f32 %v2322, 1.442695
        %v2331 = vpow.pop %v2330
        %v2332 = vmul.f32 %v2323, 1.442695
        %v2333 = vpow.pop %v2332
        %v2334 = vmul.f32 %v2324, 1.442695
        %v2335 = vpow.pop %v2334
        %v2336 = vmul.f32 %v2325, 1.442695
        %v2337 = vpow.pop %v2336
        %v2338 = vmul.f32 %v2326, 1.442695
        %v2339 = vpow.pop %v2338
        %v2340 = vmul.f32 %v2327, 1.442695
        %v2341 = vpow.pop %v2340
        %v2342 = vmul.f32 %v2328, 1.442695
        %v2343 = vpow.pop %v2342
        %v2344 = vmul.f32 %v2329, 1.442695
        %v2345 = vpow.pop %v2344
        %v2346 = vsel %vm2027, %v2331, 0.0
        %2347 = vadd.xlane.f32.xlu0 %v2346
        %v2348 = vpop.xlane.xlu0 %2347
        %v2349 = vsel %vm2027, %v2333, 0.0
        %2350 = vadd.xlane.f32.xlu0 %v2349
        %v2351 = vpop.xlane.xlu0 %2350
        %v2352 = vsel %vm2027, %v2335, 0.0
        %2353 = vadd.xlane.f32.xlu0 %v2352
        %v2354 = vpop.xlane.xlu0 %2353
        %v2355 = vsel %vm2027, %v2337, 0.0
        %2356 = vadd.xlane.f32.xlu0 %v2355
        %v2357 = vpop.xlane.xlu0 %2356
        %v2358 = vsel %vm2027, %v2339, 0.0
        %2359 = vadd.xlane.f32.xlu0 %v2358
        %v2360 = vpop.xlane.xlu0 %2359
        %v2361 = vsel %vm2027, %v2341, 0.0
        %2362 = vadd.xlane.f32.xlu0 %v2361
        %v2363 = vpop.xlane.xlu0 %2362
        %v2364 = vsel %vm2027, %v2343, 0.0
        %2365 = vadd.xlane.f32.xlu0 %v2364
        %v2366 = vpop.xlane.xlu0 %2365
        %v2367 = vsel %vm2027, %v2345, 0.0
        %2368 = vadd.xlane.f32.xlu0 %v2367
        %v2369 = vpop.xlane.xlu0 %2368
        %v2370 = vrcp.pop %v2348
        %v2371 = vmul.f32 %v2331, %v2370
        %v2372 = vrcp.pop %v2351
        %v2373 = vmul.f32 %v2333, %v2372
        %v2374 = vrcp.pop %v2354
        %v2375 = vmul.f32 %v2335, %v2374
        %v2376 = vrcp.pop %v2357
        %v2377 = vmul.f32 %v2337, %v2376
        %v2378 = vrcp.pop %v2360
        %v2379 = vmul.f32 %v2339, %v2378
        %v2380 = vrcp.pop %v2363
        %v2381 = vmul.f32 %v2341, %v2380
        %v2382 = vrcp.pop %v2366
        %v2383 = vmul.f32 %v2343, %v2382
        %v2384 = vrcp.pop %v2369
        %v2385 = vmul.f32 %v2345, %v2384
        %v2386 = vpack.c.bf16 %v2373, %v2371
        %v2387 = vpack.c.bf16 %v2377, %v2375
        %v2388 = vpack.c.bf16 %v2381, %v2379
        %v2389 = vpack.c.bf16 %v2385, %v2383
        %v2391 = vsel %vm2027, %v2386, 0
        %v2394 = vsel %vm2027, %v2387, 0
        %v2397 = vsel %vm2027, %v2388, 0
        %v2400 = vsel %vm2027, %v2389, 0
        %2402 = vmatprep.subr.bf16.mxu0 0
        %2403 = vmatpush1.bf16.msra.mxu0 %v2221
        %2404 = vmatprep.subr.bf16.mxu0 0
        %2405 = vmatpush1.bf16.msra.mxu0 %v2222
        %2406 = vmatprep.subr.bf16.mxu0 0
        %2407 = vmatpush1.bf16.msra.mxu0 %v2223
        %2408 = vmatprep.subr.bf16.mxu0 0
        %2409 = vmatpush1.bf16.msra.mxu0 %v2224
        %2410 = vmatprep.subr.bf16.mxu0 0
        %2411 = vmatpush1.bf16.msra.mxu0 0
        %2412 = vmatprep.subr.bf16.mxu0 0
        %2413 = vmatpush1.bf16.msra.mxu0 0
        %2414 = vmatprep.subr.bf16.mxu0 0
        %2415 = vmatpush1.bf16.msra.mxu0 0
        %2416 = vmatprep.subr.bf16.mxu0 0
        %2417 = vmatpush1.bf16.msra.mxu0 0
        %2418 = vmatprep.subr.bf16.mxu0 0
        %2419 = vmatpush1.bf16.msra.mxu0 0
        %2420 = vmatprep.subr.bf16.mxu0 0
        %2421 = vmatpush1.bf16.msra.mxu0 0
        %2422 = vmatprep.subr.bf16.mxu0 0
        %2423 = vmatpush1.bf16.msra.mxu0 0
        %2424 = vmatprep.subr.bf16.mxu0 0
        %2425 = vmatpush1.bf16.msra.mxu0 0
        %2426 = vmatprep.subr.bf16.mxu0 0
        %2427 = vmatpush1.bf16.msra.mxu0 0
        %2428 = vmatprep.subr.bf16.mxu0 0
        %2429 = vmatpush1.bf16.msra.mxu0 0
        %2430 = vmatprep.subr.bf16.mxu0 0
        %2431 = vmatpush1.bf16.msra.mxu0 0
        %2432 = vmatprep.subr.bf16.mxu0 0
        %2433 = vmatpush1.bf16.msra.mxu0 0
        %2434 = vmatprep.mubr.bf16.mxu0 0
        %2435 = vmatmul.mubr.bf16.gmra.mrb[0].mxu0 %v2391
        %v2436 = vpop.f32.mrb[0].mxu0
        %v2437 = vadd.f32 0.0, %v2436
        %v2438 = vpop.f32.mrb[0].mxu0
        %v2439 = vpop.f32.mrb[0].mxu0
        %v2440 = vadd.f32 0.0, %v2439
        %v2441 = vpop.f32.mrb[0].mxu0
        %2442 = vmatprep.mubr.bf16.mxu0 0
        %2443 = vmatmul.mubr.bf16.gmra.mrb[0].mxu0 %v2394
        %v2444 = vpop.f32.mrb[0].mxu0
        %v2445 = vadd.f32 0.0, %v2444
        %v2446 = vpop.f32.mrb[0].mxu0
        %v2447 = vpop.f32.mrb[0].mxu0
        %v2448 = vadd.f32 0.0, %v2447
        %v2449 = vpop.f32.mrb[0].mxu0
        %2450 = vmatprep.mubr.bf16.mxu0 0
        %2451 = vmatmul.mubr.bf16.gmra.mrb[0].mxu0 %v2397
        %v2452 = vpop.f32.mrb[0].mxu0
        %v2453 = vadd.f32 0.0, %v2452
        %v2454 = vpop.f32.mrb[0].mxu0
        %v2455 = vpop.f32.mrb[0].mxu0
        %v2456 = vadd.f32 0.0, %v2455
        %v2457 = vpop.f32.mrb[0].mxu0
        %2458 = vmatprep.mubr.bf16.mxu0 0
        %2459 = vmatmul.mubr.bf16.gmra.mrb[0].mxu0 %v2400
        %v2460 = vpop.f32.mrb[0].mxu0
        %v2461 = vadd.f32 0.0, %v2460
        %v2462 = vpop.f32.mrb[0].mxu0
        %v2463 = vpop.f32.mrb[0].mxu0
        %v2464 = vadd.f32 0.0, %v2463
        %v2465 = vpop.f32.mrb[0].mxu0
        %2466 = vdwg.mxu0
        %2467 = vst [vmem:[#allocation3 + $0x8] sm:$0xff] %v2437
        %2468 = vst [vmem:[#allocation3 + $0x18] sm:$0xff] %v2440
        %2469 = vst [vmem:[#allocation3 + $0x28] sm:$0xff] %v2445
        %2470 = vst [vmem:[#allocation3 + $0x38] sm:$0xff] %v2448
        %2471 = vst [vmem:[#allocation3 + $0x48] sm:$0xff] %v2453
        %2472 = vst [vmem:[#allocation3 + $0x58] sm:$0xff] %v2456
        %2473 = vst [vmem:[#allocation3 + $0x68] sm:$0xff] %v2461
        %2474 = vst [vmem:[#allocation3 + $0x78] sm:$0xff] %v2464
        %v2475 = vmul.f32 %v1651, 0.088388346
        %v2476 = vmul.f32 %v1655, 0.088388346
        %v2477 = vmul.f32 %v1661, 0.088388346
        %v2478 = vmul.f32 %v1665, 0.088388346
        %v2479 = vmul.f32 %v1671, 0.088388346
        %v2480 = vmul.f32 %v1675, 0.088388346
        %v2481 = vmul.f32 %v1681, 0.088388346
        %v2482 = vmul.f32 %v1685, 0.088388346
        %v2483 = vpack.c.bf16 %v2476, %v2475
        %v2484 = vpack.c.bf16 %v2478, %v2477
        %v2485 = vpack.c.bf16 %v2480, %v2479
        %v2486 = vpack.c.bf16 %v2482, %v2481
        %v2487 = vpack.c.bf16 %v1768, %v1764
        %v2488 = vpack.c.bf16 %v1778, %v1774
        %v2489 = vpack.c.bf16 %v1788, %v1784
        %v2490 = vpack.c.bf16 %v1798, %v1794
        %v2491 = vpack.c.bf16 %v1881, %v1877
        %v2492 = vpack.c.bf16 %v1891, %v1887
        %v2493 = vpack.c.bf16 %v1901, %v1897
        %v2494 = vpack.c.bf16 %v1911, %v1907
        %2495 = vmatprep.subr.bf16.mxu0 0
        %2496 = vmatpush1.bf16.xpose.msra.mxu0 %v2487
        %2497 = vmatprep.subr.bf16.mxu0 0
        %2498 = vmatpush1.bf16.xpose.msra.mxu0 %v2488
        %2499 = vmatprep.subr.bf16.mxu0 0
        %2500 = vmatpush1.bf16.xpose.msra.mxu0 %v2489
        %2501 = vmatprep.subr.bf16.mxu0 0
        %2502 = vmatpush1.bf16.xpose.msra.mxu0 %v2490
        %2503 = vmatprep.subr.bf16.mxu0 0
        %2504 = vmatpush1.bf16.xpose.msra.mxu0 0
        %2505 = vmatprep.subr.bf16.mxu0 0
        %2506 = vmatpush1.bf16.xpose.msra.mxu0 0
        %2507 = vmatprep.subr.bf16.mxu0 0
        %2508 = vmatpush1.bf16.xpose.msra.mxu0 0
        %2509 = vmatprep.subr.bf16.mxu0 0
        %2510 = vmatpush1.bf16.xpose.msra.mxu0 0
        %2511 = vmatprep.subr.bf16.mxu0 0
        %2512 = vmatpush1.bf16.xpose.msra.mxu0 0
        %2513 = vmatprep.subr.bf16.mxu0 0
        %2514 = vmatpush1.bf16.xpose.msra.mxu0 0
        %2515 = vmatprep.subr.bf16.mxu0 0
        %2516 = vmatpush1.bf16.xpose.msra.mxu0 0
        %2517 = vmatprep.subr.bf16.mxu0 0
        %2518 = vmatpush1.bf16.xpose.msra.mxu0 0
        %2519 = vmatprep.subr.bf16.mxu0 0
        %2520 = vmatpush1.bf16.xpose.msra.mxu0 0
        %2521 = vmatprep.subr.bf16.mxu0 0
        %2522 = vmatpush1.bf16.xpose.msra.mxu0 0
        %2523 = vmatprep.subr.bf16.mxu0 0
        %2524 = vmatpush1.bf16.xpose.msra.mxu0 0
        %2525 = vmatprep.subr.bf16.mxu0 0
        %2526 = vmatpush1.bf16.xpose.msra.mxu0 0
        %2527 = vmatprep.mubr.bf16.mxu0 0
        %2528 = vmatmul.mubr.bf16.gmra.mrb[0].mxu0 %v2483
        %v2529 = vpop.f32.mrb[0].mxu0
        %v2530 = vadd.f32 0.0, %v2529
        %v2531 = vpop.f32.mrb[0].mxu0
        %v2532 = vpop.f32.mrb[0].mxu0
        %v2533 = vadd.f32 0.0, %v2532
        %v2534 = vpop.f32.mrb[0].mxu0
        %2535 = vmatprep.mubr.bf16.mxu0 0
        %2536 = vmatmul.mubr.bf16.gmra.mrb[0].mxu0 %v2484
        %v2537 = vpop.f32.mrb[0].mxu0
        %v2538 = vadd.f32 0.0, %v2537
        %v2539 = vpop.f32.mrb[0].mxu0
        %v2540 = vpop.f32.mrb[0].mxu0
        %v2541 = vadd.f32 0.0, %v2540
        %v2542 = vpop.f32.mrb[0].mxu0
        %2543 = vmatprep.mubr.bf16.mxu0 0
        %2544 = vmatmul.mubr.bf16.gmra.mrb[0].mxu0 %v2485
        %v2545 = vpop.f32.mrb[0].mxu0
        %v2546 = vadd.f32 0.0, %v2545
        %v2547 = vpop.f32.mrb[0].mxu0
        %v2548 = vpop.f32.mrb[0].mxu0
        %v2549 = vadd.f32 0.0, %v2548
        %v2550 = vpop.f32.mrb[0].mxu0
        %2551 = vmatprep.mubr.bf16.mxu0 0
        %2552 = vmatmul.mubr.bf16.gmra.mrb[0].mxu0 %v2486
        %v2553 = vpop.f32.mrb[0].mxu0
        %v2554 = vadd.f32 0.0, %v2553
        %v2555 = vpop.f32.mrb[0].mxu0
        %v2556 = vpop.f32.mrb[0].mxu0
        %v2557 = vadd.f32 0.0, %v2556
        %v2558 = vpop.f32.mrb[0].mxu0
        %2559 = vdwg.mxu0
        %v2560 = vsel %vm1926, -1e+30, %v2530
        %v2561 = vsel %vm1927, -1e+30, %v2533
        %v2562 = vsel %vm1928, -1e+30, %v2538
        %v2563 = vsel %vm1929, -1e+30, %v2541
        %v2564 = vsel %vm1930, -1e+30, %v2546
        %v2565 = vsel %vm1931, -1e+30, %v2549
        %v2566 = vsel %vm1932, -1e+30, %v2554
        %v2567 = vsel %vm1933, -1e+30, %v2557
        %v2568 = vsel %vm2027, %v2560, -inf
        %2569 = vmax.xlane.f32.xlu0 %v2568
        %v2570 = vpop.xlane.xlu0 %2569
        %v2571 = vsel %vm2027, %v2561, -inf
        %2572 = vmax.xlane.f32.xlu0 %v2571
        %v2573 = vpop.xlane.xlu0 %2572
        %v2574 = vsel %vm2027, %v2562, -inf
        %2575 = vmax.xlane.f32.xlu0 %v2574
        %v2576 = vpop.xlane.xlu0 %2575
        %v2577 = vsel %vm2027, %v2563, -inf
        %2578 = vmax.xlane.f32.xlu0 %v2577
        %v2579 = vpop.xlane.xlu0 %2578
        %v2580 = vsel %vm2027, %v2564, -inf
        %2581 = vmax.xlane.f32.xlu0 %v2580
        %v2582 = vpop.xlane.xlu0 %2581
        %v2583 = vsel %vm2027, %v2565, -inf
        %2584 = vmax.xlane.f32.xlu0 %v2583
        %v2585 = vpop.xlane.xlu0 %2584
        %v2586 = vsel %vm2027, %v2566, -inf
        %2587 = vmax.xlane.f32.xlu0 %v2586
        %v2588 = vpop.xlane.xlu0 %2587
        %v2589 = vsel %vm2027, %v2567, -inf
        %2590 = vmax.xlane.f32.xlu0 %v2589
        %v2591 = vpop.xlane.xlu0 %2590
        %v2592 = vsub.f32 %v2560, %v2570
        %v2593 = vsub.f32 %v2561, %v2573
        %v2594 = vsub.f32 %v2562, %v2576
        %v2595 = vsub.f32 %v2563, %v2579
        %v2596 = vsub.f32 %v2564, %v2582
        %v2597 = vsub.f32 %v2565, %v2585
        %v2598 = vsub.f32 %v2566, %v2588
        %v2599 = vsub.f32 %v2567, %v2591
        %v2600 = vmul.f32 %v2592, 1.442695
        %v2601 = vpow.pop %v2600
        %v2602 = vmul.f32 %v2593, 1.442695
        %v2603 = vpow.pop %v2602
        %v2604 = vmul.f32 %v2594, 1.442695
        %v2605 = vpow.pop %v2604
        %v2606 = vmul.f32 %v2595, 1.442695
        %v2607 = vpow.pop %v2606
        %v2608 = vmul.f32 %v2596, 1.442695
        %v2609 = vpow.pop %v2608
        %v2610 = vmul.f32 %v2597, 1.442695
        %v2611 = vpow.pop %v2610
        %v2612 = vmul.f32 %v2598, 1.442695
        %v2613 = vpow.pop %v2612
        %v2614 = vmul.f32 %v2599, 1.442695
        %v2615 = vpow.pop %v2614
        %v2616 = vsel %vm2027, %v2601, 0.0
        %2617 = vadd.xlane.f32.xlu0 %v2616
        %v2618 = vpop.xlane.xlu0 %2617
        %v2619 = vsel %vm2027, %v2603, 0.0
        %2620 = vadd.xlane.f32.xlu0 %v2619
        %v2621 = vpop.xlane.xlu0 %2620
        %v2622 = vsel %vm2027, %v2605, 0.0
        %2623 = vadd.xlane.f32.xlu0 %v2622
        %v2624 = vpop.xlane.xlu0 %2623
        %v2625 = vsel %vm2027, %v2607, 0.0
        %2626 = vadd.xlane.f32.xlu0 %v2625
        %v2627 = vpop.xlane.xlu0 %2626
        %v2628 = vsel %vm2027, %v2609, 0.0
        %2629 = vadd.xlane.f32.xlu0 %v2628
        %v2630 = vpop.xlane.xlu0 %2629
        %v2631 = vsel %vm2027, %v2611, 0.0
        %2632 = vadd.xlane.f32.xlu0 %v2631
        %v2633 = vpop.xlane.xlu0 %2632
        %v2634 = vsel %vm2027, %v2613, 0.0
        %2635 = vadd.xlane.f32.xlu0 %v2634
        %v2636 = vpop.xlane.xlu0 %2635
        %v2637 = vsel %vm2027, %v2615, 0.0
        %2638 = vadd.xlane.f32.xlu0 %v2637
        %v2639 = vpop.xlane.xlu0 %2638
        %v2640 = vrcp.pop %v2618
        %v2641 = vmul.f32 %v2601, %v2640
        %v2642 = vrcp.pop %v2621
        %v2643 = vmul.f32 %v2603, %v2642
        %v2644 = vrcp.pop %v2624
        %v2645 = vmul.f32 %v2605, %v2644
        %v2646 = vrcp.pop %v2627
        %v2647 = vmul.f32 %v2607, %v2646
        %v2648 = vrcp.pop %v2630
        %v2649 = vmul.f32 %v2609, %v2648
        %v2650 = vrcp.pop %v2633
        %v2651 = vmul.f32 %v2611, %v2650
        %v2652 = vrcp.pop %v2636
        %v2653 = vmul.f32 %v2613, %v2652
        %v2654 = vrcp.pop %v2639
        %v2655 = vmul.f32 %v2615, %v2654
        %v2656 = vpack.c.bf16 %v2643, %v2641
        %v2657 = vpack.c.bf16 %v2647, %v2645
        %v2658 = vpack.c.bf16 %v2651, %v2649
        %v2659 = vpack.c.bf16 %v2655, %v2653
        %v2661 = vsel %vm2027, %v2656, 0
        %v2664 = vsel %vm2027, %v2657, 0
        %v2667 = vsel %vm2027, %v2658, 0
        %v2670 = vsel %vm2027, %v2659, 0
        %2672 = vmatprep.subr.bf16.mxu0 0
        %2673 = vmatpush1.bf16.msra.mxu0 %v2491
        %2674 = vmatprep.subr.bf16.mxu0 0
        %2675 = vmatpush1.bf16.msra.mxu0 %v2492
        %2676 = vmatprep.subr.bf16.mxu0 0
        %2677 = vmatpush1.bf16.msra.mxu0 %v2493
        %2678 = vmatprep.subr.bf16.mxu0 0
        %2679 = vmatpush1.bf16.msra.mxu0 %v2494
        %2680 = vmatprep.subr.bf16.mxu0 0
        %2681 = vmatpush1.bf16.msra.mxu0 0
        %2682 = vmatprep.subr.bf16.mxu0 0
        %2683 = vmatpush1.bf16.msra.mxu0 0
        %2684 = vmatprep.subr.bf16.mxu0 0
        %2685 = vmatpush1.bf16.msra.mxu0 0
        %2686 = vmatprep.subr.bf16.mxu0 0
        %2687 = vmatpush1.bf16.msra.mxu0 0
        %2688 = vmatprep.subr.bf16.mxu0 0
        %2689 = vmatpush1.bf16.msra.mxu0 0
        %2690 = vmatprep.subr.bf16.mxu0 0
        %2691 = vmatpush1.bf16.msra.mxu0 0
        %2692 = vmatprep.subr.bf16.mxu0 0
        %2693 = vmatpush1.bf16.msra.mxu0 0
        %2694 = vmatprep.subr.bf16.mxu0 0
        %2695 = vmatpush1.bf16.msra.mxu0 0
        %2696 = vmatprep.subr.bf16.mxu0 0
        %2697 = vmatpush1.bf16.msra.mxu0 0
        %2698 = vmatprep.subr.bf16.mxu0 0
        %2699 = vmatpush1.bf16.msra.mxu0 0
        %2700 = vmatprep.subr.bf16.mxu0 0
        %2701 = vmatpush1.bf16.msra.mxu0 0
        %2702 = vmatprep.subr.bf16.mxu0 0
        %2703 = vmatpush1.bf16.msra.mxu0 0
        %2704 = vmatprep.mubr.bf16.mxu0 0
        %2705 = vmatmul.mubr.bf16.gmra.mrb[0].mxu0 %v2661
        %v2706 = vpop.f32.mrb[0].mxu0
        %v2707 = vadd.f32 0.0, %v2706
        %v2708 = vpop.f32.mrb[0].mxu0
        %v2709 = vpop.f32.mrb[0].mxu0
        %v2710 = vadd.f32 0.0, %v2709
        %v2711 = vpop.f32.mrb[0].mxu0
        %2712 = vmatprep.mubr.bf16.mxu0 0
        %2713 = vmatmul.mubr.bf16.gmra.mrb[0].mxu0 %v2664
        %v2714 = vpop.f32.mrb[0].mxu0
        %v2715 = vadd.f32 0.0, %v2714
        %v2716 = vpop.f32.mrb[0].mxu0
        %v2717 = vpop.f32.mrb[0].mxu0
        %v2718 = vadd.f32 0.0, %v2717
        %v2719 = vpop.f32.mrb[0].mxu0
        %2720 = vmatprep.mubr.bf16.mxu0 0
        %2721 = vmatmul.mubr.bf16.gmra.mrb[0].mxu0 %v2667
        %v2722 = vpop.f32.mrb[0].mxu0
        %v2723 = vadd.f32 0.0, %v2722
        %v2724 = vpop.f32.mrb[0].mxu0
        %v2725 = vpop.f32.mrb[0].mxu0
        %v2726 = vadd.f32 0.0, %v2725
        %v2727 = vpop.f32.mrb[0].mxu0
        %2728 = vmatprep.mubr.bf16.mxu0 0
        %2729 = vmatmul.mubr.bf16.gmra.mrb[0].mxu0 %v2670
        %v2730 = vpop.f32.mrb[0].mxu0
        %v2731 = vadd.f32 0.0, %v2730
        %v2732 = vpop.f32.mrb[0].mxu0
        %v2733 = vpop.f32.mrb[0].mxu0
        %v2734 = vadd.f32 0.0, %v2733
        %v2735 = vpop.f32.mrb[0].mxu0
        %2736 = vdwg.mxu0
        %2737 = vst [vmem:[#allocation3 + $0x80] sm:$0xff] %v2707
        %2738 = vst [vmem:[#allocation3 + $0x90] sm:$0xff] %v2710
        %2739 = vst [vmem:[#allocation3 + $0xa0] sm:$0xff] %v2715
        %2740 = vst [vmem:[#allocation3 + $0xb0] sm:$0xff] %v2718
        %2741 = vst [vmem:[#allocation3 + $0xc0] sm:$0xff] %v2723
        %2742 = vst [vmem:[#allocation3 + $0xd0] sm:$0xff] %v2726
        %2743 = vst [vmem:[#allocation3 + $0xe0] sm:$0xff] %v2731
        %2744 = vst [vmem:[#allocation3 + $0xf0] sm:$0xff] %v2734
        %v2745 = vmul.f32 %v1653, 0.088388346
        %v2746 = vmul.f32 %v1657, 0.088388346
        %v2747 = vmul.f32 %v1663, 0.088388346
        %v2748 = vmul.f32 %v1667, 0.088388346
        %v2749 = vmul.f32 %v1673, 0.088388346
        %v2750 = vmul.f32 %v1677, 0.088388346
        %v2751 = vmul.f32 %v1683, 0.088388346
        %v2752 = vmul.f32 %v1687, 0.088388346
        %v2753 = vpack.c.bf16 %v2746, %v2745
        %v2754 = vpack.c.bf16 %v2748, %v2747
        %v2755 = vpack.c.bf16 %v2750, %v2749
        %v2756 = vpack.c.bf16 %v2752, %v2751
        %v2757 = vpack.c.bf16 %v1770, %v1766
        %v2758 = vpack.c.bf16 %v1780, %v1776
        %v2759 = vpack.c.bf16 %v1790, %v1786
        %v2760 = vpack.c.bf16 %v1800, %v1796
        %v2761 = vpack.c.bf16 %v1883, %v1879
        %v2762 = vpack.c.bf16 %v1893, %v1889
        %v2763 = vpack.c.bf16 %v1903, %v1899
        %v2764 = vpack.c.bf16 %v1913, %v1909
        %2765 = vmatprep.subr.bf16.mxu0 0
        %2766 = vmatpush1.bf16.xpose.msra.mxu0 %v2757
        %2767 = vmatprep.subr.bf16.mxu0 0
        %2768 = vmatpush1.bf16.xpose.msra.mxu0 %v2758
        %2769 = vmatprep.subr.bf16.mxu0 0
        %2770 = vmatpush1.bf16.xpose.msra.mxu0 %v2759
        %2771 = vmatprep.subr.bf16.mxu0 0
        %2772 = vmatpush1.bf16.xpose.msra.mxu0 %v2760
        %2773 = vmatprep.subr.bf16.mxu0 0
        %2774 = vmatpush1.bf16.xpose.msra.mxu0 0
        %2775 = vmatprep.subr.bf16.mxu0 0
        %2776 = vmatpush1.bf16.xpose.msra.mxu0 0
        %2777 = vmatprep.subr.bf16.mxu0 0
        %2778 = vmatpush1.bf16.xpose.msra.mxu0 0
        %2779 = vmatprep.subr.bf16.mxu0 0
        %2780 = vmatpush1.bf16.xpose.msra.mxu0 0
        %2781 = vmatprep.subr.bf16.mxu0 0
        %2782 = vmatpush1.bf16.xpose.msra.mxu0 0
        %2783 = vmatprep.subr.bf16.mxu0 0
        %2784 = vmatpush1.bf16.xpose.msra.mxu0 0
        %2785 = vmatprep.subr.bf16.mxu0 0
        %2786 = vmatpush1.bf16.xpose.msra.mxu0 0
        %2787 = vmatprep.subr.bf16.mxu0 0
        %2788 = vmatpush1.bf16.xpose.msra.mxu0 0
        %2789 = vmatprep.subr.bf16.mxu0 0
        %2790 = vmatpush1.bf16.xpose.msra.mxu0 0
        %2791 = vmatprep.subr.bf16.mxu0 0
        %2792 = vmatpush1.bf16.xpose.msra.mxu0 0
        %2793 = vmatprep.subr.bf16.mxu0 0
        %2794 = vmatpush1.bf16.xpose.msra.mxu0 0
        %2795 = vmatprep.subr.bf16.mxu0 0
        %2796 = vmatpush1.bf16.xpose.msra.mxu0 0
        %2797 = vmatprep.mubr.bf16.mxu0 0
        %2798 = vmatmul.mubr.bf16.gmra.mrb[0].mxu0 %v2753
        %v2799 = vpop.f32.mrb[0].mxu0
        %v2800 = vadd.f32 0.0, %v2799
        %v2801 = vpop.f32.mrb[0].mxu0
        %v2802 = vpop.f32.mrb[0].mxu0
        %v2803 = vadd.f32 0.0, %v2802
        %v2804 = vpop.f32.mrb[0].mxu0
        %2805 = vmatprep.mubr.bf16.mxu0 0
        %2806 = vmatmul.mubr.bf16.gmra.mrb[0].mxu0 %v2754
        %v2807 = vpop.f32.mrb[0].mxu0
        %v2808 = vadd.f32 0.0, %v2807
        %v2809 = vpop.f32.mrb[0].mxu0
        %v2810 = vpop.f32.mrb[0].mxu0
        %v2811 = vadd.f32 0.0, %v2810
        %v2812 = vpop.f32.mrb[0].mxu0
        %2813 = vmatprep.mubr.bf16.mxu0 0
        %2814 = vmatmul.mubr.bf16.gmra.mrb[0].mxu0 %v2755
        %v2815 = vpop.f32.mrb[0].mxu0
        %v2816 = vadd.f32 0.0, %v2815
        %v2817 = vpop.f32.mrb[0].mxu0
        %v2818 = vpop.f32.mrb[0].mxu0
        %v2819 = vadd.f32 0.0, %v2818
        %v2820 = vpop.f32.mrb[0].mxu0
        %2821 = vmatprep.mubr.bf16.mxu0 0
        %2822 = vmatmul.mubr.bf16.gmra.mrb[0].mxu0 %v2756
        %v2823 = vpop.f32.mrb[0].mxu0
        %v2824 = vadd.f32 0.0, %v2823
        %v2825 = vpop.f32.mrb[0].mxu0
        %v2826 = vpop.f32.mrb[0].mxu0
        %v2827 = vadd.f32 0.0, %v2826
        %v2828 = vpop.f32.mrb[0].mxu0
        %2829 = vdwg.mxu0
        %v2830 = vsel %vm1926, -1e+30, %v2800
        %v2831 = vsel %vm1927, -1e+30, %v2803
        %v2832 = vsel %vm1928, -1e+30, %v2808
        %v2833 = vsel %vm1929, -1e+30, %v2811
        %v2834 = vsel %vm1930, -1e+30, %v2816
        %v2835 = vsel %vm1931, -1e+30, %v2819
        %v2836 = vsel %vm1932, -1e+30, %v2824
        %v2837 = vsel %vm1933, -1e+30, %v2827
        %v2838 = vsel %vm2027, %v2830, -inf
        %2839 = vmax.xlane.f32.xlu0 %v2838
        %v2840 = vpop.xlane.xlu0 %2839
        %v2841 = vsel %vm2027, %v2831, -inf
        %2842 = vmax.xlane.f32.xlu0 %v2841
        %v2843 = vpop.xlane.xlu0 %2842
        %v2844 = vsel %vm2027, %v2832, -inf
        %2845 = vmax.xlane.f32.xlu0 %v2844
        %v2846 = vpop.xlane.xlu0 %2845
        %v2847 = vsel %vm2027, %v2833, -inf
        %2848 = vmax.xlane.f32.xlu0 %v2847
        %v2849 = vpop.xlane.xlu0 %2848
        %v2850 = vsel %vm2027, %v2834, -inf
        %2851 = vmax.xlane.f32.xlu0 %v2850
        %v2852 = vpop.xlane.xlu0 %2851
        %v2853 = vsel %vm2027, %v2835, -inf
        %2854 = vmax.xlane.f32.xlu0 %v2853
        %v2855 = vpop.xlane.xlu0 %2854
        %v2856 = vsel %vm2027, %v2836, -inf
        %2857 = vmax.xlane.f32.xlu0 %v2856
        %v2858 = vpop.xlane.xlu0 %2857
        %v2859 = vsel %vm2027, %v2837, -inf
        %2860 = vmax.xlane.f32.xlu0 %v2859
        %v2861 = vpop.xlane.xlu0 %2860
        %v2862 = vsub.f32 %v2830, %v2840
        %v2863 = vsub.f32 %v2831, %v2843
        %v2864 = vsub.f32 %v2832, %v2846
        %v2865 = vsub.f32 %v2833, %v2849
        %v2866 = vsub.f32 %v2834, %v2852
        %v2867 = vsub.f32 %v2835, %v2855
        %v2868 = vsub.f32 %v2836, %v2858
        %v2869 = vsub.f32 %v2837, %v2861
        %v2870 = vmul.f32 %v2862, 1.442695
        %v2871 = vpow.pop %v2870
        %v2872 = vmul.f32 %v2863, 1.442695
        %v2873 = vpow.pop %v2872
        %v2874 = vmul.f32 %v2864, 1.442695
        %v2875 = vpow.pop %v2874
        %v2876 = vmul.f32 %v2865, 1.442695
        %v2877 = vpow.pop %v2876
        %v2878 = vmul.f32 %v2866, 1.442695
        %v2879 = vpow.pop %v2878
        %v2880 = vmul.f32 %v2867, 1.442695
        %v2881 = vpow.pop %v2880
        %v2882 = vmul.f32 %v2868, 1.442695
        %v2883 = vpow.pop %v2882
        %v2884 = vmul.f32 %v2869, 1.442695
        %v2885 = vpow.pop %v2884
        %v2886 = vsel %vm2027, %v2871, 0.0
        %2887 = vadd.xlane.f32.xlu0 %v2886
        %v2888 = vpop.xlane.xlu0 %2887
        %v2889 = vsel %vm2027, %v2873, 0.0
        %2890 = vadd.xlane.f32.xlu0 %v2889
        %v2891 = vpop.xlane.xlu0 %2890
        %v2892 = vsel %vm2027, %v2875, 0.0
        %2893 = vadd.xlane.f32.xlu0 %v2892
        %v2894 = vpop.xlane.xlu0 %2893
        %v2895 = vsel %vm2027, %v2877, 0.0
        %2896 = vadd.xlane.f32.xlu0 %v2895
        %v2897 = vpop.xlane.xlu0 %2896
        %v2898 = vsel %vm2027, %v2879, 0.0
        %2899 = vadd.xlane.f32.xlu0 %v2898
        %v2900 = vpop.xlane.xlu0 %2899
        %v2901 = vsel %vm2027, %v2881, 0.0
        %2902 = vadd.xlane.f32.xlu0 %v2901
        %v2903 = vpop.xlane.xlu0 %2902
        %v2904 = vsel %vm2027, %v2883, 0.0
        %2905 = vadd.xlane.f32.xlu0 %v2904
        %v2906 = vpop.xlane.xlu0 %2905
        %v2907 = vsel %vm2027, %v2885, 0.0
        %2908 = vadd.xlane.f32.xlu0 %v2907
        %v2909 = vpop.xlane.xlu0 %2908
        %v2910 = vrcp.pop %v2888
        %v2911 = vmul.f32 %v2871, %v2910
        %v2912 = vrcp.pop %v2891
        %v2913 = vmul.f32 %v2873, %v2912
        %v2914 = vrcp.pop %v2894
        %v2915 = vmul.f32 %v2875, %v2914
        %v2916 = vrcp.pop %v2897
        %v2917 = vmul.f32 %v2877, %v2916
        %v2918 = vrcp.pop %v2900
        %v2919 = vmul.f32 %v2879, %v2918
        %v2920 = vrcp.pop %v2903
        %v2921 = vmul.f32 %v2881, %v2920
        %v2922 = vrcp.pop %v2906
        %v2923 = vmul.f32 %v2883, %v2922
        %v2924 = vrcp.pop %v2909
        %v2925 = vmul.f32 %v2885, %v2924
        %v2926 = vpack.c.bf16 %v2913, %v2911
        %v2927 = vpack.c.bf16 %v2917, %v2915
        %v2928 = vpack.c.bf16 %v2921, %v2919
        %v2929 = vpack.c.bf16 %v2925, %v2923
        %v2931 = vsel %vm2027, %v2926, 0
        %v2934 = vsel %vm2027, %v2927, 0
        %v2937 = vsel %vm2027, %v2928, 0
        %v2940 = vsel %vm2027, %v2929, 0
        %2942 = vmatprep.subr.bf16.mxu0 0
        %2943 = vmatpush1.bf16.msra.mxu0 %v2761
        %2944 = vmatprep.subr.bf16.mxu0 0
        %2945 = vmatpush1.bf16.msra.mxu0 %v2762
        %2946 = vmatprep.subr.bf16.mxu0 0
        %2947 = vmatpush1.bf16.msra.mxu0 %v2763
        %2948 = vmatprep.subr.bf16.mxu0 0
        %2949 = vmatpush1.bf16.msra.mxu0 %v2764
        %2950 = vmatprep.subr.bf16.mxu0 0
        %2951 = vmatpush1.bf16.msra.mxu0 0
        %2952 = vmatprep.subr.bf16.mxu0 0
        %2953 = vmatpush1.bf16.msra.mxu0 0
        %2954 = vmatprep.subr.bf16.mxu0 0
        %2955 = vmatpush1.bf16.msra.mxu0 0
        %2956 = vmatprep.subr.bf16.mxu0 0
        %2957 = vmatpush1.bf16.msra.mxu0 0
        %2958 = vmatprep.subr.bf16.mxu0 0
        %2959 = vmatpush1.bf16.msra.mxu0 0
        %2960 = vmatprep.subr.bf16.mxu0 0
        %2961 = vmatpush1.bf16.msra.mxu0 0
        %2962 = vmatprep.subr.bf16.mxu0 0
        %2963 = vmatpush1.bf16.msra.mxu0 0
        %2964 = vmatprep.subr.bf16.mxu0 0
        %2965 = vmatpush1.bf16.msra.mxu0 0
        %2966 = vmatprep.subr.bf16.mxu0 0
        %2967 = vmatpush1.bf16.msra.mxu0 0
        %2968 = vmatprep.subr.bf16.mxu0 0
        %2969 = vmatpush1.bf16.msra.mxu0 0
        %2970 = vmatprep.subr.bf16.mxu0 0
        %2971 = vmatpush1.bf16.msra.mxu0 0
        %2972 = vmatprep.subr.bf16.mxu0 0
        %2973 = vmatpush1.bf16.msra.mxu0 0
        %2974 = vmatprep.mubr.bf16.mxu0 0
        %2975 = vmatmul.mubr.bf16.gmra.mrb[0].mxu0 %v2931
        %v2976 = vpop.f32.mrb[0].mxu0
        %v2977 = vadd.f32 0.0, %v2976
        %v2978 = vpop.f32.mrb[0].mxu0
        %v2979 = vpop.f32.mrb[0].mxu0
        %v2980 = vadd.f32 0.0, %v2979
        %v2981 = vpop.f32.mrb[0].mxu0
        %2982 = vmatprep.mubr.bf16.mxu0 0
        %2983 = vmatmul.mubr.bf16.gmra.mrb[0].mxu0 %v2934
        %v2984 = vpop.f32.mrb[0].mxu0
        %v2985 = vadd.f32 0.0, %v2984
        %v2986 = vpop.f32.mrb[0].mxu0
        %v2987 = vpop.f32.mrb[0].mxu0
        %v2988 = vadd.f32 0.0, %v2987
        %v2989 = vpop.f32.mrb[0].mxu0
        %2990 = vmatprep.mubr.bf16.mxu0 0
        %2991 = vmatmul.mubr.bf16.gmra.mrb[0].mxu0 %v2937
        %v2992 = vpop.f32.mrb[0].mxu0
        %v2993 = vadd.f32 0.0, %v2992
        %v2994 = vpop.f32.mrb[0].mxu0
        %v2995 = vpop.f32.mrb[0].mxu0
        %v2996 = vadd.f32 0.0, %v2995
        %v2997 = vpop.f32.mrb[0].mxu0
        %2998 = vmatprep.mubr.bf16.mxu0 0
        %2999 = vmatmul.mubr.bf16.gmra.mrb[0].mxu0 %v2940
        %v3000 = vpop.f32.mrb[0].mxu0
        %v3001 = vadd.f32 0.0, %v3000
        %v3002 = vpop.f32.mrb[0].mxu0
        %v3003 = vpop.f32.mrb[0].mxu0
        %v3004 = vadd.f32 0.0, %v3003
        %v3005 = vpop.f32.mrb[0].mxu0
        %3006 = vdwg.mxu0
        %3007 = vst [vmem:[#allocation3 + $0x88] sm:$0xff] %v2977
        %3008 = vst [vmem:[#allocation3 + $0x98] sm:$0xff] %v2980
        %3009 = vst [vmem:[#allocation3 + $0xa8] sm:$0xff] %v2985
        %3010 = vst [vmem:[#allocation3 + $0xb8] sm:$0xff] %v2988
        %3011 = vst [vmem:[#allocation3 + $0xc8] sm:$0xff] %v2993
        %3012 = vst [vmem:[#allocation3 + $0xd8] sm:$0xff] %v2996
        %3013 = vst [vmem:[#allocation3 + $0xe8] sm:$0xff] %v3001
        %3014 = vst [vmem:[#allocation3 + $0xf8] sm:$0xff] %v3004
        %v3015 = vld [vmem:[#allocation3] sm:$0xff]
        %v3016 = vld [vmem:[#allocation3 + $0x8] sm:$0xff]
        %v3017 = vld [vmem:[#allocation3 + $0x10] sm:$0xff]
        %v3018 = vld [vmem:[#allocation3 + $0x18] sm:$0xff]
        %v3019 = vld [vmem:[#allocation3 + $0x20] sm:$0xff]
        %v3020 = vld [vmem:[#allocation3 + $0x28] sm:$0xff]
        %v3021 = vld [vmem:[#allocation3 + $0x30] sm:$0xff]
        %v3022 = vld [vmem:[#allocation3 + $0x38] sm:$0xff]
        %v3023 = vld [vmem:[#allocation3 + $0x40] sm:$0xff]
        %v3024 = vld [vmem:[#allocation3 + $0x48] sm:$0xff]
        %v3025 = vld [vmem:[#allocation3 + $0x50] sm:$0xff]
        %v3026 = vld [vmem:[#allocation3 + $0x58] sm:$0xff]
        %v3027 = vld [vmem:[#allocation3 + $0x60] sm:$0xff]
        %v3028 = vld [vmem:[#allocation3 + $0x68] sm:$0xff]
        %v3029 = vld [vmem:[#allocation3 + $0x70] sm:$0xff]
        %v3030 = vld [vmem:[#allocation3 + $0x78] sm:$0xff]
        %v3031 = vld [vmem:[#allocation3 + $0x80] sm:$0xff]
        %v3032 = vld [vmem:[#allocation3 + $0x88] sm:$0xff]
        %v3033 = vld [vmem:[#allocation3 + $0x90] sm:$0xff]
        %v3034 = vld [vmem:[#allocation3 + $0x98] sm:$0xff]
        %v3035 = vld [vmem:[#allocation3 + $0xa0] sm:$0xff]
        %v3036 = vld [vmem:[#allocation3 + $0xa8] sm:$0xff]
        %v3037 = vld [vmem:[#allocation3 + $0xb0] sm:$0xff]
        %v3038 = vld [vmem:[#allocation3 + $0xb8] sm:$0xff]
        %v3039 = vld [vmem:[#allocation3 + $0xc0] sm:$0xff]
        %v3040 = vld [vmem:[#allocation3 + $0xc8] sm:$0xff]
        %v3041 = vld [vmem:[#allocation3 + $0xd0] sm:$0xff]
        %v3042 = vld [vmem:[#allocation3 + $0xd8] sm:$0xff]
        %v3043 = vld [vmem:[#allocation3 + $0xe0] sm:$0xff]
        %v3044 = vld [vmem:[#allocation3 + $0xe8] sm:$0xff]
        %v3045 = vld [vmem:[#allocation3 + $0xf0] sm:$0xff]
        %v3046 = vld [vmem:[#allocation3 + $0xf8] sm:$0xff]
        %v3047 = vld [vmem:[%s694] sm:$0xff]
        %v3048 = vld [vmem:[%s694 + $0x8] sm:$0xff]
        %v3049 = vld [vmem:[%s694 + $0x10] sm:$0xff]
        %v3050 = vld [vmem:[%s694 + $0x18] sm:$0xff]
        %v3051 = vld [vmem:[%s694 + $0x20] sm:$0xff]
        %v3052 = vld [vmem:[%s694 + $0x28] sm:$0xff]
        %v3053 = vld [vmem:[%s694 + $0x30] sm:$0xff]
        %v3054 = vld [vmem:[%s694 + $0x38] sm:$0xff]
        %v3055 = vld [vmem:[%s694 + $0x40] sm:$0xff]
        %v3056 = vld [vmem:[%s694 + $0x48] sm:$0xff]
        %v3057 = vld [vmem:[%s694 + $0x50] sm:$0xff]
        %v3058 = vld [vmem:[%s694 + $0x58] sm:$0xff]
        %v3059 = vld [vmem:[%s694 + $0x60] sm:$0xff]
        %v3060 = vld [vmem:[%s694 + $0x68] sm:$0xff]
        %v3061 = vld [vmem:[%s694 + $0x70] sm:$0xff]
        %v3062 = vld [vmem:[%s694 + $0x78] sm:$0xff]
        %v3063 = vld [vmem:[%s694 + $0x80] sm:$0xff]
        %v3064 = vld [vmem:[%s694 + $0x88] sm:$0xff]
        %v3065 = vld [vmem:[%s694 + $0x90] sm:$0xff]
        %v3066 = vld [vmem:[%s694 + $0x98] sm:$0xff]
        %v3067 = vld [vmem:[%s694 + $0xa0] sm:$0xff]
        %v3068 = vld [vmem:[%s694 + $0xa8] sm:$0xff]
        %v3069 = vld [vmem:[%s694 + $0xb0] sm:$0xff]
        %v3070 = vld [vmem:[%s694 + $0xb8] sm:$0xff]
        %v3071 = vld [vmem:[%s694 + $0xc0] sm:$0xff]
        %v3072 = vld [vmem:[%s694 + $0xc8] sm:$0xff]
        %v3073 = vld [vmem:[%s694 + $0xd0] sm:$0xff]
        %v3074 = vld [vmem:[%s694 + $0xd8] sm:$0xff]
        %v3075 = vld [vmem:[%s694 + $0xe0] sm:$0xff]
        %v3076 = vld [vmem:[%s694 + $0xe8] sm:$0xff]
        %v3077 = vld [vmem:[%s694 + $0xf0] sm:$0xff]
        %v3078 = vld [vmem:[%s694 + $0xf8] sm:$0xff]
        %v3079 = vpack.c.bf16 %v3017, %v3015
        %v3080 = vpack.c.bf16 %v3018, %v3016
        %v3081 = vpack.c.bf16 %v3021, %v3019
        %v3082 = vpack.c.bf16 %v3022, %v3020
        %v3083 = vpack.c.bf16 %v3025, %v3023
        %v3084 = vpack.c.bf16 %v3026, %v3024
        %v3085 = vpack.c.bf16 %v3029, %v3027
        %v3086 = vpack.c.bf16 %v3030, %v3028
        %v3087 = vpack.c.bf16 %v3033, %v3031
        %v3088 = vpack.c.bf16 %v3034, %v3032
        %v3089 = vpack.c.bf16 %v3037, %v3035
        %v3090 = vpack.c.bf16 %v3038, %v3036
        %v3091 = vpack.c.bf16 %v3041, %v3039
        %v3092 = vpack.c.bf16 %v3042, %v3040
        %v3093 = vpack.c.bf16 %v3045, %v3043
        %v3094 = vpack.c.bf16 %v3046, %v3044
        %v3095 = vld [vmem:[%s703] sm:$0x3]
        %v3097 = vlaneseq
        %v3098 = vshrl.u32 %v3097, 7
        %v3099 = vsub.s32 0, %v3098
        %v3100 = vrot.slane %v3095, %v3099
        %v3101 = vlaneseq
        %v3102 = vshrl.u32 %v3101, 7
        %v3103 = vsub.s32 1, %v3102
        %v3104 = vrot.slane %v3095, %v3103
        %v3139 = vunpack.c.l.b16 %v3047
        %v3140 = vunpack.c.h.b16 %v3047
        %v3141 = vunpack.c.l.b16 %v3048
        %v3142 = vunpack.c.h.b16 %v3048
        %v3143 = vunpack.c.l.b16 %v3049
        %v3144 = vunpack.c.h.b16 %v3049
        %v3145 = vunpack.c.l.b16 %v3050
        %v3146 = vunpack.c.h.b16 %v3050
        %v3147 = vunpack.c.l.b16 %v3051
        %v3148 = vunpack.c.h.b16 %v3051
        %v3149 = vunpack.c.l.b16 %v3052
        %v3150 = vunpack.c.h.b16 %v3052
        %v3151 = vunpack.c.l.b16 %v3053
        %v3152 = vunpack.c.h.b16 %v3053
        %v3153 = vunpack.c.l.b16 %v3054
        %v3154 = vunpack.c.h.b16 %v3054
        %v3155 = vunpack.c.l.b16 %v3055
        %v3156 = vunpack.c.h.b16 %v3055
        %v3157 = vunpack.c.l.b16 %v3056
        %v3158 = vunpack.c.h.b16 %v3056
        %v3159 = vunpack.c.l.b16 %v3057
        %v3160 = vunpack.c.h.b16 %v3057
        %v3161 = vunpack.c.l.b16 %v3058
        %v3162 = vunpack.c.h.b16 %v3058
        %v3163 = vunpack.c.l.b16 %v3059
        %v3164 = vunpack.c.h.b16 %v3059
        %v3165 = vunpack.c.l.b16 %v3060
        %v3166 = vunpack.c.h.b16 %v3060
        %v3167 = vunpack.c.l.b16 %v3061
        %v3168 = vunpack.c.h.b16 %v3061
        %v3169 = vunpack.c.l.b16 %v3062
        %v3170 = vunpack.c.h.b16 %v3062
        %v3171 = vunpack.c.l.b16 %v3063
        %v3172 = vunpack.c.h.b16 %v3063
        %v3173 = vunpack.c.l.b16 %v3064
        %v3174 = vunpack.c.h.b16 %v3064
        %v3175 = vunpack.c.l.b16 %v3065
        %v3176 = vunpack.c.h.b16 %v3065
        %v3177 = vunpack.c.l.b16 %v3066
        %v3178 = vunpack.c.h.b16 %v3066
        %v3179 = vunpack.c.l.b16 %v3067
        %v3180 = vunpack.c.h.b16 %v3067
        %v3181 = vunpack.c.l.b16 %v3068
        %v3182 = vunpack.c.h.b16 %v3068
        %v3183 = vunpack.c.l.b16 %v3069
        %v3184 = vunpack.c.h.b16 %v3069
        %v3185 = vunpack.c.l.b16 %v3070
        %v3186 = vunpack.c.h.b16 %v3070
        %v3187 = vunpack.c.l.b16 %v3071
        %v3188 = vunpack.c.h.b16 %v3071
        %v3189 = vunpack.c.l.b16 %v3072
        %v3190 = vunpack.c.h.b16 %v3072
        %v3191 = vunpack.c.l.b16 %v3073
        %v3192 = vunpack.c.h.b16 %v3073
        %v3193 = vunpack.c.l.b16 %v3074
        %v3194 = vunpack.c.h.b16 %v3074
        %v3195 = vunpack.c.l.b16 %v3075
        %v3196 = vunpack.c.h.b16 %v3075
        %v3197 = vunpack.c.l.b16 %v3076
        %v3198 = vunpack.c.h.b16 %v3076
        %v3199 = vunpack.c.l.b16 %v3077
        %v3200 = vunpack.c.h.b16 %v3077
        %v3201 = vunpack.c.l.b16 %v3078
        %v3202 = vunpack.c.h.b16 %v3078
        %v3203 = vpack.c.b16 %v3141, %v3139
        %v3204 = vpack.c.b16 %v3142, %v3140
        %v3205 = vpack.c.b16 %v3145, %v3143
        %v3206 = vpack.c.b16 %v3146, %v3144
        %v3207 = vpack.c.b16 %v3149, %v3147
        %v3208 = vpack.c.b16 %v3150, %v3148
        %v3209 = vpack.c.b16 %v3153, %v3151
        %v3210 = vpack.c.b16 %v3154, %v3152
        %v3211 = vpack.c.b16 %v3157, %v3155
        %v3212 = vpack.c.b16 %v3158, %v3156
        %v3213 = vpack.c.b16 %v3161, %v3159
        %v3214 = vpack.c.b16 %v3162, %v3160
        %v3215 = vpack.c.b16 %v3165, %v3163
        %v3216 = vpack.c.b16 %v3166, %v3164
        %v3217 = vpack.c.b16 %v3169, %v3167
        %v3218 = vpack.c.b16 %v3170, %v3168
        %v3219 = vpack.c.b16 %v3173, %v3171
        %v3220 = vpack.c.b16 %v3174, %v3172
        %v3221 = vpack.c.b16 %v3177, %v3175
        %v3222 = vpack.c.b16 %v3178, %v3176
        %v3223 = vpack.c.b16 %v3181, %v3179
        %v3224 = vpack.c.b16 %v3182, %v3180
        %v3225 = vpack.c.b16 %v3185, %v3183
        %v3226 = vpack.c.b16 %v3186, %v3184
        %v3227 = vpack.c.b16 %v3189, %v3187
        %v3228 = vpack.c.b16 %v3190, %v3188
        %v3229 = vpack.c.b16 %v3193, %v3191
        %v3230 = vpack.c.b16 %v3194, %v3192
        %v3231 = vpack.c.b16 %v3197, %v3195
        %v3232 = vpack.c.b16 %v3198, %v3196
        %v3233 = vpack.c.b16 %v3201, %v3199
        %v3234 = vpack.c.b16 %v3202, %v3200
        %3267 = vmatprep.subr.bf16.mxu0 %v3204
        %3268 = vmatpush1.bf16.msra.mxu0 %v3203
        %3269 = vmatprep.subr.bf16.mxu0 %v3206
        %3270 = vmatpush1.bf16.msra.mxu0 %v3205
        %3271 = vmatprep.subr.bf16.mxu0 %v3208
        %3272 = vmatpush1.bf16.msra.mxu0 %v3207
        %3273 = vmatprep.subr.bf16.mxu0 %v3210
        %3274 = vmatpush1.bf16.msra.mxu0 %v3209
        %3275 = vmatprep.subr.bf16.mxu0 %v3212
        %3276 = vmatpush1.bf16.msra.mxu0 %v3211
        %3277 = vmatprep.subr.bf16.mxu0 %v3214
        %3278 = vmatpush1.bf16.msra.mxu0 %v3213
        %3279 = vmatprep.subr.bf16.mxu0 %v3216
        %3280 = vmatpush1.bf16.msra.mxu0 %v3215
        %3281 = vmatprep.subr.bf16.mxu0 %v3218
        %3282 = vmatpush1.bf16.msra.mxu0 %v3217
        %3283 = vmatprep.subr.bf16.mxu0 %v3220
        %3284 = vmatpush1.bf16.msra.mxu0 %v3219
        %3285 = vmatprep.subr.bf16.mxu0 %v3222
        %3286 = vmatpush1.bf16.msra.mxu0 %v3221
        %3287 = vmatprep.subr.bf16.mxu0 %v3224
        %3288 = vmatpush1.bf16.msra.mxu0 %v3223
        %3289 = vmatprep.subr.bf16.mxu0 %v3226
        %3290 = vmatpush1.bf16.msra.mxu0 %v3225
        %3291 = vmatprep.subr.bf16.mxu0 %v3228
        %3292 = vmatpush1.bf16.msra.mxu0 %v3227
        %3293 = vmatprep.subr.bf16.mxu0 %v3230
        %3294 = vmatpush1.bf16.msra.mxu0 %v3229
        %3295 = vmatprep.subr.bf16.mxu0 %v3232
        %3296 = vmatpush1.bf16.msra.mxu0 %v3231
        %3297 = vmatprep.subr.bf16.mxu0 %v3234
        %3298 = vmatpush1.bf16.msra.mxu0 %v3233
        %3299 = vmatprep.mubr.bf16.mxu0 %v3080
        %3300 = vmatmul.mubr.bf16.gmra.mrb[0].mxu0 %v3079
        %v3301 = vpop.f32.mrb[0].mxu0
        %v3302 = vadd.f32 %v3100, %v3301
        %v3303 = vpop.f32.mrb[0].mxu0
        %v3304 = vadd.f32 %v3104, %v3303
        %v3305 = vpop.f32.mrb[0].mxu0
        %v3306 = vadd.f32 %v3100, %v3305
        %v3307 = vpop.f32.mrb[0].mxu0
        %v3308 = vadd.f32 %v3104, %v3307
        %3309 = vmatprep.mubr.bf16.mxu0 %v3082
        %3310 = vmatmul.mubr.bf16.gmra.mrb[0].mxu0 %v3081
        %v3311 = vpop.f32.mrb[0].mxu0
        %v3312 = vadd.f32 %v3100, %v3311
        %v3313 = vpop.f32.mrb[0].mxu0
        %v3314 = vadd.f32 %v3104, %v3313
        %v3315 = vpop.f32.mrb[0].mxu0
        %v3316 = vadd.f32 %v3100, %v3315
        %v3317 = vpop.f32.mrb[0].mxu0
        %v3318 = vadd.f32 %v3104, %v3317
        %3319 = vmatprep.mubr.bf16.mxu0 %v3084
        %3320 = vmatmul.mubr.bf16.gmra.mrb[0].mxu0 %v3083
        %v3321 = vpop.f32.mrb[0].mxu0
        %v3322 = vadd.f32 %v3100, %v3321
        %v3323 = vpop.f32.mrb[0].mxu0
        %v3324 = vadd.f32 %v3104, %v3323
        %v3325 = vpop.f32.mrb[0].mxu0
        %v3326 = vadd.f32 %v3100, %v3325
        %v3327 = vpop.f32.mrb[0].mxu0
        %v3328 = vadd.f32 %v3104, %v3327
        %3329 = vmatprep.mubr.bf16.mxu0 %v3086
        %3330 = vmatmul.mubr.bf16.gmra.mrb[0].mxu0 %v3085
        %v3331 = vpop.f32.mrb[0].mxu0
        %v3332 = vadd.f32 %v3100, %v3331
        %v3333 = vpop.f32.mrb[0].mxu0
        %v3334 = vadd.f32 %v3104, %v3333
        %v3335 = vpop.f32.mrb[0].mxu0
        %v3336 = vadd.f32 %v3100, %v3335
        %v3337 = vpop.f32.mrb[0].mxu0
        %v3338 = vadd.f32 %v3104, %v3337
        %3339 = vmatprep.mubr.bf16.mxu0 %v3088
        %3340 = vmatmul.mubr.bf16.gmra.mrb[0].mxu0 %v3087
        %v3341 = vpop.f32.mrb[0].mxu0
        %v3342 = vadd.f32 %v3100, %v3341
        %v3343 = vpop.f32.mrb[0].mxu0
        %v3344 = vadd.f32 %v3104, %v3343
        %v3345 = vpop.f32.mrb[0].mxu0
        %v3346 = vadd.f32 %v3100, %v3345
        %v3347 = vpop.f32.mrb[0].mxu0
        %v3348 = vadd.f32 %v3104, %v3347
        %3349 = vmatprep.mubr.bf16.mxu0 %v3090
        %3350 = vmatmul.mubr.bf16.gmra.mrb[0].mxu0 %v3089
        %v3351 = vpop.f32.mrb[0].mxu0
        %v3352 = vadd.f32 %v3100, %v3351
        %v3353 = vpop.f32.mrb[0].mxu0
        %v3354 = vadd.f32 %v3104, %v3353
        %v3355 = vpop.f32.mrb[0].mxu0
        %v3356 = vadd.f32 %v3100, %v3355
        %v3357 = vpop.f32.mrb[0].mxu0
        %v3358 = vadd.f32 %v3104, %v3357
        %3359 = vmatprep.mubr.bf16.mxu0 %v3092
        %3360 = vmatmul.mubr.bf16.gmra.mrb[0].mxu0 %v3091
        %v3361 = vpop.f32.mrb[0].mxu0
        %v3362 = vadd.f32 %v3100, %v3361
        %v3363 = vpop.f32.mrb[0].mxu0
        %v3364 = vadd.f32 %v3104, %v3363
        %v3365 = vpop.f32.mrb[0].mxu0
        %v3366 = vadd.f32 %v3100, %v3365
        %v3367 = vpop.f32.mrb[0].mxu0
        %v3368 = vadd.f32 %v3104, %v3367
        %3369 = vmatprep.mubr.bf16.mxu0 %v3094
        %3370 = vmatmul.mubr.bf16.gmra.mrb[0].mxu0 %v3093
        %v3371 = vpop.f32.mrb[0].mxu0
        %v3372 = vadd.f32 %v3100, %v3371
        %v3373 = vpop.f32.mrb[0].mxu0
        %v3374 = vadd.f32 %v3104, %v3373
        %v3375 = vpop.f32.mrb[0].mxu0
        %v3376 = vadd.f32 %v3100, %v3375
        %v3377 = vpop.f32.mrb[0].mxu0
        %v3378 = vadd.f32 %v3104, %v3377
        %3379 = vdwg.mxu0
        %v3380 = vadd.f32 %v920, %v3302
        %v3381 = vadd.f32 %v921, %v3304
        %v3382 = vadd.f32 %v922, %v3306
        %v3383 = vadd.f32 %v923, %v3308
        %v3384 = vadd.f32 %v924, %v3312
        %v3385 = vadd.f32 %v925, %v3314
        %v3386 = vadd.f32 %v926, %v3316
        %v3387 = vadd.f32 %v927, %v3318
        %v3388 = vadd.f32 %v928, %v3322
        %v3389 = vadd.f32 %v929, %v3324
        %v3390 = vadd.f32 %v930, %v3326
        %v3391 = vadd.f32 %v931, %v3328
        %v3392 = vadd.f32 %v932, %v3332
        %v3393 = vadd.f32 %v933, %v3334
        %v3394 = vadd.f32 %v934, %v3336
        %v3395 = vadd.f32 %v935, %v3338
        %v3396 = vadd.f32 %v936, %v3342
        %v3397 = vadd.f32 %v937, %v3344
        %v3398 = vadd.f32 %v938, %v3346
        %v3399 = vadd.f32 %v939, %v3348
        %v3400 = vadd.f32 %v940, %v3352
        %v3401 = vadd.f32 %v941, %v3354
        %v3402 = vadd.f32 %v942, %v3356
        %v3403 = vadd.f32 %v943, %v3358
        %v3404 = vadd.f32 %v944, %v3362
        %v3405 = vadd.f32 %v945, %v3364
        %v3406 = vadd.f32 %v946, %v3366
        %v3407 = vadd.f32 %v947, %v3368
        %v3408 = vadd.f32 %v948, %v3372
        %v3409 = vadd.f32 %v949, %v3374
        %v3410 = vadd.f32 %v950, %v3376
        %v3411 = vadd.f32 %v951, %v3378
        %v3412 = vld [vmem:[%s712] sm:$0x3]
        %v3413 = vld [vmem:[%s721] sm:$0x3]
        %v3414 = vadd.f32 %v3380, %v3381
        %3415 = vadd.xlane.f32.xlu0 %v3414
        %v3416 = vpop.xlane.xlu0 %3415
        %v3417 = vadd.f32 %v3382, %v3383
        %3418 = vadd.xlane.f32.xlu0 %v3417
        %v3419 = vpop.xlane.xlu0 %3418
        %v3420 = vadd.f32 %v3384, %v3385
        %3421 = vadd.xlane.f32.xlu0 %v3420
        %v3422 = vpop.xlane.xlu0 %3421
        %v3423 = vadd.f32 %v3386, %v3387
        %3424 = vadd.xlane.f32.xlu0 %v3423
        %v3425 = vpop.xlane.xlu0 %3424
        %v3426 = vadd.f32 %v3388, %v3389
        %3427 = vadd.xlane.f32.xlu0 %v3426
        %v3428 = vpop.xlane.xlu0 %3427
        %v3429 = vadd.f32 %v3390, %v3391
        %3430 = vadd.xlane.f32.xlu0 %v3429
        %v3431 = vpop.xlane.xlu0 %3430
        %v3432 = vadd.f32 %v3392, %v3393
        %3433 = vadd.xlane.f32.xlu0 %v3432
        %v3434 = vpop.xlane.xlu0 %3433
        %v3435 = vadd.f32 %v3394, %v3395
        %3436 = vadd.xlane.f32.xlu0 %v3435
        %v3437 = vpop.xlane.xlu0 %3436
        %v3438 = vadd.f32 %v3396, %v3397
        %3439 = vadd.xlane.f32.xlu0 %v3438
        %v3440 = vpop.xlane.xlu0 %3439
        %v3441 = vadd.f32 %v3398, %v3399
        %3442 = vadd.xlane.f32.xlu0 %v3441
        %v3443 = vpop.xlane.xlu0 %3442
        %v3444 = vadd.f32 %v3400, %v3401
        %3445 = vadd.xlane.f32.xlu0 %v3444
        %v3446 = vpop.xlane.xlu0 %3445
        %v3447 = vadd.f32 %v3402, %v3403
        %3448 = vadd.xlane.f32.xlu0 %v3447
        %v3449 = vpop.xlane.xlu0 %3448
        %v3450 = vadd.f32 %v3404, %v3405
        %3451 = vadd.xlane.f32.xlu0 %v3450
        %v3452 = vpop.xlane.xlu0 %3451
        %v3453 = vadd.f32 %v3406, %v3407
        %3454 = vadd.xlane.f32.xlu0 %v3453
        %v3455 = vpop.xlane.xlu0 %3454
        %v3456 = vadd.f32 %v3408, %v3409
        %3457 = vadd.xlane.f32.xlu0 %v3456
        %v3458 = vpop.xlane.xlu0 %3457
        %v3459 = vadd.f32 %v3410, %v3411
        %3460 = vadd.xlane.f32.xlu0 %v3459
        %v3461 = vpop.xlane.xlu0 %3460
        %v3462 = vrcp.pop 256.0
        %v3463 = vmul.f32 %v3416, %v3462
        %v3464 = vmul.f32 %v3419, %v3462
        %v3465 = vmul.f32 %v3422, %v3462
        %v3466 = vmul.f32 %v3425, %v3462
        %v3467 = vmul.f32 %v3428, %v3462
        %v3468 = vmul.f32 %v3431, %v3462
        %v3469 = vmul.f32 %v3434, %v3462
        %v3470 = vmul.f32 %v3437, %v3462
        %v3471 = vmul.f32 %v3440, %v3462
        %v3472 = vmul.f32 %v3443, %v3462
        %v3473 = vmul.f32 %v3446, %v3462
        %v3474 = vmul.f32 %v3449, %v3462
        %v3475 = vmul.f32 %v3452, %v3462
        %v3476 = vmul.f32 %v3455, %v3462
        %v3477 = vmul.f32 %v3458, %v3462
        %v3478 = vmul.f32 %v3461, %v3462
        %v3479 = vsub.f32 %v3380, %v3463
        %v3480 = vsub.f32 %v3381, %v3463
        %v3481 = vsub.f32 %v3382, %v3464
        %v3482 = vsub.f32 %v3383, %v3464
        %v3483 = vsub.f32 %v3384, %v3465
        %v3484 = vsub.f32 %v3385, %v3465
        %v3485 = vsub.f32 %v3386, %v3466
        %v3486 = vsub.f32 %v3387, %v3466
        %v3487 = vsub.f32 %v3388, %v3467
        %v3488 = vsub.f32 %v3389, %v3467
        %v3489 = vsub.f32 %v3390, %v3468
        %v3490 = vsub.f32 %v3391, %v3468
        %v3491 = vsub.f32 %v3392, %v3469
        %v3492 = vsub.f32 %v3393, %v3469
        %v3493 = vsub.f32 %v3394, %v3470
        %v3494 = vsub.f32 %v3395, %v3470
        %v3495 = vsub.f32 %v3396, %v3471
        %v3496 = vsub.f32 %v3397, %v3471
        %v3497 = vsub.f32 %v3398, %v3472
        %v3498 = vsub.f32 %v3399, %v3472
        %v3499 = vsub.f32 %v3400, %v3473
        %v3500 = vsub.f32 %v3401, %v3473
        %v3501 = vsub.f32 %v3402, %v3474
        %v3502 = vsub.f32 %v3403, %v3474
        %v3503 = vsub.f32 %v3404, %v3475
        %v3504 = vsub.f32 %v3405, %v3475
        %v3505 = vsub.f32 %v3406, %v3476
        %v3506 = vsub.f32 %v3407, %v3476
        %v3507 = vsub.f32 %v3408, %v3477
        %v3508 = vsub.f32 %v3409, %v3477
        %v3509 = vsub.f32 %v3410, %v3478
        %v3510 = vsub.f32 %v3411, %v3478
        %v3511 = vmul.f32 %v3479, %v3479
        %v3512 = vmul.f32 %v3480, %v3480
        %v3513 = vmul.f32 %v3481, %v3481
        %v3514 = vmul.f32 %v3482, %v3482
        %v3515 = vmul.f32 %v3483, %v3483
        %v3516 = vmul.f32 %v3484, %v3484
        %v3517 = vmul.f32 %v3485, %v3485
        %v3518 = vmul.f32 %v3486, %v3486
        %v3519 = vmul.f32 %v3487, %v3487
        %v3520 = vmul.f32 %v3488, %v3488
        %v3521 = vmul.f32 %v3489, %v3489
        %v3522 = vmul.f32 %v3490, %v3490
        %v3523 = vmul.f32 %v3491, %v3491
        %v3524 = vmul.f32 %v3492, %v3492
        %v3525 = vmul.f32 %v3493, %v3493
        %v3526 = vmul.f32 %v3494, %v3494
        %v3527 = vmul.f32 %v3495, %v3495
        %v3528 = vmul.f32 %v3496, %v3496
        %v3529 = vmul.f32 %v3497, %v3497
        %v3530 = vmul.f32 %v3498, %v3498
        %v3531 = vmul.f32 %v3499, %v3499
        %v3532 = vmul.f32 %v3500, %v3500
        %v3533 = vmul.f32 %v3501, %v3501
        %v3534 = vmul.f32 %v3502, %v3502
        %v3535 = vmul.f32 %v3503, %v3503
        %v3536 = vmul.f32 %v3504, %v3504
        %v3537 = vmul.f32 %v3505, %v3505
        %v3538 = vmul.f32 %v3506, %v3506
        %v3539 = vmul.f32 %v3507, %v3507
        %v3540 = vmul.f32 %v3508, %v3508
        %v3541 = vmul.f32 %v3509, %v3509
        %v3542 = vmul.f32 %v3510, %v3510
        %v3543 = vadd.f32 %v3511, %v3512
        %3544 = vadd.xlane.f32.xlu0 %v3543
        %v3545 = vpop.xlane.xlu0 %3544
        %v3546 = vadd.f32 %v3513, %v3514
        %3547 = vadd.xlane.f32.xlu0 %v3546
        %v3548 = vpop.xlane.xlu0 %3547
        %v3549 = vadd.f32 %v3515, %v3516
        %3550 = vadd.xlane.f32.xlu0 %v3549
        %v3551 = vpop.xlane.xlu0 %3550
        %v3552 = vadd.f32 %v3517, %v3518
        %3553 = vadd.xlane.f32.xlu0 %v3552
        %v3554 = vpop.xlane.xlu0 %3553
        %v3555 = vadd.f32 %v3519, %v3520
        %3556 = vadd.xlane.f32.xlu0 %v3555
        %v3557 = vpop.xlane.xlu0 %3556
        %v3558 = vadd.f32 %v3521, %v3522
        %3559 = vadd.xlane.f32.xlu0 %v3558
        %v3560 = vpop.xlane.xlu0 %3559
        %v3561 = vadd.f32 %v3523, %v3524
        %3562 = vadd.xlane.f32.xlu0 %v3561
        %v3563 = vpop.xlane.xlu0 %3562
        %v3564 = vadd.f32 %v3525, %v3526
        %3565 = vadd.xlane.f32.xlu0 %v3564
        %v3566 = vpop.xlane.xlu0 %3565
        %v3567 = vadd.f32 %v3527, %v3528
        %3568 = vadd.xlane.f32.xlu0 %v3567
        %v3569 = vpop.xlane.xlu0 %3568
        %v3570 = vadd.f32 %v3529, %v3530
        %3571 = vadd.xlane.f32.xlu0 %v3570
        %v3572 = vpop.xlane.xlu0 %3571
        %v3573 = vadd.f32 %v3531, %v3532
        %3574 = vadd.xlane.f32.xlu0 %v3573
        %v3575 = vpop.xlane.xlu0 %3574
        %v3576 = vadd.f32 %v3533, %v3534
        %3577 = vadd.xlane.f32.xlu0 %v3576
        %v3578 = vpop.xlane.xlu0 %3577
        %v3579 = vadd.f32 %v3535, %v3536
        %3580 = vadd.xlane.f32.xlu0 %v3579
        %v3581 = vpop.xlane.xlu0 %3580
        %v3582 = vadd.f32 %v3537, %v3538
        %3583 = vadd.xlane.f32.xlu0 %v3582
        %v3584 = vpop.xlane.xlu0 %3583
        %v3585 = vadd.f32 %v3539, %v3540
        %3586 = vadd.xlane.f32.xlu0 %v3585
        %v3587 = vpop.xlane.xlu0 %3586
        %v3588 = vadd.f32 %v3541, %v3542
        %3589 = vadd.xlane.f32.xlu0 %v3588
        %v3590 = vpop.xlane.xlu0 %3589
        %v3591 = vmul.f32 %v3545, %v3462
        %v3592 = vmul.f32 %v3548, %v3462
        %v3593 = vmul.f32 %v3551, %v3462
        %v3594 = vmul.f32 %v3554, %v3462
        %v3595 = vmul.f32 %v3557, %v3462
        %v3596 = vmul.f32 %v3560, %v3462
        %v3597 = vmul.f32 %v3563, %v3462
        %v3598 = vmul.f32 %v3566, %v3462
        %v3599 = vmul.f32 %v3569, %v3462
        %v3600 = vmul.f32 %v3572, %v3462
        %v3601 = vmul.f32 %v3575, %v3462
        %v3602 = vmul.f32 %v3578, %v3462
        %v3603 = vmul.f32 %v3581, %v3462
        %v3604 = vmul.f32 %v3584, %v3462
        %v3605 = vmul.f32 %v3587, %v3462
        %v3606 = vmul.f32 %v3590, %v3462
        %v3607 = vadd.f32 %v3591, 1e-05
        %v3608 = vadd.f32 %v3592, 1e-05
        %v3609 = vadd.f32 %v3593, 1e-05
        %v3610 = vadd.f32 %v3594, 1e-05
        %v3611 = vadd.f32 %v3595, 1e-05
        %v3612 = vadd.f32 %v3596, 1e-05
        %v3613 = vadd.f32 %v3597, 1e-05
        %v3614 = vadd.f32 %v3598, 1e-05
        %v3615 = vadd.f32 %v3599, 1e-05
        %v3616 = vadd.f32 %v3600, 1e-05
        %v3617 = vadd.f32 %v3601, 1e-05
        %v3618 = vadd.f32 %v3602, 1e-05
        %v3619 = vadd.f32 %v3603, 1e-05
        %v3620 = vadd.f32 %v3604, 1e-05
        %v3621 = vadd.f32 %v3605, 1e-05
        %v3622 = vadd.f32 %v3606, 1e-05
        %v3623 = vrsqrt.pop %v3607
        %v3624 = vrsqrt.pop %v3608
        %v3625 = vrsqrt.pop %v3609
        %v3626 = vrsqrt.pop %v3610
        %v3627 = vrsqrt.pop %v3611
        %v3628 = vrsqrt.pop %v3612
        %v3629 = vrsqrt.pop %v3613
        %v3630 = vrsqrt.pop %v3614
        %v3631 = vrsqrt.pop %v3615
        %v3632 = vrsqrt.pop %v3616
        %v3633 = vrsqrt.pop %v3617
        %v3634 = vrsqrt.pop %v3618
        %v3635 = vrsqrt.pop %v3619
        %v3636 = vrsqrt.pop %v3620
        %v3637 = vrsqrt.pop %v3621
        %v3638 = vrsqrt.pop %v3622
        %v3639 = vmul.f32 %v3479, %v3623
        %v3640 = vmul.f32 %v3480, %v3623
        %v3641 = vmul.f32 %v3481, %v3624
        %v3642 = vmul.f32 %v3482, %v3624
        %v3643 = vmul.f32 %v3483, %v3625
        %v3644 = vmul.f32 %v3484, %v3625
        %v3645 = vmul.f32 %v3485, %v3626
        %v3646 = vmul.f32 %v3486, %v3626
        %v3647 = vmul.f32 %v3487, %v3627
        %v3648 = vmul.f32 %v3488, %v3627
        %v3649 = vmul.f32 %v3489, %v3628
        %v3650 = vmul.f32 %v3490, %v3628
        %v3651 = vmul.f32 %v3491, %v3629
        %v3652 = vmul.f32 %v3492, %v3629
        %v3653 = vmul.f32 %v3493, %v3630
        %v3654 = vmul.f32 %v3494, %v3630
        %v3655 = vmul.f32 %v3495, %v3631
        %v3656 = vmul.f32 %v3496, %v3631
        %v3657 = vmul.f32 %v3497, %v3632
        %v3658 = vmul.f32 %v3498, %v3632
        %v3659 = vmul.f32 %v3499, %v3633
        %v3660 = vmul.f32 %v3500, %v3633
        %v3661 = vmul.f32 %v3501, %v3634
        %v3662 = vmul.f32 %v3502, %v3634
        %v3663 = vmul.f32 %v3503, %v3635
        %v3664 = vmul.f32 %v3504, %v3635
        %v3665 = vmul.f32 %v3505, %v3636
        %v3666 = vmul.f32 %v3506, %v3636
        %v3667 = vmul.f32 %v3507, %v3637
        %v3668 = vmul.f32 %v3508, %v3637
        %v3669 = vmul.f32 %v3509, %v3638
        %v3670 = vmul.f32 %v3510, %v3638
        %v3672 = vlaneseq
        %v3673 = vshrl.u32 %v3672, 7
        %v3674 = vsub.s32 0, %v3673
        %v3675 = vrot.slane %v3412, %v3674
        %v3676 = vlaneseq
        %v3677 = vshrl.u32 %v3676, 7
        %v3678 = vsub.s32 1, %v3677
        %v3679 = vrot.slane %v3412, %v3678
        %v3682 = vmul.f32 %v3639, %v3675
        %v3683 = vmul.f32 %v3640, %v3679
        %v3684 = vmul.f32 %v3641, %v3675
        %v3685 = vmul.f32 %v3642, %v3679
        %v3686 = vmul.f32 %v3643, %v3675
        %v3687 = vmul.f32 %v3644, %v3679
        %v3688 = vmul.f32 %v3645, %v3675
        %v3689 = vmul.f32 %v3646, %v3679
        %v3690 = vmul.f32 %v3647, %v3675
        %v3691 = vmul.f32 %v3648, %v3679
        %v3692 = vmul.f32 %v3649, %v3675
        %v3693 = vmul.f32 %v3650, %v3679
        %v3694 = vmul.f32 %v3651, %v3675
        %v3695 = vmul.f32 %v3652, %v3679
        %v3696 = vmul.f32 %v3653, %v3675
        %v3697 = vmul.f32 %v3654, %v3679
        %v3698 = vmul.f32 %v3655, %v3675
        %v3699 = vmul.f32 %v3656, %v3679
        %v3700 = vmul.f32 %v3657, %v3675
        %v3701 = vmul.f32 %v3658, %v3679
        %v3702 = vmul.f32 %v3659, %v3675
        %v3703 = vmul.f32 %v3660, %v3679
        %v3704 = vmul.f32 %v3661, %v3675
        %v3705 = vmul.f32 %v3662, %v3679
        %v3706 = vmul.f32 %v3663, %v3675
        %v3707 = vmul.f32 %v3664, %v3679
        %v3708 = vmul.f32 %v3665, %v3675
        %v3709 = vmul.f32 %v3666, %v3679
        %v3710 = vmul.f32 %v3667, %v3675
        %v3711 = vmul.f32 %v3668, %v3679
        %v3712 = vmul.f32 %v3669, %v3675
        %v3713 = vmul.f32 %v3670, %v3679
        %v3715 = vlaneseq
        %v3716 = vshrl.u32 %v3715, 7
        %v3717 = vsub.s32 0, %v3716
        %v3718 = vrot.slane %v3413, %v3717
        %v3719 = vlaneseq
        %v3720 = vshrl.u32 %v3719, 7
        %v3721 = vsub.s32 1, %v3720
        %v3722 = vrot.slane %v3413, %v3721
        %v3725 = vadd.f32 %v3682, %v3718
        %v3726 = vadd.f32 %v3683, %v3722
        %v3727 = vadd.f32 %v3684, %v3718
        %v3728 = vadd.f32 %v3685, %v3722
        %v3729 = vadd.f32 %v3686, %v3718
        %v3730 = vadd.f32 %v3687, %v3722
        %v3731 = vadd.f32 %v3688, %v3718
        %v3732 = vadd.f32 %v3689, %v3722
        %v3733 = vadd.f32 %v3690, %v3718
        %v3734 = vadd.f32 %v3691, %v3722
        %v3735 = vadd.f32 %v3692, %v3718
        %v3736 = vadd.f32 %v3693, %v3722
        %v3737 = vadd.f32 %v3694, %v3718
        %v3738 = vadd.f32 %v3695, %v3722
        %v3739 = vadd.f32 %v3696, %v3718
        %v3740 = vadd.f32 %v3697, %v3722
        %v3741 = vadd.f32 %v3698, %v3718
        %v3742 = vadd.f32 %v3699, %v3722
        %v3743 = vadd.f32 %v3700, %v3718
        %v3744 = vadd.f32 %v3701, %v3722
        %v3745 = vadd.f32 %v3702, %v3718
        %v3746 = vadd.f32 %v3703, %v3722
        %v3747 = vadd.f32 %v3704, %v3718
        %v3748 = vadd.f32 %v3705, %v3722
        %v3749 = vadd.f32 %v3706, %v3718
        %v3750 = vadd.f32 %v3707, %v3722
        %v3751 = vadd.f32 %v3708, %v3718
        %v3752 = vadd.f32 %v3709, %v3722
        %v3753 = vadd.f32 %v3710, %v3718
        %v3754 = vadd.f32 %v3711, %v3722
        %v3755 = vadd.f32 %v3712, %v3718
        %v3756 = vadd.f32 %v3713, %v3722
        %v3757 = vld [vmem:[%s730] sm:$0xff]
        %v3758 = vld [vmem:[%s730 + $0x8] sm:$0xff]
        %v3759 = vld [vmem:[%s730 + $0x10] sm:$0xff]
        %v3760 = vld [vmem:[%s730 + $0x18] sm:$0xff]
        %v3761 = vld [vmem:[%s730 + $0x20] sm:$0xff]
        %v3762 = vld [vmem:[%s730 + $0x28] sm:$0xff]
        %v3763 = vld [vmem:[%s730 + $0x30] sm:$0xff]
        %v3764 = vld [vmem:[%s730 + $0x38] sm:$0xff]
        %v3765 = vld [vmem:[%s730 + $0x40] sm:$0xff]
        %v3766 = vld [vmem:[%s730 + $0x48] sm:$0xff]
        %v3767 = vld [vmem:[%s730 + $0x50] sm:$0xff]
        %v3768 = vld [vmem:[%s730 + $0x58] sm:$0xff]
        %v3769 = vld [vmem:[%s730 + $0x60] sm:$0xff]
        %v3770 = vld [vmem:[%s730 + $0x68] sm:$0xff]
        %v3771 = vld [vmem:[%s730 + $0x70] sm:$0xff]
        %v3772 = vld [vmem:[%s730 + $0x78] sm:$0xff]
        %v3773 = vld [vmem:[%s730 + $0x80] sm:$0xff]
        %v3774 = vld [vmem:[%s730 + $0x88] sm:$0xff]
        %v3775 = vld [vmem:[%s730 + $0x90] sm:$0xff]
        %v3776 = vld [vmem:[%s730 + $0x98] sm:$0xff]
        %v3777 = vld [vmem:[%s730 + $0xa0] sm:$0xff]
        %v3778 = vld [vmem:[%s730 + $0xa8] sm:$0xff]
        %v3779 = vld [vmem:[%s730 + $0xb0] sm:$0xff]
        %v3780 = vld [vmem:[%s730 + $0xb8] sm:$0xff]
        %v3781 = vld [vmem:[%s730 + $0xc0] sm:$0xff]
        %v3782 = vld [vmem:[%s730 + $0xc8] sm:$0xff]
        %v3783 = vld [vmem:[%s730 + $0xd0] sm:$0xff]
        %v3784 = vld [vmem:[%s730 + $0xd8] sm:$0xff]
        %v3785 = vld [vmem:[%s730 + $0xe0] sm:$0xff]
        %v3786 = vld [vmem:[%s730 + $0xe8] sm:$0xff]
        %v3787 = vld [vmem:[%s730 + $0xf0] sm:$0xff]
        %v3788 = vld [vmem:[%s730 + $0xf8] sm:$0xff]
        %v3789 = vld [vmem:[%s730 + $0x100] sm:$0xff]
        %v3790 = vld [vmem:[%s730 + $0x108] sm:$0xff]
        %v3791 = vld [vmem:[%s730 + $0x110] sm:$0xff]
        %v3792 = vld [vmem:[%s730 + $0x118] sm:$0xff]
        %v3793 = vld [vmem:[%s730 + $0x120] sm:$0xff]
        %v3794 = vld [vmem:[%s730 + $0x128] sm:$0xff]
        %v3795 = vld [vmem:[%s730 + $0x130] sm:$0xff]
        %v3796 = vld [vmem:[%s730 + $0x138] sm:$0xff]
        %v3797 = vld [vmem:[%s730 + $0x140] sm:$0xff]
        %v3798 = vld [vmem:[%s730 + $0x148] sm:$0xff]
        %v3799 = vld [vmem:[%s730 + $0x150] sm:$0xff]
        %v3800 = vld [vmem:[%s730 + $0x158] sm:$0xff]
        %v3801 = vld [vmem:[%s730 + $0x160] sm:$0xff]
        %v3802 = vld [vmem:[%s730 + $0x168] sm:$0xff]
        %v3803 = vld [vmem:[%s730 + $0x170] sm:$0xff]
        %v3804 = vld [vmem:[%s730 + $0x178] sm:$0xff]
        %v3805 = vld [vmem:[%s730 + $0x180] sm:$0xff]
        %v3806 = vld [vmem:[%s730 + $0x188] sm:$0xff]
        %v3807 = vld [vmem:[%s730 + $0x190] sm:$0xff]
        %v3808 = vld [vmem:[%s730 + $0x198] sm:$0xff]
        %v3809 = vld [vmem:[%s730 + $0x1a0] sm:$0xff]
        %v3810 = vld [vmem:[%s730 + $0x1a8] sm:$0xff]
        %v3811 = vld [vmem:[%s730 + $0x1b0] sm:$0xff]
        %v3812 = vld [vmem:[%s730 + $0x1b8] sm:$0xff]
        %v3813 = vld [vmem:[%s730 + $0x1c0] sm:$0xff]
        %v3814 = vld [vmem:[%s730 + $0x1c8] sm:$0xff]
        %v3815 = vld [vmem:[%s730 + $0x1d0] sm:$0xff]
        %v3816 = vld [vmem:[%s730 + $0x1d8] sm:$0xff]
        %v3817 = vld [vmem:[%s730 + $0x1e0] sm:$0xff]
        %v3818 = vld [vmem:[%s730 + $0x1e8] sm:$0xff]
        %v3819 = vld [vmem:[%s730 + $0x1f0] sm:$0xff]
        %v3820 = vld [vmem:[%s730 + $0x1f8] sm:$0xff]
        %v3821 = vld [vmem:[%s730 + $0x200] sm:$0xff]
        %v3822 = vld [vmem:[%s730 + $0x208] sm:$0xff]
        %v3823 = vld [vmem:[%s730 + $0x210] sm:$0xff]
        %v3824 = vld [vmem:[%s730 + $0x218] sm:$0xff]
        %v3825 = vld [vmem:[%s730 + $0x220] sm:$0xff]
        %v3826 = vld [vmem:[%s730 + $0x228] sm:$0xff]
        %v3827 = vld [vmem:[%s730 + $0x230] sm:$0xff]
        %v3828 = vld [vmem:[%s730 + $0x238] sm:$0xff]
        %v3829 = vld [vmem:[%s730 + $0x240] sm:$0xff]
        %v3830 = vld [vmem:[%s730 + $0x248] sm:$0xff]
        %v3831 = vld [vmem:[%s730 + $0x250] sm:$0xff]
        %v3832 = vld [vmem:[%s730 + $0x258] sm:$0xff]
        %v3833 = vld [vmem:[%s730 + $0x260] sm:$0xff]
        %v3834 = vld [vmem:[%s730 + $0x268] sm:$0xff]
        %v3835 = vld [vmem:[%s730 + $0x270] sm:$0xff]
        %v3836 = vld [vmem:[%s730 + $0x278] sm:$0xff]
        %v3837 = vld [vmem:[%s730 + $0x280] sm:$0xff]
        %v3838 = vld [vmem:[%s730 + $0x288] sm:$0xff]
        %v3839 = vld [vmem:[%s730 + $0x290] sm:$0xff]
        %v3840 = vld [vmem:[%s730 + $0x298] sm:$0xff]
        %v3841 = vld [vmem:[%s730 + $0x2a0] sm:$0xff]
        %v3842 = vld [vmem:[%s730 + $0x2a8] sm:$0xff]
        %v3843 = vld [vmem:[%s730 + $0x2b0] sm:$0xff]
        %v3844 = vld [vmem:[%s730 + $0x2b8] sm:$0xff]
        %v3845 = vld [vmem:[%s730 + $0x2c0] sm:$0xff]
        %v3846 = vld [vmem:[%s730 + $0x2c8] sm:$0xff]
        %v3847 = vld [vmem:[%s730 + $0x2d0] sm:$0xff]
        %v3848 = vld [vmem:[%s730 + $0x2d8] sm:$0xff]
        %v3849 = vld [vmem:[%s730 + $0x2e0] sm:$0xff]
        %v3850 = vld [vmem:[%s730 + $0x2e8] sm:$0xff]
        %v3851 = vld [vmem:[%s730 + $0x2f0] sm:$0xff]
        %v3852 = vld [vmem:[%s730 + $0x2f8] sm:$0xff]
        %v3853 = vld [vmem:[%s730 + $0x300] sm:$0xff]
        %v3854 = vld [vmem:[%s730 + $0x308] sm:$0xff]
        %v3855 = vld [vmem:[%s730 + $0x310] sm:$0xff]
        %v3856 = vld [vmem:[%s730 + $0x318] sm:$0xff]
        %v3857 = vld [vmem:[%s730 + $0x320] sm:$0xff]
        %v3858 = vld [vmem:[%s730 + $0x328] sm:$0xff]
        %v3859 = vld [vmem:[%s730 + $0x330] sm:$0xff]
        %v3860 = vld [vmem:[%s730 + $0x338] sm:$0xff]
        %v3861 = vld [vmem:[%s730 + $0x340] sm:$0xff]
        %v3862 = vld [vmem:[%s730 + $0x348] sm:$0xff]
        %v3863 = vld [vmem:[%s730 + $0x350] sm:$0xff]
        %v3864 = vld [vmem:[%s730 + $0x358] sm:$0xff]
        %v3865 = vld [vmem:[%s730 + $0x360] sm:$0xff]
        %v3866 = vld [vmem:[%s730 + $0x368] sm:$0xff]
        %v3867 = vld [vmem:[%s730 + $0x370] sm:$0xff]
        %v3868 = vld [vmem:[%s730 + $0x378] sm:$0xff]
        %v3869 = vld [vmem:[%s730 + $0x380] sm:$0xff]
        %v3870 = vld [vmem:[%s730 + $0x388] sm:$0xff]
        %v3871 = vld [vmem:[%s730 + $0x390] sm:$0xff]
        %v3872 = vld [vmem:[%s730 + $0x398] sm:$0xff]
        %v3873 = vld [vmem:[%s730 + $0x3a0] sm:$0xff]
        %v3874 = vld [vmem:[%s730 + $0x3a8] sm:$0xff]
        %v3875 = vld [vmem:[%s730 + $0x3b0] sm:$0xff]
        %v3876 = vld [vmem:[%s730 + $0x3b8] sm:$0xff]
        %v3877 = vld [vmem:[%s730 + $0x3c0] sm:$0xff]
        %v3878 = vld [vmem:[%s730 + $0x3c8] sm:$0xff]
        %v3879 = vld [vmem:[%s730 + $0x3d0] sm:$0xff]
        %v3880 = vld [vmem:[%s730 + $0x3d8] sm:$0xff]
        %v3881 = vld [vmem:[%s730 + $0x3e0] sm:$0xff]
        %v3882 = vld [vmem:[%s730 + $0x3e8] sm:$0xff]
        %v3883 = vld [vmem:[%s730 + $0x3f0] sm:$0xff]
        %v3884 = vld [vmem:[%s730 + $0x3f8] sm:$0xff]
        %v3885 = vpack.c.bf16 %v3727, %v3725
        %v3886 = vpack.c.bf16 %v3728, %v3726
        %v3887 = vpack.c.bf16 %v3731, %v3729
        %v3888 = vpack.c.bf16 %v3732, %v3730
        %v3889 = vpack.c.bf16 %v3735, %v3733
        %v3890 = vpack.c.bf16 %v3736, %v3734
        %v3891 = vpack.c.bf16 %v3739, %v3737
        %v3892 = vpack.c.bf16 %v3740, %v3738
        %v3893 = vpack.c.bf16 %v3743, %v3741
        %v3894 = vpack.c.bf16 %v3744, %v3742
        %v3895 = vpack.c.bf16 %v3747, %v3745
        %v3896 = vpack.c.bf16 %v3748, %v3746
        %v3897 = vpack.c.bf16 %v3751, %v3749
        %v3898 = vpack.c.bf16 %v3752, %v3750
        %v3899 = vpack.c.bf16 %v3755, %v3753
        %v3900 = vpack.c.bf16 %v3756, %v3754
        %v3901 = vld [vmem:[%s838] sm:$0xff]
        %v3903 = vlaneseq
        %v3904 = vshrl.u32 %v3903, 7
        %v3905 = vsub.s32 0, %v3904
        %v3906 = vrot.slane %v3901, %v3905
        %v3907 = vlaneseq
        %v3908 = vshrl.u32 %v3907, 7
        %v3909 = vsub.s32 1, %v3908
        %v3910 = vrot.slane %v3901, %v3909
        %v3911 = vlaneseq
        %v3912 = vshrl.u32 %v3911, 7
        %v3913 = vsub.s32 2, %v3912
        %v3914 = vrot.slane %v3901, %v3913
        %v3915 = vlaneseq
        %v3916 = vshrl.u32 %v3915, 7
        %v3917 = vsub.s32 3, %v3916
        %v3918 = vrot.slane %v3901, %v3917
        %v3919 = vlaneseq
        %v3920 = vshrl.u32 %v3919, 7
        %v3921 = vsub.s32 4, %v3920
        %v3922 = vrot.slane %v3901, %v3921
        %v3923 = vlaneseq
        %v3924 = vshrl.u32 %v3923, 7
        %v3925 = vsub.s32 5, %v3924
        %v3926 = vrot.slane %v3901, %v3925
        %v3927 = vlaneseq
        %v3928 = vshrl.u32 %v3927, 7
        %v3929 = vsub.s32 6, %v3928
        %v3930 = vrot.slane %v3901, %v3929
        %v3931 = vlaneseq
        %v3932 = vshrl.u32 %v3931, 7
        %v3933 = vsub.s32 7, %v3932
        %v3934 = vrot.slane %v3901, %v3933
        %v4071 = vunpack.c.l.b16 %v3757
        %v4072 = vunpack.c.h.b16 %v3757
        %v4073 = vunpack.c.l.b16 %v3758
        %v4074 = vunpack.c.h.b16 %v3758
        %v4075 = vunpack.c.l.b16 %v3759
        %v4076 = vunpack.c.h.b16 %v3759
        %v4077 = vunpack.c.l.b16 %v3760
        %v4078 = vunpack.c.h.b16 %v3760
        %v4079 = vunpack.c.l.b16 %v3761
        %v4080 = vunpack.c.h.b16 %v3761
        %v4081 = vunpack.c.l.b16 %v3762
        %v4082 = vunpack.c.h.b16 %v3762
        %v4083 = vunpack.c.l.b16 %v3763
        %v4084 = vunpack.c.h.b16 %v3763
        %v4085 = vunpack.c.l.b16 %v3764
        %v4086 = vunpack.c.h.b16 %v3764
        %v4087 = vunpack.c.l.b16 %v3765
        %v4088 = vunpack.c.h.b16 %v3765
        %v4089 = vunpack.c.l.b16 %v3766
        %v4090 = vunpack.c.h.b16 %v3766
        %v4091 = vunpack.c.l.b16 %v3767
        %v4092 = vunpack.c.h.b16 %v3767
        %v4093 = vunpack.c.l.b16 %v3768
        %v4094 = vunpack.c.h.b16 %v3768
        %v4095 = vunpack.c.l.b16 %v3769
        %v4096 = vunpack.c.h.b16 %v3769
        %v4097 = vunpack.c.l.b16 %v3770
        %v4098 = vunpack.c.h.b16 %v3770
        %v4099 = vunpack.c.l.b16 %v3771
        %v4100 = vunpack.c.h.b16 %v3771
        %v4101 = vunpack.c.l.b16 %v3772
        %v4102 = vunpack.c.h.b16 %v3772
        %v4103 = vunpack.c.l.b16 %v3773
        %v4104 = vunpack.c.h.b16 %v3773
        %v4105 = vunpack.c.l.b16 %v3774
        %v4106 = vunpack.c.h.b16 %v3774
        %v4107 = vunpack.c.l.b16 %v3775
        %v4108 = vunpack.c.h.b16 %v3775
        %v4109 = vunpack.c.l.b16 %v3776
        %v4110 = vunpack.c.h.b16 %v3776
        %v4111 = vunpack.c.l.b16 %v3777
        %v4112 = vunpack.c.h.b16 %v3777
        %v4113 = vunpack.c.l.b16 %v3778
        %v4114 = vunpack.c.h.b16 %v3778
        %v4115 = vunpack.c.l.b16 %v3779
        %v4116 = vunpack.c.h.b16 %v3779
        %v4117 = vunpack.c.l.b16 %v3780
        %v4118 = vunpack.c.h.b16 %v3780
        %v4119 = vunpack.c.l.b16 %v3781
        %v4120 = vunpack.c.h.b16 %v3781
        %v4121 = vunpack.c.l.b16 %v3782
        %v4122 = vunpack.c.h.b16 %v3782
        %v4123 = vunpack.c.l.b16 %v3783
        %v4124 = vunpack.c.h.b16 %v3783
        %v4125 = vunpack.c.l.b16 %v3784
        %v4126 = vunpack.c.h.b16 %v3784
        %v4127 = vunpack.c.l.b16 %v3785
        %v4128 = vunpack.c.h.b16 %v3785
        %v4129 = vunpack.c.l.b16 %v3786
        %v4130 = vunpack.c.h.b16 %v3786
        %v4131 = vunpack.c.l.b16 %v3787
        %v4132 = vunpack.c.h.b16 %v3787
        %v4133 = vunpack.c.l.b16 %v3788
        %v4134 = vunpack.c.h.b16 %v3788
        %v4135 = vunpack.c.l.b16 %v3789
        %v4136 = vunpack.c.h.b16 %v3789
        %v4137 = vunpack.c.l.b16 %v3790
        %v4138 = vunpack.c.h.b16 %v3790
        %v4139 = vunpack.c.l.b16 %v3791
        %v4140 = vunpack.c.h.b16 %v3791
        %v4141 = vunpack.c.l.b16 %v3792
        %v4142 = vunpack.c.h.b16 %v3792
        %v4143 = vunpack.c.l.b16 %v3793
        %v4144 = vunpack.c.h.b16 %v3793
        %v4145 = vunpack.c.l.b16 %v3794
        %v4146 = vunpack.c.h.b16 %v3794
        %v4147 = vunpack.c.l.b16 %v3795
        %v4148 = vunpack.c.h.b16 %v3795
        %v4149 = vunpack.c.l.b16 %v3796
        %v4150 = vunpack.c.h.b16 %v3796
        %v4151 = vunpack.c.l.b16 %v3797
        %v4152 = vunpack.c.h.b16 %v3797
        %v4153 = vunpack.c.l.b16 %v3798
        %v4154 = vunpack.c.h.b16 %v3798
        %v4155 = vunpack.c.l.b16 %v3799
        %v4156 = vunpack.c.h.b16 %v3799
        %v4157 = vunpack.c.l.b16 %v3800
        %v4158 = vunpack.c.h.b16 %v3800
        %v4159 = vunpack.c.l.b16 %v3801
        %v4160 = vunpack.c.h.b16 %v3801
        %v4161 = vunpack.c.l.b16 %v3802
        %v4162 = vunpack.c.h.b16 %v3802
        %v4163 = vunpack.c.l.b16 %v3803
        %v4164 = vunpack.c.h.b16 %v3803
        %v4165 = vunpack.c.l.b16 %v3804
        %v4166 = vunpack.c.h.b16 %v3804
        %v4167 = vunpack.c.l.b16 %v3805
        %v4168 = vunpack.c.h.b16 %v3805
        %v4169 = vunpack.c.l.b16 %v3806
        %v4170 = vunpack.c.h.b16 %v3806
        %v4171 = vunpack.c.l.b16 %v3807
        %v4172 = vunpack.c.h.b16 %v3807
        %v4173 = vunpack.c.l.b16 %v3808
        %v4174 = vunpack.c.h.b16 %v3808
        %v4175 = vunpack.c.l.b16 %v3809
        %v4176 = vunpack.c.h.b16 %v3809
        %v4177 = vunpack.c.l.b16 %v3810
        %v4178 = vunpack.c.h.b16 %v3810
        %v4179 = vunpack.c.l.b16 %v3811
        %v4180 = vunpack.c.h.b16 %v3811
        %v4181 = vunpack.c.l.b16 %v3812
        %v4182 = vunpack.c.h.b16 %v3812
        %v4183 = vunpack.c.l.b16 %v3813
        %v4184 = vunpack.c.h.b16 %v3813
        %v4185 = vunpack.c.l.b16 %v3814
        %v4186 = vunpack.c.h.b16 %v3814
        %v4187 = vunpack.c.l.b16 %v3815
        %v4188 = vunpack.c.h.b16 %v3815
        %v4189 = vunpack.c.l.b16 %v3816
        %v4190 = vunpack.c.h.b16 %v3816
        %v4191 = vunpack.c.l.b16 %v3817
        %v4192 = vunpack.c.h.b16 %v3817
        %v4193 = vunpack.c.l.b16 %v3818
        %v4194 = vunpack.c.h.b16 %v3818
        %v4195 = vunpack.c.l.b16 %v3819
        %v4196 = vunpack.c.h.b16 %v3819
        %v4197 = vunpack.c.l.b16 %v3820
        %v4198 = vunpack.c.h.b16 %v3820
        %v4199 = vunpack.c.l.b16 %v3821
        %v4200 = vunpack.c.h.b16 %v3821
        %v4201 = vunpack.c.l.b16 %v3822
        %v4202 = vunpack.c.h.b16 %v3822
        %v4203 = vunpack.c.l.b16 %v3823
        %v4204 = vunpack.c.h.b16 %v3823
        %v4205 = vunpack.c.l.b16 %v3824
        %v4206 = vunpack.c.h.b16 %v3824
        %v4207 = vunpack.c.l.b16 %v3825
        %v4208 = vunpack.c.h.b16 %v3825
        %v4209 = vunpack.c.l.b16 %v3826
        %v4210 = vunpack.c.h.b16 %v3826
        %v4211 = vunpack.c.l.b16 %v3827
        %v4212 = vunpack.c.h.b16 %v3827
        %v4213 = vunpack.c.l.b16 %v3828
        %v4214 = vunpack.c.h.b16 %v3828
        %v4215 = vunpack.c.l.b16 %v3829
        %v4216 = vunpack.c.h.b16 %v3829
        %v4217 = vunpack.c.l.b16 %v3830
        %v4218 = vunpack.c.h.b16 %v3830
        %v4219 = vunpack.c.l.b16 %v3831
        %v4220 = vunpack.c.h.b16 %v3831
        %v4221 = vunpack.c.l.b16 %v3832
        %v4222 = vunpack.c.h.b16 %v3832
        %v4223 = vunpack.c.l.b16 %v3833
        %v4224 = vunpack.c.h.b16 %v3833
        %v4225 = vunpack.c.l.b16 %v3834
        %v4226 = vunpack.c.h.b16 %v3834
        %v4227 = vunpack.c.l.b16 %v3835
        %v4228 = vunpack.c.h.b16 %v3835
        %v4229 = vunpack.c.l.b16 %v3836
        %v4230 = vunpack.c.h.b16 %v3836
        %v4231 = vunpack.c.l.b16 %v3837
        %v4232 = vunpack.c.h.b16 %v3837
        %v4233 = vunpack.c.l.b16 %v3838
        %v4234 = vunpack.c.h.b16 %v3838
        %v4235 = vunpack.c.l.b16 %v3839
        %v4236 = vunpack.c.h.b16 %v3839
        %v4237 = vunpack.c.l.b16 %v3840
        %v4238 = vunpack.c.h.b16 %v3840
        %v4239 = vunpack.c.l.b16 %v3841
        %v4240 = vunpack.c.h.b16 %v3841
        %v4241 = vunpack.c.l.b16 %v3842
        %v4242 = vunpack.c.h.b16 %v3842
        %v4243 = vunpack.c.l.b16 %v3843
        %v4244 = vunpack.c.h.b16 %v3843
        %v4245 = vunpack.c.l.b16 %v3844
        %v4246 = vunpack.c.h.b16 %v3844
        %v4247 = vunpack.c.l.b16 %v3845
        %v4248 = vunpack.c.h.b16 %v3845
        %v4249 = vunpack.c.l.b16 %v3846
        %v4250 = vunpack.c.h.b16 %v3846
        %v4251 = vunpack.c.l.b16 %v3847
        %v4252 = vunpack.c.h.b16 %v3847
        %v4253 = vunpack.c.l.b16 %v3848
        %v4254 = vunpack.c.h.b16 %v3848
        %v4255 = vunpack.c.l.b16 %v3849
        %v4256 = vunpack.c.h.b16 %v3849
        %v4257 = vunpack.c.l.b16 %v3850
        %v4258 = vunpack.c.h.b16 %v3850
        %v4259 = vunpack.c.l.b16 %v3851
        %v4260 = vunpack.c.h.b16 %v3851
        %v4261 = vunpack.c.l.b16 %v3852
        %v4262 = vunpack.c.h.b16 %v3852
        %v4263 = vunpack.c.l.b16 %v3853
        %v4264 = vunpack.c.h.b16 %v3853
        %v4265 = vunpack.c.l.b16 %v3854
        %v4266 = vunpack.c.h.b16 %v3854
        %v4267 = vunpack.c.l.b16 %v3855
        %v4268 = vunpack.c.h.b16 %v3855
        %v4269 = vunpack.c.l.b16 %v3856
        %v4270 = vunpack.c.h.b16 %v3856
        %v4271 = vunpack.c.l.b16 %v3857
        %v4272 = vunpack.c.h.b16 %v3857
        %v4273 = vunpack.c.l.b16 %v3858
        %v4274 = vunpack.c.h.b16 %v3858
        %v4275 = vunpack.c.l.b16 %v3859
        %v4276 = vunpack.c.h.b16 %v3859
        %v4277 = vunpack.c.l.b16 %v3860
        %v4278 = vunpack.c.h.b16 %v3860
        %v4279 = vunpack.c.l.b16 %v3861
        %v4280 = vunpack.c.h.b16 %v3861
        %v4281 = vunpack.c.l.b16 %v3862
        %v4282 = vunpack.c.h.b16 %v3862
        %v4283 = vunpack.c.l.b16 %v3863
        %v4284 = vunpack.c.h.b16 %v3863
        %v4285 = vunpack.c.l.b16 %v3864
        %v4286 = vunpack.c.h.b16 %v3864
        %v4287 = vunpack.c.l.b16 %v3865
        %v4288 = vunpack.c.h.b16 %v3865
        %v4289 = vunpack.c.l.b16 %v3866
        %v4290 = vunpack.c.h.b16 %v3866
        %v4291 = vunpack.c.l.b16 %v3867
        %v4292 = vunpack.c.h.b16 %v3867
        %v4293 = vunpack.c.l.b16 %v3868
        %v4294 = vunpack.c.h.b16 %v3868
        %v4295 = vunpack.c.l.b16 %v3869
        %v4296 = vunpack.c.h.b16 %v3869
        %v4297 = vunpack.c.l.b16 %v3870
        %v4298 = vunpack.c.h.b16 %v3870
        %v4299 = vunpack.c.l.b16 %v3871
        %v4300 = vunpack.c.h.b16 %v3871
        %v4301 = vunpack.c.l.b16 %v3872
        %v4302 = vunpack.c.h.b16 %v3872
        %v4303 = vunpack.c.l.b16 %v3873
        %v4304 = vunpack.c.h.b16 %v3873
        %v4305 = vunpack.c.l.b16 %v3874
        %v4306 = vunpack.c.h.b16 %v3874
        %v4307 = vunpack.c.l.b16 %v3875
        %v4308 = vunpack.c.h.b16 %v3875
        %v4309 = vunpack.c.l.b16 %v3876
        %v4310 = vunpack.c.h.b16 %v3876
        %v4311 = vunpack.c.l.b16 %v3877
        %v4312 = vunpack.c.h.b16 %v3877
        %v4313 = vunpack.c.l.b16 %v3878
        %v4314 = vunpack.c.h.b16 %v3878
        %v4315 = vunpack.c.l.b16 %v3879
        %v4316 = vunpack.c.h.b16 %v3879
        %v4317 = vunpack.c.l.b16 %v3880
        %v4318 = vunpack.c.h.b16 %v3880
        %v4319 = vunpack.c.l.b16 %v3881
        %v4320 = vunpack.c.h.b16 %v3881
        %v4321 = vunpack.c.l.b16 %v3882
        %v4322 = vunpack.c.h.b16 %v3882
        %v4323 = vunpack.c.l.b16 %v3883
        %v4324 = vunpack.c.h.b16 %v3883
        %v4325 = vunpack.c.l.b16 %v3884
        %v4326 = vunpack.c.h.b16 %v3884
        %v4327 = vpack.c.b16 %v4079, %v4071
        %v4328 = vpack.c.b16 %v4080, %v4072
        %v4329 = vpack.c.b16 %v4081, %v4073
        %v4330 = vpack.c.b16 %v4082, %v4074
        %v4331 = vpack.c.b16 %v4083, %v4075
        %v4332 = vpack.c.b16 %v4084, %v4076
        %v4333 = vpack.c.b16 %v4085, %v4077
        %v4334 = vpack.c.b16 %v4086, %v4078
        %v4335 = vpack.c.b16 %v4095, %v4087
        %v4336 = vpack.c.b16 %v4096, %v4088
        %v4337 = vpack.c.b16 %v4097, %v4089
        %v4338 = vpack.c.b16 %v4098, %v4090
        %v4339 = vpack.c.b16 %v4099, %v4091
        %v4340 = vpack.c.b16 %v4100, %v4092
        %v4341 = vpack.c.b16 %v4101, %v4093
        %v4342 = vpack.c.b16 %v4102, %v4094
        %v4343 = vpack.c.b16 %v4111, %v4103
        %v4344 = vpack.c.b16 %v4112, %v4104
        %v4345 = vpack.c.b16 %v4113, %v4105
        %v4346 = vpack.c.b16 %v4114, %v4106
        %v4347 = vpack.c.b16 %v4115, %v4107
        %v4348 = vpack.c.b16 %v4116, %v4108
        %v4349 = vpack.c.b16 %v4117, %v4109
        %v4350 = vpack.c.b16 %v4118, %v4110
        %v4351 = vpack.c.b16 %v4127, %v4119
        %v4352 = vpack.c.b16 %v4128, %v4120
        %v4353 = vpack.c.b16 %v4129, %v4121
        %v4354 = vpack.c.b16 %v4130, %v4122
        %v4355 = vpack.c.b16 %v4131, %v4123
        %v4356 = vpack.c.b16 %v4132, %v4124
        %v4357 = vpack.c.b16 %v4133, %v4125
        %v4358 = vpack.c.b16 %v4134, %v4126
        %v4359 = vpack.c.b16 %v4143, %v4135
        %v4360 = vpack.c.b16 %v4144, %v4136
        %v4361 = vpack.c.b16 %v4145, %v4137
        %v4362 = vpack.c.b16 %v4146, %v4138
        %v4363 = vpack.c.b16 %v4147, %v4139
        %v4364 = vpack.c.b16 %v4148, %v4140
        %v4365 = vpack.c.b16 %v4149, %v4141
        %v4366 = vpack.c.b16 %v4150, %v4142
        %v4367 = vpack.c.b16 %v4159, %v4151
        %v4368 = vpack.c.b16 %v4160, %v4152
        %v4369 = vpack.c.b16 %v4161, %v4153
        %v4370 = vpack.c.b16 %v4162, %v4154
        %v4371 = vpack.c.b16 %v4163, %v4155
        %v4372 = vpack.c.b16 %v4164, %v4156
        %v4373 = vpack.c.b16 %v4165, %v4157
        %v4374 = vpack.c.b16 %v4166, %v4158
        %v4375 = vpack.c.b16 %v4175, %v4167
        %v4376 = vpack.c.b16 %v4176, %v4168
        %v4377 = vpack.c.b16 %v4177, %v4169
        %v4378 = vpack.c.b16 %v4178, %v4170
        %v4379 = vpack.c.b16 %v4179, %v4171
        %v4380 = vpack.c.b16 %v4180, %v4172
        %v4381 = vpack.c.b16 %v4181, %v4173
        %v4382 = vpack.c.b16 %v4182, %v4174
        %v4383 = vpack.c.b16 %v4191, %v4183
        %v4384 = vpack.c.b16 %v4192, %v4184
        %v4385 = vpack.c.b16 %v4193, %v4185
        %v4386 = vpack.c.b16 %v4194, %v4186
        %v4387 = vpack.c.b16 %v4195, %v4187
        %v4388 = vpack.c.b16 %v4196, %v4188
        %v4389 = vpack.c.b16 %v4197, %v4189
        %v4390 = vpack.c.b16 %v4198, %v4190
        %v4391 = vpack.c.b16 %v4207, %v4199
        %v4392 = vpack.c.b16 %v4208, %v4200
        %v4393 = vpack.c.b16 %v4209, %v4201
        %v4394 = vpack.c.b16 %v4210, %v4202
        %v4395 = vpack.c.b16 %v4211, %v4203
        %v4396 = vpack.c.b16 %v4212, %v4204
        %v4397 = vpack.c.b16 %v4213, %v4205
        %v4398 = vpack.c.b16 %v4214, %v4206
        %v4399 = vpack.c.b16 %v4223, %v4215
        %v4400 = vpack.c.b16 %v4224, %v4216
        %v4401 = vpack.c.b16 %v4225, %v4217
        %v4402 = vpack.c.b16 %v4226, %v4218
        %v4403 = vpack.c.b16 %v4227, %v4219
        %v4404 = vpack.c.b16 %v4228, %v4220
        %v4405 = vpack.c.b16 %v4229, %v4221
        %v4406 = vpack.c.b16 %v4230, %v4222
        %v4407 = vpack.c.b16 %v4239, %v4231
        %v4408 = vpack.c.b16 %v4240, %v4232
        %v4409 = vpack.c.b16 %v4241, %v4233
        %v4410 = vpack.c.b16 %v4242, %v4234
        %v4411 = vpack.c.b16 %v4243, %v4235
        %v4412 = vpack.c.b16 %v4244, %v4236
        %v4413 = vpack.c.b16 %v4245, %v4237
        %v4414 = vpack.c.b16 %v4246, %v4238
        %v4415 = vpack.c.b16 %v4255, %v4247
        %v4416 = vpack.c.b16 %v4256, %v4248
        %v4417 = vpack.c.b16 %v4257, %v4249
        %v4418 = vpack.c.b16 %v4258, %v4250
        %v4419 = vpack.c.b16 %v4259, %v4251
        %v4420 = vpack.c.b16 %v4260, %v4252
        %v4421 = vpack.c.b16 %v4261, %v4253
        %v4422 = vpack.c.b16 %v4262, %v4254
        %v4423 = vpack.c.b16 %v4271, %v4263
        %v4424 = vpack.c.b16 %v4272, %v4264
        %v4425 = vpack.c.b16 %v4273, %v4265
        %v4426 = vpack.c.b16 %v4274, %v4266
        %v4427 = vpack.c.b16 %v4275, %v4267
        %v4428 = vpack.c.b16 %v4276, %v4268
        %v4429 = vpack.c.b16 %v4277, %v4269
        %v4430 = vpack.c.b16 %v4278, %v4270
        %v4431 = vpack.c.b16 %v4287, %v4279
        %v4432 = vpack.c.b16 %v4288, %v4280
        %v4433 = vpack.c.b16 %v4289, %v4281
        %v4434 = vpack.c.b16 %v4290, %v4282
        %v4435 = vpack.c.b16 %v4291, %v4283
        %v4436 = vpack.c.b16 %v4292, %v4284
        %v4437 = vpack.c.b16 %v4293, %v4285
        %v4438 = vpack.c.b16 %v4294, %v4286
        %v4439 = vpack.c.b16 %v4303, %v4295
        %v4440 = vpack.c.b16 %v4304, %v4296
        %v4441 = vpack.c.b16 %v4305, %v4297
        %v4442 = vpack.c.b16 %v4306, %v4298
        %v4443 = vpack.c.b16 %v4307, %v4299
        %v4444 = vpack.c.b16 %v4308, %v4300
        %v4445 = vpack.c.b16 %v4309, %v4301
        %v4446 = vpack.c.b16 %v4310, %v4302
        %v4447 = vpack.c.b16 %v4319, %v4311
        %v4448 = vpack.c.b16 %v4320, %v4312
        %v4449 = vpack.c.b16 %v4321, %v4313
        %v4450 = vpack.c.b16 %v4322, %v4314
        %v4451 = vpack.c.b16 %v4323, %v4315
        %v4452 = vpack.c.b16 %v4324, %v4316
        %v4453 = vpack.c.b16 %v4325, %v4317
        %v4454 = vpack.c.b16 %v4326, %v4318
        %4583 = vmatprep.subr.bf16.mxu0 %v4328
        %4584 = vmatpush1.bf16.msra.mxu0 %v4327
        %4585 = vmatprep.subr.bf16.mxu0 %v4336
        %4586 = vmatpush1.bf16.msra.mxu0 %v4335
        %4587 = vmatprep.subr.bf16.mxu0 %v4344
        %4588 = vmatpush1.bf16.msra.mxu0 %v4343
        %4589 = vmatprep.subr.bf16.mxu0 %v4352
        %4590 = vmatpush1.bf16.msra.mxu0 %v4351
        %4591 = vmatprep.subr.bf16.mxu0 %v4360
        %4592 = vmatpush1.bf16.msra.mxu0 %v4359
        %4593 = vmatprep.subr.bf16.mxu0 %v4368
        %4594 = vmatpush1.bf16.msra.mxu0 %v4367
        %4595 = vmatprep.subr.bf16.mxu0 %v4376
        %4596 = vmatpush1.bf16.msra.mxu0 %v4375
        %4597 = vmatprep.subr.bf16.mxu0 %v4384
        %4598 = vmatpush1.bf16.msra.mxu0 %v4383
        %4599 = vmatprep.subr.bf16.mxu0 %v4392
        %4600 = vmatpush1.bf16.msra.mxu0 %v4391
        %4601 = vmatprep.subr.bf16.mxu0 %v4400
        %4602 = vmatpush1.bf16.msra.mxu0 %v4399
        %4603 = vmatprep.subr.bf16.mxu0 %v4408
        %4604 = vmatpush1.bf16.msra.mxu0 %v4407
        %4605 = vmatprep.subr.bf16.mxu0 %v4416
        %4606 = vmatpush1.bf16.msra.mxu0 %v4415
        %4607 = vmatprep.subr.bf16.mxu0 %v4424
        %4608 = vmatpush1.bf16.msra.mxu0 %v4423
        %4609 = vmatprep.subr.bf16.mxu0 %v4432
        %4610 = vmatpush1.bf16.msra.mxu0 %v4431
        %4611 = vmatprep.subr.bf16.mxu0 %v4440
        %4612 = vmatpush1.bf16.msra.mxu0 %v4439
        %4613 = vmatprep.subr.bf16.mxu0 %v4448
        %4614 = vmatpush1.bf16.msra.mxu0 %v4447
        %4615 = vmatprep.mubr.bf16.mxu0 %v3886
        %4616 = vmatmul.mubr.bf16.gmra.mrb[0].mxu0 %v3885
        %v4617 = vpop.f32.mrb[0].mxu0
        %v4618 = vadd.f32 %v3906, %v4617
        %v4619 = vpop.f32.mrb[0].mxu0
        %v4620 = vadd.f32 %v3910, %v4619
        %v4621 = vpop.f32.mrb[0].mxu0
        %v4622 = vadd.f32 %v3906, %v4621
        %v4623 = vpop.f32.mrb[0].mxu0
        %v4624 = vadd.f32 %v3910, %v4623
        %4625 = vmatprep.mubr.bf16.mxu0 %v3888
        %4626 = vmatmul.mubr.bf16.gmra.mrb[0].mxu0 %v3887
        %v4627 = vpop.f32.mrb[0].mxu0
        %v4628 = vadd.f32 %v3906, %v4627
        %v4629 = vpop.f32.mrb[0].mxu0
        %v4630 = vadd.f32 %v3910, %v4629
        %v4631 = vpop.f32.mrb[0].mxu0
        %v4632 = vadd.f32 %v3906, %v4631
        %v4633 = vpop.f32.mrb[0].mxu0
        %v4634 = vadd.f32 %v3910, %v4633
        %4635 = vmatprep.mubr.bf16.mxu0 %v3890
        %4636 = vmatmul.mubr.bf16.gmra.mrb[0].mxu0 %v3889
        %v4637 = vpop.f32.mrb[0].mxu0
        %v4638 = vadd.f32 %v3906, %v4637
        %v4639 = vpop.f32.mrb[0].mxu0
        %v4640 = vadd.f32 %v3910, %v4639
        %v4641 = vpop.f32.mrb[0].mxu0
        %v4642 = vadd.f32 %v3906, %v4641
        %v4643 = vpop.f32.mrb[0].mxu0
        %v4644 = vadd.f32 %v3910, %v4643
        %4645 = vmatprep.mubr.bf16.mxu0 %v3892
        %4646 = vmatmul.mubr.bf16.gmra.mrb[0].mxu0 %v3891
        %v4647 = vpop.f32.mrb[0].mxu0
        %v4648 = vadd.f32 %v3906, %v4647
        %v4649 = vpop.f32.mrb[0].mxu0
        %v4650 = vadd.f32 %v3910, %v4649
        %v4651 = vpop.f32.mrb[0].mxu0
        %v4652 = vadd.f32 %v3906, %v4651
        %v4653 = vpop.f32.mrb[0].mxu0
        %v4654 = vadd.f32 %v3910, %v4653
        %4655 = vmatprep.mubr.bf16.mxu0 %v3894
        %4656 = vmatmul.mubr.bf16.gmra.mrb[0].mxu0 %v3893
        %v4657 = vpop.f32.mrb[0].mxu0
        %v4658 = vadd.f32 %v3906, %v4657
        %v4659 = vpop.f32.mrb[0].mxu0
        %v4660 = vadd.f32 %v3910, %v4659
        %v4661 = vpop.f32.mrb[0].mxu0
        %v4662 = vadd.f32 %v3906, %v4661
        %v4663 = vpop.f32.mrb[0].mxu0
        %v4664 = vadd.f32 %v3910, %v4663
        %4665 = vmatprep.mubr.bf16.mxu0 %v3896
        %4666 = vmatmul.mubr.bf16.gmra.mrb[0].mxu0 %v3895
        %v4667 = vpop.f32.mrb[0].mxu0
        %v4668 = vadd.f32 %v3906, %v4667
        %v4669 = vpop.f32.mrb[0].mxu0
        %v4670 = vadd.f32 %v3910, %v4669
        %v4671 = vpop.f32.mrb[0].mxu0
        %v4672 = vadd.f32 %v3906, %v4671
        %v4673 = vpop.f32.mrb[0].mxu0
        %v4674 = vadd.f32 %v3910, %v4673
        %4675 = vmatprep.mubr.bf16.mxu0 %v3898
        %4676 = vmatmul.mubr.bf16.gmra.mrb[0].mxu0 %v3897
        %v4677 = vpop.f32.mrb[0].mxu0
        %v4678 = vadd.f32 %v3906, %v4677
        %v4679 = vpop.f32.mrb[0].mxu0
        %v4680 = vadd.f32 %v3910, %v4679
        %v4681 = vpop.f32.mrb[0].mxu0
        %v4682 = vadd.f32 %v3906, %v4681
        %v4683 = vpop.f32.mrb[0].mxu0
        %v4684 = vadd.f32 %v3910, %v4683
        %4685 = vmatprep.mubr.bf16.mxu0 %v3900
        %4686 = vmatmul.mubr.bf16.gmra.mrb[0].mxu0 %v3899
        %v4687 = vpop.f32.mrb[0].mxu0
        %v4688 = vadd.f32 %v3906, %v4687
        %v4689 = vpop.f32.mrb[0].mxu0
        %v4690 = vadd.f32 %v3910, %v4689
        %v4691 = vpop.f32.mrb[0].mxu0
        %v4692 = vadd.f32 %v3906, %v4691
        %v4693 = vpop.f32.mrb[0].mxu0
        %v4694 = vadd.f32 %v3910, %v4693
        %4695 = vdwg.mxu0
        %4696 = vmatprep.subr.bf16.mxu0 %v4330
        %4697 = vmatpush1.bf16.msra.mxu0 %v4329
        %4698 = vmatprep.subr.bf16.mxu0 %v4338
        %4699 = vmatpush1.bf16.msra.mxu0 %v4337
        %4700 = vmatprep.subr.bf16.mxu0 %v4346
        %4701 = vmatpush1.bf16.msra.mxu0 %v4345
        %4702 = vmatprep.subr.bf16.mxu0 %v4354
        %4703 = vmatpush1.bf16.msra.mxu0 %v4353
        %4704 = vmatprep.subr.bf16.mxu0 %v4362
        %4705 = vmatpush1.bf16.msra.mxu0 %v4361
        %4706 = vmatprep.subr.bf16.mxu0 %v4370
        %4707 = vmatpush1.bf16.msra.mxu0 %v4369
        %4708 = vmatprep.subr.bf16.mxu0 %v4378
        %4709 = vmatpush1.bf16.msra.mxu0 %v4377
        %4710 = vmatprep.subr.bf16.mxu0 %v4386
        %4711 = vmatpush1.bf16.msra.mxu0 %v4385
        %4712 = vmatprep.subr.bf16.mxu0 %v4394
        %4713 = vmatpush1.bf16.msra.mxu0 %v4393
        %4714 = vmatprep.subr.bf16.mxu0 %v4402
        %4715 = vmatpush1.bf16.msra.mxu0 %v4401
        %4716 = vmatprep.subr.bf16.mxu0 %v4410
        %4717 = vmatpush1.bf16.msra.mxu0 %v4409
        %4718 = vmatprep.subr.bf16.mxu0 %v4418
        %4719 = vmatpush1.bf16.msra.mxu0 %v4417
        %4720 = vmatprep.subr.bf16.mxu0 %v4426
        %4721 = vmatpush1.bf16.msra.mxu0 %v4425
        %4722 = vmatprep.subr.bf16.mxu0 %v4434
        %4723 = vmatpush1.bf16.msra.mxu0 %v4433
        %4724 = vmatprep.subr.bf16.mxu0 %v4442
        %4725 = vmatpush1.bf16.msra.mxu0 %v4441
        %4726 = vmatprep.subr.bf16.mxu0 %v4450
        %4727 = vmatpush1.bf16.msra.mxu0 %v4449
        %4728 = vmatprep.mubr.bf16.mxu0 %v3886
        %4729 = vmatmul.mubr.bf16.gmra.mrb[0].mxu0 %v3885
        %v4730 = vpop.f32.mrb[0].mxu0
        %v4731 = vadd.f32 %v3914, %v4730
        %v4732 = vpop.f32.mrb[0].mxu0
        %v4733 = vadd.f32 %v3918, %v4732
        %v4734 = vpop.f32.mrb[0].mxu0
        %v4735 = vadd.f32 %v3914, %v4734
        %v4736 = vpop.f32.mrb[0].mxu0
        %v4737 = vadd.f32 %v3918, %v4736
        %4738 = vmatprep.mubr.bf16.mxu0 %v3888
        %4739 = vmatmul.mubr.bf16.gmra.mrb[0].mxu0 %v3887
        %v4740 = vpop.f32.mrb[0].mxu0
        %v4741 = vadd.f32 %v3914, %v4740
        %v4742 = vpop.f32.mrb[0].mxu0
        %v4743 = vadd.f32 %v3918, %v4742
        %v4744 = vpop.f32.mrb[0].mxu0
        %v4745 = vadd.f32 %v3914, %v4744
        %v4746 = vpop.f32.mrb[0].mxu0
        %v4747 = vadd.f32 %v3918, %v4746
        %4748 = vmatprep.mubr.bf16.mxu0 %v3890
        %4749 = vmatmul.mubr.bf16.gmra.mrb[0].mxu0 %v3889
        %v4750 = vpop.f32.mrb[0].mxu0
        %v4751 = vadd.f32 %v3914, %v4750
        %v4752 = vpop.f32.mrb[0].mxu0
        %v4753 = vadd.f32 %v3918, %v4752
        %v4754 = vpop.f32.mrb[0].mxu0
        %v4755 = vadd.f32 %v3914, %v4754
        %v4756 = vpop.f32.mrb[0].mxu0
        %v4757 = vadd.f32 %v3918, %v4756
        %4758 = vmatprep.mubr.bf16.mxu0 %v3892
        %4759 = vmatmul.mubr.bf16.gmra.mrb[0].mxu0 %v3891
        %v4760 = vpop.f32.mrb[0].mxu0
        %v4761 = vadd.f32 %v3914, %v4760
        %v4762 = vpop.f32.mrb[0].mxu0
        %v4763 = vadd.f32 %v3918, %v4762
        %v4764 = vpop.f32.mrb[0].mxu0
        %v4765 = vadd.f32 %v3914, %v4764
        %v4766 = vpop.f32.mrb[0].mxu0
        %v4767 = vadd.f32 %v3918, %v4766
        %4768 = vmatprep.mubr.bf16.mxu0 %v3894
        %4769 = vmatmul.mubr.bf16.gmra.mrb[0].mxu0 %v3893
        %v4770 = vpop.f32.mrb[0].mxu0
        %v4771 = vadd.f32 %v3914, %v4770
        %v4772 = vpop.f32.mrb[0].mxu0
        %v4773 = vadd.f32 %v3918, %v4772
        %v4774 = vpop.f32.mrb[0].mxu0
        %v4775 = vadd.f32 %v3914, %v4774
        %v4776 = vpop.f32.mrb[0].mxu0
        %v4777 = vadd.f32 %v3918, %v4776
        %4778 = vmatprep.mubr.bf16.mxu0 %v3896
        %4779 = vmatmul.mubr.bf16.gmra.mrb[0].mxu0 %v3895
        %v4780 = vpop.f32.mrb[0].mxu0
        %v4781 = vadd.f32 %v3914, %v4780
        %v4782 = vpop.f32.mrb[0].mxu0
        %v4783 = vadd.f32 %v3918, %v4782
        %v4784 = vpop.f32.mrb[0].mxu0
        %v4785 = vadd.f32 %v3914, %v4784
        %v4786 = vpop.f32.mrb[0].mxu0
        %v4787 = vadd.f32 %v3918, %v4786
        %4788 = vmatprep.mubr.bf16.mxu0 %v3898
        %4789 = vmatmul.mubr.bf16.gmra.mrb[0].mxu0 %v3897
        %v4790 = vpop.f32.mrb[0].mxu0
        %v4791 = vadd.f32 %v3914, %v4790
        %v4792 = vpop.f32.mrb[0].mxu0
        %v4793 = vadd.f32 %v3918, %v4792
        %v4794 = vpop.f32.mrb[0].mxu0
        %v4795 = vadd.f32 %v3914, %v4794
        %v4796 = vpop.f32.mrb[0].mxu0
        %v4797 = vadd.f32 %v3918, %v4796
        %4798 = vmatprep.mubr.bf16.mxu0 %v3900
        %4799 = vmatmul.mubr.bf16.gmra.mrb[0].mxu0 %v3899
        %v4800 = vpop.f32.mrb[0].mxu0
        %v4801 = vadd.f32 %v3914, %v4800
        %v4802 = vpop.f32.mrb[0].mxu0
        %v4803 = vadd.f32 %v3918, %v4802
        %v4804 = vpop.f32.mrb[0].mxu0
        %v4805 = vadd.f32 %v3914, %v4804
        %v4806 = vpop.f32.mrb[0].mxu0
        %v4807 = vadd.f32 %v3918, %v4806
        %4808 = vdwg.mxu0
        %4809 = vmatprep.subr.bf16.mxu0 %v4332
        %4810 = vmatpush1.bf16.msra.mxu0 %v4331
        %4811 = vmatprep.subr.bf16.mxu0 %v4340
        %4812 = vmatpush1.bf16.msra.mxu0 %v4339
        %4813 = vmatprep.subr.bf16.mxu0 %v4348
        %4814 = vmatpush1.bf16.msra.mxu0 %v4347
        %4815 = vmatprep.subr.bf16.mxu0 %v4356
        %4816 = vmatpush1.bf16.msra.mxu0 %v4355
        %4817 = vmatprep.subr.bf16.mxu0 %v4364
        %4818 = vmatpush1.bf16.msra.mxu0 %v4363
        %4819 = vmatprep.subr.bf16.mxu0 %v4372
        %4820 = vmatpush1.bf16.msra.mxu0 %v4371
        %4821 = vmatprep.subr.bf16.mxu0 %v4380
        %4822 = vmatpush1.bf16.msra.mxu0 %v4379
        %4823 = vmatprep.subr.bf16.mxu0 %v4388
        %4824 = vmatpush1.bf16.msra.mxu0 %v4387
        %4825 = vmatprep.subr.bf16.mxu0 %v4396
        %4826 = vmatpush1.bf16.msra.mxu0 %v4395
        %4827 = vmatprep.subr.bf16.mxu0 %v4404
        %4828 = vmatpush1.bf16.msra.mxu0 %v4403
        %4829 = vmatprep.subr.bf16.mxu0 %v4412
        %4830 = vmatpush1.bf16.msra.mxu0 %v4411
        %4831 = vmatprep.subr.bf16.mxu0 %v4420
        %4832 = vmatpush1.bf16.msra.mxu0 %v4419
        %4833 = vmatprep.subr.bf16.mxu0 %v4428
        %4834 = vmatpush1.bf16.msra.mxu0 %v4427
        %4835 = vmatprep.subr.bf16.mxu0 %v4436
        %4836 = vmatpush1.bf16.msra.mxu0 %v4435
        %4837 = vmatprep.subr.bf16.mxu0 %v4444
        %4838 = vmatpush1.bf16.msra.mxu0 %v4443
        %4839 = vmatprep.subr.bf16.mxu0 %v4452
        %4840 = vmatpush1.bf16.msra.mxu0 %v4451
        %4841 = vmatprep.mubr.bf16.mxu0 %v3886
        %4842 = vmatmul.mubr.bf16.gmra.mrb[0].mxu0 %v3885
        %v4843 = vpop.f32.mrb[0].mxu0
        %v4844 = vadd.f32 %v3922, %v4843
        %v4845 = vpop.f32.mrb[0].mxu0
        %v4846 = vadd.f32 %v3926, %v4845
        %v4847 = vpop.f32.mrb[0].mxu0
        %v4848 = vadd.f32 %v3922, %v4847
        %v4849 = vpop.f32.mrb[0].mxu0
        %v4850 = vadd.f32 %v3926, %v4849
        %4851 = vmatprep.mubr.bf16.mxu0 %v3888
        %4852 = vmatmul.mubr.bf16.gmra.mrb[0].mxu0 %v3887
        %v4853 = vpop.f32.mrb[0].mxu0
        %v4854 = vadd.f32 %v3922, %v4853
        %v4855 = vpop.f32.mrb[0].mxu0
        %v4856 = vadd.f32 %v3926, %v4855
        %v4857 = vpop.f32.mrb[0].mxu0
        %v4858 = vadd.f32 %v3922, %v4857
        %v4859 = vpop.f32.mrb[0].mxu0
        %v4860 = vadd.f32 %v3926, %v4859
        %4861 = vmatprep.mubr.bf16.mxu0 %v3890
        %4862 = vmatmul.mubr.bf16.gmra.mrb[0].mxu0 %v3889
        %v4863 = vpop.f32.mrb[0].mxu0
        %v4864 = vadd.f32 %v3922, %v4863
        %v4865 = vpop.f32.mrb[0].mxu0
        %v4866 = vadd.f32 %v3926, %v4865
        %v4867 = vpop.f32.mrb[0].mxu0
        %v4868 = vadd.f32 %v3922, %v4867
        %v4869 = vpop.f32.mrb[0].mxu0
        %v4870 = vadd.f32 %v3926, %v4869
        %4871 = vmatprep.mubr.bf16.mxu0 %v3892
        %4872 = vmatmul.mubr.bf16.gmra.mrb[0].mxu0 %v3891
        %v4873 = vpop.f32.mrb[0].mxu0
        %v4874 = vadd.f32 %v3922, %v4873
        %v4875 = vpop.f32.mrb[0].mxu0
        %v4876 = vadd.f32 %v3926, %v4875
        %v4877 = vpop.f32.mrb[0].mxu0
        %v4878 = vadd.f32 %v3922, %v4877
        %v4879 = vpop.f32.mrb[0].mxu0
        %v4880 = vadd.f32 %v3926, %v4879
        %4881 = vmatprep.mubr.bf16.mxu0 %v3894
        %4882 = vmatmul.mubr.bf16.gmra.mrb[0].mxu0 %v3893
        %v4883 = vpop.f32.mrb[0].mxu0
        %v4884 = vadd.f32 %v3922, %v4883
        %v4885 = vpop.f32.mrb[0].mxu0
        %v4886 = vadd.f32 %v3926, %v4885
        %v4887 = vpop.f32.mrb[0].mxu0
        %v4888 = vadd.f32 %v3922, %v4887
        %v4889 = vpop.f32.mrb[0].mxu0
        %v4890 = vadd.f32 %v3926, %v4889
        %4891 = vmatprep.mubr.bf16.mxu0 %v3896
        %4892 = vmatmul.mubr.bf16.gmra.mrb[0].mxu0 %v3895
        %v4893 = vpop.f32.mrb[0].mxu0
        %v4894 = vadd.f32 %v3922, %v4893
        %v4895 = vpop.f32.mrb[0].mxu0
        %v4896 = vadd.f32 %v3926, %v4895
        %v4897 = vpop.f32.mrb[0].mxu0
        %v4898 = vadd.f32 %v3922, %v4897
        %v4899 = vpop.f32.mrb[0].mxu0
        %v4900 = vadd.f32 %v3926, %v4899
        %4901 = vmatprep.mubr.bf16.mxu0 %v3898
        %4902 = vmatmul.mubr.bf16.gmra.mrb[0].mxu0 %v3897
        %v4903 = vpop.f32.mrb[0].mxu0
        %v4904 = vadd.f32 %v3922, %v4903
        %v4905 = vpop.f32.mrb[0].mxu0
        %v4906 = vadd.f32 %v3926, %v4905
        %v4907 = vpop.f32.mrb[0].mxu0
        %v4908 = vadd.f32 %v3922, %v4907
        %v4909 = vpop.f32.mrb[0].mxu0
        %v4910 = vadd.f32 %v3926, %v4909
        %4911 = vmatprep.mubr.bf16.mxu0 %v3900
        %4912 = vmatmul.mubr.bf16.gmra.mrb[0].mxu0 %v3899
        %v4913 = vpop.f32.mrb[0].mxu0
        %v4914 = vadd.f32 %v3922, %v4913
        %v4915 = vpop.f32.mrb[0].mxu0
        %v4916 = vadd.f32 %v3926, %v4915
        %v4917 = vpop.f32.mrb[0].mxu0
        %v4918 = vadd.f32 %v3922, %v4917
        %v4919 = vpop.f32.mrb[0].mxu0
        %v4920 = vadd.f32 %v3926, %v4919
        %4921 = vdwg.mxu0
        %4922 = vmatprep.subr.bf16.mxu0 %v4334
        %4923 = vmatpush1.bf16.msra.mxu0 %v4333
        %4924 = vmatprep.subr.bf16.mxu0 %v4342
        %4925 = vmatpush1.bf16.msra.mxu0 %v4341
        %4926 = vmatprep.subr.bf16.mxu0 %v4350
        %4927 = vmatpush1.bf16.msra.mxu0 %v4349
        %4928 = vmatprep.subr.bf16.mxu0 %v4358
        %4929 = vmatpush1.bf16.msra.mxu0 %v4357
        %4930 = vmatprep.subr.bf16.mxu0 %v4366
        %4931 = vmatpush1.bf16.msra.mxu0 %v4365
        %4932 = vmatprep.subr.bf16.mxu0 %v4374
        %4933 = vmatpush1.bf16.msra.mxu0 %v4373
        %4934 = vmatprep.subr.bf16.mxu0 %v4382
        %4935 = vmatpush1.bf16.msra.mxu0 %v4381
        %4936 = vmatprep.subr.bf16.mxu0 %v4390
        %4937 = vmatpush1.bf16.msra.mxu0 %v4389
        %4938 = vmatprep.subr.bf16.mxu0 %v4398
        %4939 = vmatpush1.bf16.msra.mxu0 %v4397
        %4940 = vmatprep.subr.bf16.mxu0 %v4406
        %4941 = vmatpush1.bf16.msra.mxu0 %v4405
        %4942 = vmatprep.subr.bf16.mxu0 %v4414
        %4943 = vmatpush1.bf16.msra.mxu0 %v4413
        %4944 = vmatprep.subr.bf16.mxu0 %v4422
        %4945 = vmatpush1.bf16.msra.mxu0 %v4421
        %4946 = vmatprep.subr.bf16.mxu0 %v4430
        %4947 = vmatpush1.bf16.msra.mxu0 %v4429
        %4948 = vmatprep.subr.bf16.mxu0 %v4438
        %4949 = vmatpush1.bf16.msra.mxu0 %v4437
        %4950 = vmatprep.subr.bf16.mxu0 %v4446
        %4951 = vmatpush1.bf16.msra.mxu0 %v4445
        %4952 = vmatprep.subr.bf16.mxu0 %v4454
        %4953 = vmatpush1.bf16.msra.mxu0 %v4453
        %4954 = vmatprep.mubr.bf16.mxu0 %v3886
        %4955 = vmatmul.mubr.bf16.gmra.mrb[0].mxu0 %v3885
        %v4956 = vpop.f32.mrb[0].mxu0
        %v4957 = vadd.f32 %v3930, %v4956
        %v4958 = vpop.f32.mrb[0].mxu0
        %v4959 = vadd.f32 %v3934, %v4958
        %v4960 = vpop.f32.mrb[0].mxu0
        %v4961 = vadd.f32 %v3930, %v4960
        %v4962 = vpop.f32.mrb[0].mxu0
        %v4963 = vadd.f32 %v3934, %v4962
        %4964 = vmatprep.mubr.bf16.mxu0 %v3888
        %4965 = vmatmul.mubr.bf16.gmra.mrb[0].mxu0 %v3887
        %v4966 = vpop.f32.mrb[0].mxu0
        %v4967 = vadd.f32 %v3930, %v4966
        %v4968 = vpop.f32.mrb[0].mxu0
        %v4969 = vadd.f32 %v3934, %v4968
        %v4970 = vpop.f32.mrb[0].mxu0
        %v4971 = vadd.f32 %v3930, %v4970
        %v4972 = vpop.f32.mrb[0].mxu0
        %v4973 = vadd.f32 %v3934, %v4972
        %4974 = vmatprep.mubr.bf16.mxu0 %v3890
        %4975 = vmatmul.mubr.bf16.gmra.mrb[0].mxu0 %v3889
        %v4976 = vpop.f32.mrb[0].mxu0
        %v4977 = vadd.f32 %v3930, %v4976
        %v4978 = vpop.f32.mrb[0].mxu0
        %v4979 = vadd.f32 %v3934, %v4978
        %v4980 = vpop.f32.mrb[0].mxu0
        %v4981 = vadd.f32 %v3930, %v4980
        %v4982 = vpop.f32.mrb[0].mxu0
        %v4983 = vadd.f32 %v3934, %v4982
        %4984 = vmatprep.mubr.bf16.mxu0 %v3892
        %4985 = vmatmul.mubr.bf16.gmra.mrb[0].mxu0 %v3891
        %v4986 = vpop.f32.mrb[0].mxu0
        %v4987 = vadd.f32 %v3930, %v4986
        %v4988 = vpop.f32.mrb[0].mxu0
        %v4989 = vadd.f32 %v3934, %v4988
        %v4990 = vpop.f32.mrb[0].mxu0
        %v4991 = vadd.f32 %v3930, %v4990
        %v4992 = vpop.f32.mrb[0].mxu0
        %v4993 = vadd.f32 %v3934, %v4992
        %4994 = vmatprep.mubr.bf16.mxu0 %v3894
        %4995 = vmatmul.mubr.bf16.gmra.mrb[0].mxu0 %v3893
        %v4996 = vpop.f32.mrb[0].mxu0
        %v4997 = vadd.f32 %v3930, %v4996
        %v4998 = vpop.f32.mrb[0].mxu0
        %v4999 = vadd.f32 %v3934, %v4998
        %v5000 = vpop.f32.mrb[0].mxu0
        %v5001 = vadd.f32 %v3930, %v5000
        %v5002 = vpop.f32.mrb[0].mxu0
        %v5003 = vadd.f32 %v3934, %v5002
        %5004 = vmatprep.mubr.bf16.mxu0 %v3896
        %5005 = vmatmul.mubr.bf16.gmra.mrb[0].mxu0 %v3895
        %v5006 = vpop.f32.mrb[0].mxu0
        %v5007 = vadd.f32 %v3930, %v5006
        %v5008 = vpop.f32.mrb[0].mxu0
        %v5009 = vadd.f32 %v3934, %v5008
        %v5010 = vpop.f32.mrb[0].mxu0
        %v5011 = vadd.f32 %v3930, %v5010
        %v5012 = vpop.f32.mrb[0].mxu0
        %v5013 = vadd.f32 %v3934, %v5012
        %5014 = vmatprep.mubr.bf16.mxu0 %v3898
        %5015 = vmatmul.mubr.bf16.gmra.mrb[0].mxu0 %v3897
        %v5016 = vpop.f32.mrb[0].mxu0
        %v5017 = vadd.f32 %v3930, %v5016
        %v5018 = vpop.f32.mrb[0].mxu0
        %v5019 = vadd.f32 %v3934, %v5018
        %v5020 = vpop.f32.mrb[0].mxu0
        %v5021 = vadd.f32 %v3930, %v5020
        %v5022 = vpop.f32.mrb[0].mxu0
        %v5023 = vadd.f32 %v3934, %v5022
        %5024 = vmatprep.mubr.bf16.mxu0 %v3900
        %5025 = vmatmul.mubr.bf16.gmra.mrb[0].mxu0 %v3899
        %v5026 = vpop.f32.mrb[0].mxu0
        %v5027 = vadd.f32 %v3930, %v5026
        %v5028 = vpop.f32.mrb[0].mxu0
        %v5029 = vadd.f32 %v3934, %v5028
        %v5030 = vpop.f32.mrb[0].mxu0
        %v5031 = vadd.f32 %v3930, %v5030
        %v5032 = vpop.f32.mrb[0].mxu0
        %v5033 = vadd.f32 %v3934, %v5032
        %5034 = vdwg.mxu0
        %v5035 = vmax.f32 %v4618, 0.0
        %v5036 = vmax.f32 %v4620, 0.0
        %v5037 = vmax.f32 %v4731, 0.0
        %v5038 = vmax.f32 %v4733, 0.0
        %v5039 = vmax.f32 %v4844, 0.0
        %v5040 = vmax.f32 %v4846, 0.0
        %v5041 = vmax.f32 %v4957, 0.0
        %v5042 = vmax.f32 %v4959, 0.0
        %v5043 = vmax.f32 %v4622, 0.0
        %v5044 = vmax.f32 %v4624, 0.0
        %v5045 = vmax.f32 %v4735, 0.0
        %v5046 = vmax.f32 %v4737, 0.0
        %v5047 = vmax.f32 %v4848, 0.0
        %v5048 = vmax.f32 %v4850, 0.0
        %v5049 = vmax.f32 %v4961, 0.0
        %v5050 = vmax.f32 %v4963, 0.0
        %v5051 = vmax.f32 %v4628, 0.0
        %v5052 = vmax.f32 %v4630, 0.0
        %v5053 = vmax.f32 %v4741, 0.0
        %v5054 = vmax.f32 %v4743, 0.0
        %v5055 = vmax.f32 %v4854, 0.0
        %v5056 = vmax.f32 %v4856, 0.0
        %v5057 = vmax.f32 %v4967, 0.0
        %v5058 = vmax.f32 %v4969, 0.0
        %v5059 = vmax.f32 %v4632, 0.0
        %v5060 = vmax.f32 %v4634, 0.0
        %v5061 = vmax.f32 %v4745, 0.0
        %v5062 = vmax.f32 %v4747, 0.0
        %v5063 = vmax.f32 %v4858, 0.0
        %v5064 = vmax.f32 %v4860, 0.0
        %v5065 = vmax.f32 %v4971, 0.0
        %v5066 = vmax.f32 %v4973, 0.0
        %v5067 = vmax.f32 %v4638, 0.0
        %v5068 = vmax.f32 %v4640, 0.0
        %v5069 = vmax.f32 %v4751, 0.0
        %v5070 = vmax.f32 %v4753, 0.0
        %v5071 = vmax.f32 %v4864, 0.0
        %v5072 = vmax.f32 %v4866, 0.0
        %v5073 = vmax.f32 %v4977, 0.0
        %v5074 = vmax.f32 %v4979, 0.0
        %v5075 = vmax.f32 %v4642, 0.0
        %v5076 = vmax.f32 %v4644, 0.0
        %v5077 = vmax.f32 %v4755, 0.0
        %v5078 = vmax.f32 %v4757, 0.0
        %v5079 = vmax.f32 %v4868, 0.0
        %v5080 = vmax.f32 %v4870, 0.0
        %v5081 = vmax.f32 %v4981, 0.0
        %v5082 = vmax.f32 %v4983, 0.0
        %v5083 = vmax.f32 %v4648, 0.0
        %v5084 = vmax.f32 %v4650, 0.0
        %v5085 = vmax.f32 %v4761, 0.0
        %v5086 = vmax.f32 %v4763, 0.0
        %v5087 = vmax.f32 %v4874, 0.0
        %v5088 = vmax.f32 %v4876, 0.0
        %v5089 = vmax.f32 %v4987, 0.0
        %v5090 = vmax.f32 %v4989, 0.0
        %v5091 = vmax.f32 %v4652, 0.0
        %v5092 = vmax.f32 %v4654, 0.0
        %v5093 = vmax.f32 %v4765, 0.0
        %v5094 = vmax.f32 %v4767, 0.0
        %v5095 = vmax.f32 %v4878, 0.0
        %v5096 = vmax.f32 %v4880, 0.0
        %v5097 = vmax.f32 %v4991, 0.0
        %v5098 = vmax.f32 %v4993, 0.0
        %v5099 = vmax.f32 %v4658, 0.0
        %v5100 = vmax.f32 %v4660, 0.0
        %v5101 = vmax.f32 %v4771, 0.0
        %v5102 = vmax.f32 %v4773, 0.0
        %v5103 = vmax.f32 %v4884, 0.0
        %v5104 = vmax.f32 %v4886, 0.0
        %v5105 = vmax.f32 %v4997, 0.0
        %v5106 = vmax.f32 %v4999, 0.0
        %v5107 = vmax.f32 %v4662, 0.0
        %v5108 = vmax.f32 %v4664, 0.0
        %v5109 = vmax.f32 %v4775, 0.0
        %v5110 = vmax.f32 %v4777, 0.0
        %v5111 = vmax.f32 %v4888, 0.0
        %v5112 = vmax.f32 %v4890, 0.0
        %v5113 = vmax.f32 %v5001, 0.0
        %v5114 = vmax.f32 %v5003, 0.0
        %v5115 = vmax.f32 %v4668, 0.0
        %v5116 = vmax.f32 %v4670, 0.0
        %v5117 = vmax.f32 %v4781, 0.0
        %v5118 = vmax.f32 %v4783, 0.0
        %v5119 = vmax.f32 %v4894, 0.0
        %v5120 = vmax.f32 %v4896, 0.0
        %v5121 = vmax.f32 %v5007, 0.0
        %v5122 = vmax.f32 %v5009, 0.0
        %v5123 = vmax.f32 %v4672, 0.0
        %v5124 = vmax.f32 %v4674, 0.0
        %v5125 = vmax.f32 %v4785, 0.0
        %v5126 = vmax.f32 %v4787, 0.0
        %v5127 = vmax.f32 %v4898, 0.0
        %v5128 = vmax.f32 %v4900, 0.0
        %v5129 = vmax.f32 %v5011, 0.0
        %v5130 = vmax.f32 %v5013, 0.0
        %v5131 = vmax.f32 %v4678, 0.0
        %v5132 = vmax.f32 %v4680, 0.0
        %v5133 = vmax.f32 %v4791, 0.0
        %v5134 = vmax.f32 %v4793, 0.0
        %v5135 = vmax.f32 %v4904, 0.0
        %v5136 = vmax.f32 %v4906, 0.0
        %v5137 = vmax.f32 %v5017, 0.0
        %v5138 = vmax.f32 %v5019, 0.0
        %v5139 = vmax.f32 %v4682, 0.0
        %v5140 = vmax.f32 %v4684, 0.0
        %v5141 = vmax.f32 %v4795, 0.0
        %v5142 = vmax.f32 %v4797, 0.0
        %v5143 = vmax.f32 %v4908, 0.0
        %v5144 = vmax.f32 %v4910, 0.0
        %v5145 = vmax.f32 %v5021, 0.0
        %v5146 = vmax.f32 %v5023, 0.0
        %v5147 = vmax.f32 %v4688, 0.0
        %v5148 = vmax.f32 %v4690, 0.0
        %v5149 = vmax.f32 %v4801, 0.0
        %v5150 = vmax.f32 %v4803, 0.0
        %v5151 = vmax.f32 %v4914, 0.0
        %v5152 = vmax.f32 %v4916, 0.0
        %v5153 = vmax.f32 %v5027, 0.0
        %v5154 = vmax.f32 %v5029, 0.0
        %v5155 = vmax.f32 %v4692, 0.0
        %v5156 = vmax.f32 %v4694, 0.0
        %v5157 = vmax.f32 %v4805, 0.0
        %v5158 = vmax.f32 %v4807, 0.0
        %v5159 = vmax.f32 %v4918, 0.0
        %v5160 = vmax.f32 %v4920, 0.0
        %v5161 = vmax.f32 %v5031, 0.0
        %v5162 = vmax.f32 %v5033, 0.0
        %v5163 = vld [vmem:[%s739] sm:$0xff]
        %v5164 = vld [vmem:[%s739 + $0x8] sm:$0xff]
        %v5165 = vld [vmem:[%s739 + $0x10] sm:$0xff]
        %v5166 = vld [vmem:[%s739 + $0x18] sm:$0xff]
        %v5167 = vld [vmem:[%s739 + $0x20] sm:$0xff]
        %v5168 = vld [vmem:[%s739 + $0x28] sm:$0xff]
        %v5169 = vld [vmem:[%s739 + $0x30] sm:$0xff]
        %v5170 = vld [vmem:[%s739 + $0x38] sm:$0xff]
        %v5171 = vld [vmem:[%s739 + $0x40] sm:$0xff]
        %v5172 = vld [vmem:[%s739 + $0x48] sm:$0xff]
        %v5173 = vld [vmem:[%s739 + $0x50] sm:$0xff]
        %v5174 = vld [vmem:[%s739 + $0x58] sm:$0xff]
        %v5175 = vld [vmem:[%s739 + $0x60] sm:$0xff]
        %v5176 = vld [vmem:[%s739 + $0x68] sm:$0xff]
        %v5177 = vld [vmem:[%s739 + $0x70] sm:$0xff]
        %v5178 = vld [vmem:[%s739 + $0x78] sm:$0xff]
        %v5179 = vld [vmem:[%s739 + $0x80] sm:$0xff]
        %v5180 = vld [vmem:[%s739 + $0x88] sm:$0xff]
        %v5181 = vld [vmem:[%s739 + $0x90] sm:$0xff]
        %v5182 = vld [vmem:[%s739 + $0x98] sm:$0xff]
        %v5183 = vld [vmem:[%s739 + $0xa0] sm:$0xff]
        %v5184 = vld [vmem:[%s739 + $0xa8] sm:$0xff]
        %v5185 = vld [vmem:[%s739 + $0xb0] sm:$0xff]
        %v5186 = vld [vmem:[%s739 + $0xb8] sm:$0xff]
        %v5187 = vld [vmem:[%s739 + $0xc0] sm:$0xff]
        %v5188 = vld [vmem:[%s739 + $0xc8] sm:$0xff]
        %v5189 = vld [vmem:[%s739 + $0xd0] sm:$0xff]
        %v5190 = vld [vmem:[%s739 + $0xd8] sm:$0xff]
        %v5191 = vld [vmem:[%s739 + $0xe0] sm:$0xff]
        %v5192 = vld [vmem:[%s739 + $0xe8] sm:$0xff]
        %v5193 = vld [vmem:[%s739 + $0xf0] sm:$0xff]
        %v5194 = vld [vmem:[%s739 + $0xf8] sm:$0xff]
        %v5195 = vld [vmem:[%s739 + $0x100] sm:$0xff]
        %v5196 = vld [vmem:[%s739 + $0x108] sm:$0xff]
        %v5197 = vld [vmem:[%s739 + $0x110] sm:$0xff]
        %v5198 = vld [vmem:[%s739 + $0x118] sm:$0xff]
        %v5199 = vld [vmem:[%s739 + $0x120] sm:$0xff]
        %v5200 = vld [vmem:[%s739 + $0x128] sm:$0xff]
        %v5201 = vld [vmem:[%s739 + $0x130] sm:$0xff]
        %v5202 = vld [vmem:[%s739 + $0x138] sm:$0xff]
        %v5203 = vld [vmem:[%s739 + $0x140] sm:$0xff]
        %v5204 = vld [vmem:[%s739 + $0x148] sm:$0xff]
        %v5205 = vld [vmem:[%s739 + $0x150] sm:$0xff]
        %v5206 = vld [vmem:[%s739 + $0x158] sm:$0xff]
        %v5207 = vld [vmem:[%s739 + $0x160] sm:$0xff]
        %v5208 = vld [vmem:[%s739 + $0x168] sm:$0xff]
        %v5209 = vld [vmem:[%s739 + $0x170] sm:$0xff]
        %v5210 = vld [vmem:[%s739 + $0x178] sm:$0xff]
        %v5211 = vld [vmem:[%s739 + $0x180] sm:$0xff]
        %v5212 = vld [vmem:[%s739 + $0x188] sm:$0xff]
        %v5213 = vld [vmem:[%s739 + $0x190] sm:$0xff]
        %v5214 = vld [vmem:[%s739 + $0x198] sm:$0xff]
        %v5215 = vld [vmem:[%s739 + $0x1a0] sm:$0xff]
        %v5216 = vld [vmem:[%s739 + $0x1a8] sm:$0xff]
        %v5217 = vld [vmem:[%s739 + $0x1b0] sm:$0xff]
        %v5218 = vld [vmem:[%s739 + $0x1b8] sm:$0xff]
        %v5219 = vld [vmem:[%s739 + $0x1c0] sm:$0xff]
        %v5220 = vld [vmem:[%s739 + $0x1c8] sm:$0xff]
        %v5221 = vld [vmem:[%s739 + $0x1d0] sm:$0xff]
        %v5222 = vld [vmem:[%s739 + $0x1d8] sm:$0xff]
        %v5223 = vld [vmem:[%s739 + $0x1e0] sm:$0xff]
        %v5224 = vld [vmem:[%s739 + $0x1e8] sm:$0xff]
        %v5225 = vld [vmem:[%s739 + $0x1f0] sm:$0xff]
        %v5226 = vld [vmem:[%s739 + $0x1f8] sm:$0xff]
        %v5227 = vld [vmem:[%s739 + $0x200] sm:$0xff]
        %v5228 = vld [vmem:[%s739 + $0x208] sm:$0xff]
        %v5229 = vld [vmem:[%s739 + $0x210] sm:$0xff]
        %v5230 = vld [vmem:[%s739 + $0x218] sm:$0xff]
        %v5231 = vld [vmem:[%s739 + $0x220] sm:$0xff]
        %v5232 = vld [vmem:[%s739 + $0x228] sm:$0xff]
        %v5233 = vld [vmem:[%s739 + $0x230] sm:$0xff]
        %v5234 = vld [vmem:[%s739 + $0x238] sm:$0xff]
        %v5235 = vld [vmem:[%s739 + $0x240] sm:$0xff]
        %v5236 = vld [vmem:[%s739 + $0x248] sm:$0xff]
        %v5237 = vld [vmem:[%s739 + $0x250] sm:$0xff]
        %v5238 = vld [vmem:[%s739 + $0x258] sm:$0xff]
        %v5239 = vld [vmem:[%s739 + $0x260] sm:$0xff]
        %v5240 = vld [vmem:[%s739 + $0x268] sm:$0xff]
        %v5241 = vld [vmem:[%s739 + $0x270] sm:$0xff]
        %v5242 = vld [vmem:[%s739 + $0x278] sm:$0xff]
        %v5243 = vld [vmem:[%s739 + $0x280] sm:$0xff]
        %v5244 = vld [vmem:[%s739 + $0x288] sm:$0xff]
        %v5245 = vld [vmem:[%s739 + $0x290] sm:$0xff]
        %v5246 = vld [vmem:[%s739 + $0x298] sm:$0xff]
        %v5247 = vld [vmem:[%s739 + $0x2a0] sm:$0xff]
        %v5248 = vld [vmem:[%s739 + $0x2a8] sm:$0xff]
        %v5249 = vld [vmem:[%s739 + $0x2b0] sm:$0xff]
        %v5250 = vld [vmem:[%s739 + $0x2b8] sm:$0xff]
        %v5251 = vld [vmem:[%s739 + $0x2c0] sm:$0xff]
        %v5252 = vld [vmem:[%s739 + $0x2c8] sm:$0xff]
        %v5253 = vld [vmem:[%s739 + $0x2d0] sm:$0xff]
        %v5254 = vld [vmem:[%s739 + $0x2d8] sm:$0xff]
        %v5255 = vld [vmem:[%s739 + $0x2e0] sm:$0xff]
        %v5256 = vld [vmem:[%s739 + $0x2e8] sm:$0xff]
        %v5257 = vld [vmem:[%s739 + $0x2f0] sm:$0xff]
        %v5258 = vld [vmem:[%s739 + $0x2f8] sm:$0xff]
        %v5259 = vld [vmem:[%s739 + $0x300] sm:$0xff]
        %v5260 = vld [vmem:[%s739 + $0x308] sm:$0xff]
        %v5261 = vld [vmem:[%s739 + $0x310] sm:$0xff]
        %v5262 = vld [vmem:[%s739 + $0x318] sm:$0xff]
        %v5263 = vld [vmem:[%s739 + $0x320] sm:$0xff]
        %v5264 = vld [vmem:[%s739 + $0x328] sm:$0xff]
        %v5265 = vld [vmem:[%s739 + $0x330] sm:$0xff]
        %v5266 = vld [vmem:[%s739 + $0x338] sm:$0xff]
        %v5267 = vld [vmem:[%s739 + $0x340] sm:$0xff]
        %v5268 = vld [vmem:[%s739 + $0x348] sm:$0xff]
        %v5269 = vld [vmem:[%s739 + $0x350] sm:$0xff]
        %v5270 = vld [vmem:[%s739 + $0x358] sm:$0xff]
        %v5271 = vld [vmem:[%s739 + $0x360] sm:$0xff]
        %v5272 = vld [vmem:[%s739 + $0x368] sm:$0xff]
        %v5273 = vld [vmem:[%s739 + $0x370] sm:$0xff]
        %v5274 = vld [vmem:[%s739 + $0x378] sm:$0xff]
        %v5275 = vld [vmem:[%s739 + $0x380] sm:$0xff]
        %v5276 = vld [vmem:[%s739 + $0x388] sm:$0xff]
        %v5277 = vld [vmem:[%s739 + $0x390] sm:$0xff]
        %v5278 = vld [vmem:[%s739 + $0x398] sm:$0xff]
        %v5279 = vld [vmem:[%s739 + $0x3a0] sm:$0xff]
        %v5280 = vld [vmem:[%s739 + $0x3a8] sm:$0xff]
        %v5281 = vld [vmem:[%s739 + $0x3b0] sm:$0xff]
        %v5282 = vld [vmem:[%s739 + $0x3b8] sm:$0xff]
        %v5283 = vld [vmem:[%s739 + $0x3c0] sm:$0xff]
        %v5284 = vld [vmem:[%s739 + $0x3c8] sm:$0xff]
        %v5285 = vld [vmem:[%s739 + $0x3d0] sm:$0xff]
        %v5286 = vld [vmem:[%s739 + $0x3d8] sm:$0xff]
        %v5287 = vld [vmem:[%s739 + $0x3e0] sm:$0xff]
        %v5288 = vld [vmem:[%s739 + $0x3e8] sm:$0xff]
        %v5289 = vld [vmem:[%s739 + $0x3f0] sm:$0xff]
        %v5290 = vld [vmem:[%s739 + $0x3f8] sm:$0xff]
        %v5291 = vpack.c.bf16 %v5043, %v5035
        %v5292 = vpack.c.bf16 %v5044, %v5036
        %v5293 = vpack.c.bf16 %v5045, %v5037
        %v5294 = vpack.c.bf16 %v5046, %v5038
        %v5295 = vpack.c.bf16 %v5047, %v5039
        %v5296 = vpack.c.bf16 %v5048, %v5040
        %v5297 = vpack.c.bf16 %v5049, %v5041
        %v5298 = vpack.c.bf16 %v5050, %v5042
        %v5299 = vpack.c.bf16 %v5059, %v5051
        %v5300 = vpack.c.bf16 %v5060, %v5052
        %v5301 = vpack.c.bf16 %v5061, %v5053
        %v5302 = vpack.c.bf16 %v5062, %v5054
        %v5303 = vpack.c.bf16 %v5063, %v5055
        %v5304 = vpack.c.bf16 %v5064, %v5056
        %v5305 = vpack.c.bf16 %v5065, %v5057
        %v5306 = vpack.c.bf16 %v5066, %v5058
        %v5307 = vpack.c.bf16 %v5075, %v5067
        %v5308 = vpack.c.bf16 %v5076, %v5068
        %v5309 = vpack.c.bf16 %v5077, %v5069
        %v5310 = vpack.c.bf16 %v5078, %v5070
        %v5311 = vpack.c.bf16 %v5079, %v5071
        %v5312 = vpack.c.bf16 %v5080, %v5072
        %v5313 = vpack.c.bf16 %v5081, %v5073
        %v5314 = vpack.c.bf16 %v5082, %v5074
        %v5315 = vpack.c.bf16 %v5091, %v5083
        %v5316 = vpack.c.bf16 %v5092, %v5084
        %v5317 = vpack.c.bf16 %v5093, %v5085
        %v5318 = vpack.c.bf16 %v5094, %v5086
        %v5319 = vpack.c.bf16 %v5095, %v5087
        %v5320 = vpack.c.bf16 %v5096, %v5088
        %v5321 = vpack.c.bf16 %v5097, %v5089
        %v5322 = vpack.c.bf16 %v5098, %v5090
        %v5323 = vpack.c.bf16 %v5107, %v5099
        %v5324 = vpack.c.bf16 %v5108, %v5100
        %v5325 = vpack.c.bf16 %v5109, %v5101
        %v5326 = vpack.c.bf16 %v5110, %v5102
        %v5327 = vpack.c.bf16 %v5111, %v5103
        %v5328 = vpack.c.bf16 %v5112, %v5104
        %v5329 = vpack.c.bf16 %v5113, %v5105
        %v5330 = vpack.c.bf16 %v5114, %v5106
        %v5331 = vpack.c.bf16 %v5123, %v5115
        %v5332 = vpack.c.bf16 %v5124, %v5116
        %v5333 = vpack.c.bf16 %v5125, %v5117
        %v5334 = vpack.c.bf16 %v5126, %v5118
        %v5335 = vpack.c.bf16 %v5127, %v5119
        %v5336 = vpack.c.bf16 %v5128, %v5120
        %v5337 = vpack.c.bf16 %v5129, %v5121
        %v5338 = vpack.c.bf16 %v5130, %v5122
        %v5339 = vpack.c.bf16 %v5139, %v5131
        %v5340 = vpack.c.bf16 %v5140, %v5132
        %v5341 = vpack.c.bf16 %v5141, %v5133
        %v5342 = vpack.c.bf16 %v5142, %v5134
        %v5343 = vpack.c.bf16 %v5143, %v5135
        %v5344 = vpack.c.bf16 %v5144, %v5136
        %v5345 = vpack.c.bf16 %v5145, %v5137
        %v5346 = vpack.c.bf16 %v5146, %v5138
        %v5347 = vpack.c.bf16 %v5155, %v5147
        %v5348 = vpack.c.bf16 %v5156, %v5148
        %v5349 = vpack.c.bf16 %v5157, %v5149
        %v5350 = vpack.c.bf16 %v5158, %v5150
        %v5351 = vpack.c.bf16 %v5159, %v5151
        %v5352 = vpack.c.bf16 %v5160, %v5152
        %v5353 = vpack.c.bf16 %v5161, %v5153
        %v5354 = vpack.c.bf16 %v5162, %v5154
        %v5355 = vld [vmem:[%s842] sm:$0x3]
        %v5357 = vlaneseq
        %v5358 = vshrl.u32 %v5357, 7
        %v5359 = vsub.s32 0, %v5358
        %v5360 = vrot.slane %v5355, %v5359
        %v5361 = vlaneseq
        %v5362 = vshrl.u32 %v5361, 7
        %v5363 = vsub.s32 1, %v5362
        %v5364 = vrot.slane %v5355, %v5363
        %v5495 = vunpack.c.l.b16 %v5163
        %v5496 = vunpack.c.h.b16 %v5163
        %v5497 = vunpack.c.l.b16 %v5164
        %v5498 = vunpack.c.h.b16 %v5164
        %v5499 = vunpack.c.l.b16 %v5165
        %v5500 = vunpack.c.h.b16 %v5165
        %v5501 = vunpack.c.l.b16 %v5166
        %v5502 = vunpack.c.h.b16 %v5166
        %v5503 = vunpack.c.l.b16 %v5167
        %v5504 = vunpack.c.h.b16 %v5167
        %v5505 = vunpack.c.l.b16 %v5168
        %v5506 = vunpack.c.h.b16 %v5168
        %v5507 = vunpack.c.l.b16 %v5169
        %v5508 = vunpack.c.h.b16 %v5169
        %v5509 = vunpack.c.l.b16 %v5170
        %v5510 = vunpack.c.h.b16 %v5170
        %v5511 = vunpack.c.l.b16 %v5171
        %v5512 = vunpack.c.h.b16 %v5171
        %v5513 = vunpack.c.l.b16 %v5172
        %v5514 = vunpack.c.h.b16 %v5172
        %v5515 = vunpack.c.l.b16 %v5173
        %v5516 = vunpack.c.h.b16 %v5173
        %v5517 = vunpack.c.l.b16 %v5174
        %v5518 = vunpack.c.h.b16 %v5174
        %v5519 = vunpack.c.l.b16 %v5175
        %v5520 = vunpack.c.h.b16 %v5175
        %v5521 = vunpack.c.l.b16 %v5176
        %v5522 = vunpack.c.h.b16 %v5176
        %v5523 = vunpack.c.l.b16 %v5177
        %v5524 = vunpack.c.h.b16 %v5177
        %v5525 = vunpack.c.l.b16 %v5178
        %v5526 = vunpack.c.h.b16 %v5178
        %v5527 = vunpack.c.l.b16 %v5179
        %v5528 = vunpack.c.h.b16 %v5179
        %v5529 = vunpack.c.l.b16 %v5180
        %v5530 = vunpack.c.h.b16 %v5180
        %v5531 = vunpack.c.l.b16 %v5181
        %v5532 = vunpack.c.h.b16 %v5181
        %v5533 = vunpack.c.l.b16 %v5182
        %v5534 = vunpack.c.h.b16 %v5182
        %v5535 = vunpack.c.l.b16 %v5183
        %v5536 = vunpack.c.h.b16 %v5183
        %v5537 = vunpack.c.l.b16 %v5184
        %v5538 = vunpack.c.h.b16 %v5184
        %v5539 = vunpack.c.l.b16 %v5185
        %v5540 = vunpack.c.h.b16 %v5185
        %v5541 = vunpack.c.l.b16 %v5186
        %v5542 = vunpack.c.h.b16 %v5186
        %v5543 = vunpack.c.l.b16 %v5187
        %v5544 = vunpack.c.h.b16 %v5187
        %v5545 = vunpack.c.l.b16 %v5188
        %v5546 = vunpack.c.h.b16 %v5188
        %v5547 = vunpack.c.l.b16 %v5189
        %v5548 = vunpack.c.h.b16 %v5189
        %v5549 = vunpack.c.l.b16 %v5190
        %v5550 = vunpack.c.h.b16 %v5190
        %v5551 = vunpack.c.l.b16 %v5191
        %v5552 = vunpack.c.h.b16 %v5191
        %v5553 = vunpack.c.l.b16 %v5192
        %v5554 = vunpack.c.h.b16 %v5192
        %v5555 = vunpack.c.l.b16 %v5193
        %v5556 = vunpack.c.h.b16 %v5193
        %v5557 = vunpack.c.l.b16 %v5194
        %v5558 = vunpack.c.h.b16 %v5194
        %v5559 = vunpack.c.l.b16 %v5195
        %v5560 = vunpack.c.h.b16 %v5195
        %v5561 = vunpack.c.l.b16 %v5196
        %v5562 = vunpack.c.h.b16 %v5196
        %v5563 = vunpack.c.l.b16 %v5197
        %v5564 = vunpack.c.h.b16 %v5197
        %v5565 = vunpack.c.l.b16 %v5198
        %v5566 = vunpack.c.h.b16 %v5198
        %v5567 = vunpack.c.l.b16 %v5199
        %v5568 = vunpack.c.h.b16 %v5199
        %v5569 = vunpack.c.l.b16 %v5200
        %v5570 = vunpack.c.h.b16 %v5200
        %v5571 = vunpack.c.l.b16 %v5201
        %v5572 = vunpack.c.h.b16 %v5201
        %v5573 = vunpack.c.l.b16 %v5202
        %v5574 = vunpack.c.h.b16 %v5202
        %v5575 = vunpack.c.l.b16 %v5203
        %v5576 = vunpack.c.h.b16 %v5203
        %v5577 = vunpack.c.l.b16 %v5204
        %v5578 = vunpack.c.h.b16 %v5204
        %v5579 = vunpack.c.l.b16 %v5205
        %v5580 = vunpack.c.h.b16 %v5205
        %v5581 = vunpack.c.l.b16 %v5206
        %v5582 = vunpack.c.h.b16 %v5206
        %v5583 = vunpack.c.l.b16 %v5207
        %v5584 = vunpack.c.h.b16 %v5207
        %v5585 = vunpack.c.l.b16 %v5208
        %v5586 = vunpack.c.h.b16 %v5208
        %v5587 = vunpack.c.l.b16 %v5209
        %v5588 = vunpack.c.h.b16 %v5209
        %v5589 = vunpack.c.l.b16 %v5210
        %v5590 = vunpack.c.h.b16 %v5210
        %v5591 = vunpack.c.l.b16 %v5211
        %v5592 = vunpack.c.h.b16 %v5211
        %v5593 = vunpack.c.l.b16 %v5212
        %v5594 = vunpack.c.h.b16 %v5212
        %v5595 = vunpack.c.l.b16 %v5213
        %v5596 = vunpack.c.h.b16 %v5213
        %v5597 = vunpack.c.l.b16 %v5214
        %v5598 = vunpack.c.h.b16 %v5214
        %v5599 = vunpack.c.l.b16 %v5215
        %v5600 = vunpack.c.h.b16 %v5215
        %v5601 = vunpack.c.l.b16 %v5216
        %v5602 = vunpack.c.h.b16 %v5216
        %v5603 = vunpack.c.l.b16 %v5217
        %v5604 = vunpack.c.h.b16 %v5217
        %v5605 = vunpack.c.l.b16 %v5218
        %v5606 = vunpack.c.h.b16 %v5218
        %v5607 = vunpack.c.l.b16 %v5219
        %v5608 = vunpack.c.h.b16 %v5219
        %v5609 = vunpack.c.l.b16 %v5220
        %v5610 = vunpack.c.h.b16 %v5220
        %v5611 = vunpack.c.l.b16 %v5221
        %v5612 = vunpack.c.h.b16 %v5221
        %v5613 = vunpack.c.l.b16 %v5222
        %v5614 = vunpack.c.h.b16 %v5222
        %v5615 = vunpack.c.l.b16 %v5223
        %v5616 = vunpack.c.h.b16 %v5223
        %v5617 = vunpack.c.l.b16 %v5224
        %v5618 = vunpack.c.h.b16 %v5224
        %v5619 = vunpack.c.l.b16 %v5225
        %v5620 = vunpack.c.h.b16 %v5225
        %v5621 = vunpack.c.l.b16 %v5226
        %v5622 = vunpack.c.h.b16 %v5226
        %v5623 = vunpack.c.l.b16 %v5227
        %v5624 = vunpack.c.h.b16 %v5227
        %v5625 = vunpack.c.l.b16 %v5228
        %v5626 = vunpack.c.h.b16 %v5228
        %v5627 = vunpack.c.l.b16 %v5229
        %v5628 = vunpack.c.h.b16 %v5229
        %v5629 = vunpack.c.l.b16 %v5230
        %v5630 = vunpack.c.h.b16 %v5230
        %v5631 = vunpack.c.l.b16 %v5231
        %v5632 = vunpack.c.h.b16 %v5231
        %v5633 = vunpack.c.l.b16 %v5232
        %v5634 = vunpack.c.h.b16 %v5232
        %v5635 = vunpack.c.l.b16 %v5233
        %v5636 = vunpack.c.h.b16 %v5233
        %v5637 = vunpack.c.l.b16 %v5234
        %v5638 = vunpack.c.h.b16 %v5234
        %v5639 = vunpack.c.l.b16 %v5235
        %v5640 = vunpack.c.h.b16 %v5235
        %v5641 = vunpack.c.l.b16 %v5236
        %v5642 = vunpack.c.h.b16 %v5236
        %v5643 = vunpack.c.l.b16 %v5237
        %v5644 = vunpack.c.h.b16 %v5237
        %v5645 = vunpack.c.l.b16 %v5238
        %v5646 = vunpack.c.h.b16 %v5238
        %v5647 = vunpack.c.l.b16 %v5239
        %v5648 = vunpack.c.h.b16 %v5239
        %v5649 = vunpack.c.l.b16 %v5240
        %v5650 = vunpack.c.h.b16 %v5240
        %v5651 = vunpack.c.l.b16 %v5241
        %v5652 = vunpack.c.h.b16 %v5241
        %v5653 = vunpack.c.l.b16 %v5242
        %v5654 = vunpack.c.h.b16 %v5242
        %v5655 = vunpack.c.l.b16 %v5243
        %v5656 = vunpack.c.h.b16 %v5243
        %v5657 = vunpack.c.l.b16 %v5244
        %v5658 = vunpack.c.h.b16 %v5244
        %v5659 = vunpack.c.l.b16 %v5245
        %v5660 = vunpack.c.h.b16 %v5245
        %v5661 = vunpack.c.l.b16 %v5246
        %v5662 = vunpack.c.h.b16 %v5246
        %v5663 = vunpack.c.l.b16 %v5247
        %v5664 = vunpack.c.h.b16 %v5247
        %v5665 = vunpack.c.l.b16 %v5248
        %v5666 = vunpack.c.h.b16 %v5248
        %v5667 = vunpack.c.l.b16 %v5249
        %v5668 = vunpack.c.h.b16 %v5249
        %v5669 = vunpack.c.l.b16 %v5250
        %v5670 = vunpack.c.h.b16 %v5250
        %v5671 = vunpack.c.l.b16 %v5251
        %v5672 = vunpack.c.h.b16 %v5251
        %v5673 = vunpack.c.l.b16 %v5252
        %v5674 = vunpack.c.h.b16 %v5252
        %v5675 = vunpack.c.l.b16 %v5253
        %v5676 = vunpack.c.h.b16 %v5253
        %v5677 = vunpack.c.l.b16 %v5254
        %v5678 = vunpack.c.h.b16 %v5254
        %v5679 = vunpack.c.l.b16 %v5255
        %v5680 = vunpack.c.h.b16 %v5255
        %v5681 = vunpack.c.l.b16 %v5256
        %v5682 = vunpack.c.h.b16 %v5256
        %v5683 = vunpack.c.l.b16 %v5257
        %v5684 = vunpack.c.h.b16 %v5257
        %v5685 = vunpack.c.l.b16 %v5258
        %v5686 = vunpack.c.h.b16 %v5258
        %v5687 = vunpack.c.l.b16 %v5259
        %v5688 = vunpack.c.h.b16 %v5259
        %v5689 = vunpack.c.l.b16 %v5260
        %v5690 = vunpack.c.h.b16 %v5260
        %v5691 = vunpack.c.l.b16 %v5261
        %v5692 = vunpack.c.h.b16 %v5261
        %v5693 = vunpack.c.l.b16 %v5262
        %v5694 = vunpack.c.h.b16 %v5262
        %v5695 = vunpack.c.l.b16 %v5263
        %v5696 = vunpack.c.h.b16 %v5263
        %v5697 = vunpack.c.l.b16 %v5264
        %v5698 = vunpack.c.h.b16 %v5264
        %v5699 = vunpack.c.l.b16 %v5265
        %v5700 = vunpack.c.h.b16 %v5265
        %v5701 = vunpack.c.l.b16 %v5266
        %v5702 = vunpack.c.h.b16 %v5266
        %v5703 = vunpack.c.l.b16 %v5267
        %v5704 = vunpack.c.h.b16 %v5267
        %v5705 = vunpack.c.l.b16 %v5268
        %v5706 = vunpack.c.h.b16 %v5268
        %v5707 = vunpack.c.l.b16 %v5269
        %v5708 = vunpack.c.h.b16 %v5269
        %v5709 = vunpack.c.l.b16 %v5270
        %v5710 = vunpack.c.h.b16 %v5270
        %v5711 = vunpack.c.l.b16 %v5271
        %v5712 = vunpack.c.h.b16 %v5271
        %v5713 = vunpack.c.l.b16 %v5272
        %v5714 = vunpack.c.h.b16 %v5272
        %v5715 = vunpack.c.l.b16 %v5273
        %v5716 = vunpack.c.h.b16 %v5273
        %v5717 = vunpack.c.l.b16 %v5274
        %v5718 = vunpack.c.h.b16 %v5274
        %v5719 = vunpack.c.l.b16 %v5275
        %v5720 = vunpack.c.h.b16 %v5275
        %v5721 = vunpack.c.l.b16 %v5276
        %v5722 = vunpack.c.h.b16 %v5276
        %v5723 = vunpack.c.l.b16 %v5277
        %v5724 = vunpack.c.h.b16 %v5277
        %v5725 = vunpack.c.l.b16 %v5278
        %v5726 = vunpack.c.h.b16 %v5278
        %v5727 = vunpack.c.l.b16 %v5279
        %v5728 = vunpack.c.h.b16 %v5279
        %v5729 = vunpack.c.l.b16 %v5280
        %v5730 = vunpack.c.h.b16 %v5280
        %v5731 = vunpack.c.l.b16 %v5281
        %v5732 = vunpack.c.h.b16 %v5281
        %v5733 = vunpack.c.l.b16 %v5282
        %v5734 = vunpack.c.h.b16 %v5282
        %v5735 = vunpack.c.l.b16 %v5283
        %v5736 = vunpack.c.h.b16 %v5283
        %v5737 = vunpack.c.l.b16 %v5284
        %v5738 = vunpack.c.h.b16 %v5284
        %v5739 = vunpack.c.l.b16 %v5285
        %v5740 = vunpack.c.h.b16 %v5285
        %v5741 = vunpack.c.l.b16 %v5286
        %v5742 = vunpack.c.h.b16 %v5286
        %v5743 = vunpack.c.l.b16 %v5287
        %v5744 = vunpack.c.h.b16 %v5287
        %v5745 = vunpack.c.l.b16 %v5288
        %v5746 = vunpack.c.h.b16 %v5288
        %v5747 = vunpack.c.l.b16 %v5289
        %v5748 = vunpack.c.h.b16 %v5289
        %v5749 = vunpack.c.l.b16 %v5290
        %v5750 = vunpack.c.h.b16 %v5290
        %v5751 = vpack.c.b16 %v5497, %v5495
        %v5752 = vpack.c.b16 %v5498, %v5496
        %v5753 = vpack.c.b16 %v5501, %v5499
        %v5754 = vpack.c.b16 %v5502, %v5500
        %v5755 = vpack.c.b16 %v5505, %v5503
        %v5756 = vpack.c.b16 %v5506, %v5504
        %v5757 = vpack.c.b16 %v5509, %v5507
        %v5758 = vpack.c.b16 %v5510, %v5508
        %v5759 = vpack.c.b16 %v5513, %v5511
        %v5760 = vpack.c.b16 %v5514, %v5512
        %v5761 = vpack.c.b16 %v5517, %v5515
        %v5762 = vpack.c.b16 %v5518, %v5516
        %v5763 = vpack.c.b16 %v5521, %v5519
        %v5764 = vpack.c.b16 %v5522, %v5520
        %v5765 = vpack.c.b16 %v5525, %v5523
        %v5766 = vpack.c.b16 %v5526, %v5524
        %v5767 = vpack.c.b16 %v5529, %v5527
        %v5768 = vpack.c.b16 %v5530, %v5528
        %v5769 = vpack.c.b16 %v5533, %v5531
        %v5770 = vpack.c.b16 %v5534, %v5532
        %v5771 = vpack.c.b16 %v5537, %v5535
        %v5772 = vpack.c.b16 %v5538, %v5536
        %v5773 = vpack.c.b16 %v5541, %v5539
        %v5774 = vpack.c.b16 %v5542, %v5540
        %v5775 = vpack.c.b16 %v5545, %v5543
        %v5776 = vpack.c.b16 %v5546, %v5544
        %v5777 = vpack.c.b16 %v5549, %v5547
        %v5778 = vpack.c.b16 %v5550, %v5548
        %v5779 = vpack.c.b16 %v5553, %v5551
        %v5780 = vpack.c.b16 %v5554, %v5552
        %v5781 = vpack.c.b16 %v5557, %v5555
        %v5782 = vpack.c.b16 %v5558, %v5556
        %v5783 = vpack.c.b16 %v5561, %v5559
        %v5784 = vpack.c.b16 %v5562, %v5560
        %v5785 = vpack.c.b16 %v5565, %v5563
        %v5786 = vpack.c.b16 %v5566, %v5564
        %v5787 = vpack.c.b16 %v5569, %v5567
        %v5788 = vpack.c.b16 %v5570, %v5568
        %v5789 = vpack.c.b16 %v5573, %v5571
        %v5790 = vpack.c.b16 %v5574, %v5572
        %v5791 = vpack.c.b16 %v5577, %v5575
        %v5792 = vpack.c.b16 %v5578, %v5576
        %v5793 = vpack.c.b16 %v5581, %v5579
        %v5794 = vpack.c.b16 %v5582, %v5580
        %v5795 = vpack.c.b16 %v5585, %v5583
        %v5796 = vpack.c.b16 %v5586, %v5584
        %v5797 = vpack.c.b16 %v5589, %v5587
        %v5798 = vpack.c.b16 %v5590, %v5588
        %v5799 = vpack.c.b16 %v5593, %v5591
        %v5800 = vpack.c.b16 %v5594, %v5592
        %v5801 = vpack.c.b16 %v5597, %v5595
        %v5802 = vpack.c.b16 %v5598, %v5596
        %v5803 = vpack.c.b16 %v5601, %v5599
        %v5804 = vpack.c.b16 %v5602, %v5600
        %v5805 = vpack.c.b16 %v5605, %v5603
        %v5806 = vpack.c.b16 %v5606, %v5604
        %v5807 = vpack.c.b16 %v5609, %v5607
        %v5808 = vpack.c.b16 %v5610, %v5608
        %v5809 = vpack.c.b16 %v5613, %v5611
        %v5810 = vpack.c.b16 %v5614, %v5612
        %v5811 = vpack.c.b16 %v5617, %v5615
        %v5812 = vpack.c.b16 %v5618, %v5616
        %v5813 = vpack.c.b16 %v5621, %v5619
        %v5814 = vpack.c.b16 %v5622, %v5620
        %v5815 = vpack.c.b16 %v5625, %v5623
        %v5816 = vpack.c.b16 %v5626, %v5624
        %v5817 = vpack.c.b16 %v5629, %v5627
        %v5818 = vpack.c.b16 %v5630, %v5628
        %v5819 = vpack.c.b16 %v5633, %v5631
        %v5820 = vpack.c.b16 %v5634, %v5632
        %v5821 = vpack.c.b16 %v5637, %v5635
        %v5822 = vpack.c.b16 %v5638, %v5636
        %v5823 = vpack.c.b16 %v5641, %v5639
        %v5824 = vpack.c.b16 %v5642, %v5640
        %v5825 = vpack.c.b16 %v5645, %v5643
        %v5826 = vpack.c.b16 %v5646, %v5644
        %v5827 = vpack.c.b16 %v5649, %v5647
        %v5828 = vpack.c.b16 %v5650, %v5648
        %v5829 = vpack.c.b16 %v5653, %v5651
        %v5830 = vpack.c.b16 %v5654, %v5652
        %v5831 = vpack.c.b16 %v5657, %v5655
        %v5832 = vpack.c.b16 %v5658, %v5656
        %v5833 = vpack.c.b16 %v5661, %v5659
        %v5834 = vpack.c.b16 %v5662, %v5660
        %v5835 = vpack.c.b16 %v5665, %v5663
        %v5836 = vpack.c.b16 %v5666, %v5664
        %v5837 = vpack.c.b16 %v5669, %v5667
        %v5838 = vpack.c.b16 %v5670, %v5668
        %v5839 = vpack.c.b16 %v5673, %v5671
        %v5840 = vpack.c.b16 %v5674, %v5672
        %v5841 = vpack.c.b16 %v5677, %v5675
        %v5842 = vpack.c.b16 %v5678, %v5676
        %v5843 = vpack.c.b16 %v5681, %v5679
        %v5844 = vpack.c.b16 %v5682, %v5680
        %v5845 = vpack.c.b16 %v5685, %v5683
        %v5846 = vpack.c.b16 %v5686, %v5684
        %v5847 = vpack.c.b16 %v5689, %v5687
        %v5848 = vpack.c.b16 %v5690, %v5688
        %v5849 = vpack.c.b16 %v5693, %v5691
        %v5850 = vpack.c.b16 %v5694, %v5692
        %v5851 = vpack.c.b16 %v5697, %v5695
        %v5852 = vpack.c.b16 %v5698, %v5696
        %v5853 = vpack.c.b16 %v5701, %v5699
        %v5854 = vpack.c.b16 %v5702, %v5700
        %v5855 = vpack.c.b16 %v5705, %v5703
        %v5856 = vpack.c.b16 %v5706, %v5704
        %v5857 = vpack.c.b16 %v5709, %v5707
        %v5858 = vpack.c.b16 %v5710, %v5708
        %v5859 = vpack.c.b16 %v5713, %v5711
        %v5860 = vpack.c.b16 %v5714, %v5712
        %v5861 = vpack.c.b16 %v5717, %v5715
        %v5862 = vpack.c.b16 %v5718, %v5716
        %v5863 = vpack.c.b16 %v5721, %v5719
        %v5864 = vpack.c.b16 %v5722, %v5720
        %v5865 = vpack.c.b16 %v5725, %v5723
        %v5866 = vpack.c.b16 %v5726, %v5724
        %v5867 = vpack.c.b16 %v5729, %v5727
        %v5868 = vpack.c.b16 %v5730, %v5728
        %v5869 = vpack.c.b16 %v5733, %v5731
        %v5870 = vpack.c.b16 %v5734, %v5732
        %v5871 = vpack.c.b16 %v5737, %v5735
        %v5872 = vpack.c.b16 %v5738, %v5736
        %v5873 = vpack.c.b16 %v5741, %v5739
        %v5874 = vpack.c.b16 %v5742, %v5740
        %v5875 = vpack.c.b16 %v5745, %v5743
        %v5876 = vpack.c.b16 %v5746, %v5744
        %v5877 = vpack.c.b16 %v5749, %v5747
        %v5878 = vpack.c.b16 %v5750, %v5748
        %6007 = vmatprep.subr.bf16.mxu0 %v5752
        %6008 = vmatpush1.bf16.msra.mxu0 %v5751
        %6009 = vmatprep.subr.bf16.mxu0 %v5754
        %6010 = vmatpush1.bf16.msra.mxu0 %v5753
        %6011 = vmatprep.subr.bf16.mxu0 %v5756
        %6012 = vmatpush1.bf16.msra.mxu0 %v5755
        %6013 = vmatprep.subr.bf16.mxu0 %v5758
        %6014 = vmatpush1.bf16.msra.mxu0 %v5757
        %6015 = vmatprep.subr.bf16.mxu0 %v5760
        %6016 = vmatpush1.bf16.msra.mxu0 %v5759
        %6017 = vmatprep.subr.bf16.mxu0 %v5762
        %6018 = vmatpush1.bf16.msra.mxu0 %v5761
        %6019 = vmatprep.subr.bf16.mxu0 %v5764
        %6020 = vmatpush1.bf16.msra.mxu0 %v5763
        %6021 = vmatprep.subr.bf16.mxu0 %v5766
        %6022 = vmatpush1.bf16.msra.mxu0 %v5765
        %6023 = vmatprep.subr.bf16.mxu0 %v5768
        %6024 = vmatpush1.bf16.msra.mxu0 %v5767
        %6025 = vmatprep.subr.bf16.mxu0 %v5770
        %6026 = vmatpush1.bf16.msra.mxu0 %v5769
        %6027 = vmatprep.subr.bf16.mxu0 %v5772
        %6028 = vmatpush1.bf16.msra.mxu0 %v5771
        %6029 = vmatprep.subr.bf16.mxu0 %v5774
        %6030 = vmatpush1.bf16.msra.mxu0 %v5773
        %6031 = vmatprep.subr.bf16.mxu0 %v5776
        %6032 = vmatpush1.bf16.msra.mxu0 %v5775
        %6033 = vmatprep.subr.bf16.mxu0 %v5778
        %6034 = vmatpush1.bf16.msra.mxu0 %v5777
        %6035 = vmatprep.subr.bf16.mxu0 %v5780
        %6036 = vmatpush1.bf16.msra.mxu0 %v5779
        %6037 = vmatprep.subr.bf16.mxu0 %v5782
        %6038 = vmatpush1.bf16.msra.mxu0 %v5781
        %6039 = vmatprep.mubr.bf16.mxu0 %v5292
        %6040 = vmatmul.mubr.bf16.gmra.mrb[0].mxu0 %v5291
        %v6041 = vpop.f32.mrb[0].mxu0
        %v6042 = vadd.f32 %v5360, %v6041
        %v6043 = vpop.f32.mrb[0].mxu0
        %v6044 = vadd.f32 %v5364, %v6043
        %v6045 = vpop.f32.mrb[0].mxu0
        %v6046 = vadd.f32 %v5360, %v6045
        %v6047 = vpop.f32.mrb[0].mxu0
        %v6048 = vadd.f32 %v5364, %v6047
        %6049 = vmatprep.mubr.bf16.mxu0 %v5300
        %6050 = vmatmul.mubr.bf16.gmra.mrb[0].mxu0 %v5299
        %v6051 = vpop.f32.mrb[0].mxu0
        %v6052 = vadd.f32 %v5360, %v6051
        %v6053 = vpop.f32.mrb[0].mxu0
        %v6054 = vadd.f32 %v5364, %v6053
        %v6055 = vpop.f32.mrb[0].mxu0
        %v6056 = vadd.f32 %v5360, %v6055
        %v6057 = vpop.f32.mrb[0].mxu0
        %v6058 = vadd.f32 %v5364, %v6057
        %6059 = vmatprep.mubr.bf16.mxu0 %v5308
        %6060 = vmatmul.mubr.bf16.gmra.mrb[0].mxu0 %v5307
        %v6061 = vpop.f32.mrb[0].mxu0
        %v6062 = vadd.f32 %v5360, %v6061
        %v6063 = vpop.f32.mrb[0].mxu0
        %v6064 = vadd.f32 %v5364, %v6063
        %v6065 = vpop.f32.mrb[0].mxu0
        %v6066 = vadd.f32 %v5360, %v6065
        %v6067 = vpop.f32.mrb[0].mxu0
        %v6068 = vadd.f32 %v5364, %v6067
        %6069 = vmatprep.mubr.bf16.mxu0 %v5316
        %6070 = vmatmul.mubr.bf16.gmra.mrb[0].mxu0 %v5315
        %v6071 = vpop.f32.mrb[0].mxu0
        %v6072 = vadd.f32 %v5360, %v6071
        %v6073 = vpop.f32.mrb[0].mxu0
        %v6074 = vadd.f32 %v5364, %v6073
        %v6075 = vpop.f32.mrb[0].mxu0
        %v6076 = vadd.f32 %v5360, %v6075
        %v6077 = vpop.f32.mrb[0].mxu0
        %v6078 = vadd.f32 %v5364, %v6077
        %6079 = vmatprep.mubr.bf16.mxu0 %v5324
        %6080 = vmatmul.mubr.bf16.gmra.mrb[0].mxu0 %v5323
        %v6081 = vpop.f32.mrb[0].mxu0
        %v6082 = vadd.f32 %v5360, %v6081
        %v6083 = vpop.f32.mrb[0].mxu0
        %v6084 = vadd.f32 %v5364, %v6083
        %v6085 = vpop.f32.mrb[0].mxu0
        %v6086 = vadd.f32 %v5360, %v6085
        %v6087 = vpop.f32.mrb[0].mxu0
        %v6088 = vadd.f32 %v5364, %v6087
        %6089 = vmatprep.mubr.bf16.mxu0 %v5332
        %6090 = vmatmul.mubr.bf16.gmra.mrb[0].mxu0 %v5331
        %v6091 = vpop.f32.mrb[0].mxu0
        %v6092 = vadd.f32 %v5360, %v6091
        %v6093 = vpop.f32.mrb[0].mxu0
        %v6094 = vadd.f32 %v5364, %v6093
        %v6095 = vpop.f32.mrb[0].mxu0
        %v6096 = vadd.f32 %v5360, %v6095
        %v6097 = vpop.f32.mrb[0].mxu0
        %v6098 = vadd.f32 %v5364, %v6097
        %6099 = vmatprep.mubr.bf16.mxu0 %v5340
        %6100 = vmatmul.mubr.bf16.gmra.mrb[0].mxu0 %v5339
        %v6101 = vpop.f32.mrb[0].mxu0
        %v6102 = vadd.f32 %v5360, %v6101
        %v6103 = vpop.f32.mrb[0].mxu0
        %v6104 = vadd.f32 %v5364, %v6103
        %v6105 = vpop.f32.mrb[0].mxu0
        %v6106 = vadd.f32 %v5360, %v6105
        %v6107 = vpop.f32.mrb[0].mxu0
        %v6108 = vadd.f32 %v5364, %v6107
        %6109 = vmatprep.mubr.bf16.mxu0 %v5348
        %6110 = vmatmul.mubr.bf16.gmra.mrb[0].mxu0 %v5347
        %v6111 = vpop.f32.mrb[0].mxu0
        %v6112 = vadd.f32 %v5360, %v6111
        %v6113 = vpop.f32.mrb[0].mxu0
        %v6114 = vadd.f32 %v5364, %v6113
        %v6115 = vpop.f32.mrb[0].mxu0
        %v6116 = vadd.f32 %v5360, %v6115
        %v6117 = vpop.f32.mrb[0].mxu0
        %v6118 = vadd.f32 %v5364, %v6117
        %6119 = vdwg.mxu0
        %6120 = vmatprep.subr.bf16.mxu0 %v5784
        %6121 = vmatpush1.bf16.msra.mxu0 %v5783
        %6122 = vmatprep.subr.bf16.mxu0 %v5786
        %6123 = vmatpush1.bf16.msra.mxu0 %v5785
        %6124 = vmatprep.subr.bf16.mxu0 %v5788
        %6125 = vmatpush1.bf16.msra.mxu0 %v5787
        %6126 = vmatprep.subr.bf16.mxu0 %v5790
        %6127 = vmatpush1.bf16.msra.mxu0 %v5789
        %6128 = vmatprep.subr.bf16.mxu0 %v5792
        %6129 = vmatpush1.bf16.msra.mxu0 %v5791
        %6130 = vmatprep.subr.bf16.mxu0 %v5794
        %6131 = vmatpush1.bf16.msra.mxu0 %v5793
        %6132 = vmatprep.subr.bf16.mxu0 %v5796
        %6133 = vmatpush1.bf16.msra.mxu0 %v5795
        %6134 = vmatprep.subr.bf16.mxu0 %v5798
        %6135 = vmatpush1.bf16.msra.mxu0 %v5797
        %6136 = vmatprep.subr.bf16.mxu0 %v5800
        %6137 = vmatpush1.bf16.msra.mxu0 %v5799
        %6138 = vmatprep.subr.bf16.mxu0 %v5802
        %6139 = vmatpush1.bf16.msra.mxu0 %v5801
        %6140 = vmatprep.subr.bf16.mxu0 %v5804
        %6141 = vmatpush1.bf16.msra.mxu0 %v5803
        %6142 = vmatprep.subr.bf16.mxu0 %v5806
        %6143 = vmatpush1.bf16.msra.mxu0 %v5805
        %6144 = vmatprep.subr.bf16.mxu0 %v5808
        %6145 = vmatpush1.bf16.msra.mxu0 %v5807
        %6146 = vmatprep.subr.bf16.mxu0 %v5810
        %6147 = vmatpush1.bf16.msra.mxu0 %v5809
        %6148 = vmatprep.subr.bf16.mxu0 %v5812
        %6149 = vmatpush1.bf16.msra.mxu0 %v5811
        %6150 = vmatprep.subr.bf16.mxu0 %v5814
        %6151 = vmatpush1.bf16.msra.mxu0 %v5813
        %6152 = vmatprep.mubr.bf16.mxu0 %v5294
        %6153 = vmatmul.mubr.bf16.gmra.mrb[0].mxu0 %v5293
        %v6154 = vpop.f32.mrb[0].mxu0
        %v6155 = vadd.f32 %v6042, %v6154
        %v6156 = vpop.f32.mrb[0].mxu0
        %v6157 = vadd.f32 %v6044, %v6156
        %v6158 = vpop.f32.mrb[0].mxu0
        %v6159 = vadd.f32 %v6046, %v6158
        %v6160 = vpop.f32.mrb[0].mxu0
        %v6161 = vadd.f32 %v6048, %v6160
        %6162 = vmatprep.mubr.bf16.mxu0 %v5302
        %6163 = vmatmul.mubr.bf16.gmra.mrb[0].mxu0 %v5301
        %v6164 = vpop.f32.mrb[0].mxu0
        %v6165 = vadd.f32 %v6052, %v6164
        %v6166 = vpop.f32.mrb[0].mxu0
        %v6167 = vadd.f32 %v6054, %v6166
        %v6168 = vpop.f32.mrb[0].mxu0
        %v6169 = vadd.f32 %v6056, %v6168
        %v6170 = vpop.f32.mrb[0].mxu0
        %v6171 = vadd.f32 %v6058, %v6170
        %6172 = vmatprep.mubr.bf16.mxu0 %v5310
        %6173 = vmatmul.mubr.bf16.gmra.mrb[0].mxu0 %v5309
        %v6174 = vpop.f32.mrb[0].mxu0
        %v6175 = vadd.f32 %v6062, %v6174
        %v6176 = vpop.f32.mrb[0].mxu0
        %v6177 = vadd.f32 %v6064, %v6176
        %v6178 = vpop.f32.mrb[0].mxu0
        %v6179 = vadd.f32 %v6066, %v6178
        %v6180 = vpop.f32.mrb[0].mxu0
        %v6181 = vadd.f32 %v6068, %v6180
        %6182 = vmatprep.mubr.bf16.mxu0 %v5318
        %6183 = vmatmul.mubr.bf16.gmra.mrb[0].mxu0 %v5317
        %v6184 = vpop.f32.mrb[0].mxu0
        %v6185 = vadd.f32 %v6072, %v6184
        %v6186 = vpop.f32.mrb[0].mxu0
        %v6187 = vadd.f32 %v6074, %v6186
        %v6188 = vpop.f32.mrb[0].mxu0
        %v6189 = vadd.f32 %v6076, %v6188
        %v6190 = vpop.f32.mrb[0].mxu0
        %v6191 = vadd.f32 %v6078, %v6190
        %6192 = vmatprep.mubr.bf16.mxu0 %v5326
        %6193 = vmatmul.mubr.bf16.gmra.mrb[0].mxu0 %v5325
        %v6194 = vpop.f32.mrb[0].mxu0
        %v6195 = vadd.f32 %v6082, %v6194
        %v6196 = vpop.f32.mrb[0].mxu0
        %v6197 = vadd.f32 %v6084, %v6196
        %v6198 = vpop.f32.mrb[0].mxu0
        %v6199 = vadd.f32 %v6086, %v6198
        %v6200 = vpop.f32.mrb[0].mxu0
        %v6201 = vadd.f32 %v6088, %v6200
        %6202 = vmatprep.mubr.bf16.mxu0 %v5334
        %6203 = vmatmul.mubr.bf16.gmra.mrb[0].mxu0 %v5333
        %v6204 = vpop.f32.mrb[0].mxu0
        %v6205 = vadd.f32 %v6092, %v6204
        %v6206 = vpop.f32.mrb[0].mxu0
        %v6207 = vadd.f32 %v6094, %v6206
        %v6208 = vpop.f32.mrb[0].mxu0
        %v6209 = vadd.f32 %v6096, %v6208
        %v6210 = vpop.f32.mrb[0].mxu0
        %v6211 = vadd.f32 %v6098, %v6210
        %6212 = vmatprep.mubr.bf16.mxu0 %v5342
        %6213 = vmatmul.mubr.bf16.gmra.mrb[0].mxu0 %v5341
        %v6214 = vpop.f32.mrb[0].mxu0
        %v6215 = vadd.f32 %v6102, %v6214
        %v6216 = vpop.f32.mrb[0].mxu0
        %v6217 = vadd.f32 %v6104, %v6216
        %v6218 = vpop.f32.mrb[0].mxu0
        %v6219 = vadd.f32 %v6106, %v6218
        %v6220 = vpop.f32.mrb[0].mxu0
        %v6221 = vadd.f32 %v6108, %v6220
        %6222 = vmatprep.mubr.bf16.mxu0 %v5350
        %6223 = vmatmul.mubr.bf16.gmra.mrb[0].mxu0 %v5349
        %v6224 = vpop.f32.mrb[0].mxu0
        %v6225 = vadd.f32 %v6112, %v6224
        %v6226 = vpop.f32.mrb[0].mxu0
        %v6227 = vadd.f32 %v6114, %v6226
        %v6228 = vpop.f32.mrb[0].mxu0
        %v6229 = vadd.f32 %v6116, %v6228
        %v6230 = vpop.f32.mrb[0].mxu0
        %v6231 = vadd.f32 %v6118, %v6230
        %6232 = vdwg.mxu0
        %6233 = vmatprep.subr.bf16.mxu0 %v5816
        %6234 = vmatpush1.bf16.msra.mxu0 %v5815
        %6235 = vmatprep.subr.bf16.mxu0 %v5818
        %6236 = vmatpush1.bf16.msra.mxu0 %v5817
        %6237 = vmatprep.subr.bf16.mxu0 %v5820
        %6238 = vmatpush1.bf16.msra.mxu0 %v5819
        %6239 = vmatprep.subr.bf16.mxu0 %v5822
        %6240 = vmatpush1.bf16.msra.mxu0 %v5821
        %6241 = vmatprep.subr.bf16.mxu0 %v5824
        %6242 = vmatpush1.bf16.msra.mxu0 %v5823
        %6243 = vmatprep.subr.bf16.mxu0 %v5826
        %6244 = vmatpush1.bf16.msra.mxu0 %v5825
        %6245 = vmatprep.subr.bf16.mxu0 %v5828
        %6246 = vmatpush1.bf16.msra.mxu0 %v5827
        %6247 = vmatprep.subr.bf16.mxu0 %v5830
        %6248 = vmatpush1.bf16.msra.mxu0 %v5829
        %6249 = vmatprep.subr.bf16.mxu0 %v5832
        %6250 = vmatpush1.bf16.msra.mxu0 %v5831
        %6251 = vmatprep.subr.bf16.mxu0 %v5834
        %6252 = vmatpush1.bf16.msra.mxu0 %v5833
        %6253 = vmatprep.subr.bf16.mxu0 %v5836
        %6254 = vmatpush1.bf16.msra.mxu0 %v5835
        %6255 = vmatprep.subr.bf16.mxu0 %v5838
        %6256 = vmatpush1.bf16.msra.mxu0 %v5837
        %6257 = vmatprep.subr.bf16.mxu0 %v5840
        %6258 = vmatpush1.bf16.msra.mxu0 %v5839
        %6259 = vmatprep.subr.bf16.mxu0 %v5842
        %6260 = vmatpush1.bf16.msra.mxu0 %v5841
        %6261 = vmatprep.subr.bf16.mxu0 %v5844
        %6262 = vmatpush1.bf16.msra.mxu0 %v5843
        %6263 = vmatprep.subr.bf16.mxu0 %v5846
        %6264 = vmatpush1.bf16.msra.mxu0 %v5845
        %6265 = vmatprep.mubr.bf16.mxu0 %v5296
        %6266 = vmatmul.mubr.bf16.gmra.mrb[0].mxu0 %v5295
        %v6267 = vpop.f32.mrb[0].mxu0
        %v6268 = vadd.f32 %v6155, %v6267
        %v6269 = vpop.f32.mrb[0].mxu0
        %v6270 = vadd.f32 %v6157, %v6269
        %v6271 = vpop.f32.mrb[0].mxu0
        %v6272 = vadd.f32 %v6159, %v6271
        %v6273 = vpop.f32.mrb[0].mxu0
        %v6274 = vadd.f32 %v6161, %v6273
        %6275 = vmatprep.mubr.bf16.mxu0 %v5304
        %6276 = vmatmul.mubr.bf16.gmra.mrb[0].mxu0 %v5303
        %v6277 = vpop.f32.mrb[0].mxu0
        %v6278 = vadd.f32 %v6165, %v6277
        %v6279 = vpop.f32.mrb[0].mxu0
        %v6280 = vadd.f32 %v6167, %v6279
        %v6281 = vpop.f32.mrb[0].mxu0
        %v6282 = vadd.f32 %v6169, %v6281
        %v6283 = vpop.f32.mrb[0].mxu0
        %v6284 = vadd.f32 %v6171, %v6283
        %6285 = vmatprep.mubr.bf16.mxu0 %v5312
        %6286 = vmatmul.mubr.bf16.gmra.mrb[0].mxu0 %v5311
        %v6287 = vpop.f32.mrb[0].mxu0
        %v6288 = vadd.f32 %v6175, %v6287
        %v6289 = vpop.f32.mrb[0].mxu0
        %v6290 = vadd.f32 %v6177, %v6289
        %v6291 = vpop.f32.mrb[0].mxu0
        %v6292 = vadd.f32 %v6179, %v6291
        %v6293 = vpop.f32.mrb[0].mxu0
        %v6294 = vadd.f32 %v6181, %v6293
        %6295 = vmatprep.mubr.bf16.mxu0 %v5320
        %6296 = vmatmul.mubr.bf16.gmra.mrb[0].mxu0 %v5319
        %v6297 = vpop.f32.mrb[0].mxu0
        %v6298 = vadd.f32 %v6185, %v6297
        %v6299 = vpop.f32.mrb[0].mxu0
        %v6300 = vadd.f32 %v6187, %v6299
        %v6301 = vpop.f32.mrb[0].mxu0
        %v6302 = vadd.f32 %v6189, %v6301
        %v6303 = vpop.f32.mrb[0].mxu0
        %v6304 = vadd.f32 %v6191, %v6303
        %6305 = vmatprep.mubr.bf16.mxu0 %v5328
        %6306 = vmatmul.mubr.bf16.gmra.mrb[0].mxu0 %v5327
        %v6307 = vpop.f32.mrb[0].mxu0
        %v6308 = vadd.f32 %v6195, %v6307
        %v6309 = vpop.f32.mrb[0].mxu0
        %v6310 = vadd.f32 %v6197, %v6309
        %v6311 = vpop.f32.mrb[0].mxu0
        %v6312 = vadd.f32 %v6199, %v6311
        %v6313 = vpop.f32.mrb[0].mxu0
        %v6314 = vadd.f32 %v6201, %v6313
        %6315 = vmatprep.mubr.bf16.mxu0 %v5336
        %6316 = vmatmul.mubr.bf16.gmra.mrb[0].mxu0 %v5335
        %v6317 = vpop.f32.mrb[0].mxu0
        %v6318 = vadd.f32 %v6205, %v6317
        %v6319 = vpop.f32.mrb[0].mxu0
        %v6320 = vadd.f32 %v6207, %v6319
        %v6321 = vpop.f32.mrb[0].mxu0
        %v6322 = vadd.f32 %v6209, %v6321
        %v6323 = vpop.f32.mrb[0].mxu0
        %v6324 = vadd.f32 %v6211, %v6323
        %6325 = vmatprep.mubr.bf16.mxu0 %v5344
        %6326 = vmatmul.mubr.bf16.gmra.mrb[0].mxu0 %v5343
        %v6327 = vpop.f32.mrb[0].mxu0
        %v6328 = vadd.f32 %v6215, %v6327
        %v6329 = vpop.f32.mrb[0].mxu0
        %v6330 = vadd.f32 %v6217, %v6329
        %v6331 = vpop.f32.mrb[0].mxu0
        %v6332 = vadd.f32 %v6219, %v6331
        %v6333 = vpop.f32.mrb[0].mxu0
        %v6334 = vadd.f32 %v6221, %v6333
        %6335 = vmatprep.mubr.bf16.mxu0 %v5352
        %6336 = vmatmul.mubr.bf16.gmra.mrb[0].mxu0 %v5351
        %v6337 = vpop.f32.mrb[0].mxu0
        %v6338 = vadd.f32 %v6225, %v6337
        %v6339 = vpop.f32.mrb[0].mxu0
        %v6340 = vadd.f32 %v6227, %v6339
        %v6341 = vpop.f32.mrb[0].mxu0
        %v6342 = vadd.f32 %v6229, %v6341
        %v6343 = vpop.f32.mrb[0].mxu0
        %v6344 = vadd.f32 %v6231, %v6343
        %6345 = vdwg.mxu0
        %6346 = vmatprep.subr.bf16.mxu0 %v5848
        %6347 = vmatpush1.bf16.msra.mxu0 %v5847
        %6348 = vmatprep.subr.bf16.mxu0 %v5850
        %6349 = vmatpush1.bf16.msra.mxu0 %v5849
        %6350 = vmatprep.subr.bf16.mxu0 %v5852
        %6351 = vmatpush1.bf16.msra.mxu0 %v5851
        %6352 = vmatprep.subr.bf16.mxu0 %v5854
        %6353 = vmatpush1.bf16.msra.mxu0 %v5853
        %6354 = vmatprep.subr.bf16.mxu0 %v5856
        %6355 = vmatpush1.bf16.msra.mxu0 %v5855
        %6356 = vmatprep.subr.bf16.mxu0 %v5858
        %6357 = vmatpush1.bf16.msra.mxu0 %v5857
        %6358 = vmatprep.subr.bf16.mxu0 %v5860
        %6359 = vmatpush1.bf16.msra.mxu0 %v5859
        %6360 = vmatprep.subr.bf16.mxu0 %v5862
        %6361 = vmatpush1.bf16.msra.mxu0 %v5861
        %6362 = vmatprep.subr.bf16.mxu0 %v5864
        %6363 = vmatpush1.bf16.msra.mxu0 %v5863
        %6364 = vmatprep.subr.bf16.mxu0 %v5866
        %6365 = vmatpush1.bf16.msra.mxu0 %v5865
        %6366 = vmatprep.subr.bf16.mxu0 %v5868
        %6367 = vmatpush1.bf16.msra.mxu0 %v5867
        %6368 = vmatprep.subr.bf16.mxu0 %v5870
        %6369 = vmatpush1.bf16.msra.mxu0 %v5869
        %6370 = vmatprep.subr.bf16.mxu0 %v5872
        %6371 = vmatpush1.bf16.msra.mxu0 %v5871
        %6372 = vmatprep.subr.bf16.mxu0 %v5874
        %6373 = vmatpush1.bf16.msra.mxu0 %v5873
        %6374 = vmatprep.subr.bf16.mxu0 %v5876
        %6375 = vmatpush1.bf16.msra.mxu0 %v5875
        %6376 = vmatprep.subr.bf16.mxu0 %v5878
        %6377 = vmatpush1.bf16.msra.mxu0 %v5877
        %6378 = vmatprep.mubr.bf16.mxu0 %v5298
        %6379 = vmatmul.mubr.bf16.gmra.mrb[0].mxu0 %v5297
        %v6380 = vpop.f32.mrb[0].mxu0
        %v6381 = vadd.f32 %v6268, %v6380
        %v6382 = vpop.f32.mrb[0].mxu0
        %v6383 = vadd.f32 %v6270, %v6382
        %v6384 = vpop.f32.mrb[0].mxu0
        %v6385 = vadd.f32 %v6272, %v6384
        %v6386 = vpop.f32.mrb[0].mxu0
        %v6387 = vadd.f32 %v6274, %v6386
        %6388 = vmatprep.mubr.bf16.mxu0 %v5306
        %6389 = vmatmul.mubr.bf16.gmra.mrb[0].mxu0 %v5305
        %v6390 = vpop.f32.mrb[0].mxu0
        %v6391 = vadd.f32 %v6278, %v6390
        %v6392 = vpop.f32.mrb[0].mxu0
        %v6393 = vadd.f32 %v6280, %v6392
        %v6394 = vpop.f32.mrb[0].mxu0
        %v6395 = vadd.f32 %v6282, %v6394
        %v6396 = vpop.f32.mrb[0].mxu0
        %v6397 = vadd.f32 %v6284, %v6396
        %6398 = vmatprep.mubr.bf16.mxu0 %v5314
        %6399 = vmatmul.mubr.bf16.gmra.mrb[0].mxu0 %v5313
        %v6400 = vpop.f32.mrb[0].mxu0
        %v6401 = vadd.f32 %v6288, %v6400
        %v6402 = vpop.f32.mrb[0].mxu0
        %v6403 = vadd.f32 %v6290, %v6402
        %v6404 = vpop.f32.mrb[0].mxu0
        %v6405 = vadd.f32 %v6292, %v6404
        %v6406 = vpop.f32.mrb[0].mxu0
        %v6407 = vadd.f32 %v6294, %v6406
        %6408 = vmatprep.mubr.bf16.mxu0 %v5322
        %6409 = vmatmul.mubr.bf16.gmra.mrb[0].mxu0 %v5321
        %v6410 = vpop.f32.mrb[0].mxu0
        %v6411 = vadd.f32 %v6298, %v6410
        %v6412 = vpop.f32.mrb[0].mxu0
        %v6413 = vadd.f32 %v6300, %v6412
        %v6414 = vpop.f32.mrb[0].mxu0
        %v6415 = vadd.f32 %v6302, %v6414
        %v6416 = vpop.f32.mrb[0].mxu0
        %v6417 = vadd.f32 %v6304, %v6416
        %6418 = vmatprep.mubr.bf16.mxu0 %v5330
        %6419 = vmatmul.mubr.bf16.gmra.mrb[0].mxu0 %v5329
        %v6420 = vpop.f32.mrb[0].mxu0
        %v6421 = vadd.f32 %v6308, %v6420
        %v6422 = vpop.f32.mrb[0].mxu0
        %v6423 = vadd.f32 %v6310, %v6422
        %v6424 = vpop.f32.mrb[0].mxu0
        %v6425 = vadd.f32 %v6312, %v6424
        %v6426 = vpop.f32.mrb[0].mxu0
        %v6427 = vadd.f32 %v6314, %v6426
        %6428 = vmatprep.mubr.bf16.mxu0 %v5338
        %6429 = vmatmul.mubr.bf16.gmra.mrb[0].mxu0 %v5337
        %v6430 = vpop.f32.mrb[0].mxu0
        %v6431 = vadd.f32 %v6318, %v6430
        %v6432 = vpop.f32.mrb[0].mxu0
        %v6433 = vadd.f32 %v6320, %v6432
        %v6434 = vpop.f32.mrb[0].mxu0
        %v6435 = vadd.f32 %v6322, %v6434
        %v6436 = vpop.f32.mrb[0].mxu0
        %v6437 = vadd.f32 %v6324, %v6436
        %6438 = vmatprep.mubr.bf16.mxu0 %v5346
        %6439 = vmatmul.mubr.bf16.gmra.mrb[0].mxu0 %v5345
        %v6440 = vpop.f32.mrb[0].mxu0
        %v6441 = vadd.f32 %v6328, %v6440
        %v6442 = vpop.f32.mrb[0].mxu0
        %v6443 = vadd.f32 %v6330, %v6442
        %v6444 = vpop.f32.mrb[0].mxu0
        %v6445 = vadd.f32 %v6332, %v6444
        %v6446 = vpop.f32.mrb[0].mxu0
        %v6447 = vadd.f32 %v6334, %v6446
        %6448 = vmatprep.mubr.bf16.mxu0 %v5354
        %6449 = vmatmul.mubr.bf16.gmra.mrb[0].mxu0 %v5353
        %v6450 = vpop.f32.mrb[0].mxu0
        %v6451 = vadd.f32 %v6338, %v6450
        %v6452 = vpop.f32.mrb[0].mxu0
        %v6453 = vadd.f32 %v6340, %v6452
        %v6454 = vpop.f32.mrb[0].mxu0
        %v6455 = vadd.f32 %v6342, %v6454
        %v6456 = vpop.f32.mrb[0].mxu0
        %v6457 = vadd.f32 %v6344, %v6456
        %6458 = vdwg.mxu0
        %v6459 = vadd.f32 %v3725, %v6381
        %v6460 = vadd.f32 %v3726, %v6383
        %v6461 = vadd.f32 %v3727, %v6385
        %v6462 = vadd.f32 %v3728, %v6387
        %v6463 = vadd.f32 %v3729, %v6391
        %v6464 = vadd.f32 %v3730, %v6393
        %v6465 = vadd.f32 %v3731, %v6395
        %v6466 = vadd.f32 %v3732, %v6397
        %v6467 = vadd.f32 %v3733, %v6401
        %v6468 = vadd.f32 %v3734, %v6403
        %v6469 = vadd.f32 %v3735, %v6405
        %v6470 = vadd.f32 %v3736, %v6407
        %v6471 = vadd.f32 %v3737, %v6411
        %v6472 = vadd.f32 %v3738, %v6413
        %v6473 = vadd.f32 %v3739, %v6415
        %v6474 = vadd.f32 %v3740, %v6417
        %v6475 = vadd.f32 %v3741, %v6421
        %v6476 = vadd.f32 %v3742, %v6423
        %v6477 = vadd.f32 %v3743, %v6425
        %v6478 = vadd.f32 %v3744, %v6427
        %v6479 = vadd.f32 %v3745, %v6431
        %v6480 = vadd.f32 %v3746, %v6433
        %v6481 = vadd.f32 %v3747, %v6435
        %v6482 = vadd.f32 %v3748, %v6437
        %v6483 = vadd.f32 %v3749, %v6441
        %v6484 = vadd.f32 %v3750, %v6443
        %v6485 = vadd.f32 %v3751, %v6445
        %v6486 = vadd.f32 %v3752, %v6447
        %v6487 = vadd.f32 %v3753, %v6451
        %v6488 = vadd.f32 %v3754, %v6453
        %v6489 = vadd.f32 %v3755, %v6455
        %v6490 = vadd.f32 %v3756, %v6457
        %v6491 = vld [vmem:[%s846] sm:$0x3]
        %v6492 = vld [vmem:[%s850] sm:$0x3]
        %v6493 = vadd.f32 %v6459, %v6460
        %6494 = vadd.xlane.f32.xlu0 %v6493
        %v6495 = vpop.xlane.xlu0 %6494
        %v6496 = vadd.f32 %v6461, %v6462
        %6497 = vadd.xlane.f32.xlu0 %v6496
        %v6498 = vpop.xlane.xlu0 %6497
        %v6499 = vadd.f32 %v6463, %v6464
        %6500 = vadd.xlane.f32.xlu0 %v6499
        %v6501 = vpop.xlane.xlu0 %6500
        %v6502 = vadd.f32 %v6465, %v6466
        %6503 = vadd.xlane.f32.xlu0 %v6502
        %v6504 = vpop.xlane.xlu0 %6503
        %v6505 = vadd.f32 %v6467, %v6468
        %6506 = vadd.xlane.f32.xlu0 %v6505
        %v6507 = vpop.xlane.xlu0 %6506
        %v6508 = vadd.f32 %v6469, %v6470
        %6509 = vadd.xlane.f32.xlu0 %v6508
        %v6510 = vpop.xlane.xlu0 %6509
        %v6511 = vadd.f32 %v6471, %v6472
        %6512 = vadd.xlane.f32.xlu0 %v6511
        %v6513 = vpop.xlane.xlu0 %6512
        %v6514 = vadd.f32 %v6473, %v6474
        %6515 = vadd.xlane.f32.xlu0 %v6514
        %v6516 = vpop.xlane.xlu0 %6515
        %v6517 = vadd.f32 %v6475, %v6476
        %6518 = vadd.xlane.f32.xlu0 %v6517
        %v6519 = vpop.xlane.xlu0 %6518
        %v6520 = vadd.f32 %v6477, %v6478
        %6521 = vadd.xlane.f32.xlu0 %v6520
        %v6522 = vpop.xlane.xlu0 %6521
        %v6523 = vadd.f32 %v6479, %v6480
        %6524 = vadd.xlane.f32.xlu0 %v6523
        %v6525 = vpop.xlane.xlu0 %6524
        %v6526 = vadd.f32 %v6481, %v6482
        %6527 = vadd.xlane.f32.xlu0 %v6526
        %v6528 = vpop.xlane.xlu0 %6527
        %v6529 = vadd.f32 %v6483, %v6484
        %6530 = vadd.xlane.f32.xlu0 %v6529
        %v6531 = vpop.xlane.xlu0 %6530
        %v6532 = vadd.f32 %v6485, %v6486
        %6533 = vadd.xlane.f32.xlu0 %v6532
        %v6534 = vpop.xlane.xlu0 %6533
        %v6535 = vadd.f32 %v6487, %v6488
        %6536 = vadd.xlane.f32.xlu0 %v6535
        %v6537 = vpop.xlane.xlu0 %6536
        %v6538 = vadd.f32 %v6489, %v6490
        %6539 = vadd.xlane.f32.xlu0 %v6538
        %v6540 = vpop.xlane.xlu0 %6539
        %v6541 = vmul.f32 %v6495, %v3462
        %v6542 = vmul.f32 %v6498, %v3462
        %v6543 = vmul.f32 %v6501, %v3462
        %v6544 = vmul.f32 %v6504, %v3462
        %v6545 = vmul.f32 %v6507, %v3462
        %v6546 = vmul.f32 %v6510, %v3462
        %v6547 = vmul.f32 %v6513, %v3462
        %v6548 = vmul.f32 %v6516, %v3462
        %v6549 = vmul.f32 %v6519, %v3462
        %v6550 = vmul.f32 %v6522, %v3462
        %v6551 = vmul.f32 %v6525, %v3462
        %v6552 = vmul.f32 %v6528, %v3462
        %v6553 = vmul.f32 %v6531, %v3462
        %v6554 = vmul.f32 %v6534, %v3462
        %v6555 = vmul.f32 %v6537, %v3462
        %v6556 = vmul.f32 %v6540, %v3462
        %v6557 = vsub.f32 %v6459, %v6541
        %v6558 = vsub.f32 %v6460, %v6541
        %v6559 = vsub.f32 %v6461, %v6542
        %v6560 = vsub.f32 %v6462, %v6542
        %v6561 = vsub.f32 %v6463, %v6543
        %v6562 = vsub.f32 %v6464, %v6543
        %v6563 = vsub.f32 %v6465, %v6544
        %v6564 = vsub.f32 %v6466, %v6544
        %v6565 = vsub.f32 %v6467, %v6545
        %v6566 = vsub.f32 %v6468, %v6545
        %v6567 = vsub.f32 %v6469, %v6546
        %v6568 = vsub.f32 %v6470, %v6546
        %v6569 = vsub.f32 %v6471, %v6547
        %v6570 = vsub.f32 %v6472, %v6547
        %v6571 = vsub.f32 %v6473, %v6548
        %v6572 = vsub.f32 %v6474, %v6548
        %v6573 = vsub.f32 %v6475, %v6549
        %v6574 = vsub.f32 %v6476, %v6549
        %v6575 = vsub.f32 %v6477, %v6550
        %v6576 = vsub.f32 %v6478, %v6550
        %v6577 = vsub.f32 %v6479, %v6551
        %v6578 = vsub.f32 %v6480, %v6551
        %v6579 = vsub.f32 %v6481, %v6552
        %v6580 = vsub.f32 %v6482, %v6552
        %v6581 = vsub.f32 %v6483, %v6553
        %v6582 = vsub.f32 %v6484, %v6553
        %v6583 = vsub.f32 %v6485, %v6554
        %v6584 = vsub.f32 %v6486, %v6554
        %v6585 = vsub.f32 %v6487, %v6555
        %v6586 = vsub.f32 %v6488, %v6555
        %v6587 = vsub.f32 %v6489, %v6556
        %v6588 = vsub.f32 %v6490, %v6556
        %v6589 = vmul.f32 %v6557, %v6557
        %v6590 = vmul.f32 %v6558, %v6558
        %v6591 = vmul.f32 %v6559, %v6559
        %v6592 = vmul.f32 %v6560, %v6560
        %v6593 = vmul.f32 %v6561, %v6561
        %v6594 = vmul.f32 %v6562, %v6562
        %v6595 = vmul.f32 %v6563, %v6563
        %v6596 = vmul.f32 %v6564, %v6564
        %v6597 = vmul.f32 %v6565, %v6565
        %v6598 = vmul.f32 %v6566, %v6566
        %v6599 = vmul.f32 %v6567, %v6567
        %v6600 = vmul.f32 %v6568, %v6568
        %v6601 = vmul.f32 %v6569, %v6569
        %v6602 = vmul.f32 %v6570, %v6570
        %v6603 = vmul.f32 %v6571, %v6571
        %v6604 = vmul.f32 %v6572, %v6572
        %v6605 = vmul.f32 %v6573, %v6573
        %v6606 = vmul.f32 %v6574, %v6574
        %v6607 = vmul.f32 %v6575, %v6575
        %v6608 = vmul.f32 %v6576, %v6576
        %v6609 = vmul.f32 %v6577, %v6577
        %v6610 = vmul.f32 %v6578, %v6578
        %v6611 = vmul.f32 %v6579, %v6579
        %v6612 = vmul.f32 %v6580, %v6580
        %v6613 = vmul.f32 %v6581, %v6581
        %v6614 = vmul.f32 %v6582, %v6582
        %v6615 = vmul.f32 %v6583, %v6583
        %v6616 = vmul.f32 %v6584, %v6584
        %v6617 = vmul.f32 %v6585, %v6585
        %v6618 = vmul.f32 %v6586, %v6586
        %v6619 = vmul.f32 %v6587, %v6587
        %v6620 = vmul.f32 %v6588, %v6588
        %v6621 = vadd.f32 %v6589, %v6590
        %6622 = vadd.xlane.f32.xlu0 %v6621
        %v6623 = vpop.xlane.xlu0 %6622
        %v6624 = vadd.f32 %v6591, %v6592
        %6625 = vadd.xlane.f32.xlu0 %v6624
        %v6626 = vpop.xlane.xlu0 %6625
        %v6627 = vadd.f32 %v6593, %v6594
        %6628 = vadd.xlane.f32.xlu0 %v6627
        %v6629 = vpop.xlane.xlu0 %6628
        %v6630 = vadd.f32 %v6595, %v6596
        %6631 = vadd.xlane.f32.xlu0 %v6630
        %v6632 = vpop.xlane.xlu0 %6631
        %v6633 = vadd.f32 %v6597, %v6598
        %6634 = vadd.xlane.f32.xlu0 %v6633
        %v6635 = vpop.xlane.xlu0 %6634
        %v6636 = vadd.f32 %v6599, %v6600
        %6637 = vadd.xlane.f32.xlu0 %v6636
        %v6638 = vpop.xlane.xlu0 %6637
        %v6639 = vadd.f32 %v6601, %v6602
        %6640 = vadd.xlane.f32.xlu0 %v6639
        %v6641 = vpop.xlane.xlu0 %6640
        %v6642 = vadd.f32 %v6603, %v6604
        %6643 = vadd.xlane.f32.xlu0 %v6642
        %v6644 = vpop.xlane.xlu0 %6643
        %v6645 = vadd.f32 %v6605, %v6606
        %6646 = vadd.xlane.f32.xlu0 %v6645
        %v6647 = vpop.xlane.xlu0 %6646
        %v6648 = vadd.f32 %v6607, %v6608
        %6649 = vadd.xlane.f32.xlu0 %v6648
        %v6650 = vpop.xlane.xlu0 %6649
        %v6651 = vadd.f32 %v6609, %v6610
        %6652 = vadd.xlane.f32.xlu0 %v6651
        %v6653 = vpop.xlane.xlu0 %6652
        %v6654 = vadd.f32 %v6611, %v6612
        %6655 = vadd.xlane.f32.xlu0 %v6654
        %v6656 = vpop.xlane.xlu0 %6655
        %v6657 = vadd.f32 %v6613, %v6614
        %6658 = vadd.xlane.f32.xlu0 %v6657
        %v6659 = vpop.xlane.xlu0 %6658
        %v6660 = vadd.f32 %v6615, %v6616
        %6661 = vadd.xlane.f32.xlu0 %v6660
        %v6662 = vpop.xlane.xlu0 %6661
        %v6663 = vadd.f32 %v6617, %v6618
        %6664 = vadd.xlane.f32.xlu0 %v6663
        %v6665 = vpop.xlane.xlu0 %6664
        %v6666 = vadd.f32 %v6619, %v6620
        %6667 = vadd.xlane.f32.xlu0 %v6666
        %v6668 = vpop.xlane.xlu0 %6667
        %v6669 = vmul.f32 %v6623, %v3462
        %v6670 = vmul.f32 %v6626, %v3462
        %v6671 = vmul.f32 %v6629, %v3462
        %v6672 = vmul.f32 %v6632, %v3462
        %v6673 = vmul.f32 %v6635, %v3462
        %v6674 = vmul.f32 %v6638, %v3462
        %v6675 = vmul.f32 %v6641, %v3462
        %v6676 = vmul.f32 %v6644, %v3462
        %v6677 = vmul.f32 %v6647, %v3462
        %v6678 = vmul.f32 %v6650, %v3462
        %v6679 = vmul.f32 %v6653, %v3462
        %v6680 = vmul.f32 %v6656, %v3462
        %v6681 = vmul.f32 %v6659, %v3462
        %v6682 = vmul.f32 %v6662, %v3462
        %v6683 = vmul.f32 %v6665, %v3462
        %v6684 = vmul.f32 %v6668, %v3462
        %v6685 = vadd.f32 %v6669, 1e-05
        %v6686 = vadd.f32 %v6670, 1e-05
        %v6687 = vadd.f32 %v6671, 1e-05
        %v6688 = vadd.f32 %v6672, 1e-05
        %v6689 = vadd.f32 %v6673, 1e-05
        %v6690 = vadd.f32 %v6674, 1e-05
        %v6691 = vadd.f32 %v6675, 1e-05
        %v6692 = vadd.f32 %v6676, 1e-05
        %v6693 = vadd.f32 %v6677, 1e-05
        %v6694 = vadd.f32 %v6678, 1e-05
        %v6695 = vadd.f32 %v6679, 1e-05
        %v6696 = vadd.f32 %v6680, 1e-05
        %v6697 = vadd.f32 %v6681, 1e-05
        %v6698 = vadd.f32 %v6682, 1e-05
        %v6699 = vadd.f32 %v6683, 1e-05
        %v6700 = vadd.f32 %v6684, 1e-05
        %v6701 = vrsqrt.pop %v6685
        %v6702 = vrsqrt.pop %v6686
        %v6703 = vrsqrt.pop %v6687
        %v6704 = vrsqrt.pop %v6688
        %v6705 = vrsqrt.pop %v6689
        %v6706 = vrsqrt.pop %v6690
        %v6707 = vrsqrt.pop %v6691
        %v6708 = vrsqrt.pop %v6692
        %v6709 = vrsqrt.pop %v6693
        %v6710 = vrsqrt.pop %v6694
        %v6711 = vrsqrt.pop %v6695
        %v6712 = vrsqrt.pop %v6696
        %v6713 = vrsqrt.pop %v6697
        %v6714 = vrsqrt.pop %v6698
        %v6715 = vrsqrt.pop %v6699
        %v6716 = vrsqrt.pop %v6700
        %v6717 = vmul.f32 %v6557, %v6701
        %v6718 = vmul.f32 %v6558, %v6701
        %v6719 = vmul.f32 %v6559, %v6702
        %v6720 = vmul.f32 %v6560, %v6702
        %v6721 = vmul.f32 %v6561, %v6703
        %v6722 = vmul.f32 %v6562, %v6703
        %v6723 = vmul.f32 %v6563, %v6704
        %v6724 = vmul.f32 %v6564, %v6704
        %v6725 = vmul.f32 %v6565, %v6705
        %v6726 = vmul.f32 %v6566, %v6705
        %v6727 = vmul.f32 %v6567, %v6706
        %v6728 = vmul.f32 %v6568, %v6706
        %v6729 = vmul.f32 %v6569, %v6707
        %v6730 = vmul.f32 %v6570, %v6707
        %v6731 = vmul.f32 %v6571, %v6708
        %v6732 = vmul.f32 %v6572, %v6708
        %v6733 = vmul.f32 %v6573, %v6709
        %v6734 = vmul.f32 %v6574, %v6709
        %v6735 = vmul.f32 %v6575, %v6710
        %v6736 = vmul.f32 %v6576, %v6710
        %v6737 = vmul.f32 %v6577, %v6711
        %v6738 = vmul.f32 %v6578, %v6711
        %v6739 = vmul.f32 %v6579, %v6712
        %v6740 = vmul.f32 %v6580, %v6712
        %v6741 = vmul.f32 %v6581, %v6713
        %v6742 = vmul.f32 %v6582, %v6713
        %v6743 = vmul.f32 %v6583, %v6714
        %v6744 = vmul.f32 %v6584, %v6714
        %v6745 = vmul.f32 %v6585, %v6715
        %v6746 = vmul.f32 %v6586, %v6715
        %v6747 = vmul.f32 %v6587, %v6716
        %v6748 = vmul.f32 %v6588, %v6716
        %v6750 = vlaneseq
        %v6751 = vshrl.u32 %v6750, 7
        %v6752 = vsub.s32 0, %v6751
        %v6753 = vrot.slane %v6491, %v6752
        %v6754 = vlaneseq
        %v6755 = vshrl.u32 %v6754, 7
        %v6756 = vsub.s32 1, %v6755
        %v6757 = vrot.slane %v6491, %v6756
        %v6760 = vmul.f32 %v6717, %v6753
        %v6761 = vmul.f32 %v6718, %v6757
        %v6762 = vmul.f32 %v6719, %v6753
        %v6763 = vmul.f32 %v6720, %v6757
        %v6764 = vmul.f32 %v6721, %v6753
        %v6765 = vmul.f32 %v6722, %v6757
        %v6766 = vmul.f32 %v6723, %v6753
        %v6767 = vmul.f32 %v6724, %v6757
        %v6768 = vmul.f32 %v6725, %v6753
        %v6769 = vmul.f32 %v6726, %v6757
        %v6770 = vmul.f32 %v6727, %v6753
        %v6771 = vmul.f32 %v6728, %v6757
        %v6772 = vmul.f32 %v6729, %v6753
        %v6773 = vmul.f32 %v6730, %v6757
        %v6774 = vmul.f32 %v6731, %v6753
        %v6775 = vmul.f32 %v6732, %v6757
        %v6776 = vmul.f32 %v6733, %v6753
        %v6777 = vmul.f32 %v6734, %v6757
        %v6778 = vmul.f32 %v6735, %v6753
        %v6779 = vmul.f32 %v6736, %v6757
        %v6780 = vmul.f32 %v6737, %v6753
        %v6781 = vmul.f32 %v6738, %v6757
        %v6782 = vmul.f32 %v6739, %v6753
        %v6783 = vmul.f32 %v6740, %v6757
        %v6784 = vmul.f32 %v6741, %v6753
        %v6785 = vmul.f32 %v6742, %v6757
        %v6786 = vmul.f32 %v6743, %v6753
        %v6787 = vmul.f32 %v6744, %v6757
        %v6788 = vmul.f32 %v6745, %v6753
        %v6789 = vmul.f32 %v6746, %v6757
        %v6790 = vmul.f32 %v6747, %v6753
        %v6791 = vmul.f32 %v6748, %v6757
        %v6793 = vlaneseq
        %v6794 = vshrl.u32 %v6793, 7
        %v6795 = vsub.s32 0, %v6794
        %v6796 = vrot.slane %v6492, %v6795
        %v6797 = vlaneseq
        %v6798 = vshrl.u32 %v6797, 7
        %v6799 = vsub.s32 1, %v6798
        %v6800 = vrot.slane %v6492, %v6799
        %v6803 = vadd.f32 %v6760, %v6796
        %v6804 = vadd.f32 %v6761, %v6800
        %v6805 = vadd.f32 %v6762, %v6796
        %v6806 = vadd.f32 %v6763, %v6800
        %v6807 = vadd.f32 %v6764, %v6796
        %v6808 = vadd.f32 %v6765, %v6800
        %v6809 = vadd.f32 %v6766, %v6796
        %v6810 = vadd.f32 %v6767, %v6800
        %v6811 = vadd.f32 %v6768, %v6796
        %v6812 = vadd.f32 %v6769, %v6800
        %v6813 = vadd.f32 %v6770, %v6796
        %v6814 = vadd.f32 %v6771, %v6800
        %v6815 = vadd.f32 %v6772, %v6796
        %v6816 = vadd.f32 %v6773, %v6800
        %v6817 = vadd.f32 %v6774, %v6796
        %v6818 = vadd.f32 %v6775, %v6800
        %v6819 = vadd.f32 %v6776, %v6796
        %v6820 = vadd.f32 %v6777, %v6800
        %v6821 = vadd.f32 %v6778, %v6796
        %v6822 = vadd.f32 %v6779, %v6800
        %v6823 = vadd.f32 %v6780, %v6796
        %v6824 = vadd.f32 %v6781, %v6800
        %v6825 = vadd.f32 %v6782, %v6796
        %v6826 = vadd.f32 %v6783, %v6800
        %v6827 = vadd.f32 %v6784, %v6796
        %v6828 = vadd.f32 %v6785, %v6800
        %v6829 = vadd.f32 %v6786, %v6796
        %v6830 = vadd.f32 %v6787, %v6800
        %v6831 = vadd.f32 %v6788, %v6796
        %v6832 = vadd.f32 %v6789, %v6800
        %v6833 = vadd.f32 %v6790, %v6796
        %v6834 = vadd.f32 %v6791, %v6800
        %6835 = vst [vmem:[#allocation2] sm:$0xff] %v6803
        %6836 = vst [vmem:[#allocation2 + $0x8] sm:$0xff] %v6804
        %6837 = vst [vmem:[#allocation2 + $0x10] sm:$0xff] %v6805
        %6838 = vst [vmem:[#allocation2 + $0x18] sm:$0xff] %v6806
        %6839 = vst [vmem:[#allocation2 + $0x20] sm:$0xff] %v6807
        %6840 = vst [vmem:[#allocation2 + $0x28] sm:$0xff] %v6808
        %6841 = vst [vmem:[#allocation2 + $0x30] sm:$0xff] %v6809
        %6842 = vst [vmem:[#allocation2 + $0x38] sm:$0xff] %v6810
        %6843 = vst [vmem:[#allocation2 + $0x40] sm:$0xff] %v6811
        %6844 = vst [vmem:[#allocation2 + $0x48] sm:$0xff] %v6812
        %6845 = vst [vmem:[#allocation2 + $0x50] sm:$0xff] %v6813
        %6846 = vst [vmem:[#allocation2 + $0x58] sm:$0xff] %v6814
        %6847 = vst [vmem:[#allocation2 + $0x60] sm:$0xff] %v6815
        %6848 = vst [vmem:[#allocation2 + $0x68] sm:$0xff] %v6816
        %6849 = vst [vmem:[#allocation2 + $0x70] sm:$0xff] %v6817
        %6850 = vst [vmem:[#allocation2 + $0x78] sm:$0xff] %v6818
        %6851 = vst [vmem:[#allocation2 + $0x80] sm:$0xff] %v6819
        %6852 = vst [vmem:[#allocation2 + $0x88] sm:$0xff] %v6820
        %6853 = vst [vmem:[#allocation2 + $0x90] sm:$0xff] %v6821
        %6854 = vst [vmem:[#allocation2 + $0x98] sm:$0xff] %v6822
        %6855 = vst [vmem:[#allocation2 + $0xa0] sm:$0xff] %v6823
        %6856 = vst [vmem:[#allocation2 + $0xa8] sm:$0xff] %v6824
        %6857 = vst [vmem:[#allocation2 + $0xb0] sm:$0xff] %v6825
        %6858 = vst [vmem:[#allocation2 + $0xb8] sm:$0xff] %v6826
        %6859 = vst [vmem:[#allocation2 + $0xc0] sm:$0xff] %v6827
        %6860 = vst [vmem:[#allocation2 + $0xc8] sm:$0xff] %v6828
        %6861 = vst [vmem:[#allocation2 + $0xd0] sm:$0xff] %v6829
        %6862 = vst [vmem:[#allocation2 + $0xd8] sm:$0xff] %v6830
        %6863 = vst [vmem:[#allocation2 + $0xe0] sm:$0xff] %v6831
        %6864 = vst [vmem:[#allocation2 + $0xe8] sm:$0xff] %v6832
        %6865 = vst [vmem:[#allocation2 + $0xf0] sm:$0xff] %v6833
        %6866 = vst [vmem:[#allocation2 + $0xf8] sm:$0xff] %v6834
        %p6867 = scmp.eq.s32.totalorder %s41, 1
        // Predicated region
        $region125: #{tpu_custom_call.1} parent=79 // pred_check
          %p6868 = pneg %p6867
        $region126: #{tpu_custom_call.1} parent=79 // pred_check_branch
          %6870 = sbr.rel (%p6868) target = $region128
        $region127: #{tpu_custom_call.1} parent=79 // pred_region
          %v6871 = vld [vmem:[#allocation7] sm:$0x3]
          %v6872 = vld [vmem:[#allocation9] sm:$0x3]
          %v6873 = vadd.f32 %v6803, %v6804
          %6874 = vadd.xlane.f32.xlu0 %v6873
          %v6875 = vpop.xlane.xlu0 %6874
          %v6876 = vadd.f32 %v6805, %v6806
          %6877 = vadd.xlane.f32.xlu0 %v6876
          %v6878 = vpop.xlane.xlu0 %6877
          %v6879 = vadd.f32 %v6807, %v6808
          %6880 = vadd.xlane.f32.xlu0 %v6879
          %v6881 = vpop.xlane.xlu0 %6880
          %v6882 = vadd.f32 %v6809, %v6810
          %6883 = vadd.xlane.f32.xlu0 %v6882
          %v6884 = vpop.xlane.xlu0 %6883
          %v6885 = vadd.f32 %v6811, %v6812
          %6886 = vadd.xlane.f32.xlu0 %v6885
          %v6887 = vpop.xlane.xlu0 %6886
          %v6888 = vadd.f32 %v6813, %v6814
          %6889 = vadd.xlane.f32.xlu0 %v6888
          %v6890 = vpop.xlane.xlu0 %6889
          %v6891 = vadd.f32 %v6815, %v6816
          %6892 = vadd.xlane.f32.xlu0 %v6891
          %v6893 = vpop.xlane.xlu0 %6892
          %v6894 = vadd.f32 %v6817, %v6818
          %6895 = vadd.xlane.f32.xlu0 %v6894
          %v6896 = vpop.xlane.xlu0 %6895
          %v6897 = vadd.f32 %v6819, %v6820
          %6898 = vadd.xlane.f32.xlu0 %v6897
          %v6899 = vpop.xlane.xlu0 %6898
          %v6900 = vadd.f32 %v6821, %v6822
          %6901 = vadd.xlane.f32.xlu0 %v6900
          %v6902 = vpop.xlane.xlu0 %6901
          %v6903 = vadd.f32 %v6823, %v6824
          %6904 = vadd.xlane.f32.xlu0 %v6903
          %v6905 = vpop.xlane.xlu0 %6904
          %v6906 = vadd.f32 %v6825, %v6826
          %6907 = vadd.xlane.f32.xlu0 %v6906
          %v6908 = vpop.xlane.xlu0 %6907
          %v6909 = vadd.f32 %v6827, %v6828
          %6910 = vadd.xlane.f32.xlu0 %v6909
          %v6911 = vpop.xlane.xlu0 %6910
          %v6912 = vadd.f32 %v6829, %v6830
          %6913 = vadd.xlane.f32.xlu0 %v6912
          %v6914 = vpop.xlane.xlu0 %6913
          %v6915 = vadd.f32 %v6831, %v6832
          %6916 = vadd.xlane.f32.xlu0 %v6915
          %v6917 = vpop.xlane.xlu0 %6916
          %v6918 = vadd.f32 %v6833, %v6834
          %6919 = vadd.xlane.f32.xlu0 %v6918
          %v6920 = vpop.xlane.xlu0 %6919
          %v6921 = vmul.f32 %v6875, %v3462
          %v6922 = vmul.f32 %v6878, %v3462
          %v6923 = vmul.f32 %v6881, %v3462
          %v6924 = vmul.f32 %v6884, %v3462
          %v6925 = vmul.f32 %v6887, %v3462
          %v6926 = vmul.f32 %v6890, %v3462
          %v6927 = vmul.f32 %v6893, %v3462
          %v6928 = vmul.f32 %v6896, %v3462
          %v6929 = vmul.f32 %v6899, %v3462
          %v6930 = vmul.f32 %v6902, %v3462
          %v6931 = vmul.f32 %v6905, %v3462
          %v6932 = vmul.f32 %v6908, %v3462
          %v6933 = vmul.f32 %v6911, %v3462
          %v6934 = vmul.f32 %v6914, %v3462
          %v6935 = vmul.f32 %v6917, %v3462
          %v6936 = vmul.f32 %v6920, %v3462
          %v6937 = vsub.f32 %v6803, %v6921
          %v6938 = vsub.f32 %v6804, %v6921
          %v6939 = vsub.f32 %v6805, %v6922
          %v6940 = vsub.f32 %v6806, %v6922
          %v6941 = vsub.f32 %v6807, %v6923
          %v6942 = vsub.f32 %v6808, %v6923
          %v6943 = vsub.f32 %v6809, %v6924
          %v6944 = vsub.f32 %v6810, %v6924
          %v6945 = vsub.f32 %v6811, %v6925
          %v6946 = vsub.f32 %v6812, %v6925
          %v6947 = vsub.f32 %v6813, %v6926
          %v6948 = vsub.f32 %v6814, %v6926
          %v6949 = vsub.f32 %v6815, %v6927
          %v6950 = vsub.f32 %v6816, %v6927
          %v6951 = vsub.f32 %v6817, %v6928
          %v6952 = vsub.f32 %v6818, %v6928
          %v6953 = vsub.f32 %v6819, %v6929
          %v6954 = vsub.f32 %v6820, %v6929
          %v6955 = vsub.f32 %v6821, %v6930
          %v6956 = vsub.f32 %v6822, %v6930
          %v6957 = vsub.f32 %v6823, %v6931
          %v6958 = vsub.f32 %v6824, %v6931
          %v6959 = vsub.f32 %v6825, %v6932
          %v6960 = vsub.f32 %v6826, %v6932
          %v6961 = vsub.f32 %v6827, %v6933
          %v6962 = vsub.f32 %v6828, %v6933
          %v6963 = vsub.f32 %v6829, %v6934
          %v6964 = vsub.f32 %v6830, %v6934
          %v6965 = vsub.f32 %v6831, %v6935
          %v6966 = vsub.f32 %v6832, %v6935
          %v6967 = vsub.f32 %v6833, %v6936
          %v6968 = vsub.f32 %v6834, %v6936
          %v6969 = vmul.f32 %v6937, %v6937
          %v6970 = vmul.f32 %v6938, %v6938
          %v6971 = vmul.f32 %v6939, %v6939
          %v6972 = vmul.f32 %v6940, %v6940
          %v6973 = vmul.f32 %v6941, %v6941
          %v6974 = vmul.f32 %v6942, %v6942
          %v6975 = vmul.f32 %v6943, %v6943
          %v6976 = vmul.f32 %v6944, %v6944
          %v6977 = vmul.f32 %v6945, %v6945
          %v6978 = vmul.f32 %v6946, %v6946
          %v6979 = vmul.f32 %v6947, %v6947
          %v6980 = vmul.f32 %v6948, %v6948
          %v6981 = vmul.f32 %v6949, %v6949
          %v6982 = vmul.f32 %v6950, %v6950
          %v6983 = vmul.f32 %v6951, %v6951
          %v6984 = vmul.f32 %v6952, %v6952
          %v6985 = vmul.f32 %v6953, %v6953
          %v6986 = vmul.f32 %v6954, %v6954
          %v6987 = vmul.f32 %v6955, %v6955
          %v6988 = vmul.f32 %v6956, %v6956
          %v6989 = vmul.f32 %v6957, %v6957
          %v6990 = vmul.f32 %v6958, %v6958
          %v6991 = vmul.f32 %v6959, %v6959
          %v6992 = vmul.f32 %v6960, %v6960
          %v6993 = vmul.f32 %v6961, %v6961
          %v6994 = vmul.f32 %v6962, %v6962
          %v6995 = vmul.f32 %v6963, %v6963
          %v6996 = vmul.f32 %v6964, %v6964
          %v6997 = vmul.f32 %v6965, %v6965
          %v6998 = vmul.f32 %v6966, %v6966
          %v6999 = vmul.f32 %v6967, %v6967
          %v7000 = vmul.f32 %v6968, %v6968
          %v7001 = vadd.f32 %v6969, %v6970
          %7002 = vadd.xlane.f32.xlu0 %v7001
          %v7003 = vpop.xlane.xlu0 %7002
          %v7004 = vadd.f32 %v6971, %v6972
          %7005 = vadd.xlane.f32.xlu0 %v7004
          %v7006 = vpop.xlane.xlu0 %7005
          %v7007 = vadd.f32 %v6973, %v6974
          %7008 = vadd.xlane.f32.xlu0 %v7007
          %v7009 = vpop.xlane.xlu0 %7008
          %v7010 = vadd.f32 %v6975, %v6976
          %7011 = vadd.xlane.f32.xlu0 %v7010
          %v7012 = vpop.xlane.xlu0 %7011
          %v7013 = vadd.f32 %v6977, %v6978
          %7014 = vadd.xlane.f32.xlu0 %v7013
          %v7015 = vpop.xlane.xlu0 %7014
          %v7016 = vadd.f32 %v6979, %v6980
          %7017 = vadd.xlane.f32.xlu0 %v7016
          %v7018 = vpop.xlane.xlu0 %7017
          %v7019 = vadd.f32 %v6981, %v6982
          %7020 = vadd.xlane.f32.xlu0 %v7019
          %v7021 = vpop.xlane.xlu0 %7020
          %v7022 = vadd.f32 %v6983, %v6984
          %7023 = vadd.xlane.f32.xlu0 %v7022
          %v7024 = vpop.xlane.xlu0 %7023
          %v7025 = vadd.f32 %v6985, %v6986
          %7026 = vadd.xlane.f32.xlu0 %v7025
          %v7027 = vpop.xlane.xlu0 %7026
          %v7028 = vadd.f32 %v6987, %v6988
          %7029 = vadd.xlane.f32.xlu0 %v7028
          %v7030 = vpop.xlane.xlu0 %7029
          %v7031 = vadd.f32 %v6989, %v6990
          %7032 = vadd.xlane.f32.xlu0 %v7031
          %v7033 = vpop.xlane.xlu0 %7032
          %v7034 = vadd.f32 %v6991, %v6992
          %7035 = vadd.xlane.f32.xlu0 %v7034
          %v7036 = vpop.xlane.xlu0 %7035
          %v7037 = vadd.f32 %v6993, %v6994
          %7038 = vadd.xlane.f32.xlu0 %v7037
          %v7039 = vpop.xlane.xlu0 %7038
          %v7040 = vadd.f32 %v6995, %v6996
          %7041 = vadd.xlane.f32.xlu0 %v7040
          %v7042 = vpop.xlane.xlu0 %7041
          %v7043 = vadd.f32 %v6997, %v6998
          %7044 = vadd.xlane.f32.xlu0 %v7043
          %v7045 = vpop.xlane.xlu0 %7044
          %v7046 = vadd.f32 %v6999, %v7000
          %7047 = vadd.xlane.f32.xlu0 %v7046
          %v7048 = vpop.xlane.xlu0 %7047
          %v7049 = vmul.f32 %v7003, %v3462
          %v7050 = vmul.f32 %v7006, %v3462
          %v7051 = vmul.f32 %v7009, %v3462
          %v7052 = vmul.f32 %v7012, %v3462
          %v7053 = vmul.f32 %v7015, %v3462
          %v7054 = vmul.f32 %v7018, %v3462
          %v7055 = vmul.f32 %v7021, %v3462
          %v7056 = vmul.f32 %v7024, %v3462
          %v7057 = vmul.f32 %v7027, %v3462
          %v7058 = vmul.f32 %v7030, %v3462
          %v7059 = vmul.f32 %v7033, %v3462
          %v7060 = vmul.f32 %v7036, %v3462
          %v7061 = vmul.f32 %v7039, %v3462
          %v7062 = vmul.f32 %v7042, %v3462
          %v7063 = vmul.f32 %v7045, %v3462
          %v7064 = vmul.f32 %v7048, %v3462
          %v7065 = vadd.f32 %v7049, 1e-05
          %v7066 = vadd.f32 %v7050, 1e-05
          %v7067 = vadd.f32 %v7051, 1e-05
          %v7068 = vadd.f32 %v7052, 1e-05
          %v7069 = vadd.f32 %v7053, 1e-05
          %v7070 = vadd.f32 %v7054, 1e-05
          %v7071 = vadd.f32 %v7055, 1e-05
          %v7072 = vadd.f32 %v7056, 1e-05
          %v7073 = vadd.f32 %v7057, 1e-05
          %v7074 = vadd.f32 %v7058, 1e-05
          %v7075 = vadd.f32 %v7059, 1e-05
          %v7076 = vadd.f32 %v7060, 1e-05
          %v7077 = vadd.f32 %v7061, 1e-05
          %v7078 = vadd.f32 %v7062, 1e-05
          %v7079 = vadd.f32 %v7063, 1e-05
          %v7080 = vadd.f32 %v7064, 1e-05
          %v7081 = vrsqrt.pop %v7065
          %v7082 = vrsqrt.pop %v7066
          %v7083 = vrsqrt.pop %v7067
          %v7084 = vrsqrt.pop %v7068
          %v7085 = vrsqrt.pop %v7069
          %v7086 = vrsqrt.pop %v7070
          %v7087 = vrsqrt.pop %v7071
          %v7088 = vrsqrt.pop %v7072
          %v7089 = vrsqrt.pop %v7073
          %v7090 = vrsqrt.pop %v7074
          %v7091 = vrsqrt.pop %v7075
          %v7092 = vrsqrt.pop %v7076
          %v7093 = vrsqrt.pop %v7077
          %v7094 = vrsqrt.pop %v7078
          %v7095 = vrsqrt.pop %v7079
          %v7096 = vrsqrt.pop %v7080
          %v7097 = vmul.f32 %v6937, %v7081
          %v7098 = vmul.f32 %v6938, %v7081
          %v7099 = vmul.f32 %v6939, %v7082
          %v7100 = vmul.f32 %v6940, %v7082
          %v7101 = vmul.f32 %v6941, %v7083
          %v7102 = vmul.f32 %v6942, %v7083
          %v7103 = vmul.f32 %v6943, %v7084
          %v7104 = vmul.f32 %v6944, %v7084
          %v7105 = vmul.f32 %v6945, %v7085
          %v7106 = vmul.f32 %v6946, %v7085
          %v7107 = vmul.f32 %v6947, %v7086
          %v7108 = vmul.f32 %v6948, %v7086
          %v7109 = vmul.f32 %v6949, %v7087
          %v7110 = vmul.f32 %v6950, %v7087
          %v7111 = vmul.f32 %v6951, %v7088
          %v7112 = vmul.f32 %v6952, %v7088
          %v7113 = vmul.f32 %v6953, %v7089
          %v7114 = vmul.f32 %v6954, %v7089
          %v7115 = vmul.f32 %v6955, %v7090
          %v7116 = vmul.f32 %v6956, %v7090
          %v7117 = vmul.f32 %v6957, %v7091
          %v7118 = vmul.f32 %v6958, %v7091
          %v7119 = vmul.f32 %v6959, %v7092
          %v7120 = vmul.f32 %v6960, %v7092
          %v7121 = vmul.f32 %v6961, %v7093
          %v7122 = vmul.f32 %v6962, %v7093
          %v7123 = vmul.f32 %v6963, %v7094
          %v7124 = vmul.f32 %v6964, %v7094
          %v7125 = vmul.f32 %v6965, %v7095
          %v7126 = vmul.f32 %v6966, %v7095
          %v7127 = vmul.f32 %v6967, %v7096
          %v7128 = vmul.f32 %v6968, %v7096
          %v7130 = vlaneseq
          %v7131 = vshrl.u32 %v7130, 7
          %v7132 = vsub.s32 0, %v7131
          %v7133 = vrot.slane %v6871, %v7132
          %v7134 = vlaneseq
          %v7135 = vshrl.u32 %v7134, 7
          %v7136 = vsub.s32 1, %v7135
          %v7137 = vrot.slane %v6871, %v7136
          %v7140 = vmul.f32 %v7097, %v7133
          %v7141 = vmul.f32 %v7098, %v7137
          %v7142 = vmul.f32 %v7099, %v7133
          %v7143 = vmul.f32 %v7100, %v7137
          %v7144 = vmul.f32 %v7101, %v7133
          %v7145 = vmul.f32 %v7102, %v7137
          %v7146 = vmul.f32 %v7103, %v7133
          %v7147 = vmul.f32 %v7104, %v7137
          %v7148 = vmul.f32 %v7105, %v7133
          %v7149 = vmul.f32 %v7106, %v7137
          %v7150 = vmul.f32 %v7107, %v7133
          %v7151 = vmul.f32 %v7108, %v7137
          %v7152 = vmul.f32 %v7109, %v7133
          %v7153 = vmul.f32 %v7110, %v7137
          %v7154 = vmul.f32 %v7111, %v7133
          %v7155 = vmul.f32 %v7112, %v7137
          %v7156 = vmul.f32 %v7113, %v7133
          %v7157 = vmul.f32 %v7114, %v7137
          %v7158 = vmul.f32 %v7115, %v7133
          %v7159 = vmul.f32 %v7116, %v7137
          %v7160 = vmul.f32 %v7117, %v7133
          %v7161 = vmul.f32 %v7118, %v7137
          %v7162 = vmul.f32 %v7119, %v7133
          %v7163 = vmul.f32 %v7120, %v7137
          %v7164 = vmul.f32 %v7121, %v7133
          %v7165 = vmul.f32 %v7122, %v7137
          %v7166 = vmul.f32 %v7123, %v7133
          %v7167 = vmul.f32 %v7124, %v7137
          %v7168 = vmul.f32 %v7125, %v7133
          %v7169 = vmul.f32 %v7126, %v7137
          %v7170 = vmul.f32 %v7127, %v7133
          %v7171 = vmul.f32 %v7128, %v7137
          %v7173 = vlaneseq
          %v7174 = vshrl.u32 %v7173, 7
          %v7175 = vsub.s32 0, %v7174
          %v7176 = vrot.slane %v6872, %v7175
          %v7177 = vlaneseq
          %v7178 = vshrl.u32 %v7177, 7
          %v7179 = vsub.s32 1, %v7178
          %v7180 = vrot.slane %v6872, %v7179
          %v7183 = vadd.f32 %v7140, %v7176
          %v7184 = vadd.f32 %v7141, %v7180
          %v7185 = vadd.f32 %v7142, %v7176
          %v7186 = vadd.f32 %v7143, %v7180
          %v7187 = vadd.f32 %v7144, %v7176
          %v7188 = vadd.f32 %v7145, %v7180
          %v7189 = vadd.f32 %v7146, %v7176
          %v7190 = vadd.f32 %v7147, %v7180
          %v7191 = vadd.f32 %v7148, %v7176
          %v7192 = vadd.f32 %v7149, %v7180
          %v7193 = vadd.f32 %v7150, %v7176
          %v7194 = vadd.f32 %v7151, %v7180
          %v7195 = vadd.f32 %v7152, %v7176
          %v7196 = vadd.f32 %v7153, %v7180
          %v7197 = vadd.f32 %v7154, %v7176
          %v7198 = vadd.f32 %v7155, %v7180
          %v7199 = vadd.f32 %v7156, %v7176
          %v7200 = vadd.f32 %v7157, %v7180
          %v7201 = vadd.f32 %v7158, %v7176
          %v7202 = vadd.f32 %v7159, %v7180
          %v7203 = vadd.f32 %v7160, %v7176
          %v7204 = vadd.f32 %v7161, %v7180
          %v7205 = vadd.f32 %v7162, %v7176
          %v7206 = vadd.f32 %v7163, %v7180
          %v7207 = vadd.f32 %v7164, %v7176
          %v7208 = vadd.f32 %v7165, %v7180
          %v7209 = vadd.f32 %v7166, %v7176
          %v7210 = vadd.f32 %v7167, %v7180
          %v7211 = vadd.f32 %v7168, %v7176
          %v7212 = vadd.f32 %v7169, %v7180
          %v7213 = vadd.f32 %v7170, %v7176
          %v7214 = vadd.f32 %v7171, %v7180
          %7215 = vst [vmem:[#allocation21] sm:$0xff] %v7183
          %7216 = vst [vmem:[#allocation21 + $0x8] sm:$0xff] %v7184
          %7217 = vst [vmem:[#allocation21 + $0x10] sm:$0xff] %v7185
          %7218 = vst [vmem:[#allocation21 + $0x18] sm:$0xff] %v7186
          %7219 = vst [vmem:[#allocation21 + $0x20] sm:$0xff] %v7187
          %7220 = vst [vmem:[#allocation21 + $0x28] sm:$0xff] %v7188
          %7221 = vst [vmem:[#allocation21 + $0x30] sm:$0xff] %v7189
          %7222 = vst [vmem:[#allocation21 + $0x38] sm:$0xff] %v7190
          %7223 = vst [vmem:[#allocation21 + $0x40] sm:$0xff] %v7191
          %7224 = vst [vmem:[#allocation21 + $0x48] sm:$0xff] %v7192
          %7225 = vst [vmem:[#allocation21 + $0x50] sm:$0xff] %v7193
          %7226 = vst [vmem:[#allocation21 + $0x58] sm:$0xff] %v7194
          %7227 = vst [vmem:[#allocation21 + $0x60] sm:$0xff] %v7195
          %7228 = vst [vmem:[#allocation21 + $0x68] sm:$0xff] %v7196
          %7229 = vst [vmem:[#allocation21 + $0x70] sm:$0xff] %v7197
          %7230 = vst [vmem:[#allocation21 + $0x78] sm:$0xff] %v7198
          %7231 = vst [vmem:[#allocation21 + $0x80] sm:$0xff] %v7199
          %7232 = vst [vmem:[#allocation21 + $0x88] sm:$0xff] %v7200
          %7233 = vst [vmem:[#allocation21 + $0x90] sm:$0xff] %v7201
          %7234 = vst [vmem:[#allocation21 + $0x98] sm:$0xff] %v7202
          %7235 = vst [vmem:[#allocation21 + $0xa0] sm:$0xff] %v7203
          %7236 = vst [vmem:[#allocation21 + $0xa8] sm:$0xff] %v7204
          %7237 = vst [vmem:[#allocation21 + $0xb0] sm:$0xff] %v7205
          %7238 = vst [vmem:[#allocation21 + $0xb8] sm:$0xff] %v7206
          %7239 = vst [vmem:[#allocation21 + $0xc0] sm:$0xff] %v7207
          %7240 = vst [vmem:[#allocation21 + $0xc8] sm:$0xff] %v7208
          %7241 = vst [vmem:[#allocation21 + $0xd0] sm:$0xff] %v7209
          %7242 = vst [vmem:[#allocation21 + $0xd8] sm:$0xff] %v7210
          %7243 = vst [vmem:[#allocation21 + $0xe0] sm:$0xff] %v7211
          %7244 = vst [vmem:[#allocation21 + $0xe8] sm:$0xff] %v7212
          %7245 = vst [vmem:[#allocation21 + $0xf0] sm:$0xff] %v7213
          %7246 = vst [vmem:[#allocation21 + $0xf8] sm:$0xff] %v7214
        $region128: #{tpu_custom_call.1} parent=79 // pred_fallthru
          _
        // Predicated region
        $region129: #{tpu_custom_call.1} parent=79 // pred_check
          %p7247 = pneg %p429
        $region130: #{tpu_custom_call.1} parent=79 // pred_check_branch
          %7249 = sbr.rel (%p7247) target = $region132
        $region131: #{tpu_custom_call.1} parent=79 // pred_region
          %s7251 = ssub.s32 4096, 4096
          %7252 = vsyncadd [#allocation6], %s7251
          %s7253 = sshll.u32 [#allocation21], 4
          %s7254 = int_to_ptr.vmem [resolvable:$true] %s7253
          %7259 = dma.vmem_to_hbm [thread:$0]  %s7254, 4096, %s15, [#allocation6], 256, 256, 16
        $region132: #{tpu_custom_call.1} parent=79 // pred_fallthru
          _
        // Predicated region
        $region133: #{tpu_custom_call.1} parent=79 // pred_check
          %p7260 = pneg %p429
        $region134: #{tpu_custom_call.1} parent=79 // pred_check_branch
          %7262 = sbr.rel (%p7260) target = $region136
        $region135: #{tpu_custom_call.1} parent=79 // pred_region
          %7263 = dma.done [#allocation6], 4096
        $region136: #{tpu_custom_call.1} parent=79 // pred_fallthru
          _
      $region80: #{tpu_custom_call.1} parent=5 // pred_fallthru
        _
      %p7264 = scmp.le.s32.totalorder 2, %s36
      // Predicated region
      $region137: #{tpu_custom_call.1} parent=5 // pred_check
        %p7265 = pneg %p7264
      $region138: #{tpu_custom_call.1} parent=5 // pred_check_branch
        %7267 = sbr.rel (%p7265) target = $region140
      $region139: #{tpu_custom_call.1} parent=5 // pred_region
        %s7268 = ssub.s32 %s36, 2
      $region140: #{tpu_custom_call.1} parent=5 // pred_fallthru
        _
    $region6: #{tpu_custom_call.1} parent=1 // loop_footer
      %s40 = sadd.s32 1, %s36
    $region7: #{tpu_custom_call.1} parent=1 // loop_footer_branch
      %35 = sbr.rel target = $region3
    $region8: #{tpu_custom_call.1} parent=1 // loop_exit
      _
    %7269 = vsyncpa [#allocation5], 1
    %s7270 = scalar_lea.sflag [#allocation5], 1
    %7271 = vsyncpa %s7270, 1
    %7272 = vsyncpa [#allocation8], 1
    %7273 = vsyncpa [#allocation11], 1
    %s7274 = scalar_lea.sflag [#allocation11], 1
    %7275 = vsyncpa %s7274, 1
    %7276 = vsyncpa [#allocation14], 1
    %s7277 = scalar_lea.sflag [#allocation14], 1
    %7278 = vsyncpa %s7277, 1
    %7279 = vsyncpa [#allocation17], 1
    %s7280 = scalar_lea.sflag [#allocation17], 1
    %7281 = vsyncpa %s7280, 1
    %7282 = vsyncpa [#allocation20], 1
    %s7283 = scalar_lea.sflag [#allocation20], 1
    %7284 = vsyncpa %s7283, 1
    %7285 = vsyncpa [#allocation6], 1
    %s7286 = scalar_lea.sflag [#allocation6], 1
    %7287 = vsyncpa %s7286, 1

</llo_original>
